<compile_context>
chip_gen: v5e
topology: v5e:2x2
jax: 0.10.0
libtpu: 0.0.40
codegen_flags: <defaults>
</compile_context>

<pallas_src>
import jax
import jax.numpy as jnp
from jax import lax
from jax.experimental import pallas as pl
from jax.experimental.pallas import tpu as pltpu

COO_COMBS = ((0, 3), (1, 3), (2, 3))


def _round_up(x, m):
    return ((x + m - 1) // m) * m


# --------------------------------------------------------------------------- #
# Kernel
# --------------------------------------------------------------------------- #
def _make_fused_kernel(plane_Ws, H, C, TN, num_scales):
    """Fused kernel over all scales.  plane_Ws[s][ci] = TRUE spatial resolution."""

    def kernel(pts_ref, s_ref, *refs):
        grid_refs = refs[:-1]          # num_scales * 3 plane refs, each (Wp, HCp)
        out_ref = refs[-1]             # (TN, num_scales * C)
        hcp = s_ref.shape[0]           # padded H*C
        pts = pts_ref[...]             # (TN, 4)

        # ---- time axis: identical for every plane of every scale (hoisted) ----
        t = pts[:, 3:4]
        iy = jnp.clip((t + 1.0) * 0.5 * (H - 1), 0.0, float(H - 1))
        y0f = jnp.floor(iy)
        wy = iy - y0f
        y0 = y0f.astype(jnp.int32)
        y1 = jnp.minimum(y0 + 1, H - 1)
        col = lax.broadcasted_iota(jnp.int32, (TN, hcp), 1)   # built once
        lo0 = y0 * C
        lo1 = y1 * C
        # By[n, h*C + c] = (1-wy) for h == y0, wy for h == y1 (weights sum at the
        # border when y0 == y1, matching grid_sample's border clamping).
        by = (jnp.where((col >= lo0) & (col < lo0 + C), 1.0 - wy, 0.0)
              + jnp.where((col >= lo1) & (col < lo1 + C), wy, 0.0))
        s_mat = s_ref[...]                                    # (HCp, C)

        colw_cache = {}                # trace-time cache: one iota per distinct Wp
        gi = 0
        for s in range(num_scales):
            acc = None
            for ci in range(3):
                W = plane_Ws[s][ci]                    # true spatial resolution
                wp = grid_refs[gi].shape[0]            # padded spatial resolution
                x = pts[:, ci:ci + 1]
                ix = jnp.clip((x + 1.0) * 0.5 * (W - 1), 0.0, float(W - 1))
                x0f = jnp.floor(ix)
                wx = ix - x0f
                x0 = x0f.astype(jnp.int32)
                x1 = jnp.minimum(x0 + 1, W - 1)
                if wp not in colw_cache:
                    colw_cache[wp] = lax.broadcasted_iota(jnp.int32, (TN, wp), 1)
                colw = colw_cache[wp]
                # spatial one-hot: O(TN * W) compares (tiny)
                ax = (jnp.where(colw == x0, 1.0 - wx, 0.0)
                      + jnp.where(colw == x1, wx, 0.0))
                # stage 1: gather/interp the two spatial columns  -> (TN, HCp)
                z = jnp.dot(ax, grid_refs[gi][...],
                            preferred_element_type=jnp.float32)
                # stage 2: weighted sum over the two time rows     -> (TN, C)
                plane = jnp.dot(z * by, s_mat,
                                preferred_element_type=jnp.float32)
                acc = plane if acc is None else acc * plane
                gi += 1
            out_ref[:, s * C:(s + 1) * C] = acc

    return kernel


# --------------------------------------------------------------------------- #
# Host-side wrappers
# --------------------------------------------------------------------------- #
def init_plane_t_params(key, grid_config, a=0.1, b=0.5):
    """Same plane shapes as Plane_t.__init__, re-laid-out for the kernel.

    Kernel layout per plane: (W_spatial, H_time * C) with column index h*C + c.
    NOTE: Plane_t.__init__ would nn.init.ones_ every plane containing the time
    axis (has_time_planes); we use uniform(a, b) so the bilinear-interpolation
    hot path is actually exercised (init is not part of the forward semantics).
    """
    C = grid_config['output_coordinate_dim']
    base_res = grid_config['resolution']
    grids = []
    for m in grid_config['multiscale_res']:
        reso = [r * m for r in base_res[:3]] + list(base_res[3:])
        planes = []
        for coo in COO_COMBS:
            H = reso[coo[1]]          # time
            W = reso[coo[0]]          # spatial
            key, sub = jax.random.split(key)
            p = jax.random.uniform(sub, (1, C, H, W), jnp.float32,
                                   minval=a, maxval=b)   # PyTorch NCHW param
            planes.append(jnp.transpose(p[0], (2, 1, 0)).reshape(W, H * C))
        grids.append(tuple(planes))
    return grids


def _pad_grids(ms_grids, H, C):
    """Zero-pad W and H*C up to multiples of 128 (exact: padded entries get zero
    one-hot weight inside the kernel)."""
    hc = H * C
    hcp = _round_up(hc, 128)
    out = []
    for planes in ms_grids:
        padded = []
        for g in planes:
            w = g.shape[0]
            wp = _round_up(w, 128)
            padded.append(jnp.pad(g, ((0, wp - w), (0, hcp - hc))))
        out.append(tuple(padded))
    return out, hcp


def plane_t_forward(pts, ms_grids, *, time_res, out_dim, tile_n=256):
    """Equivalent of Plane_t.forward: (..., 4) -> (N, out_dim * num_scales)."""
    H, C = time_res, out_dim
    num_scales = len(ms_grids)

    pts2 = pts.reshape(-1, pts.shape[-1]).astype(jnp.float32)
    n = pts2.shape[0]

    # tile: multiple of 128 (sublane/MXU friendly); clamp for tiny point counts.
    tile = max(128, min(_round_up(tile_n, 128), _round_up(n, 128)))
    n_pad = _round_up(n, tile)
    if n_pad != n:
        pts2 = jnp.pad(pts2, ((0, n_pad - n), (0, 0)))

    true_Ws = tuple(tuple(g.shape[0] for g in planes) for planes in ms_grids)
    padded_grids, hcp = _pad_grids(ms_grids, H, C)
    grid_inputs = [g for planes in padded_grids for g in planes]

    # Stage-2 reduction matrix S[h*C + c, c'] = (c == c'), zero rows in the pad.
    s_mat = jnp.zeros((hcp, C), jnp.float32)
    s_mat = s_mat.at[: H * C].set(jnp.tile(jnp.eye(C, dtype=jnp.float32), (H, 1)))

    kernel = _make_fused_kernel(true_Ws, H, C, tile, num_scales)

    in_specs = [pl.BlockSpec((tile, 4), lambda i: (i, 0)),
                pl.BlockSpec((hcp, C), lambda i: (0, 0))]
    for g in grid_inputs:
        in_specs.append(pl.BlockSpec(g.shape, lambda i: (0, 0)))
    out_spec = pl.BlockSpec((tile, num_scales * C), lambda i: (i, 0))

    # Advisory cost estimate for the XLA scheduler.
    flops = 0
    bytes_accessed = pts2.size * 4 + s_mat.size * 4 + n_pad * num_scales * C * 4
    for g in grid_inputs:
        flops += 2 * n_pad * g.shape[0] * hcp + 2 * n_pad * hcp * C
        bytes_accessed += g.size * 4

    out = pl.pallas_call(
        kernel,
        out_shape=jax.ShapeDtypeStruct((n_pad, num_scales * C), jnp.float32),
        grid=(n_pad // tile,),
        in_specs=in_specs,
        out_specs=out_spec,
        compiler_params=pltpu.CompilerParams(
            dimension_semantics=("parallel",),
            vmem_limit_bytes=48 * 1024 * 1024),
        cost_estimate=pl.CostEstimate(flops=int(flops), transcendentals=0,
                                      bytes_accessed=int(bytes_accessed)),
    )(pts2, s_mat, *grid_inputs)
    return out[:n]


# ---------------- pure-JAX reference (for sanity check only) ---------------- #
def _ref_sample(g2, H, C, xs, ts):
    W = g2.shape[0]
    grid = g2.reshape(W, H, C)
    ix = jnp.clip((xs + 1.0) * 0.5 * (W - 1), 0.0, float(W - 1))
    iy = jnp.clip((ts + 1.0) * 0.5 * (H - 1), 0.0, float(H - 1))
    x0 = jnp.floor(ix).astype(jnp.int32)
    y0 = jnp.floor(iy).astype(jnp.int32)
    x1 = jnp.minimum(x0 + 1, W - 1)
    y1 = jnp.minimum(y0 + 1, H - 1)
    wx = (ix - x0.astype(jnp.float32))[:, None]
    wy = (iy - y0.astype(jnp.float32))[:, None]
    v00 = grid[x0, y0]; v01 = grid[x1, y0]
    v10 = grid[x0, y1]; v11 = grid[x1, y1]
    return (v00 * (1 - wx) * (1 - wy) + v01 * wx * (1 - wy)
            + v10 * (1 - wx) * wy + v11 * wx * wy)


def plane_t_forward_ref(pts, ms_grids, *, time_res, out_dim):
    pts2 = pts.reshape(-1, pts.shape[-1])
    feats = []
    for planes in ms_grids:
        acc = jnp.ones((pts2.shape[0], out_dim), jnp.float32)
        for ci, g in enumerate(planes):
            acc = acc * _ref_sample(g, time_res, out_dim, pts2[:, ci], pts2[:, 3])
        feats.append(acc)
    return jnp.concatenate(feats, axis=-1)


if __name__ == "__main__":
    grid_config = {
        'grid_dimensions': 2,
        'input_coordinate_dim': 4,      # (x, y, z, t)
        'output_coordinate_dim': 16,
        'resolution': [16, 16, 16, 8],  # spatial x3, time
        'multiscale_res': [1, 2],
    }
    time_res = grid_config['resolution'][3]
    out_dim = grid_config['output_coordinate_dim']

    key = jax.random.PRNGKey(0)
    kp, kg = jax.random.split(key)
    ms_grids = init_plane_t_params(kg, grid_config)
    # pts: (4, 256, 4) -> N=1024 points; tile_n=256 -> 4 parallel grid steps.
    pts = jax.random.uniform(kp, (4, 256, 4), jnp.float32, minval=-1.0, maxval=1.0)

    out = plane_t_forward(pts, ms_grids, time_res=time_res, out_dim=out_dim,
                          tile_n=256)
    out = jax.block_until_ready(out)

    ref = plane_t_forward_ref(pts, ms_grids, time_res=time_res, out_dim=out_dim)
    assert out.shape == (4 * 256, out_dim * len(grid_config['multiscale_res'])), out.shape
    err = float(jnp.max(jnp.abs(out - ref)))
    assert err < 1e-4, f"max abs error {err}"
    print("KERNEL_OK")
</pallas_src>

<mosaic_0001>
module attributes {stable_mosaic.version = 11 : i64} {
  func.func @kernel(%arg0: i32, %arg1: memref<256x4xf32, #tpu.memory_space<vmem>>, %arg2: memref<128x16xf32, #tpu.memory_space<vmem>>, %arg3: memref<128x128xf32, #tpu.memory_space<vmem>>, %arg4: memref<128x128xf32, #tpu.memory_space<vmem>>, %arg5: memref<128x128xf32, #tpu.memory_space<vmem>>, %arg6: memref<128x128xf32, #tpu.memory_space<vmem>>, %arg7: memref<128x128xf32, #tpu.memory_space<vmem>>, %arg8: memref<128x128xf32, #tpu.memory_space<vmem>>, %arg9: memref<256x32xf32, #tpu.memory_space<vmem>>) attributes {dimension_semantics = [#tpu.dimension_semantics<parallel>], iteration_bounds = array<i64: 4>, scalar_prefetch = 0 : i64, scratch_operands = 0 : i64, tpu.core_type = #tpu.core_type<tc>, window_params = [{transform_indices = @transform_0, window_bounds = array<i64: 256, 4>}, {pipeline_mode = #tpu.pipeline_mode<synchronous>, transform_indices = @transform_1, window_bounds = array<i64: 128, 16>}, {pipeline_mode = #tpu.pipeline_mode<synchronous>, transform_indices = @transform_2, window_bounds = array<i64: 128, 128>}, {pipeline_mode = #tpu.pipeline_mode<synchronous>, transform_indices = @transform_3, window_bounds = array<i64: 128, 128>}, {pipeline_mode = #tpu.pipeline_mode<synchronous>, transform_indices = @transform_4, window_bounds = array<i64: 128, 128>}, {pipeline_mode = #tpu.pipeline_mode<synchronous>, transform_indices = @transform_5, window_bounds = array<i64: 128, 128>}, {pipeline_mode = #tpu.pipeline_mode<synchronous>, transform_indices = @transform_6, window_bounds = array<i64: 128, 128>}, {pipeline_mode = #tpu.pipeline_mode<synchronous>, transform_indices = @transform_7, window_bounds = array<i64: 128, 128>}, {transform_indices = @transform_8, window_bounds = array<i64: 256, 32>}]} {
    %c0 = arith.constant 0 : index
    %c0_0 = arith.constant 0 : index
    %0 = vector.load %arg1[%c0, %c0_0] : memref<256x4xf32, #tpu.memory_space<vmem>>, vector<256x4xf32>
    %1 = vector.extract_strided_slice %0 {offsets = [0, 3], sizes = [256, 1], strides = [1, 1]} : vector<256x4xf32> to vector<256x1xf32>
    %cst = arith.constant 1.000000e+00 : f32
    %2 = vector.broadcast %cst : f32 to vector<256x1xf32>
    %3 = arith.addf %1, %2 : vector<256x1xf32>
    %cst_1 = arith.constant 5.000000e-01 : f32
    %4 = vector.broadcast %cst_1 : f32 to vector<256x1xf32>
    %5 = arith.mulf %3, %4 : vector<256x1xf32>
    %cst_2 = arith.constant 7.000000e+00 : f32
    %6 = vector.broadcast %cst_2 : f32 to vector<256x1xf32>
    %7 = arith.mulf %5, %6 : vector<256x1xf32>
    %cst_3 = arith.constant 0.000000e+00 : f32
    %cst_4 = arith.constant 7.000000e+00 : f32
    %8 = vector.broadcast %cst_3 : f32 to vector<256x1xf32>
    %9 = arith.maximumf %8, %7 : vector<256x1xf32>
    %10 = vector.broadcast %cst_4 : f32 to vector<256x1xf32>
    %11 = arith.minimumf %10, %9 : vector<256x1xf32>
    %12 = math.floor %11 : vector<256x1xf32>
    %13 = arith.subf %11, %12 : vector<256x1xf32>
    %14 = arith.fptosi %12 : vector<256x1xf32> to vector<256x1xi32>
    %c1_i32 = arith.constant 1 : i32
    %15 = vector.broadcast %c1_i32 : i32 to vector<256x1xi32>
    %16 = arith.addi %14, %15 : vector<256x1xi32>
    %c7_i32 = arith.constant 7 : i32
    %17 = vector.broadcast %c7_i32 : i32 to vector<256x1xi32>
    %18 = arith.minsi %16, %17 : vector<256x1xi32>
    %19 = tpu.iota {dimensions = array<i32: 1>} : vector<256x128xi32>
    %c16_i32 = arith.constant 16 : i32
    %20 = vector.broadcast %c16_i32 : i32 to vector<256x1xi32>
    %21 = arith.muli %14, %20 : vector<256x1xi32>
    %c16_i32_5 = arith.constant 16 : i32
    %22 = vector.broadcast %c16_i32_5 : i32 to vector<256x1xi32>
    %23 = arith.muli %18, %22 : vector<256x1xi32>
    %24 = vector.broadcast %21 : vector<256x1xi32> to vector<256x128xi32>
    %25 = arith.cmpi sge, %19, %24 : vector<256x128xi32>
    %c16_i32_6 = arith.constant 16 : i32
    %26 = vector.broadcast %c16_i32_6 : i32 to vector<256x1xi32>
    %27 = arith.addi %21, %26 : vector<256x1xi32>
    %28 = vector.broadcast %27 : vector<256x1xi32> to vector<256x128xi32>
    %29 = arith.cmpi slt, %19, %28 : vector<256x128xi32>
    %30 = arith.andi %25, %29 : vector<256x128xi1>
    %cst_7 = arith.constant 1.000000e+00 : f32
    %31 = vector.broadcast %cst_7 : f32 to vector<256x1xf32>
    %32 = arith.subf %31, %13 : vector<256x1xf32>
    %cst_8 = arith.constant 0.000000e+00 : f32
    %33 = vector.shape_cast %32 : vector<256x1xf32> to vector<256x1xf32>
    %34 = vector.broadcast %33 : vector<256x1xf32> to vector<256x128xf32>
    %35 = vector.broadcast %cst_8 : f32 to vector<256x128xf32>
    %36 = arith.select %30, %34, %35 : vector<256x128xi1>, vector<256x128xf32>
    %37 = vector.broadcast %23 : vector<256x1xi32> to vector<256x128xi32>
    %38 = arith.cmpi sge, %19, %37 : vector<256x128xi32>
    %c16_i32_9 = arith.constant 16 : i32
    %39 = vector.broadcast %c16_i32_9 : i32 to vector<256x1xi32>
    %40 = arith.addi %23, %39 : vector<256x1xi32>
    %41 = vector.broadcast %40 : vector<256x1xi32> to vector<256x128xi32>
    %42 = arith.cmpi slt, %19, %41 : vector<256x128xi32>
    %43 = arith.andi %38, %42 : vector<256x128xi1>
    %cst_10 = arith.constant 0.000000e+00 : f32
    %44 = vector.shape_cast %13 : vector<256x1xf32> to vector<256x1xf32>
    %45 = vector.broadcast %44 : vector<256x1xf32> to vector<256x128xf32>
    %46 = vector.broadcast %cst_10 : f32 to vector<256x128xf32>
    %47 = arith.select %43, %45, %46 : vector<256x128xi1>, vector<256x128xf32>
    %48 = arith.addf %36, %47 : vector<256x128xf32>
    %c0_11 = arith.constant 0 : index
    %c0_12 = arith.constant 0 : index
    %49 = vector.load %arg2[%c0_11, %c0_12] : memref<128x16xf32, #tpu.memory_space<vmem>>, vector<128x16xf32>
    %50 = vector.extract_strided_slice %0 {offsets = [0, 0], sizes = [256, 1], strides = [1, 1]} : vector<256x4xf32> to vector<256x1xf32>
    %cst_13 = arith.constant 1.000000e+00 : f32
    %51 = vector.broadcast %cst_13 : f32 to vector<256x1xf32>
    %52 = arith.addf %50, %51 : vector<256x1xf32>
    %cst_14 = arith.constant 5.000000e-01 : f32
    %53 = vector.broadcast %cst_14 : f32 to vector<256x1xf32>
    %54 = arith.mulf %52, %53 : vector<256x1xf32>
    %cst_15 = arith.constant 1.500000e+01 : f32
    %55 = vector.broadcast %cst_15 : f32 to vector<256x1xf32>
    %56 = arith.mulf %54, %55 : vector<256x1xf32>
    %cst_16 = arith.constant 0.000000e+00 : f32
    %cst_17 = arith.constant 1.500000e+01 : f32
    %57 = vector.broadcast %cst_16 : f32 to vector<256x1xf32>
    %58 = arith.maximumf %57, %56 : vector<256x1xf32>
    %59 = vector.broadcast %cst_17 : f32 to vector<256x1xf32>
    %60 = arith.minimumf %59, %58 : vector<256x1xf32>
    %61 = math.floor %60 : vector<256x1xf32>
    %62 = arith.subf %60, %61 : vector<256x1xf32>
    %63 = arith.fptosi %61 : vector<256x1xf32> to vector<256x1xi32>
    %c1_i32_18 = arith.constant 1 : i32
    %64 = vector.broadcast %c1_i32_18 : i32 to vector<256x1xi32>
    %65 = arith.addi %63, %64 : vector<256x1xi32>
    %c15_i32 = arith.constant 15 : i32
    %66 = vector.broadcast %c15_i32 : i32 to vector<256x1xi32>
    %67 = arith.minsi %65, %66 : vector<256x1xi32>
    %68 = tpu.iota {dimensions = array<i32: 1>} : vector<256x128xi32>
    %69 = vector.broadcast %63 : vector<256x1xi32> to vector<256x128xi32>
    %70 = arith.cmpi eq, %68, %69 : vector<256x128xi32>
    %cst_19 = arith.constant 1.000000e+00 : f32
    %71 = vector.broadcast %cst_19 : f32 to vector<256x1xf32>
    %72 = arith.subf %71, %62 : vector<256x1xf32>
    %cst_20 = arith.constant 0.000000e+00 : f32
    %73 = vector.shape_cast %72 : vector<256x1xf32> to vector<256x1xf32>
    %74 = vector.broadcast %73 : vector<256x1xf32> to vector<256x128xf32>
    %75 = vector.broadcast %cst_20 : f32 to vector<256x128xf32>
    %76 = arith.select %70, %74, %75 : vector<256x128xi1>, vector<256x128xf32>
    %77 = vector.broadcast %67 : vector<256x1xi32> to vector<256x128xi32>
    %78 = arith.cmpi eq, %68, %77 : vector<256x128xi32>
    %cst_21 = arith.constant 0.000000e+00 : f32
    %79 = vector.shape_cast %62 : vector<256x1xf32> to vector<256x1xf32>
    %80 = vector.broadcast %79 : vector<256x1xf32> to vector<256x128xf32>
    %81 = vector.broadcast %cst_21 : f32 to vector<256x128xf32>
    %82 = arith.select %78, %80, %81 : vector<256x128xi1>, vector<256x128xf32>
    %83 = arith.addf %76, %82 : vector<256x128xf32>
    %c0_22 = arith.constant 0 : index
    %c0_23 = arith.constant 0 : index
    %84 = vector.load %arg3[%c0_22, %c0_23] : memref<128x128xf32, #tpu.memory_space<vmem>>, vector<128x128xf32>
    %cst_24 = arith.constant dense<0.000000e+00> : vector<256x128xf32>
    %85 = tpu.matmul %83, %84, %cst_24 {dimension_numbers = #tpu.dot_dimension_numbers<[1], [0], [0], [1], [0, 0, 1, 1], [], []>} : vector<256x128xf32>, vector<128x128xf32>, vector<256x128xf32> -> vector<256x128xf32>
    %86 = arith.mulf %85, %48 : vector<256x128xf32>
    %cst_25 = arith.constant dense<0.000000e+00> : vector<256x16xf32>
    %87 = tpu.matmul %86, %49, %cst_25 {dimension_numbers = #tpu.dot_dimension_numbers<[1], [0], [0], [1], [0, 0, 1, 1], [], []>} : vector<256x128xf32>, vector<128x16xf32>, vector<256x16xf32> -> vector<256x16xf32>
    %88 = vector.extract_strided_slice %0 {offsets = [0, 1], sizes = [256, 1], strides = [1, 1]} : vector<256x4xf32> to vector<256x1xf32>
    %cst_26 = arith.constant 1.000000e+00 : f32
    %89 = vector.broadcast %cst_26 : f32 to vector<256x1xf32>
    %90 = arith.addf %88, %89 : vector<256x1xf32>
    %cst_27 = arith.constant 5.000000e-01 : f32
    %91 = vector.broadcast %cst_27 : f32 to vector<256x1xf32>
    %92 = arith.mulf %90, %91 : vector<256x1xf32>
    %cst_28 = arith.constant 1.500000e+01 : f32
    %93 = vector.broadcast %cst_28 : f32 to vector<256x1xf32>
    %94 = arith.mulf %92, %93 : vector<256x1xf32>
    %cst_29 = arith.constant 0.000000e+00 : f32
    %cst_30 = arith.constant 1.500000e+01 : f32
    %95 = vector.broadcast %cst_29 : f32 to vector<256x1xf32>
    %96 = arith.maximumf %95, %94 : vector<256x1xf32>
    %97 = vector.broadcast %cst_30 : f32 to vector<256x1xf32>
    %98 = arith.minimumf %97, %96 : vector<256x1xf32>
    %99 = math.floor %98 : vector<256x1xf32>
    %100 = arith.subf %98, %99 : vector<256x1xf32>
    %101 = arith.fptosi %99 : vector<256x1xf32> to vector<256x1xi32>
    %c1_i32_31 = arith.constant 1 : i32
    %102 = vector.broadcast %c1_i32_31 : i32 to vector<256x1xi32>
    %103 = arith.addi %101, %102 : vector<256x1xi32>
    %c15_i32_32 = arith.constant 15 : i32
    %104 = vector.broadcast %c15_i32_32 : i32 to vector<256x1xi32>
    %105 = arith.minsi %103, %104 : vector<256x1xi32>
    %106 = vector.broadcast %101 : vector<256x1xi32> to vector<256x128xi32>
    %107 = arith.cmpi eq, %68, %106 : vector<256x128xi32>
    %cst_33 = arith.constant 1.000000e+00 : f32
    %108 = vector.broadcast %cst_33 : f32 to vector<256x1xf32>
    %109 = arith.subf %108, %100 : vector<256x1xf32>
    %cst_34 = arith.constant 0.000000e+00 : f32
    %110 = vector.shape_cast %109 : vector<256x1xf32> to vector<256x1xf32>
    %111 = vector.broadcast %110 : vector<256x1xf32> to vector<256x128xf32>
    %112 = vector.broadcast %cst_34 : f32 to vector<256x128xf32>
    %113 = arith.select %107, %111, %112 : vector<256x128xi1>, vector<256x128xf32>
    %114 = vector.broadcast %105 : vector<256x1xi32> to vector<256x128xi32>
    %115 = arith.cmpi eq, %68, %114 : vector<256x128xi32>
    %cst_35 = arith.constant 0.000000e+00 : f32
    %116 = vector.shape_cast %100 : vector<256x1xf32> to vector<256x1xf32>
    %117 = vector.broadcast %116 : vector<256x1xf32> to vector<256x128xf32>
    %118 = vector.broadcast %cst_35 : f32 to vector<256x128xf32>
    %119 = arith.select %115, %117, %118 : vector<256x128xi1>, vector<256x128xf32>
    %120 = arith.addf %113, %119 : vector<256x128xf32>
    %c0_36 = arith.constant 0 : index
    %c0_37 = arith.constant 0 : index
    %121 = vector.load %arg4[%c0_36, %c0_37] : memref<128x128xf32, #tpu.memory_space<vmem>>, vector<128x128xf32>
    %cst_38 = arith.constant dense<0.000000e+00> : vector<256x128xf32>
    %122 = tpu.matmul %120, %121, %cst_38 {dimension_numbers = #tpu.dot_dimension_numbers<[1], [0], [0], [1], [0, 0, 1, 1], [], []>} : vector<256x128xf32>, vector<128x128xf32>, vector<256x128xf32> -> vector<256x128xf32>
    %123 = arith.mulf %122, %48 : vector<256x128xf32>
    %cst_39 = arith.constant dense<0.000000e+00> : vector<256x16xf32>
    %124 = tpu.matmul %123, %49, %cst_39 {dimension_numbers = #tpu.dot_dimension_numbers<[1], [0], [0], [1], [0, 0, 1, 1], [], []>} : vector<256x128xf32>, vector<128x16xf32>, vector<256x16xf32> -> vector<256x16xf32>
    %125 = arith.mulf %87, %124 : vector<256x16xf32>
    %126 = vector.extract_strided_slice %0 {offsets = [0, 2], sizes = [256, 1], strides = [1, 1]} : vector<256x4xf32> to vector<256x1xf32>
    %cst_40 = arith.constant 1.000000e+00 : f32
    %127 = vector.broadcast %cst_40 : f32 to vector<256x1xf32>
    %128 = arith.addf %126, %127 : vector<256x1xf32>
    %cst_41 = arith.constant 5.000000e-01 : f32
    %129 = vector.broadcast %cst_41 : f32 to vector<256x1xf32>
    %130 = arith.mulf %128, %129 : vector<256x1xf32>
    %cst_42 = arith.constant 1.500000e+01 : f32
    %131 = vector.broadcast %cst_42 : f32 to vector<256x1xf32>
    %132 = arith.mulf %130, %131 : vector<256x1xf32>
    %cst_43 = arith.constant 0.000000e+00 : f32
    %cst_44 = arith.constant 1.500000e+01 : f32
    %133 = vector.broadcast %cst_43 : f32 to vector<256x1xf32>
    %134 = arith.maximumf %133, %132 : vector<256x1xf32>
    %135 = vector.broadcast %cst_44 : f32 to vector<256x1xf32>
    %136 = arith.minimumf %135, %134 : vector<256x1xf32>
    %137 = math.floor %136 : vector<256x1xf32>
    %138 = arith.subf %136, %137 : vector<256x1xf32>
    %139 = arith.fptosi %137 : vector<256x1xf32> to vector<256x1xi32>
    %c1_i32_45 = arith.constant 1 : i32
    %140 = vector.broadcast %c1_i32_45 : i32 to vector<256x1xi32>
    %141 = arith.addi %139, %140 : vector<256x1xi32>
    %c15_i32_46 = arith.constant 15 : i32
    %142 = vector.broadcast %c15_i32_46 : i32 to vector<256x1xi32>
    %143 = arith.minsi %141, %142 : vector<256x1xi32>
    %144 = vector.broadcast %139 : vector<256x1xi32> to vector<256x128xi32>
    %145 = arith.cmpi eq, %68, %144 : vector<256x128xi32>
    %cst_47 = arith.constant 1.000000e+00 : f32
    %146 = vector.broadcast %cst_47 : f32 to vector<256x1xf32>
    %147 = arith.subf %146, %138 : vector<256x1xf32>
    %cst_48 = arith.constant 0.000000e+00 : f32
    %148 = vector.shape_cast %147 : vector<256x1xf32> to vector<256x1xf32>
    %149 = vector.broadcast %148 : vector<256x1xf32> to vector<256x128xf32>
    %150 = vector.broadcast %cst_48 : f32 to vector<256x128xf32>
    %151 = arith.select %145, %149, %150 : vector<256x128xi1>, vector<256x128xf32>
    %152 = vector.broadcast %143 : vector<256x1xi32> to vector<256x128xi32>
    %153 = arith.cmpi eq, %68, %152 : vector<256x128xi32>
    %cst_49 = arith.constant 0.000000e+00 : f32
    %154 = vector.shape_cast %138 : vector<256x1xf32> to vector<256x1xf32>
    %155 = vector.broadcast %154 : vector<256x1xf32> to vector<256x128xf32>
    %156 = vector.broadcast %cst_49 : f32 to vector<256x128xf32>
    %157 = arith.select %153, %155, %156 : vector<256x128xi1>, vector<256x128xf32>
    %158 = arith.addf %151, %157 : vector<256x128xf32>
    %c0_50 = arith.constant 0 : index
    %c0_51 = arith.constant 0 : index
    %159 = vector.load %arg5[%c0_50, %c0_51] : memref<128x128xf32, #tpu.memory_space<vmem>>, vector<128x128xf32>
    %cst_52 = arith.constant dense<0.000000e+00> : vector<256x128xf32>
    %160 = tpu.matmul %158, %159, %cst_52 {dimension_numbers = #tpu.dot_dimension_numbers<[1], [0], [0], [1], [0, 0, 1, 1], [], []>} : vector<256x128xf32>, vector<128x128xf32>, vector<256x128xf32> -> vector<256x128xf32>
    %161 = arith.mulf %160, %48 : vector<256x128xf32>
    %cst_53 = arith.constant dense<0.000000e+00> : vector<256x16xf32>
    %162 = tpu.matmul %161, %49, %cst_53 {dimension_numbers = #tpu.dot_dimension_numbers<[1], [0], [0], [1], [0, 0, 1, 1], [], []>} : vector<256x128xf32>, vector<128x16xf32>, vector<256x16xf32> -> vector<256x16xf32>
    %163 = arith.mulf %125, %162 : vector<256x16xf32>
    %c0_54 = arith.constant 0 : index
    %c0_55 = arith.constant 0 : index
    %164 = vector.load %arg9[%c0_54, %c0_55] : memref<256x32xf32, #tpu.memory_space<vmem>>, vector<256x16xf32>
    tpu.vector_store %arg9[%c0_54, %c0_55], %163 {strides = array<i32>} : memref<256x32xf32, #tpu.memory_space<vmem>>, vector<256x16xf32>,
    %165 = vector.extract_strided_slice %0 {offsets = [0, 0], sizes = [256, 1], strides = [1, 1]} : vector<256x4xf32> to vector<256x1xf32>
    %cst_56 = arith.constant 1.000000e+00 : f32
    %166 = vector.broadcast %cst_56 : f32 to vector<256x1xf32>
    %167 = arith.addf %165, %166 : vector<256x1xf32>
    %cst_57 = arith.constant 5.000000e-01 : f32
    %168 = vector.broadcast %cst_57 : f32 to vector<256x1xf32>
    %169 = arith.mulf %167, %168 : vector<256x1xf32>
    %cst_58 = arith.constant 3.100000e+01 : f32
    %170 = vector.broadcast %cst_58 : f32 to vector<256x1xf32>
    %171 = arith.mulf %169, %170 : vector<256x1xf32>
    %cst_59 = arith.constant 0.000000e+00 : f32
    %cst_60 = arith.constant 3.100000e+01 : f32
    %172 = vector.broadcast %cst_59 : f32 to vector<256x1xf32>
    %173 = arith.maximumf %172, %171 : vector<256x1xf32>
    %174 = vector.broadcast %cst_60 : f32 to vector<256x1xf32>
    %175 = arith.minimumf %174, %173 : vector<256x1xf32>
    %176 = math.floor %175 : vector<256x1xf32>
    %177 = arith.subf %175, %176 : vector<256x1xf32>
    %178 = arith.fptosi %176 : vector<256x1xf32> to vector<256x1xi32>
    %c1_i32_61 = arith.constant 1 : i32
    %179 = vector.broadcast %c1_i32_61 : i32 to vector<256x1xi32>
    %180 = arith.addi %178, %179 : vector<256x1xi32>
    %c31_i32 = arith.constant 31 : i32
    %181 = vector.broadcast %c31_i32 : i32 to vector<256x1xi32>
    %182 = arith.minsi %180, %181 : vector<256x1xi32>
    %183 = vector.broadcast %178 : vector<256x1xi32> to vector<256x128xi32>
    %184 = arith.cmpi eq, %68, %183 : vector<256x128xi32>
    %cst_62 = arith.constant 1.000000e+00 : f32
    %185 = vector.broadcast %cst_62 : f32 to vector<256x1xf32>
    %186 = arith.subf %185, %177 : vector<256x1xf32>
    %cst_63 = arith.constant 0.000000e+00 : f32
    %187 = vector.shape_cast %186 : vector<256x1xf32> to vector<256x1xf32>
    %188 = vector.broadcast %187 : vector<256x1xf32> to vector<256x128xf32>
    %189 = vector.broadcast %cst_63 : f32 to vector<256x128xf32>
    %190 = arith.select %184, %188, %189 : vector<256x128xi1>, vector<256x128xf32>
    %191 = vector.broadcast %182 : vector<256x1xi32> to vector<256x128xi32>
    %192 = arith.cmpi eq, %68, %191 : vector<256x128xi32>
    %cst_64 = arith.constant 0.000000e+00 : f32
    %193 = vector.shape_cast %177 : vector<256x1xf32> to vector<256x1xf32>
    %194 = vector.broadcast %193 : vector<256x1xf32> to vector<256x128xf32>
    %195 = vector.broadcast %cst_64 : f32 to vector<256x128xf32>
    %196 = arith.select %192, %194, %195 : vector<256x128xi1>, vector<256x128xf32>
    %197 = arith.addf %190, %196 : vector<256x128xf32>
    %c0_65 = arith.constant 0 : index
    %c0_66 = arith.constant 0 : index
    %198 = vector.load %arg6[%c0_65, %c0_66] : memref<128x128xf32, #tpu.memory_space<vmem>>, vector<128x128xf32>
    %cst_67 = arith.constant dense<0.000000e+00> : vector<256x128xf32>
    %199 = tpu.matmul %197, %198, %cst_67 {dimension_numbers = #tpu.dot_dimension_numbers<[1], [0], [0], [1], [0, 0, 1, 1], [], []>} : vector<256x128xf32>, vector<128x128xf32>, vector<256x128xf32> -> vector<256x128xf32>
    %200 = arith.mulf %199, %48 : vector<256x128xf32>
    %cst_68 = arith.constant dense<0.000000e+00> : vector<256x16xf32>
    %201 = tpu.matmul %200, %49, %cst_68 {dimension_numbers = #tpu.dot_dimension_numbers<[1], [0], [0], [1], [0, 0, 1, 1], [], []>} : vector<256x128xf32>, vector<128x16xf32>, vector<256x16xf32> -> vector<256x16xf32>
    %202 = vector.extract_strided_slice %0 {offsets = [0, 1], sizes = [256, 1], strides = [1, 1]} : vector<256x4xf32> to vector<256x1xf32>
    %cst_69 = arith.constant 1.000000e+00 : f32
    %203 = vector.broadcast %cst_69 : f32 to vector<256x1xf32>
    %204 = arith.addf %202, %203 : vector<256x1xf32>
    %cst_70 = arith.constant 5.000000e-01 : f32
    %205 = vector.broadcast %cst_70 : f32 to vector<256x1xf32>
    %206 = arith.mulf %204, %205 : vector<256x1xf32>
    %cst_71 = arith.constant 3.100000e+01 : f32
    %207 = vector.broadcast %cst_71 : f32 to vector<256x1xf32>
    %208 = arith.mulf %206, %207 : vector<256x1xf32>
    %cst_72 = arith.constant 0.000000e+00 : f32
    %cst_73 = arith.constant 3.100000e+01 : f32
    %209 = vector.broadcast %cst_72 : f32 to vector<256x1xf32>
    %210 = arith.maximumf %209, %208 : vector<256x1xf32>
    %211 = vector.broadcast %cst_73 : f32 to vector<256x1xf32>
    %212 = arith.minimumf %211, %210 : vector<256x1xf32>
    %213 = math.floor %212 : vector<256x1xf32>
    %214 = arith.subf %212, %213 : vector<256x1xf32>
    %215 = arith.fptosi %213 : vector<256x1xf32> to vector<256x1xi32>
    %c1_i32_74 = arith.constant 1 : i32
    %216 = vector.broadcast %c1_i32_74 : i32 to vector<256x1xi32>
    %217 = arith.addi %215, %216 : vector<256x1xi32>
    %c31_i32_75 = arith.constant 31 : i32
    %218 = vector.broadcast %c31_i32_75 : i32 to vector<256x1xi32>
    %219 = arith.minsi %217, %218 : vector<256x1xi32>
    %220 = vector.broadcast %215 : vector<256x1xi32> to vector<256x128xi32>
    %221 = arith.cmpi eq, %68, %220 : vector<256x128xi32>
    %cst_76 = arith.constant 1.000000e+00 : f32
    %222 = vector.broadcast %cst_76 : f32 to vector<256x1xf32>
    %223 = arith.subf %222, %214 : vector<256x1xf32>
    %cst_77 = arith.constant 0.000000e+00 : f32
    %224 = vector.shape_cast %223 : vector<256x1xf32> to vector<256x1xf32>
    %225 = vector.broadcast %224 : vector<256x1xf32> to vector<256x128xf32>
    %226 = vector.broadcast %cst_77 : f32 to vector<256x128xf32>
    %227 = arith.select %221, %225, %226 : vector<256x128xi1>, vector<256x128xf32>
    %228 = vector.broadcast %219 : vector<256x1xi32> to vector<256x128xi32>
    %229 = arith.cmpi eq, %68, %228 : vector<256x128xi32>
    %cst_78 = arith.constant 0.000000e+00 : f32
    %230 = vector.shape_cast %214 : vector<256x1xf32> to vector<256x1xf32>
    %231 = vector.broadcast %230 : vector<256x1xf32> to vector<256x128xf32>
    %232 = vector.broadcast %cst_78 : f32 to vector<256x128xf32>
    %233 = arith.select %229, %231, %232 : vector<256x128xi1>, vector<256x128xf32>
    %234 = arith.addf %227, %233 : vector<256x128xf32>
    %c0_79 = arith.constant 0 : index
    %c0_80 = arith.constant 0 : index
    %235 = vector.load %arg7[%c0_79, %c0_80] : memref<128x128xf32, #tpu.memory_space<vmem>>, vector<128x128xf32>
    %cst_81 = arith.constant dense<0.000000e+00> : vector<256x128xf32>
    %236 = tpu.matmul %234, %235, %cst_81 {dimension_numbers = #tpu.dot_dimension_numbers<[1], [0], [0], [1], [0, 0, 1, 1], [], []>} : vector<256x128xf32>, vector<128x128xf32>, vector<256x128xf32> -> vector<256x128xf32>
    %237 = arith.mulf %236, %48 : vector<256x128xf32>
    %cst_82 = arith.constant dense<0.000000e+00> : vector<256x16xf32>
    %238 = tpu.matmul %237, %49, %cst_82 {dimension_numbers = #tpu.dot_dimension_numbers<[1], [0], [0], [1], [0, 0, 1, 1], [], []>} : vector<256x128xf32>, vector<128x16xf32>, vector<256x16xf32> -> vector<256x16xf32>
    %239 = arith.mulf %201, %238 : vector<256x16xf32>
    %240 = vector.extract_strided_slice %0 {offsets = [0, 2], sizes = [256, 1], strides = [1, 1]} : vector<256x4xf32> to vector<256x1xf32>
    %cst_83 = arith.constant 1.000000e+00 : f32
    %241 = vector.broadcast %cst_83 : f32 to vector<256x1xf32>
    %242 = arith.addf %240, %241 : vector<256x1xf32>
    %cst_84 = arith.constant 5.000000e-01 : f32
    %243 = vector.broadcast %cst_84 : f32 to vector<256x1xf32>
    %244 = arith.mulf %242, %243 : vector<256x1xf32>
    %cst_85 = arith.constant 3.100000e+01 : f32
    %245 = vector.broadcast %cst_85 : f32 to vector<256x1xf32>
    %246 = arith.mulf %244, %245 : vector<256x1xf32>
    %cst_86 = arith.constant 0.000000e+00 : f32
    %cst_87 = arith.constant 3.100000e+01 : f32
    %247 = vector.broadcast %cst_86 : f32 to vector<256x1xf32>
    %248 = arith.maximumf %247, %246 : vector<256x1xf32>
    %249 = vector.broadcast %cst_87 : f32 to vector<256x1xf32>
    %250 = arith.minimumf %249, %248 : vector<256x1xf32>
    %251 = math.floor %250 : vector<256x1xf32>
    %252 = arith.subf %250, %251 : vector<256x1xf32>
    %253 = arith.fptosi %251 : vector<256x1xf32> to vector<256x1xi32>
    %c1_i32_88 = arith.constant 1 : i32
    %254 = vector.broadcast %c1_i32_88 : i32 to vector<256x1xi32>
    %255 = arith.addi %253, %254 : vector<256x1xi32>
    %c31_i32_89 = arith.constant 31 : i32
    %256 = vector.broadcast %c31_i32_89 : i32 to vector<256x1xi32>
    %257 = arith.minsi %255, %256 : vector<256x1xi32>
    %258 = vector.broadcast %253 : vector<256x1xi32> to vector<256x128xi32>
    %259 = arith.cmpi eq, %68, %258 : vector<256x128xi32>
    %cst_90 = arith.constant 1.000000e+00 : f32
    %260 = vector.broadcast %cst_90 : f32 to vector<256x1xf32>
    %261 = arith.subf %260, %252 : vector<256x1xf32>
    %cst_91 = arith.constant 0.000000e+00 : f32
    %262 = vector.shape_cast %261 : vector<256x1xf32> to vector<256x1xf32>
    %263 = vector.broadcast %262 : vector<256x1xf32> to vector<256x128xf32>
    %264 = vector.broadcast %cst_91 : f32 to vector<256x128xf32>
    %265 = arith.select %259, %263, %264 : vector<256x128xi1>, vector<256x128xf32>
    %266 = vector.broadcast %257 : vector<256x1xi32> to vector<256x128xi32>
    %267 = arith.cmpi eq, %68, %266 : vector<256x128xi32>
    %cst_92 = arith.constant 0.000000e+00 : f32
    %268 = vector.shape_cast %252 : vector<256x1xf32> to vector<256x1xf32>
    %269 = vector.broadcast %268 : vector<256x1xf32> to vector<256x128xf32>
    %270 = vector.broadcast %cst_92 : f32 to vector<256x128xf32>
    %271 = arith.select %267, %269, %270 : vector<256x128xi1>, vector<256x128xf32>
    %272 = arith.addf %265, %271 : vector<256x128xf32>
    %c0_93 = arith.constant 0 : index
    %c0_94 = arith.constant 0 : index
    %273 = vector.load %arg8[%c0_93, %c0_94] : memref<128x128xf32, #tpu.memory_space<vmem>>, vector<128x128xf32>
    %cst_95 = arith.constant dense<0.000000e+00> : vector<256x128xf32>
    %274 = tpu.matmul %272, %273, %cst_95 {dimension_numbers = #tpu.dot_dimension_numbers<[1], [0], [0], [1], [0, 0, 1, 1], [], []>} : vector<256x128xf32>, vector<128x128xf32>, vector<256x128xf32> -> vector<256x128xf32>
    %275 = arith.mulf %274, %48 : vector<256x128xf32>
    %cst_96 = arith.constant dense<0.000000e+00> : vector<256x16xf32>
    %276 = tpu.matmul %275, %49, %cst_96 {dimension_numbers = #tpu.dot_dimension_numbers<[1], [0], [0], [1], [0, 0, 1, 1], [], []>} : vector<256x128xf32>, vector<128x16xf32>, vector<256x16xf32> -> vector<256x16xf32>
    %277 = arith.mulf %239, %276 : vector<256x16xf32>
    %c0_97 = arith.constant 0 : index
    %c16 = arith.constant 16 : index
    %278 = vector.load %arg9[%c0_97, %c16] : memref<256x32xf32, #tpu.memory_space<vmem>>, vector<256x16xf32>
    tpu.vector_store %arg9[%c0_97, %c16], %277 {strides = array<i32>} : memref<256x32xf32, #tpu.memory_space<vmem>>, vector<256x16xf32>,
    return
  }
  func.func @transform_0(%arg0: i32) -> (i32, i32) {
    %c0_i32 = arith.constant 0 : i32
    %c0_i32_0 = arith.constant 0 : i32
    return %arg0, %c0_i32 : i32, i32
  }
  func.func @transform_1(%arg0: i32) -> (i32, i32) {
    %c0_i32 = arith.constant 0 : i32
    %c0_i32_0 = arith.constant 0 : i32
    %c0_i32_1 = arith.constant 0 : i32
    return %c0_i32, %c0_i32_0 : i32, i32
  }
  func.func @transform_2(%arg0: i32) -> (i32, i32) {
    %c0_i32 = arith.constant 0 : i32
    %c0_i32_0 = arith.constant 0 : i32
    %c0_i32_1 = arith.constant 0 : i32
    return %c0_i32, %c0_i32_0 : i32, i32
  }
  func.func @transform_3(%arg0: i32) -> (i32, i32) {
    %c0_i32 = arith.constant 0 : i32
    %c0_i32_0 = arith.constant 0 : i32
    %c0_i32_1 = arith.constant 0 : i32
    return %c0_i32, %c0_i32_0 : i32, i32
  }
  func.func @transform_4(%arg0: i32) -> (i32, i32) {
    %c0_i32 = arith.constant 0 : i32
    %c0_i32_0 = arith.constant 0 : i32
    %c0_i32_1 = arith.constant 0 : i32
    return %c0_i32, %c0_i32_0 : i32, i32
  }
  func.func @transform_5(%arg0: i32) -> (i32, i32) {
    %c0_i32 = arith.constant 0 : i32
    %c0_i32_0 = arith.constant 0 : i32
    %c0_i32_1 = arith.constant 0 : i32
    return %c0_i32, %c0_i32_0 : i32, i32
  }
  func.func @transform_6(%arg0: i32) -> (i32, i32) {
    %c0_i32 = arith.constant 0 : i32
    %c0_i32_0 = arith.constant 0 : i32
    %c0_i32_1 = arith.constant 0 : i32
    return %c0_i32, %c0_i32_0 : i32, i32
  }
  func.func @transform_7(%arg0: i32) -> (i32, i32) {
    %c0_i32 = arith.constant 0 : i32
    %c0_i32_0 = arith.constant 0 : i32
    %c0_i32_1 = arith.constant 0 : i32
    return %c0_i32, %c0_i32_0 : i32, i32
  }
  func.func @transform_8(%arg0: i32) -> (i32, i32) {
    %c0_i32 = arith.constant 0 : i32
    %c0_i32_0 = arith.constant 0 : i32
    return %arg0, %c0_i32 : i32, i32
  }
}

</mosaic_0001>

<llo_original>
// kernel: tpu_custom_call.1
$region0: #{tpu_custom_call.1}
  #allocation0 [shape = 'u32[]', space=smem, size = 0x4, offset = 0x4, fixed_abs, tag = 'smem constant byte address 0x4 - core index']
  #allocation1 [shape = 'u32[72,128]{1,0:T(1,128)}', space=vmem, size = 0x9000, scoped, tag = 'internal scratch']
  %s0 = inlined_call_operand.vmem [shape: f32[1024,4], index: 0, kind: input, shape index: {}]
  %s1 = inlined_call_operand.vmem [shape: f32[128,16], index: 1, kind: input, shape index: {}]
  %s2 = inlined_call_operand.vmem [shape: f32[128,128], index: 2, kind: input, shape index: {}]
  %s3 = inlined_call_operand.vmem [shape: f32[128,128], index: 3, kind: input, shape index: {}]
  %s4 = inlined_call_operand.vmem [shape: f32[128,128], index: 4, kind: input, shape index: {}]
  %s5 = inlined_call_operand.vmem [shape: f32[128,128], index: 5, kind: input, shape index: {}]
  %s6 = inlined_call_operand.vmem [shape: f32[128,128], index: 6, kind: input, shape index: {}]
  %s7 = inlined_call_operand.vmem [shape: f32[128,128], index: 7, kind: input, shape index: {}]
  %s8 = inlined_call_operand.vmem [shape: f32[1024,32], index: 8, kind: output, shape index: {}]
  %s9 = sld [smem:[#allocation0]]
  $region65: #{tpu_custom_call.1} parent=0
    _
  %s11 = ssub.s32 1, %s9
  %s12 = scalar_select 0, %s11, %s9
  loop: start=0, step=1, limit=6
  $region2: #{tpu_custom_call.1} parent=0 // loop_pre_header
    _
  $region3: #{tpu_custom_call.1} parent=0 // loop_header
    %s14 = sphi 0, %s18
    %p15 = scmp.ge.s32.totalorder %s14, 6
    %s24 = sphi 0, %s26
    %s27 = sphi 0, %s24
    %s28 = sphi 0, %s27
    %s44 = sphi 0, %s28
    %s48 = sphi 0, %s48
    %s50 = sphi 0, %s48
    %s51 = sphi 0, %s50
    %s65 = sphi 0, %s51
    %s69 = sphi 0, %s69
    %s71 = sphi 0, %s69
    %s72 = sphi 0, %s71
    %s86 = sphi 0, %s72
    %s90 = sphi 0, %s90
    %s92 = sphi 0, %s90
    %s93 = sphi 0, %s92
    %s107 = sphi 0, %s93
    %s111 = sphi 0, %s111
    %s113 = sphi 0, %s111
    %s114 = sphi 0, %s113
    %s128 = sphi 0, %s114
    %s132 = sphi 0, %s132
    %s134 = sphi 0, %s132
    %s135 = sphi 0, %s134
    %s149 = sphi 0, %s135
    %s153 = sphi 0, %s153
    %s155 = sphi 0, %s153
    %s156 = sphi 0, %s155
    %s170 = sphi 0, %s156
    %s174 = sphi 0, %s174
    %s176 = sphi 0, %s174
    %s177 = sphi 0, %s176
    %s191 = sphi 0, %s177
    %s197 = sphi 0, %s199
    %s200 = sphi 0, %s197
    %s201 = sphi 0, %s200
    %s217 = sphi 0, %s201
  $region4: #{tpu_custom_call.1} parent=0 // loop_header_branch
    %17 = sbr.rel (%p15) target = $region8
  $region5: #{tpu_custom_call.1} parent=0 // loop_body
    %s19 = ssub.s32 %s14, 1
    %s20 = ssub.s32 %s14, 2
    %s21 = sadd.s32 %s14, 1
    %s22 = ssub.s32 %s14, %s21
    %p23 = scmp.eq.s32.totalorder %s22, 0
    %s25 = sadd.s32 %s24, 1
    %s26 = scalar_select %p23, %s24, %s25
    %p29 = pneg %p23
    %p30 = scmp.eq.s32.totalorder %s14, 3
    %p31 = por %p29, %p30
    %p32 = scmp.ne.s32.totalorder %s24, %s27
    %p33 = scmp.eq.s32.totalorder %s14, 0
    %p34 = por %p32, %p33
    %p35 = scmp.ne.s32.totalorder %s24, %s27
    %p36 = scmp.eq.s32.totalorder %s19, 3
    %p37 = por %p35, %p36
    %p38 = scmp.ne.s32.totalorder %s27, %s28
    %p39 = scmp.eq.s32.totalorder %s19, 0
    %p40 = por %p38, %p39
    %p41 = scmp.ne.s32.totalorder %s27, %s28
    %p42 = scmp.eq.s32.totalorder %s20, 3
    %p43 = por %p41, %p42
    %p45 = scmp.ne.s32.totalorder %s28, %s44
    %p46 = scmp.eq.s32.totalorder %s20, 0
    %p47 = por %p45, %p46
    %s49 = sadd.s32 %s48, 1
    %p52 = scmp.eq.s32.totalorder %s14, 3
    %p53 = scmp.ne.s32.totalorder %s48, %s50
    %p54 = scmp.eq.s32.totalorder %s14, 0
    %p55 = por %p53, %p54
    %p56 = scmp.ne.s32.totalorder %s48, %s50
    %p57 = scmp.eq.s32.totalorder %s19, 3
    %p58 = por %p56, %p57
    %p59 = scmp.ne.s32.totalorder %s50, %s51
    %p60 = scmp.eq.s32.totalorder %s19, 0
    %p61 = por %p59, %p60
    %p62 = scmp.ne.s32.totalorder %s50, %s51
    %p63 = scmp.eq.s32.totalorder %s20, 3
    %p64 = por %p62, %p63
    %p66 = scmp.ne.s32.totalorder %s51, %s65
    %p67 = scmp.eq.s32.totalorder %s20, 0
    %p68 = por %p66, %p67
    %s70 = sadd.s32 %s69, 1
    %p73 = scmp.eq.s32.totalorder %s14, 3
    %p74 = scmp.ne.s32.totalorder %s69, %s71
    %p75 = scmp.eq.s32.totalorder %s14, 0
    %p76 = por %p74, %p75
    %p77 = scmp.ne.s32.totalorder %s69, %s71
    %p78 = scmp.eq.s32.totalorder %s19, 3
    %p79 = por %p77, %p78
    %p80 = scmp.ne.s32.totalorder %s71, %s72
    %p81 = scmp.eq.s32.totalorder %s19, 0
    %p82 = por %p80, %p81
    %p83 = scmp.ne.s32.totalorder %s71, %s72
    %p84 = scmp.eq.s32.totalorder %s20, 3
    %p85 = por %p83, %p84
    %p87 = scmp.ne.s32.totalorder %s72, %s86
    %p88 = scmp.eq.s32.totalorder %s20, 0
    %p89 = por %p87, %p88
    %s91 = sadd.s32 %s90, 1
    %p94 = scmp.eq.s32.totalorder %s14, 3
    %p95 = scmp.ne.s32.totalorder %s90, %s92
    %p96 = scmp.eq.s32.totalorder %s14, 0
    %p97 = por %p95, %p96
    %p98 = scmp.ne.s32.totalorder %s90, %s92
    %p99 = scmp.eq.s32.totalorder %s19, 3
    %p100 = por %p98, %p99
    %p101 = scmp.ne.s32.totalorder %s92, %s93
    %p102 = scmp.eq.s32.totalorder %s19, 0
    %p103 = por %p101, %p102
    %p104 = scmp.ne.s32.totalorder %s92, %s93
    %p105 = scmp.eq.s32.totalorder %s20, 3
    %p106 = por %p104, %p105
    %p108 = scmp.ne.s32.totalorder %s93, %s107
    %p109 = scmp.eq.s32.totalorder %s20, 0
    %p110 = por %p108, %p109
    %s112 = sadd.s32 %s111, 1
    %p115 = scmp.eq.s32.totalorder %s14, 3
    %p116 = scmp.ne.s32.totalorder %s111, %s113
    %p117 = scmp.eq.s32.totalorder %s14, 0
    %p118 = por %p116, %p117
    %p119 = scmp.ne.s32.totalorder %s111, %s113
    %p120 = scmp.eq.s32.totalorder %s19, 3
    %p121 = por %p119, %p120
    %p122 = scmp.ne.s32.totalorder %s113, %s114
    %p123 = scmp.eq.s32.totalorder %s19, 0
    %p124 = por %p122, %p123
    %p125 = scmp.ne.s32.totalorder %s113, %s114
    %p126 = scmp.eq.s32.totalorder %s20, 3
    %p127 = por %p125, %p126
    %p129 = scmp.ne.s32.totalorder %s114, %s128
    %p130 = scmp.eq.s32.totalorder %s20, 0
    %p131 = por %p129, %p130
    %s133 = sadd.s32 %s132, 1
    %p136 = scmp.eq.s32.totalorder %s14, 3
    %p137 = scmp.ne.s32.totalorder %s132, %s134
    %p138 = scmp.eq.s32.totalorder %s14, 0
    %p139 = por %p137, %p138
    %p140 = scmp.ne.s32.totalorder %s132, %s134
    %p141 = scmp.eq.s32.totalorder %s19, 3
    %p142 = por %p140, %p141
    %p143 = scmp.ne.s32.totalorder %s134, %s135
    %p144 = scmp.eq.s32.totalorder %s19, 0
    %p145 = por %p143, %p144
    %p146 = scmp.ne.s32.totalorder %s134, %s135
    %p147 = scmp.eq.s32.totalorder %s20, 3
    %p148 = por %p146, %p147
    %p150 = scmp.ne.s32.totalorder %s135, %s149
    %p151 = scmp.eq.s32.totalorder %s20, 0
    %p152 = por %p150, %p151
    %s154 = sadd.s32 %s153, 1
    %p157 = scmp.eq.s32.totalorder %s14, 3
    %p158 = scmp.ne.s32.totalorder %s153, %s155
    %p159 = scmp.eq.s32.totalorder %s14, 0
    %p160 = por %p158, %p159
    %p161 = scmp.ne.s32.totalorder %s153, %s155
    %p162 = scmp.eq.s32.totalorder %s19, 3
    %p163 = por %p161, %p162
    %p164 = scmp.ne.s32.totalorder %s155, %s156
    %p165 = scmp.eq.s32.totalorder %s19, 0
    %p166 = por %p164, %p165
    %p167 = scmp.ne.s32.totalorder %s155, %s156
    %p168 = scmp.eq.s32.totalorder %s20, 3
    %p169 = por %p167, %p168
    %p171 = scmp.ne.s32.totalorder %s156, %s170
    %p172 = scmp.eq.s32.totalorder %s20, 0
    %p173 = por %p171, %p172
    %s175 = sadd.s32 %s174, 1
    %p178 = scmp.eq.s32.totalorder %s14, 3
    %p179 = scmp.ne.s32.totalorder %s174, %s176
    %p180 = scmp.eq.s32.totalorder %s14, 0
    %p181 = por %p179, %p180
    %p182 = scmp.ne.s32.totalorder %s174, %s176
    %p183 = scmp.eq.s32.totalorder %s19, 3
    %p184 = por %p182, %p183
    %p185 = scmp.ne.s32.totalorder %s176, %s177
    %p186 = scmp.eq.s32.totalorder %s19, 0
    %p187 = por %p185, %p186
    %p188 = scmp.ne.s32.totalorder %s176, %s177
    %p189 = scmp.eq.s32.totalorder %s20, 3
    %p190 = por %p188, %p189
    %p192 = scmp.ne.s32.totalorder %s177, %s191
    %p193 = scmp.eq.s32.totalorder %s20, 0
    %p194 = por %p192, %p193
    %s195 = ssub.s32 %s14, %s21
    %p196 = scmp.eq.s32.totalorder %s195, 0
    %s198 = sadd.s32 %s197, 1
    %s199 = scalar_select %p196, %s197, %s198
    %p202 = pneg %p196
    %p203 = scmp.eq.s32.totalorder %s14, 3
    %p204 = por %p202, %p203
    %p205 = scmp.ne.s32.totalorder %s197, %s200
    %p206 = scmp.eq.s32.totalorder %s14, 0
    %p207 = por %p205, %p206
    %p208 = scmp.ne.s32.totalorder %s197, %s200
    %p209 = scmp.eq.s32.totalorder %s19, 3
    %p210 = por %p208, %p209
    %p211 = scmp.ne.s32.totalorder %s200, %s201
    %p212 = scmp.eq.s32.totalorder %s19, 0
    %p213 = por %p211, %p212
    %p214 = scmp.ne.s32.totalorder %s200, %s201
    %p215 = scmp.eq.s32.totalorder %s20, 3
    %p216 = por %p214, %p215
    %p218 = scmp.ne.s32.totalorder %s201, %s217
    %p219 = scmp.eq.s32.totalorder %s20, 0
    %p220 = por %p218, %p219
    %p221 = scmp.le.s32.totalorder 1, %s14
    %p222 = scmp.lt.s32.totalorder %s14, 5
    %p223 = pnand %p221, %p222
    %p224 = pneg %p223
    // Predicated region
    $region9: #{tpu_custom_call.1} parent=5 // pred_check
      _
    $region10: #{tpu_custom_call.1} parent=5 // pred_check_branch
      %226 = sbr.rel (%p223) target = $region12
    $region11: #{tpu_custom_call.1} parent=5 // pred_region
      %s227 = ssub.s32 %s14, 1
      // Predicated region
      $region13: #{tpu_custom_call.1} parent=11 // pred_check
        %p228 = pneg %p61
      $region14: #{tpu_custom_call.1} parent=11 // pred_check_branch
        %230 = sbr.rel (%p228) target = $region16
      $region15: #{tpu_custom_call.1} parent=11 // pred_region
        _
      $region16: #{tpu_custom_call.1} parent=11 // pred_fallthru
        _
      // Predicated region
      $region17: #{tpu_custom_call.1} parent=11 // pred_check
        %p231 = pneg %p82
      $region18: #{tpu_custom_call.1} parent=11 // pred_check_branch
        %233 = sbr.rel (%p231) target = $region20
      $region19: #{tpu_custom_call.1} parent=11 // pred_region
        _
      $region20: #{tpu_custom_call.1} parent=11 // pred_fallthru
        _
      // Predicated region
      $region21: #{tpu_custom_call.1} parent=11 // pred_check
        %p234 = pneg %p103
      $region22: #{tpu_custom_call.1} parent=11 // pred_check_branch
        %236 = sbr.rel (%p234) target = $region24
      $region23: #{tpu_custom_call.1} parent=11 // pred_region
        _
      $region24: #{tpu_custom_call.1} parent=11 // pred_fallthru
        _
      // Predicated region
      $region25: #{tpu_custom_call.1} parent=11 // pred_check
        %p237 = pneg %p124
      $region26: #{tpu_custom_call.1} parent=11 // pred_check_branch
        %239 = sbr.rel (%p237) target = $region28
      $region27: #{tpu_custom_call.1} parent=11 // pred_region
        _
      $region28: #{tpu_custom_call.1} parent=11 // pred_fallthru
        _
      // Predicated region
      $region29: #{tpu_custom_call.1} parent=11 // pred_check
        %p240 = pneg %p145
      $region30: #{tpu_custom_call.1} parent=11 // pred_check_branch
        %242 = sbr.rel (%p240) target = $region32
      $region31: #{tpu_custom_call.1} parent=11 // pred_region
        _
      $region32: #{tpu_custom_call.1} parent=11 // pred_fallthru
        _
      // Predicated region
      $region33: #{tpu_custom_call.1} parent=11 // pred_check
        %p243 = pneg %p166
      $region34: #{tpu_custom_call.1} parent=11 // pred_check_branch
        %245 = sbr.rel (%p243) target = $region36
      $region35: #{tpu_custom_call.1} parent=11 // pred_region
        _
      $region36: #{tpu_custom_call.1} parent=11 // pred_fallthru
        _
      // Predicated region
      $region37: #{tpu_custom_call.1} parent=11 // pred_check
        %p246 = pneg %p187
      $region38: #{tpu_custom_call.1} parent=11 // pred_check_branch
        %248 = sbr.rel (%p246) target = $region40
      $region39: #{tpu_custom_call.1} parent=11 // pred_region
        _
      $region40: #{tpu_custom_call.1} parent=11 // pred_fallthru
        _
    $region12: #{tpu_custom_call.1} parent=5 // pred_fallthru
      _
    %p249 = scmp.lt.s32.totalorder %s14, 4
    // Predicated region
    $region41: #{tpu_custom_call.1} parent=5 // pred_check
      %p250 = pneg %p249
    $region42: #{tpu_custom_call.1} parent=5 // pred_check_branch
      %252 = sbr.rel (%p250) target = $region44
    $region43: #{tpu_custom_call.1} parent=5 // pred_region
      // Predicated region
      $region45: #{tpu_custom_call.1} parent=43 // pred_check
        %p253 = pneg %p34
      $region46: #{tpu_custom_call.1} parent=43 // pred_check_branch
        %255 = sbr.rel (%p253) target = $region48
      $region47: #{tpu_custom_call.1} parent=43 // pred_region
        %s256 = smul.u32 32, %s14
        %p257 = scmp.lt.s32.totalorder %s256, 127
        %s258 = scalar_select %p257, %s256, 127
        %s259 = smul.addr %s258, 8
        %s260 = scalar_lea.vmem %s0, %s259
        %s261 = smul.u32 32, %s14
      $region48: #{tpu_custom_call.1} parent=43 // pred_fallthru
        _
    $region44: #{tpu_custom_call.1} parent=5 // pred_fallthru
      _
    %p262 = scmp.le.s32.totalorder 1, %s14
    %p263 = scmp.lt.s32.totalorder %s14, 5
    %p264 = pnand %p262, %p263
    %p265 = pneg %p264
    // Predicated region
    $region49: #{tpu_custom_call.1} parent=5 // pred_check
      _
    $region50: #{tpu_custom_call.1} parent=5 // pred_check_branch
      %267 = sbr.rel (%p264) target = $region52
    $region51: #{tpu_custom_call.1} parent=5 // pred_region
      %s268 = ssub.s32 %s14, 1
      %s269 = smul.u32 32, %s19
      %p270 = scmp.lt.s32.totalorder %s269, 127
      %s271 = scalar_select %p270, %s269, 127
      %s272 = smul.addr %s271, 8
      %s273 = scalar_lea.vmem %s0, %s272
      %p274 = pneg %p40
      %p275 = pneg %p37
      %p276 = pneg %p61
      %p277 = pneg %p58
      %p278 = pneg %p82
      %p279 = pneg %p79
      %p280 = pneg %p103
      %p281 = pneg %p100
      %p282 = pneg %p124
      %p283 = pneg %p121
      %p284 = pneg %p145
      %p285 = pneg %p142
      %p286 = pneg %p166
      %p287 = pneg %p163
      %p288 = pneg %p187
      %p289 = pneg %p184
      %p290 = pneg %p213
      %p291 = pneg %p210
      %s292 = smul.u32 32, %s19
      %p293 = scmp.lt.s32.totalorder %s292, 127
      %s294 = scalar_select %p293, %s292, 127
      %s295 = smul.addr %s294, 8
      %s296 = scalar_lea.vmem %s8, %s295
      %s297 = smul.u32 32, %s19
      %p298 = scmp.lt.s32.totalorder %s297, 127
      %s299 = scalar_select %p298, %s297, 127
      %s300 = smul.addr %s299, 8
      %s301 = scalar_lea.vmem %s0, %s300
      %s302 = smul.u32 32, %s19
      %s303 = smul.u32 32, %s19
      %p304 = scmp.lt.s32.totalorder %s303, 127
      %s305 = scalar_select %p304, %s303, 127
      %s306 = smul.addr %s305, 8
      %s307 = scalar_lea.vmem %s8, %s306
      %s308 = smul.u32 32, %s19
      %v309 = vld [vmem:[%s301] sm:$0xff]
      %v310 = vld [vmem:[%s301 + $0x8] sm:$0xff]
      %v311 = vld [vmem:[%s301 + $0x10] sm:$0xff]
      %v312 = vld [vmem:[%s301 + $0x18] sm:$0xff]
      %v313 = vld [vmem:[%s301 + $0x20] sm:$0xff]
      %v314 = vld [vmem:[%s301 + $0x28] sm:$0xff]
      %v315 = vld [vmem:[%s301 + $0x30] sm:$0xff]
      %v316 = vld [vmem:[%s301 + $0x38] sm:$0xff]
      %v317 = vld [vmem:[%s301 + $0x40] sm:$0xff]
      %v318 = vld [vmem:[%s301 + $0x48] sm:$0xff]
      %v319 = vld [vmem:[%s301 + $0x50] sm:$0xff]
      %v320 = vld [vmem:[%s301 + $0x58] sm:$0xff]
      %v321 = vld [vmem:[%s301 + $0x60] sm:$0xff]
      %v322 = vld [vmem:[%s301 + $0x68] sm:$0xff]
      %v323 = vld [vmem:[%s301 + $0x70] sm:$0xff]
      %v324 = vld [vmem:[%s301 + $0x78] sm:$0xff]
      %v325 = vld [vmem:[%s301 + $0x80] sm:$0xff]
      %v326 = vld [vmem:[%s301 + $0x88] sm:$0xff]
      %v327 = vld [vmem:[%s301 + $0x90] sm:$0xff]
      %v328 = vld [vmem:[%s301 + $0x98] sm:$0xff]
      %v329 = vld [vmem:[%s301 + $0xa0] sm:$0xff]
      %v330 = vld [vmem:[%s301 + $0xa8] sm:$0xff]
      %v331 = vld [vmem:[%s301 + $0xb0] sm:$0xff]
      %v332 = vld [vmem:[%s301 + $0xb8] sm:$0xff]
      %v333 = vld [vmem:[%s301 + $0xc0] sm:$0xff]
      %v334 = vld [vmem:[%s301 + $0xc8] sm:$0xff]
      %v335 = vld [vmem:[%s301 + $0xd0] sm:$0xff]
      %v336 = vld [vmem:[%s301 + $0xd8] sm:$0xff]
      %v337 = vld [vmem:[%s301 + $0xe0] sm:$0xff]
      %v338 = vld [vmem:[%s301 + $0xe8] sm:$0xff]
      %v339 = vld [vmem:[%s301 + $0xf0] sm:$0xff]
      %v340 = vld [vmem:[%s301 + $0xf8] sm:$0xff]
      %v341 = vadd.f32 %v309, 1.0
      %v342 = vadd.f32 %v310, 1.0
      %v343 = vadd.f32 %v311, 1.0
      %v344 = vadd.f32 %v312, 1.0
      %v345 = vadd.f32 %v313, 1.0
      %v346 = vadd.f32 %v314, 1.0
      %v347 = vadd.f32 %v315, 1.0
      %v348 = vadd.f32 %v316, 1.0
      %v349 = vadd.f32 %v317, 1.0
      %v350 = vadd.f32 %v318, 1.0
      %v351 = vadd.f32 %v319, 1.0
      %v352 = vadd.f32 %v320, 1.0
      %v353 = vadd.f32 %v321, 1.0
      %v354 = vadd.f32 %v322, 1.0
      %v355 = vadd.f32 %v323, 1.0
      %v356 = vadd.f32 %v324, 1.0
      %v357 = vadd.f32 %v325, 1.0
      %v358 = vadd.f32 %v326, 1.0
      %v359 = vadd.f32 %v327, 1.0
      %v360 = vadd.f32 %v328, 1.0
      %v361 = vadd.f32 %v329, 1.0
      %v362 = vadd.f32 %v330, 1.0
      %v363 = vadd.f32 %v331, 1.0
      %v364 = vadd.f32 %v332, 1.0
      %v365 = vadd.f32 %v333, 1.0
      %v366 = vadd.f32 %v334, 1.0
      %v367 = vadd.f32 %v335, 1.0
      %v368 = vadd.f32 %v336, 1.0
      %v369 = vadd.f32 %v337, 1.0
      %v370 = vadd.f32 %v338, 1.0
      %v371 = vadd.f32 %v339, 1.0
      %v372 = vadd.f32 %v340, 1.0
      %v373 = vmul.f32 %v341, 0.5
      %v374 = vmul.f32 %v342, 0.5
      %v375 = vmul.f32 %v343, 0.5
      %v376 = vmul.f32 %v344, 0.5
      %v377 = vmul.f32 %v345, 0.5
      %v378 = vmul.f32 %v346, 0.5
      %v379 = vmul.f32 %v347, 0.5
      %v380 = vmul.f32 %v348, 0.5
      %v381 = vmul.f32 %v349, 0.5
      %v382 = vmul.f32 %v350, 0.5
      %v383 = vmul.f32 %v351, 0.5
      %v384 = vmul.f32 %v352, 0.5
      %v385 = vmul.f32 %v353, 0.5
      %v386 = vmul.f32 %v354, 0.5
      %v387 = vmul.f32 %v355, 0.5
      %v388 = vmul.f32 %v356, 0.5
      %v389 = vmul.f32 %v357, 0.5
      %v390 = vmul.f32 %v358, 0.5
      %v391 = vmul.f32 %v359, 0.5
      %v392 = vmul.f32 %v360, 0.5
      %v393 = vmul.f32 %v361, 0.5
      %v394 = vmul.f32 %v362, 0.5
      %v395 = vmul.f32 %v363, 0.5
      %v396 = vmul.f32 %v364, 0.5
      %v397 = vmul.f32 %v365, 0.5
      %v398 = vmul.f32 %v366, 0.5
      %v399 = vmul.f32 %v367, 0.5
      %v400 = vmul.f32 %v368, 0.5
      %v401 = vmul.f32 %v369, 0.5
      %v402 = vmul.f32 %v370, 0.5
      %v403 = vmul.f32 %v371, 0.5
      %v404 = vmul.f32 %v372, 0.5
      %v405 = vmul.f32 %v373, 7.0
      %v406 = vmul.f32 %v374, 7.0
      %v407 = vmul.f32 %v375, 7.0
      %v408 = vmul.f32 %v376, 7.0
      %v409 = vmul.f32 %v377, 7.0
      %v410 = vmul.f32 %v378, 7.0
      %v411 = vmul.f32 %v379, 7.0
      %v412 = vmul.f32 %v380, 7.0
      %v413 = vmul.f32 %v381, 7.0
      %v414 = vmul.f32 %v382, 7.0
      %v415 = vmul.f32 %v383, 7.0
      %v416 = vmul.f32 %v384, 7.0
      %v417 = vmul.f32 %v385, 7.0
      %v418 = vmul.f32 %v386, 7.0
      %v419 = vmul.f32 %v387, 7.0
      %v420 = vmul.f32 %v388, 7.0
      %v421 = vmul.f32 %v389, 7.0
      %v422 = vmul.f32 %v390, 7.0
      %v423 = vmul.f32 %v391, 7.0
      %v424 = vmul.f32 %v392, 7.0
      %v425 = vmul.f32 %v393, 7.0
      %v426 = vmul.f32 %v394, 7.0
      %v427 = vmul.f32 %v395, 7.0
      %v428 = vmul.f32 %v396, 7.0
      %v429 = vmul.f32 %v397, 7.0
      %v430 = vmul.f32 %v398, 7.0
      %v431 = vmul.f32 %v399, 7.0
      %v432 = vmul.f32 %v400, 7.0
      %v433 = vmul.f32 %v401, 7.0
      %v434 = vmul.f32 %v402, 7.0
      %v435 = vmul.f32 %v403, 7.0
      %v436 = vmul.f32 %v404, 7.0
      %v437 = vmax.f32 %v405, 0.0
      %v438 = vmax.f32 %v406, 0.0
      %v439 = vmax.f32 %v407, 0.0
      %v440 = vmax.f32 %v408, 0.0
      %v441 = vmax.f32 %v409, 0.0
      %v442 = vmax.f32 %v410, 0.0
      %v443 = vmax.f32 %v411, 0.0
      %v444 = vmax.f32 %v412, 0.0
      %v445 = vmax.f32 %v413, 0.0
      %v446 = vmax.f32 %v414, 0.0
      %v447 = vmax.f32 %v415, 0.0
      %v448 = vmax.f32 %v416, 0.0
      %v449 = vmax.f32 %v417, 0.0
      %v450 = vmax.f32 %v418, 0.0
      %v451 = vmax.f32 %v419, 0.0
      %v452 = vmax.f32 %v420, 0.0
      %v453 = vmax.f32 %v421, 0.0
      %v454 = vmax.f32 %v422, 0.0
      %v455 = vmax.f32 %v423, 0.0
      %v456 = vmax.f32 %v424, 0.0
      %v457 = vmax.f32 %v425, 0.0
      %v458 = vmax.f32 %v426, 0.0
      %v459 = vmax.f32 %v427, 0.0
      %v460 = vmax.f32 %v428, 0.0
      %v461 = vmax.f32 %v429, 0.0
      %v462 = vmax.f32 %v430, 0.0
      %v463 = vmax.f32 %v431, 0.0
      %v464 = vmax.f32 %v432, 0.0
      %v465 = vmax.f32 %v433, 0.0
      %v466 = vmax.f32 %v434, 0.0
      %v467 = vmax.f32 %v435, 0.0
      %v468 = vmax.f32 %v436, 0.0
      %v469 = vmin.f32 %v437, 7.0
      %v470 = vmin.f32 %v438, 7.0
      %v471 = vmin.f32 %v439, 7.0
      %v472 = vmin.f32 %v440, 7.0
      %v473 = vmin.f32 %v441, 7.0
      %v474 = vmin.f32 %v442, 7.0
      %v475 = vmin.f32 %v443, 7.0
      %v476 = vmin.f32 %v444, 7.0
      %v477 = vmin.f32 %v445, 7.0
      %v478 = vmin.f32 %v446, 7.0
      %v479 = vmin.f32 %v447, 7.0
      %v480 = vmin.f32 %v448, 7.0
      %v481 = vmin.f32 %v449, 7.0
      %v482 = vmin.f32 %v450, 7.0
      %v483 = vmin.f32 %v451, 7.0
      %v484 = vmin.f32 %v452, 7.0
      %v485 = vmin.f32 %v453, 7.0
      %v486 = vmin.f32 %v454, 7.0
      %v487 = vmin.f32 %v455, 7.0
      %v488 = vmin.f32 %v456, 7.0
      %v489 = vmin.f32 %v457, 7.0
      %v490 = vmin.f32 %v458, 7.0
      %v491 = vmin.f32 %v459, 7.0
      %v492 = vmin.f32 %v460, 7.0
      %v493 = vmin.f32 %v461, 7.0
      %v494 = vmin.f32 %v462, 7.0
      %v495 = vmin.f32 %v463, 7.0
      %v496 = vmin.f32 %v464, 7.0
      %v497 = vmin.f32 %v465, 7.0
      %v498 = vmin.f32 %v466, 7.0
      %v499 = vmin.f32 %v467, 7.0
      %v500 = vmin.f32 %v468, 7.0
      %v501 = vfloor.f32 %v469
      %v502 = vfloor.f32 %v470
      %v503 = vfloor.f32 %v471
      %v504 = vfloor.f32 %v472
      %v505 = vfloor.f32 %v473
      %v506 = vfloor.f32 %v474
      %v507 = vfloor.f32 %v475
      %v508 = vfloor.f32 %v476
      %v509 = vfloor.f32 %v477
      %v510 = vfloor.f32 %v478
      %v511 = vfloor.f32 %v479
      %v512 = vfloor.f32 %v480
      %v513 = vfloor.f32 %v481
      %v514 = vfloor.f32 %v482
      %v515 = vfloor.f32 %v483
      %v516 = vfloor.f32 %v484
      %v517 = vfloor.f32 %v485
      %v518 = vfloor.f32 %v486
      %v519 = vfloor.f32 %v487
      %v520 = vfloor.f32 %v488
      %v521 = vfloor.f32 %v489
      %v522 = vfloor.f32 %v490
      %v523 = vfloor.f32 %v491
      %v524 = vfloor.f32 %v492
      %v525 = vfloor.f32 %v493
      %v526 = vfloor.f32 %v494
      %v527 = vfloor.f32 %v495
      %v528 = vfloor.f32 %v496
      %v529 = vfloor.f32 %v497
      %v530 = vfloor.f32 %v498
      %v531 = vfloor.f32 %v499
      %v532 = vfloor.f32 %v500
      %v533 = vsub.f32 %v469, %v501
      %v534 = vsub.f32 %v470, %v502
      %v535 = vsub.f32 %v471, %v503
      %v536 = vsub.f32 %v472, %v504
      %v537 = vsub.f32 %v473, %v505
      %v538 = vsub.f32 %v474, %v506
      %v539 = vsub.f32 %v475, %v507
      %v540 = vsub.f32 %v476, %v508
      %v541 = vsub.f32 %v477, %v509
      %v542 = vsub.f32 %v478, %v510
      %v543 = vsub.f32 %v479, %v511
      %v544 = vsub.f32 %v480, %v512
      %v545 = vsub.f32 %v481, %v513
      %v546 = vsub.f32 %v482, %v514
      %v547 = vsub.f32 %v483, %v515
      %v548 = vsub.f32 %v484, %v516
      %v549 = vsub.f32 %v485, %v517
      %v550 = vsub.f32 %v486, %v518
      %v551 = vsub.f32 %v487, %v519
      %v552 = vsub.f32 %v488, %v520
      %v553 = vsub.f32 %v489, %v521
      %v554 = vsub.f32 %v490, %v522
      %v555 = vsub.f32 %v491, %v523
      %v556 = vsub.f32 %v492, %v524
      %v557 = vsub.f32 %v493, %v525
      %v558 = vsub.f32 %v494, %v526
      %v559 = vsub.f32 %v495, %v527
      %v560 = vsub.f32 %v496, %v528
      %v561 = vsub.f32 %v497, %v529
      %v562 = vsub.f32 %v498, %v530
      %v563 = vsub.f32 %v499, %v531
      %v564 = vsub.f32 %v500, %v532
      %v565 = vcvt.f32.s32.to.zero.pseudo %v501
      %v566 = vcvt.f32.s32.to.zero.pseudo %v502
      %v567 = vcvt.f32.s32.to.zero.pseudo %v503
      %v568 = vcvt.f32.s32.to.zero.pseudo %v504
      %v569 = vcvt.f32.s32.to.zero.pseudo %v505
      %v570 = vcvt.f32.s32.to.zero.pseudo %v506
      %v571 = vcvt.f32.s32.to.zero.pseudo %v507
      %v572 = vcvt.f32.s32.to.zero.pseudo %v508
      %v573 = vcvt.f32.s32.to.zero.pseudo %v509
      %v574 = vcvt.f32.s32.to.zero.pseudo %v510
      %v575 = vcvt.f32.s32.to.zero.pseudo %v511
      %v576 = vcvt.f32.s32.to.zero.pseudo %v512
      %v577 = vcvt.f32.s32.to.zero.pseudo %v513
      %v578 = vcvt.f32.s32.to.zero.pseudo %v514
      %v579 = vcvt.f32.s32.to.zero.pseudo %v515
      %v580 = vcvt.f32.s32.to.zero.pseudo %v516
      %v581 = vcvt.f32.s32.to.zero.pseudo %v517
      %v582 = vcvt.f32.s32.to.zero.pseudo %v518
      %v583 = vcvt.f32.s32.to.zero.pseudo %v519
      %v584 = vcvt.f32.s32.to.zero.pseudo %v520
      %v585 = vcvt.f32.s32.to.zero.pseudo %v521
      %v586 = vcvt.f32.s32.to.zero.pseudo %v522
      %v587 = vcvt.f32.s32.to.zero.pseudo %v523
      %v588 = vcvt.f32.s32.to.zero.pseudo %v524
      %v589 = vcvt.f32.s32.to.zero.pseudo %v525
      %v590 = vcvt.f32.s32.to.zero.pseudo %v526
      %v591 = vcvt.f32.s32.to.zero.pseudo %v527
      %v592 = vcvt.f32.s32.to.zero.pseudo %v528
      %v593 = vcvt.f32.s32.to.zero.pseudo %v529
      %v594 = vcvt.f32.s32.to.zero.pseudo %v530
      %v595 = vcvt.f32.s32.to.zero.pseudo %v531
      %v596 = vcvt.f32.s32.to.zero.pseudo %v532
      %v597 = vadd.s32 %v565, 1
      %v598 = vadd.s32 %v566, 1
      %v599 = vadd.s32 %v567, 1
      %v600 = vadd.s32 %v568, 1
      %v601 = vadd.s32 %v569, 1
      %v602 = vadd.s32 %v570, 1
      %v603 = vadd.s32 %v571, 1
      %v604 = vadd.s32 %v572, 1
      %v605 = vadd.s32 %v573, 1
      %v606 = vadd.s32 %v574, 1
      %v607 = vadd.s32 %v575, 1
      %v608 = vadd.s32 %v576, 1
      %v609 = vadd.s32 %v577, 1
      %v610 = vadd.s32 %v578, 1
      %v611 = vadd.s32 %v579, 1
      %v612 = vadd.s32 %v580, 1
      %v613 = vadd.s32 %v581, 1
      %v614 = vadd.s32 %v582, 1
      %v615 = vadd.s32 %v583, 1
      %v616 = vadd.s32 %v584, 1
      %v617 = vadd.s32 %v585, 1
      %v618 = vadd.s32 %v586, 1
      %v619 = vadd.s32 %v587, 1
      %v620 = vadd.s32 %v588, 1
      %v621 = vadd.s32 %v589, 1
      %v622 = vadd.s32 %v590, 1
      %v623 = vadd.s32 %v591, 1
      %v624 = vadd.s32 %v592, 1
      %v625 = vadd.s32 %v593, 1
      %v626 = vadd.s32 %v594, 1
      %v627 = vadd.s32 %v595, 1
      %v628 = vadd.s32 %v596, 1
      %vm629 = vcmp.lt.s32.totalorder %v597, 7
      %v630 = vsel %vm629, %v597, 7
      %vm631 = vcmp.lt.s32.totalorder %v598, 7
      %v632 = vsel %vm631, %v598, 7
      %vm633 = vcmp.lt.s32.totalorder %v599, 7
      %v634 = vsel %vm633, %v599, 7
      %vm635 = vcmp.lt.s32.totalorder %v600, 7
      %v636 = vsel %vm635, %v600, 7
      %vm637 = vcmp.lt.s32.totalorder %v601, 7
      %v638 = vsel %vm637, %v601, 7
      %vm639 = vcmp.lt.s32.totalorder %v602, 7
      %v640 = vsel %vm639, %v602, 7
      %vm641 = vcmp.lt.s32.totalorder %v603, 7
      %v642 = vsel %vm641, %v603, 7
      %vm643 = vcmp.lt.s32.totalorder %v604, 7
      %v644 = vsel %vm643, %v604, 7
      %vm645 = vcmp.lt.s32.totalorder %v605, 7
      %v646 = vsel %vm645, %v605, 7
      %vm647 = vcmp.lt.s32.totalorder %v606, 7
      %v648 = vsel %vm647, %v606, 7
      %vm649 = vcmp.lt.s32.totalorder %v607, 7
      %v650 = vsel %vm649, %v607, 7
      %vm651 = vcmp.lt.s32.totalorder %v608, 7
      %v652 = vsel %vm651, %v608, 7
      %vm653 = vcmp.lt.s32.totalorder %v609, 7
      %v654 = vsel %vm653, %v609, 7
      %vm655 = vcmp.lt.s32.totalorder %v610, 7
      %v656 = vsel %vm655, %v610, 7
      %vm657 = vcmp.lt.s32.totalorder %v611, 7
      %v658 = vsel %vm657, %v611, 7
      %vm659 = vcmp.lt.s32.totalorder %v612, 7
      %v660 = vsel %vm659, %v612, 7
      %vm661 = vcmp.lt.s32.totalorder %v613, 7
      %v662 = vsel %vm661, %v613, 7
      %vm663 = vcmp.lt.s32.totalorder %v614, 7
      %v664 = vsel %vm663, %v614, 7
      %vm665 = vcmp.lt.s32.totalorder %v615, 7
      %v666 = vsel %vm665, %v615, 7
      %vm667 = vcmp.lt.s32.totalorder %v616, 7
      %v668 = vsel %vm667, %v616, 7
      %vm669 = vcmp.lt.s32.totalorder %v617, 7
      %v670 = vsel %vm669, %v617, 7
      %vm671 = vcmp.lt.s32.totalorder %v618, 7
      %v672 = vsel %vm671, %v618, 7
      %vm673 = vcmp.lt.s32.totalorder %v619, 7
      %v674 = vsel %vm673, %v619, 7
      %vm675 = vcmp.lt.s32.totalorder %v620, 7
      %v676 = vsel %vm675, %v620, 7
      %vm677 = vcmp.lt.s32.totalorder %v621, 7
      %v678 = vsel %vm677, %v621, 7
      %vm679 = vcmp.lt.s32.totalorder %v622, 7
      %v680 = vsel %vm679, %v622, 7
      %vm681 = vcmp.lt.s32.totalorder %v623, 7
      %v682 = vsel %vm681, %v623, 7
      %vm683 = vcmp.lt.s32.totalorder %v624, 7
      %v684 = vsel %vm683, %v624, 7
      %vm685 = vcmp.lt.s32.totalorder %v625, 7
      %v686 = vsel %vm685, %v625, 7
      %vm687 = vcmp.lt.s32.totalorder %v626, 7
      %v688 = vsel %vm687, %v626, 7
      %vm689 = vcmp.lt.s32.totalorder %v627, 7
      %v690 = vsel %vm689, %v627, 7
      %vm691 = vcmp.lt.s32.totalorder %v628, 7
      %v692 = vsel %vm691, %v628, 7
      %v693 = vlaneseq
      %v694 = vand.u32 %v693, 127
      %v695 = vmul.u32 %v565, 16
      %v696 = vmul.u32 %v566, 16
      %v697 = vmul.u32 %v567, 16
      %v698 = vmul.u32 %v568, 16
      %v699 = vmul.u32 %v569, 16
      %v700 = vmul.u32 %v570, 16
      %v701 = vmul.u32 %v571, 16
      %v702 = vmul.u32 %v572, 16
      %v703 = vmul.u32 %v573, 16
      %v704 = vmul.u32 %v574, 16
      %v705 = vmul.u32 %v575, 16
      %v706 = vmul.u32 %v576, 16
      %v707 = vmul.u32 %v577, 16
      %v708 = vmul.u32 %v578, 16
      %v709 = vmul.u32 %v579, 16
      %v710 = vmul.u32 %v580, 16
      %v711 = vmul.u32 %v581, 16
      %v712 = vmul.u32 %v582, 16
      %v713 = vmul.u32 %v583, 16
      %v714 = vmul.u32 %v584, 16
      %v715 = vmul.u32 %v585, 16
      %v716 = vmul.u32 %v586, 16
      %v717 = vmul.u32 %v587, 16
      %v718 = vmul.u32 %v588, 16
      %v719 = vmul.u32 %v589, 16
      %v720 = vmul.u32 %v590, 16
      %v721 = vmul.u32 %v591, 16
      %v722 = vmul.u32 %v592, 16
      %v723 = vmul.u32 %v593, 16
      %v724 = vmul.u32 %v594, 16
      %v725 = vmul.u32 %v595, 16
      %v726 = vmul.u32 %v596, 16
      %v727 = vmul.u32 %v630, 16
      %v728 = vmul.u32 %v632, 16
      %v729 = vmul.u32 %v634, 16
      %v730 = vmul.u32 %v636, 16
      %v731 = vmul.u32 %v638, 16
      %v732 = vmul.u32 %v640, 16
      %v733 = vmul.u32 %v642, 16
      %v734 = vmul.u32 %v644, 16
      %v735 = vmul.u32 %v646, 16
      %v736 = vmul.u32 %v648, 16
      %v737 = vmul.u32 %v650, 16
      %v738 = vmul.u32 %v652, 16
      %v739 = vmul.u32 %v654, 16
      %v740 = vmul.u32 %v656, 16
      %v741 = vmul.u32 %v658, 16
      %v742 = vmul.u32 %v660, 16
      %v743 = vmul.u32 %v662, 16
      %v744 = vmul.u32 %v664, 16
      %v745 = vmul.u32 %v666, 16
      %v746 = vmul.u32 %v668, 16
      %v747 = vmul.u32 %v670, 16
      %v748 = vmul.u32 %v672, 16
      %v749 = vmul.u32 %v674, 16
      %v750 = vmul.u32 %v676, 16
      %v751 = vmul.u32 %v678, 16
      %v752 = vmul.u32 %v680, 16
      %v753 = vmul.u32 %v682, 16
      %v754 = vmul.u32 %v684, 16
      %v755 = vmul.u32 %v686, 16
      %v756 = vmul.u32 %v688, 16
      %v757 = vmul.u32 %v690, 16
      %v758 = vmul.u32 %v692, 16
      %759 = vset.pattern.permute.xlu0 3
      %760 = vperm.xlu0 %759, %v695
      %v761 = vpop.permute.xlu0 %760
      %762 = vset.pattern.permute.xlu0 3
      %763 = vperm.xlu0 %762, %v696
      %v764 = vpop.permute.xlu0 %763
      %765 = vset.pattern.permute.xlu0 3
      %766 = vperm.xlu0 %765, %v697
      %v767 = vpop.permute.xlu0 %766
      %768 = vset.pattern.permute.xlu0 3
      %769 = vperm.xlu0 %768, %v698
      %v770 = vpop.permute.xlu0 %769
      %771 = vset.pattern.permute.xlu0 3
      %772 = vperm.xlu0 %771, %v699
      %v773 = vpop.permute.xlu0 %772
      %774 = vset.pattern.permute.xlu0 3
      %775 = vperm.xlu0 %774, %v700
      %v776 = vpop.permute.xlu0 %775
      %777 = vset.pattern.permute.xlu0 3
      %778 = vperm.xlu0 %777, %v701
      %v779 = vpop.permute.xlu0 %778
      %780 = vset.pattern.permute.xlu0 3
      %781 = vperm.xlu0 %780, %v702
      %v782 = vpop.permute.xlu0 %781
      %783 = vset.pattern.permute.xlu0 3
      %784 = vperm.xlu0 %783, %v703
      %v785 = vpop.permute.xlu0 %784
      %786 = vset.pattern.permute.xlu0 3
      %787 = vperm.xlu0 %786, %v704
      %v788 = vpop.permute.xlu0 %787
      %789 = vset.pattern.permute.xlu0 3
      %790 = vperm.xlu0 %789, %v705
      %v791 = vpop.permute.xlu0 %790
      %792 = vset.pattern.permute.xlu0 3
      %793 = vperm.xlu0 %792, %v706
      %v794 = vpop.permute.xlu0 %793
      %795 = vset.pattern.permute.xlu0 3
      %796 = vperm.xlu0 %795, %v707
      %v797 = vpop.permute.xlu0 %796
      %798 = vset.pattern.permute.xlu0 3
      %799 = vperm.xlu0 %798, %v708
      %v800 = vpop.permute.xlu0 %799
      %801 = vset.pattern.permute.xlu0 3
      %802 = vperm.xlu0 %801, %v709
      %v803 = vpop.permute.xlu0 %802
      %804 = vset.pattern.permute.xlu0 3
      %805 = vperm.xlu0 %804, %v710
      %v806 = vpop.permute.xlu0 %805
      %807 = vset.pattern.permute.xlu0 3
      %808 = vperm.xlu0 %807, %v711
      %v809 = vpop.permute.xlu0 %808
      %810 = vset.pattern.permute.xlu0 3
      %811 = vperm.xlu0 %810, %v712
      %v812 = vpop.permute.xlu0 %811
      %813 = vset.pattern.permute.xlu0 3
      %814 = vperm.xlu0 %813, %v713
      %v815 = vpop.permute.xlu0 %814
      %816 = vset.pattern.permute.xlu0 3
      %817 = vperm.xlu0 %816, %v714
      %v818 = vpop.permute.xlu0 %817
      %819 = vset.pattern.permute.xlu0 3
      %820 = vperm.xlu0 %819, %v715
      %v821 = vpop.permute.xlu0 %820
      %822 = vset.pattern.permute.xlu0 3
      %823 = vperm.xlu0 %822, %v716
      %v824 = vpop.permute.xlu0 %823
      %825 = vset.pattern.permute.xlu0 3
      %826 = vperm.xlu0 %825, %v717
      %v827 = vpop.permute.xlu0 %826
      %828 = vset.pattern.permute.xlu0 3
      %829 = vperm.xlu0 %828, %v718
      %v830 = vpop.permute.xlu0 %829
      %831 = vset.pattern.permute.xlu0 3
      %832 = vperm.xlu0 %831, %v719
      %v833 = vpop.permute.xlu0 %832
      %834 = vset.pattern.permute.xlu0 3
      %835 = vperm.xlu0 %834, %v720
      %v836 = vpop.permute.xlu0 %835
      %837 = vset.pattern.permute.xlu0 3
      %838 = vperm.xlu0 %837, %v721
      %v839 = vpop.permute.xlu0 %838
      %840 = vset.pattern.permute.xlu0 3
      %841 = vperm.xlu0 %840, %v722
      %v842 = vpop.permute.xlu0 %841
      %843 = vset.pattern.permute.xlu0 3
      %844 = vperm.xlu0 %843, %v723
      %v845 = vpop.permute.xlu0 %844
      %846 = vset.pattern.permute.xlu0 3
      %847 = vperm.xlu0 %846, %v724
      %v848 = vpop.permute.xlu0 %847
      %849 = vset.pattern.permute.xlu0 3
      %850 = vperm.xlu0 %849, %v725
      %v851 = vpop.permute.xlu0 %850
      %852 = vset.pattern.permute.xlu0 3
      %853 = vperm.xlu0 %852, %v726
      %v854 = vpop.permute.xlu0 %853
      %vm855 = vcmp.ge.s32.totalorder %v694, %v761
      %vm856 = vcmp.ge.s32.totalorder %v694, %v764
      %vm857 = vcmp.ge.s32.totalorder %v694, %v767
      %vm858 = vcmp.ge.s32.totalorder %v694, %v770
      %vm859 = vcmp.ge.s32.totalorder %v694, %v773
      %vm860 = vcmp.ge.s32.totalorder %v694, %v776
      %vm861 = vcmp.ge.s32.totalorder %v694, %v779
      %vm862 = vcmp.ge.s32.totalorder %v694, %v782
      %vm863 = vcmp.ge.s32.totalorder %v694, %v785
      %vm864 = vcmp.ge.s32.totalorder %v694, %v788
      %vm865 = vcmp.ge.s32.totalorder %v694, %v791
      %vm866 = vcmp.ge.s32.totalorder %v694, %v794
      %vm867 = vcmp.ge.s32.totalorder %v694, %v797
      %vm868 = vcmp.ge.s32.totalorder %v694, %v800
      %vm869 = vcmp.ge.s32.totalorder %v694, %v803
      %vm870 = vcmp.ge.s32.totalorder %v694, %v806
      %vm871 = vcmp.ge.s32.totalorder %v694, %v809
      %vm872 = vcmp.ge.s32.totalorder %v694, %v812
      %vm873 = vcmp.ge.s32.totalorder %v694, %v815
      %vm874 = vcmp.ge.s32.totalorder %v694, %v818
      %vm875 = vcmp.ge.s32.totalorder %v694, %v821
      %vm876 = vcmp.ge.s32.totalorder %v694, %v824
      %vm877 = vcmp.ge.s32.totalorder %v694, %v827
      %vm878 = vcmp.ge.s32.totalorder %v694, %v830
      %vm879 = vcmp.ge.s32.totalorder %v694, %v833
      %vm880 = vcmp.ge.s32.totalorder %v694, %v836
      %vm881 = vcmp.ge.s32.totalorder %v694, %v839
      %vm882 = vcmp.ge.s32.totalorder %v694, %v842
      %vm883 = vcmp.ge.s32.totalorder %v694, %v845
      %vm884 = vcmp.ge.s32.totalorder %v694, %v848
      %vm885 = vcmp.ge.s32.totalorder %v694, %v851
      %vm886 = vcmp.ge.s32.totalorder %v694, %v854
      %v887 = vadd.s32 %v695, 16
      %v888 = vadd.s32 %v696, 16
      %v889 = vadd.s32 %v697, 16
      %v890 = vadd.s32 %v698, 16
      %v891 = vadd.s32 %v699, 16
      %v892 = vadd.s32 %v700, 16
      %v893 = vadd.s32 %v701, 16
      %v894 = vadd.s32 %v702, 16
      %v895 = vadd.s32 %v703, 16
      %v896 = vadd.s32 %v704, 16
      %v897 = vadd.s32 %v705, 16
      %v898 = vadd.s32 %v706, 16
      %v899 = vadd.s32 %v707, 16
      %v900 = vadd.s32 %v708, 16
      %v901 = vadd.s32 %v709, 16
      %v902 = vadd.s32 %v710, 16
      %v903 = vadd.s32 %v711, 16
      %v904 = vadd.s32 %v712, 16
      %v905 = vadd.s32 %v713, 16
      %v906 = vadd.s32 %v714, 16
      %v907 = vadd.s32 %v715, 16
      %v908 = vadd.s32 %v716, 16
      %v909 = vadd.s32 %v717, 16
      %v910 = vadd.s32 %v718, 16
      %v911 = vadd.s32 %v719, 16
      %v912 = vadd.s32 %v720, 16
      %v913 = vadd.s32 %v721, 16
      %v914 = vadd.s32 %v722, 16
      %v915 = vadd.s32 %v723, 16
      %v916 = vadd.s32 %v724, 16
      %v917 = vadd.s32 %v725, 16
      %v918 = vadd.s32 %v726, 16
      %919 = vset.pattern.permute.xlu0 3
      %920 = vperm.xlu0 %919, %v887
      %v921 = vpop.permute.xlu0 %920
      %922 = vset.pattern.permute.xlu0 3
      %923 = vperm.xlu0 %922, %v888
      %v924 = vpop.permute.xlu0 %923
      %925 = vset.pattern.permute.xlu0 3
      %926 = vperm.xlu0 %925, %v889
      %v927 = vpop.permute.xlu0 %926
      %928 = vset.pattern.permute.xlu0 3
      %929 = vperm.xlu0 %928, %v890
      %v930 = vpop.permute.xlu0 %929
      %931 = vset.pattern.permute.xlu0 3
      %932 = vperm.xlu0 %931, %v891
      %v933 = vpop.permute.xlu0 %932
      %934 = vset.pattern.permute.xlu0 3
      %935 = vperm.xlu0 %934, %v892
      %v936 = vpop.permute.xlu0 %935
      %937 = vset.pattern.permute.xlu0 3
      %938 = vperm.xlu0 %937, %v893
      %v939 = vpop.permute.xlu0 %938
      %940 = vset.pattern.permute.xlu0 3
      %941 = vperm.xlu0 %940, %v894
      %v942 = vpop.permute.xlu0 %941
      %943 = vset.pattern.permute.xlu0 3
      %944 = vperm.xlu0 %943, %v895
      %v945 = vpop.permute.xlu0 %944
      %946 = vset.pattern.permute.xlu0 3
      %947 = vperm.xlu0 %946, %v896
      %v948 = vpop.permute.xlu0 %947
      %949 = vset.pattern.permute.xlu0 3
      %950 = vperm.xlu0 %949, %v897
      %v951 = vpop.permute.xlu0 %950
      %952 = vset.pattern.permute.xlu0 3
      %953 = vperm.xlu0 %952, %v898
      %v954 = vpop.permute.xlu0 %953
      %955 = vset.pattern.permute.xlu0 3
      %956 = vperm.xlu0 %955, %v899
      %v957 = vpop.permute.xlu0 %956
      %958 = vset.pattern.permute.xlu0 3
      %959 = vperm.xlu0 %958, %v900
      %v960 = vpop.permute.xlu0 %959
      %961 = vset.pattern.permute.xlu0 3
      %962 = vperm.xlu0 %961, %v901
      %v963 = vpop.permute.xlu0 %962
      %964 = vset.pattern.permute.xlu0 3
      %965 = vperm.xlu0 %964, %v902
      %v966 = vpop.permute.xlu0 %965
      %967 = vset.pattern.permute.xlu0 3
      %968 = vperm.xlu0 %967, %v903
      %v969 = vpop.permute.xlu0 %968
      %970 = vset.pattern.permute.xlu0 3
      %971 = vperm.xlu0 %970, %v904
      %v972 = vpop.permute.xlu0 %971
      %973 = vset.pattern.permute.xlu0 3
      %974 = vperm.xlu0 %973, %v905
      %v975 = vpop.permute.xlu0 %974
      %976 = vset.pattern.permute.xlu0 3
      %977 = vperm.xlu0 %976, %v906
      %v978 = vpop.permute.xlu0 %977
      %979 = vset.pattern.permute.xlu0 3
      %980 = vperm.xlu0 %979, %v907
      %v981 = vpop.permute.xlu0 %980
      %982 = vset.pattern.permute.xlu0 3
      %983 = vperm.xlu0 %982, %v908
      %v984 = vpop.permute.xlu0 %983
      %985 = vset.pattern.permute.xlu0 3
      %986 = vperm.xlu0 %985, %v909
      %v987 = vpop.permute.xlu0 %986
      %988 = vset.pattern.permute.xlu0 3
      %989 = vperm.xlu0 %988, %v910
      %v990 = vpop.permute.xlu0 %989
      %991 = vset.pattern.permute.xlu0 3
      %992 = vperm.xlu0 %991, %v911
      %v993 = vpop.permute.xlu0 %992
      %994 = vset.pattern.permute.xlu0 3
      %995 = vperm.xlu0 %994, %v912
      %v996 = vpop.permute.xlu0 %995
      %997 = vset.pattern.permute.xlu0 3
      %998 = vperm.xlu0 %997, %v913
      %v999 = vpop.permute.xlu0 %998
      %1000 = vset.pattern.permute.xlu0 3
      %1001 = vperm.xlu0 %1000, %v914
      %v1002 = vpop.permute.xlu0 %1001
      %1003 = vset.pattern.permute.xlu0 3
      %1004 = vperm.xlu0 %1003, %v915
      %v1005 = vpop.permute.xlu0 %1004
      %1006 = vset.pattern.permute.xlu0 3
      %1007 = vperm.xlu0 %1006, %v916
      %v1008 = vpop.permute.xlu0 %1007
      %1009 = vset.pattern.permute.xlu0 3
      %1010 = vperm.xlu0 %1009, %v917
      %v1011 = vpop.permute.xlu0 %1010
      %1012 = vset.pattern.permute.xlu0 3
      %1013 = vperm.xlu0 %1012, %v918
      %v1014 = vpop.permute.xlu0 %1013
      %vm1015 = vcmp.lt.s32.totalorder %v694, %v921
      %vm1016 = vcmp.lt.s32.totalorder %v694, %v924
      %vm1017 = vcmp.lt.s32.totalorder %v694, %v927
      %vm1018 = vcmp.lt.s32.totalorder %v694, %v930
      %vm1019 = vcmp.lt.s32.totalorder %v694, %v933
      %vm1020 = vcmp.lt.s32.totalorder %v694, %v936
      %vm1021 = vcmp.lt.s32.totalorder %v694, %v939
      %vm1022 = vcmp.lt.s32.totalorder %v694, %v942
      %vm1023 = vcmp.lt.s32.totalorder %v694, %v945
      %vm1024 = vcmp.lt.s32.totalorder %v694, %v948
      %vm1025 = vcmp.lt.s32.totalorder %v694, %v951
      %vm1026 = vcmp.lt.s32.totalorder %v694, %v954
      %vm1027 = vcmp.lt.s32.totalorder %v694, %v957
      %vm1028 = vcmp.lt.s32.totalorder %v694, %v960
      %vm1029 = vcmp.lt.s32.totalorder %v694, %v963
      %vm1030 = vcmp.lt.s32.totalorder %v694, %v966
      %vm1031 = vcmp.lt.s32.totalorder %v694, %v969
      %vm1032 = vcmp.lt.s32.totalorder %v694, %v972
      %vm1033 = vcmp.lt.s32.totalorder %v694, %v975
      %vm1034 = vcmp.lt.s32.totalorder %v694, %v978
      %vm1035 = vcmp.lt.s32.totalorder %v694, %v981
      %vm1036 = vcmp.lt.s32.totalorder %v694, %v984
      %vm1037 = vcmp.lt.s32.totalorder %v694, %v987
      %vm1038 = vcmp.lt.s32.totalorder %v694, %v990
      %vm1039 = vcmp.lt.s32.totalorder %v694, %v993
      %vm1040 = vcmp.lt.s32.totalorder %v694, %v996
      %vm1041 = vcmp.lt.s32.totalorder %v694, %v999
      %vm1042 = vcmp.lt.s32.totalorder %v694, %v1002
      %vm1043 = vcmp.lt.s32.totalorder %v694, %v1005
      %vm1044 = vcmp.lt.s32.totalorder %v694, %v1008
      %vm1045 = vcmp.lt.s32.totalorder %v694, %v1011
      %vm1046 = vcmp.lt.s32.totalorder %v694, %v1014
      %vm1047 = vmand %vm855, %vm1015
      %vm1048 = vmand %vm856, %vm1016
      %vm1049 = vmand %vm857, %vm1017
      %vm1050 = vmand %vm858, %vm1018
      %vm1051 = vmand %vm859, %vm1019
      %vm1052 = vmand %vm860, %vm1020
      %vm1053 = vmand %vm861, %vm1021
      %vm1054 = vmand %vm862, %vm1022
      %vm1055 = vmand %vm863, %vm1023
      %vm1056 = vmand %vm864, %vm1024
      %vm1057 = vmand %vm865, %vm1025
      %vm1058 = vmand %vm866, %vm1026
      %vm1059 = vmand %vm867, %vm1027
      %vm1060 = vmand %vm868, %vm1028
      %vm1061 = vmand %vm869, %vm1029
      %vm1062 = vmand %vm870, %vm1030
      %vm1063 = vmand %vm871, %vm1031
      %vm1064 = vmand %vm872, %vm1032
      %vm1065 = vmand %vm873, %vm1033
      %vm1066 = vmand %vm874, %vm1034
      %vm1067 = vmand %vm875, %vm1035
      %vm1068 = vmand %vm876, %vm1036
      %vm1069 = vmand %vm877, %vm1037
      %vm1070 = vmand %vm878, %vm1038
      %vm1071 = vmand %vm879, %vm1039
      %vm1072 = vmand %vm880, %vm1040
      %vm1073 = vmand %vm881, %vm1041
      %vm1074 = vmand %vm882, %vm1042
      %vm1075 = vmand %vm883, %vm1043
      %vm1076 = vmand %vm884, %vm1044
      %vm1077 = vmand %vm885, %vm1045
      %vm1078 = vmand %vm886, %vm1046
      %v1079 = vsub.f32 1.0, %v533
      %v1080 = vsub.f32 1.0, %v534
      %v1081 = vsub.f32 1.0, %v535
      %v1082 = vsub.f32 1.0, %v536
      %v1083 = vsub.f32 1.0, %v537
      %v1084 = vsub.f32 1.0, %v538
      %v1085 = vsub.f32 1.0, %v539
      %v1086 = vsub.f32 1.0, %v540
      %v1087 = vsub.f32 1.0, %v541
      %v1088 = vsub.f32 1.0, %v542
      %v1089 = vsub.f32 1.0, %v543
      %v1090 = vsub.f32 1.0, %v544
      %v1091 = vsub.f32 1.0, %v545
      %v1092 = vsub.f32 1.0, %v546
      %v1093 = vsub.f32 1.0, %v547
      %v1094 = vsub.f32 1.0, %v548
      %v1095 = vsub.f32 1.0, %v549
      %v1096 = vsub.f32 1.0, %v550
      %v1097 = vsub.f32 1.0, %v551
      %v1098 = vsub.f32 1.0, %v552
      %v1099 = vsub.f32 1.0, %v553
      %v1100 = vsub.f32 1.0, %v554
      %v1101 = vsub.f32 1.0, %v555
      %v1102 = vsub.f32 1.0, %v556
      %v1103 = vsub.f32 1.0, %v557
      %v1104 = vsub.f32 1.0, %v558
      %v1105 = vsub.f32 1.0, %v559
      %v1106 = vsub.f32 1.0, %v560
      %v1107 = vsub.f32 1.0, %v561
      %v1108 = vsub.f32 1.0, %v562
      %v1109 = vsub.f32 1.0, %v563
      %v1110 = vsub.f32 1.0, %v564
      %1112 = vset.pattern.permute.xlu0 3
      %1113 = vperm.xlu0 %1112, %v1079
      %v1114 = vpop.permute.xlu0 %1113
      %1117 = vset.pattern.permute.xlu0 3
      %1118 = vperm.xlu0 %1117, %v1080
      %v1119 = vpop.permute.xlu0 %1118
      %1122 = vset.pattern.permute.xlu0 3
      %1123 = vperm.xlu0 %1122, %v1081
      %v1124 = vpop.permute.xlu0 %1123
      %1127 = vset.pattern.permute.xlu0 3
      %1128 = vperm.xlu0 %1127, %v1082
      %v1129 = vpop.permute.xlu0 %1128
      %1132 = vset.pattern.permute.xlu0 3
      %1133 = vperm.xlu0 %1132, %v1083
      %v1134 = vpop.permute.xlu0 %1133
      %1137 = vset.pattern.permute.xlu0 3
      %1138 = vperm.xlu0 %1137, %v1084
      %v1139 = vpop.permute.xlu0 %1138
      %1142 = vset.pattern.permute.xlu0 3
      %1143 = vperm.xlu0 %1142, %v1085
      %v1144 = vpop.permute.xlu0 %1143
      %1147 = vset.pattern.permute.xlu0 3
      %1148 = vperm.xlu0 %1147, %v1086
      %v1149 = vpop.permute.xlu0 %1148
      %1152 = vset.pattern.permute.xlu0 3
      %1153 = vperm.xlu0 %1152, %v1087
      %v1154 = vpop.permute.xlu0 %1153
      %1157 = vset.pattern.permute.xlu0 3
      %1158 = vperm.xlu0 %1157, %v1088
      %v1159 = vpop.permute.xlu0 %1158
      %1162 = vset.pattern.permute.xlu0 3
      %1163 = vperm.xlu0 %1162, %v1089
      %v1164 = vpop.permute.xlu0 %1163
      %1167 = vset.pattern.permute.xlu0 3
      %1168 = vperm.xlu0 %1167, %v1090
      %v1169 = vpop.permute.xlu0 %1168
      %1172 = vset.pattern.permute.xlu0 3
      %1173 = vperm.xlu0 %1172, %v1091
      %v1174 = vpop.permute.xlu0 %1173
      %1177 = vset.pattern.permute.xlu0 3
      %1178 = vperm.xlu0 %1177, %v1092
      %v1179 = vpop.permute.xlu0 %1178
      %1182 = vset.pattern.permute.xlu0 3
      %1183 = vperm.xlu0 %1182, %v1093
      %v1184 = vpop.permute.xlu0 %1183
      %1187 = vset.pattern.permute.xlu0 3
      %1188 = vperm.xlu0 %1187, %v1094
      %v1189 = vpop.permute.xlu0 %1188
      %1192 = vset.pattern.permute.xlu0 3
      %1193 = vperm.xlu0 %1192, %v1095
      %v1194 = vpop.permute.xlu0 %1193
      %1197 = vset.pattern.permute.xlu0 3
      %1198 = vperm.xlu0 %1197, %v1096
      %v1199 = vpop.permute.xlu0 %1198
      %1202 = vset.pattern.permute.xlu0 3
      %1203 = vperm.xlu0 %1202, %v1097
      %v1204 = vpop.permute.xlu0 %1203
      %1207 = vset.pattern.permute.xlu0 3
      %1208 = vperm.xlu0 %1207, %v1098
      %v1209 = vpop.permute.xlu0 %1208
      %1212 = vset.pattern.permute.xlu0 3
      %1213 = vperm.xlu0 %1212, %v1099
      %v1214 = vpop.permute.xlu0 %1213
      %1217 = vset.pattern.permute.xlu0 3
      %1218 = vperm.xlu0 %1217, %v1100
      %v1219 = vpop.permute.xlu0 %1218
      %1222 = vset.pattern.permute.xlu0 3
      %1223 = vperm.xlu0 %1222, %v1101
      %v1224 = vpop.permute.xlu0 %1223
      %1227 = vset.pattern.permute.xlu0 3
      %1228 = vperm.xlu0 %1227, %v1102
      %v1229 = vpop.permute.xlu0 %1228
      %1232 = vset.pattern.permute.xlu0 3
      %1233 = vperm.xlu0 %1232, %v1103
      %v1234 = vpop.permute.xlu0 %1233
      %1237 = vset.pattern.permute.xlu0 3
      %1238 = vperm.xlu0 %1237, %v1104
      %v1239 = vpop.permute.xlu0 %1238
      %1242 = vset.pattern.permute.xlu0 3
      %1243 = vperm.xlu0 %1242, %v1105
      %v1244 = vpop.permute.xlu0 %1243
      %1247 = vset.pattern.permute.xlu0 3
      %1248 = vperm.xlu0 %1247, %v1106
      %v1249 = vpop.permute.xlu0 %1248
      %1252 = vset.pattern.permute.xlu0 3
      %1253 = vperm.xlu0 %1252, %v1107
      %v1254 = vpop.permute.xlu0 %1253
      %1257 = vset.pattern.permute.xlu0 3
      %1258 = vperm.xlu0 %1257, %v1108
      %v1259 = vpop.permute.xlu0 %1258
      %1262 = vset.pattern.permute.xlu0 3
      %1263 = vperm.xlu0 %1262, %v1109
      %v1264 = vpop.permute.xlu0 %1263
      %1267 = vset.pattern.permute.xlu0 3
      %1268 = vperm.xlu0 %1267, %v1110
      %v1269 = vpop.permute.xlu0 %1268
      %v1271 = vsel %vm1047, %v1114, 0.0
      %v1272 = vsel %vm1048, %v1119, 0.0
      %v1273 = vsel %vm1049, %v1124, 0.0
      %v1274 = vsel %vm1050, %v1129, 0.0
      %v1275 = vsel %vm1051, %v1134, 0.0
      %v1276 = vsel %vm1052, %v1139, 0.0
      %v1277 = vsel %vm1053, %v1144, 0.0
      %v1278 = vsel %vm1054, %v1149, 0.0
      %v1279 = vsel %vm1055, %v1154, 0.0
      %v1280 = vsel %vm1056, %v1159, 0.0
      %v1281 = vsel %vm1057, %v1164, 0.0
      %v1282 = vsel %vm1058, %v1169, 0.0
      %v1283 = vsel %vm1059, %v1174, 0.0
      %v1284 = vsel %vm1060, %v1179, 0.0
      %v1285 = vsel %vm1061, %v1184, 0.0
      %v1286 = vsel %vm1062, %v1189, 0.0
      %v1287 = vsel %vm1063, %v1194, 0.0
      %v1288 = vsel %vm1064, %v1199, 0.0
      %v1289 = vsel %vm1065, %v1204, 0.0
      %v1290 = vsel %vm1066, %v1209, 0.0
      %v1291 = vsel %vm1067, %v1214, 0.0
      %v1292 = vsel %vm1068, %v1219, 0.0
      %v1293 = vsel %vm1069, %v1224, 0.0
      %v1294 = vsel %vm1070, %v1229, 0.0
      %v1295 = vsel %vm1071, %v1234, 0.0
      %v1296 = vsel %vm1072, %v1239, 0.0
      %v1297 = vsel %vm1073, %v1244, 0.0
      %v1298 = vsel %vm1074, %v1249, 0.0
      %v1299 = vsel %vm1075, %v1254, 0.0
      %v1300 = vsel %vm1076, %v1259, 0.0
      %v1301 = vsel %vm1077, %v1264, 0.0
      %v1302 = vsel %vm1078, %v1269, 0.0
      %1303 = vset.pattern.permute.xlu0 3
      %1304 = vperm.xlu0 %1303, %v727
      %v1305 = vpop.permute.xlu0 %1304
      %1306 = vset.pattern.permute.xlu0 3
      %1307 = vperm.xlu0 %1306, %v728
      %v1308 = vpop.permute.xlu0 %1307
      %1309 = vset.pattern.permute.xlu0 3
      %1310 = vperm.xlu0 %1309, %v729
      %v1311 = vpop.permute.xlu0 %1310
      %1312 = vset.pattern.permute.xlu0 3
      %1313 = vperm.xlu0 %1312, %v730
      %v1314 = vpop.permute.xlu0 %1313
      %1315 = vset.pattern.permute.xlu0 3
      %1316 = vperm.xlu0 %1315, %v731
      %v1317 = vpop.permute.xlu0 %1316
      %1318 = vset.pattern.permute.xlu0 3
      %1319 = vperm.xlu0 %1318, %v732
      %v1320 = vpop.permute.xlu0 %1319
      %1321 = vset.pattern.permute.xlu0 3
      %1322 = vperm.xlu0 %1321, %v733
      %v1323 = vpop.permute.xlu0 %1322
      %1324 = vset.pattern.permute.xlu0 3
      %1325 = vperm.xlu0 %1324, %v734
      %v1326 = vpop.permute.xlu0 %1325
      %1327 = vset.pattern.permute.xlu0 3
      %1328 = vperm.xlu0 %1327, %v735
      %v1329 = vpop.permute.xlu0 %1328
      %1330 = vset.pattern.permute.xlu0 3
      %1331 = vperm.xlu0 %1330, %v736
      %v1332 = vpop.permute.xlu0 %1331
      %1333 = vset.pattern.permute.xlu0 3
      %1334 = vperm.xlu0 %1333, %v737
      %v1335 = vpop.permute.xlu0 %1334
      %1336 = vset.pattern.permute.xlu0 3
      %1337 = vperm.xlu0 %1336, %v738
      %v1338 = vpop.permute.xlu0 %1337
      %1339 = vset.pattern.permute.xlu0 3
      %1340 = vperm.xlu0 %1339, %v739
      %v1341 = vpop.permute.xlu0 %1340
      %1342 = vset.pattern.permute.xlu0 3
      %1343 = vperm.xlu0 %1342, %v740
      %v1344 = vpop.permute.xlu0 %1343
      %1345 = vset.pattern.permute.xlu0 3
      %1346 = vperm.xlu0 %1345, %v741
      %v1347 = vpop.permute.xlu0 %1346
      %1348 = vset.pattern.permute.xlu0 3
      %1349 = vperm.xlu0 %1348, %v742
      %v1350 = vpop.permute.xlu0 %1349
      %1351 = vset.pattern.permute.xlu0 3
      %1352 = vperm.xlu0 %1351, %v743
      %v1353 = vpop.permute.xlu0 %1352
      %1354 = vset.pattern.permute.xlu0 3
      %1355 = vperm.xlu0 %1354, %v744
      %v1356 = vpop.permute.xlu0 %1355
      %1357 = vset.pattern.permute.xlu0 3
      %1358 = vperm.xlu0 %1357, %v745
      %v1359 = vpop.permute.xlu0 %1358
      %1360 = vset.pattern.permute.xlu0 3
      %1361 = vperm.xlu0 %1360, %v746
      %v1362 = vpop.permute.xlu0 %1361
      %1363 = vset.pattern.permute.xlu0 3
      %1364 = vperm.xlu0 %1363, %v747
      %v1365 = vpop.permute.xlu0 %1364
      %1366 = vset.pattern.permute.xlu0 3
      %1367 = vperm.xlu0 %1366, %v748
      %v1368 = vpop.permute.xlu0 %1367
      %1369 = vset.pattern.permute.xlu0 3
      %1370 = vperm.xlu0 %1369, %v749
      %v1371 = vpop.permute.xlu0 %1370
      %1372 = vset.pattern.permute.xlu0 3
      %1373 = vperm.xlu0 %1372, %v750
      %v1374 = vpop.permute.xlu0 %1373
      %1375 = vset.pattern.permute.xlu0 3
      %1376 = vperm.xlu0 %1375, %v751
      %v1377 = vpop.permute.xlu0 %1376
      %1378 = vset.pattern.permute.xlu0 3
      %1379 = vperm.xlu0 %1378, %v752
      %v1380 = vpop.permute.xlu0 %1379
      %1381 = vset.pattern.permute.xlu0 3
      %1382 = vperm.xlu0 %1381, %v753
      %v1383 = vpop.permute.xlu0 %1382
      %1384 = vset.pattern.permute.xlu0 3
      %1385 = vperm.xlu0 %1384, %v754
      %v1386 = vpop.permute.xlu0 %1385
      %1387 = vset.pattern.permute.xlu0 3
      %1388 = vperm.xlu0 %1387, %v755
      %v1389 = vpop.permute.xlu0 %1388
      %1390 = vset.pattern.permute.xlu0 3
      %1391 = vperm.xlu0 %1390, %v756
      %v1392 = vpop.permute.xlu0 %1391
      %1393 = vset.pattern.permute.xlu0 3
      %1394 = vperm.xlu0 %1393, %v757
      %v1395 = vpop.permute.xlu0 %1394
      %1396 = vset.pattern.permute.xlu0 3
      %1397 = vperm.xlu0 %1396, %v758
      %v1398 = vpop.permute.xlu0 %1397
      %vm1399 = vcmp.ge.s32.totalorder %v694, %v1305
      %vm1400 = vcmp.ge.s32.totalorder %v694, %v1308
      %vm1401 = vcmp.ge.s32.totalorder %v694, %v1311
      %vm1402 = vcmp.ge.s32.totalorder %v694, %v1314
      %vm1403 = vcmp.ge.s32.totalorder %v694, %v1317
      %vm1404 = vcmp.ge.s32.totalorder %v694, %v1320
      %vm1405 = vcmp.ge.s32.totalorder %v694, %v1323
      %vm1406 = vcmp.ge.s32.totalorder %v694, %v1326
      %vm1407 = vcmp.ge.s32.totalorder %v694, %v1329
      %vm1408 = vcmp.ge.s32.totalorder %v694, %v1332
      %vm1409 = vcmp.ge.s32.totalorder %v694, %v1335
      %vm1410 = vcmp.ge.s32.totalorder %v694, %v1338
      %vm1411 = vcmp.ge.s32.totalorder %v694, %v1341
      %vm1412 = vcmp.ge.s32.totalorder %v694, %v1344
      %vm1413 = vcmp.ge.s32.totalorder %v694, %v1347
      %vm1414 = vcmp.ge.s32.totalorder %v694, %v1350
      %vm1415 = vcmp.ge.s32.totalorder %v694, %v1353
      %vm1416 = vcmp.ge.s32.totalorder %v694, %v1356
      %vm1417 = vcmp.ge.s32.totalorder %v694, %v1359
      %vm1418 = vcmp.ge.s32.totalorder %v694, %v1362
      %vm1419 = vcmp.ge.s32.totalorder %v694, %v1365
      %vm1420 = vcmp.ge.s32.totalorder %v694, %v1368
      %vm1421 = vcmp.ge.s32.totalorder %v694, %v1371
      %vm1422 = vcmp.ge.s32.totalorder %v694, %v1374
      %vm1423 = vcmp.ge.s32.totalorder %v694, %v1377
      %vm1424 = vcmp.ge.s32.totalorder %v694, %v1380
      %vm1425 = vcmp.ge.s32.totalorder %v694, %v1383
      %vm1426 = vcmp.ge.s32.totalorder %v694, %v1386
      %vm1427 = vcmp.ge.s32.totalorder %v694, %v1389
      %vm1428 = vcmp.ge.s32.totalorder %v694, %v1392
      %vm1429 = vcmp.ge.s32.totalorder %v694, %v1395
      %vm1430 = vcmp.ge.s32.totalorder %v694, %v1398
      %v1431 = vadd.s32 %v727, 16
      %v1432 = vadd.s32 %v728, 16
      %v1433 = vadd.s32 %v729, 16
      %v1434 = vadd.s32 %v730, 16
      %v1435 = vadd.s32 %v731, 16
      %v1436 = vadd.s32 %v732, 16
      %v1437 = vadd.s32 %v733, 16
      %v1438 = vadd.s32 %v734, 16
      %v1439 = vadd.s32 %v735, 16
      %v1440 = vadd.s32 %v736, 16
      %v1441 = vadd.s32 %v737, 16
      %v1442 = vadd.s32 %v738, 16
      %v1443 = vadd.s32 %v739, 16
      %v1444 = vadd.s32 %v740, 16
      %v1445 = vadd.s32 %v741, 16
      %v1446 = vadd.s32 %v742, 16
      %v1447 = vadd.s32 %v743, 16
      %v1448 = vadd.s32 %v744, 16
      %v1449 = vadd.s32 %v745, 16
      %v1450 = vadd.s32 %v746, 16
      %v1451 = vadd.s32 %v747, 16
      %v1452 = vadd.s32 %v748, 16
      %v1453 = vadd.s32 %v749, 16
      %v1454 = vadd.s32 %v750, 16
      %v1455 = vadd.s32 %v751, 16
      %v1456 = vadd.s32 %v752, 16
      %v1457 = vadd.s32 %v753, 16
      %v1458 = vadd.s32 %v754, 16
      %v1459 = vadd.s32 %v755, 16
      %v1460 = vadd.s32 %v756, 16
      %v1461 = vadd.s32 %v757, 16
      %v1462 = vadd.s32 %v758, 16
      %1463 = vset.pattern.permute.xlu0 3
      %1464 = vperm.xlu0 %1463, %v1431
      %v1465 = vpop.permute.xlu0 %1464
      %1466 = vset.pattern.permute.xlu0 3
      %1467 = vperm.xlu0 %1466, %v1432
      %v1468 = vpop.permute.xlu0 %1467
      %1469 = vset.pattern.permute.xlu0 3
      %1470 = vperm.xlu0 %1469, %v1433
      %v1471 = vpop.permute.xlu0 %1470
      %1472 = vset.pattern.permute.xlu0 3
      %1473 = vperm.xlu0 %1472, %v1434
      %v1474 = vpop.permute.xlu0 %1473
      %1475 = vset.pattern.permute.xlu0 3
      %1476 = vperm.xlu0 %1475, %v1435
      %v1477 = vpop.permute.xlu0 %1476
      %1478 = vset.pattern.permute.xlu0 3
      %1479 = vperm.xlu0 %1478, %v1436
      %v1480 = vpop.permute.xlu0 %1479
      %1481 = vset.pattern.permute.xlu0 3
      %1482 = vperm.xlu0 %1481, %v1437
      %v1483 = vpop.permute.xlu0 %1482
      %1484 = vset.pattern.permute.xlu0 3
      %1485 = vperm.xlu0 %1484, %v1438
      %v1486 = vpop.permute.xlu0 %1485
      %1487 = vset.pattern.permute.xlu0 3
      %1488 = vperm.xlu0 %1487, %v1439
      %v1489 = vpop.permute.xlu0 %1488
      %1490 = vset.pattern.permute.xlu0 3
      %1491 = vperm.xlu0 %1490, %v1440
      %v1492 = vpop.permute.xlu0 %1491
      %1493 = vset.pattern.permute.xlu0 3
      %1494 = vperm.xlu0 %1493, %v1441
      %v1495 = vpop.permute.xlu0 %1494
      %1496 = vset.pattern.permute.xlu0 3
      %1497 = vperm.xlu0 %1496, %v1442
      %v1498 = vpop.permute.xlu0 %1497
      %1499 = vset.pattern.permute.xlu0 3
      %1500 = vperm.xlu0 %1499, %v1443
      %v1501 = vpop.permute.xlu0 %1500
      %1502 = vset.pattern.permute.xlu0 3
      %1503 = vperm.xlu0 %1502, %v1444
      %v1504 = vpop.permute.xlu0 %1503
      %1505 = vset.pattern.permute.xlu0 3
      %1506 = vperm.xlu0 %1505, %v1445
      %v1507 = vpop.permute.xlu0 %1506
      %1508 = vset.pattern.permute.xlu0 3
      %1509 = vperm.xlu0 %1508, %v1446
      %v1510 = vpop.permute.xlu0 %1509
      %1511 = vset.pattern.permute.xlu0 3
      %1512 = vperm.xlu0 %1511, %v1447
      %v1513 = vpop.permute.xlu0 %1512
      %1514 = vset.pattern.permute.xlu0 3
      %1515 = vperm.xlu0 %1514, %v1448
      %v1516 = vpop.permute.xlu0 %1515
      %1517 = vset.pattern.permute.xlu0 3
      %1518 = vperm.xlu0 %1517, %v1449
      %v1519 = vpop.permute.xlu0 %1518
      %1520 = vset.pattern.permute.xlu0 3
      %1521 = vperm.xlu0 %1520, %v1450
      %v1522 = vpop.permute.xlu0 %1521
      %1523 = vset.pattern.permute.xlu0 3
      %1524 = vperm.xlu0 %1523, %v1451
      %v1525 = vpop.permute.xlu0 %1524
      %1526 = vset.pattern.permute.xlu0 3
      %1527 = vperm.xlu0 %1526, %v1452
      %v1528 = vpop.permute.xlu0 %1527
      %1529 = vset.pattern.permute.xlu0 3
      %1530 = vperm.xlu0 %1529, %v1453
      %v1531 = vpop.permute.xlu0 %1530
      %1532 = vset.pattern.permute.xlu0 3
      %1533 = vperm.xlu0 %1532, %v1454
      %v1534 = vpop.permute.xlu0 %1533
      %1535 = vset.pattern.permute.xlu0 3
      %1536 = vperm.xlu0 %1535, %v1455
      %v1537 = vpop.permute.xlu0 %1536
      %1538 = vset.pattern.permute.xlu0 3
      %1539 = vperm.xlu0 %1538, %v1456
      %v1540 = vpop.permute.xlu0 %1539
      %1541 = vset.pattern.permute.xlu0 3
      %1542 = vperm.xlu0 %1541, %v1457
      %v1543 = vpop.permute.xlu0 %1542
      %1544 = vset.pattern.permute.xlu0 3
      %1545 = vperm.xlu0 %1544, %v1458
      %v1546 = vpop.permute.xlu0 %1545
      %1547 = vset.pattern.permute.xlu0 3
      %1548 = vperm.xlu0 %1547, %v1459
      %v1549 = vpop.permute.xlu0 %1548
      %1550 = vset.pattern.permute.xlu0 3
      %1551 = vperm.xlu0 %1550, %v1460
      %v1552 = vpop.permute.xlu0 %1551
      %1553 = vset.pattern.permute.xlu0 3
      %1554 = vperm.xlu0 %1553, %v1461
      %v1555 = vpop.permute.xlu0 %1554
      %1556 = vset.pattern.permute.xlu0 3
      %1557 = vperm.xlu0 %1556, %v1462
      %v1558 = vpop.permute.xlu0 %1557
      %vm1559 = vcmp.lt.s32.totalorder %v694, %v1465
      %vm1560 = vcmp.lt.s32.totalorder %v694, %v1468
      %vm1561 = vcmp.lt.s32.totalorder %v694, %v1471
      %vm1562 = vcmp.lt.s32.totalorder %v694, %v1474
      %vm1563 = vcmp.lt.s32.totalorder %v694, %v1477
      %vm1564 = vcmp.lt.s32.totalorder %v694, %v1480
      %vm1565 = vcmp.lt.s32.totalorder %v694, %v1483
      %vm1566 = vcmp.lt.s32.totalorder %v694, %v1486
      %vm1567 = vcmp.lt.s32.totalorder %v694, %v1489
      %vm1568 = vcmp.lt.s32.totalorder %v694, %v1492
      %vm1569 = vcmp.lt.s32.totalorder %v694, %v1495
      %vm1570 = vcmp.lt.s32.totalorder %v694, %v1498
      %vm1571 = vcmp.lt.s32.totalorder %v694, %v1501
      %vm1572 = vcmp.lt.s32.totalorder %v694, %v1504
      %vm1573 = vcmp.lt.s32.totalorder %v694, %v1507
      %vm1574 = vcmp.lt.s32.totalorder %v694, %v1510
      %vm1575 = vcmp.lt.s32.totalorder %v694, %v1513
      %vm1576 = vcmp.lt.s32.totalorder %v694, %v1516
      %vm1577 = vcmp.lt.s32.totalorder %v694, %v1519
      %vm1578 = vcmp.lt.s32.totalorder %v694, %v1522
      %vm1579 = vcmp.lt.s32.totalorder %v694, %v1525
      %vm1580 = vcmp.lt.s32.totalorder %v694, %v1528
      %vm1581 = vcmp.lt.s32.totalorder %v694, %v1531
      %vm1582 = vcmp.lt.s32.totalorder %v694, %v1534
      %vm1583 = vcmp.lt.s32.totalorder %v694, %v1537
      %vm1584 = vcmp.lt.s32.totalorder %v694, %v1540
      %vm1585 = vcmp.lt.s32.totalorder %v694, %v1543
      %vm1586 = vcmp.lt.s32.totalorder %v694, %v1546
      %vm1587 = vcmp.lt.s32.totalorder %v694, %v1549
      %vm1588 = vcmp.lt.s32.totalorder %v694, %v1552
      %vm1589 = vcmp.lt.s32.totalorder %v694, %v1555
      %vm1590 = vcmp.lt.s32.totalorder %v694, %v1558
      %vm1591 = vmand %vm1399, %vm1559
      %vm1592 = vmand %vm1400, %vm1560
      %vm1593 = vmand %vm1401, %vm1561
      %vm1594 = vmand %vm1402, %vm1562
      %vm1595 = vmand %vm1403, %vm1563
      %vm1596 = vmand %vm1404, %vm1564
      %vm1597 = vmand %vm1405, %vm1565
      %vm1598 = vmand %vm1406, %vm1566
      %vm1599 = vmand %vm1407, %vm1567
      %vm1600 = vmand %vm1408, %vm1568
      %vm1601 = vmand %vm1409, %vm1569
      %vm1602 = vmand %vm1410, %vm1570
      %vm1603 = vmand %vm1411, %vm1571
      %vm1604 = vmand %vm1412, %vm1572
      %vm1605 = vmand %vm1413, %vm1573
      %vm1606 = vmand %vm1414, %vm1574
      %vm1607 = vmand %vm1415, %vm1575
      %vm1608 = vmand %vm1416, %vm1576
      %vm1609 = vmand %vm1417, %vm1577
      %vm1610 = vmand %vm1418, %vm1578
      %vm1611 = vmand %vm1419, %vm1579
      %vm1612 = vmand %vm1420, %vm1580
      %vm1613 = vmand %vm1421, %vm1581
      %vm1614 = vmand %vm1422, %vm1582
      %vm1615 = vmand %vm1423, %vm1583
      %vm1616 = vmand %vm1424, %vm1584
      %vm1617 = vmand %vm1425, %vm1585
      %vm1618 = vmand %vm1426, %vm1586
      %vm1619 = vmand %vm1427, %vm1587
      %vm1620 = vmand %vm1428, %vm1588
      %vm1621 = vmand %vm1429, %vm1589
      %vm1622 = vmand %vm1430, %vm1590
      %1624 = vset.pattern.permute.xlu0 3
      %1625 = vperm.xlu0 %1624, %v533
      %v1626 = vpop.permute.xlu0 %1625
      %1629 = vset.pattern.permute.xlu0 3
      %1630 = vperm.xlu0 %1629, %v534
      %v1631 = vpop.permute.xlu0 %1630
      %1634 = vset.pattern.permute.xlu0 3
      %1635 = vperm.xlu0 %1634, %v535
      %v1636 = vpop.permute.xlu0 %1635
      %1639 = vset.pattern.permute.xlu0 3
      %1640 = vperm.xlu0 %1639, %v536
      %v1641 = vpop.permute.xlu0 %1640
      %1644 = vset.pattern.permute.xlu0 3
      %1645 = vperm.xlu0 %1644, %v537
      %v1646 = vpop.permute.xlu0 %1645
      %1649 = vset.pattern.permute.xlu0 3
      %1650 = vperm.xlu0 %1649, %v538
      %v1651 = vpop.permute.xlu0 %1650
      %1654 = vset.pattern.permute.xlu0 3
      %1655 = vperm.xlu0 %1654, %v539
      %v1656 = vpop.permute.xlu0 %1655
      %1659 = vset.pattern.permute.xlu0 3
      %1660 = vperm.xlu0 %1659, %v540
      %v1661 = vpop.permute.xlu0 %1660
      %1664 = vset.pattern.permute.xlu0 3
      %1665 = vperm.xlu0 %1664, %v541
      %v1666 = vpop.permute.xlu0 %1665
      %1669 = vset.pattern.permute.xlu0 3
      %1670 = vperm.xlu0 %1669, %v542
      %v1671 = vpop.permute.xlu0 %1670
      %1674 = vset.pattern.permute.xlu0 3
      %1675 = vperm.xlu0 %1674, %v543
      %v1676 = vpop.permute.xlu0 %1675
      %1679 = vset.pattern.permute.xlu0 3
      %1680 = vperm.xlu0 %1679, %v544
      %v1681 = vpop.permute.xlu0 %1680
      %1684 = vset.pattern.permute.xlu0 3
      %1685 = vperm.xlu0 %1684, %v545
      %v1686 = vpop.permute.xlu0 %1685
      %1689 = vset.pattern.permute.xlu0 3
      %1690 = vperm.xlu0 %1689, %v546
      %v1691 = vpop.permute.xlu0 %1690
      %1694 = vset.pattern.permute.xlu0 3
      %1695 = vperm.xlu0 %1694, %v547
      %v1696 = vpop.permute.xlu0 %1695
      %1699 = vset.pattern.permute.xlu0 3
      %1700 = vperm.xlu0 %1699, %v548
      %v1701 = vpop.permute.xlu0 %1700
      %1704 = vset.pattern.permute.xlu0 3
      %1705 = vperm.xlu0 %1704, %v549
      %v1706 = vpop.permute.xlu0 %1705
      %1709 = vset.pattern.permute.xlu0 3
      %1710 = vperm.xlu0 %1709, %v550
      %v1711 = vpop.permute.xlu0 %1710
      %1714 = vset.pattern.permute.xlu0 3
      %1715 = vperm.xlu0 %1714, %v551
      %v1716 = vpop.permute.xlu0 %1715
      %1719 = vset.pattern.permute.xlu0 3
      %1720 = vperm.xlu0 %1719, %v552
      %v1721 = vpop.permute.xlu0 %1720
      %1724 = vset.pattern.permute.xlu0 3
      %1725 = vperm.xlu0 %1724, %v553
      %v1726 = vpop.permute.xlu0 %1725
      %1729 = vset.pattern.permute.xlu0 3
      %1730 = vperm.xlu0 %1729, %v554
      %v1731 = vpop.permute.xlu0 %1730
      %1734 = vset.pattern.permute.xlu0 3
      %1735 = vperm.xlu0 %1734, %v555
      %v1736 = vpop.permute.xlu0 %1735
      %1739 = vset.pattern.permute.xlu0 3
      %1740 = vperm.xlu0 %1739, %v556
      %v1741 = vpop.permute.xlu0 %1740
      %1744 = vset.pattern.permute.xlu0 3
      %1745 = vperm.xlu0 %1744, %v557
      %v1746 = vpop.permute.xlu0 %1745
      %1749 = vset.pattern.permute.xlu0 3
      %1750 = vperm.xlu0 %1749, %v558
      %v1751 = vpop.permute.xlu0 %1750
      %1754 = vset.pattern.permute.xlu0 3
      %1755 = vperm.xlu0 %1754, %v559
      %v1756 = vpop.permute.xlu0 %1755
      %1759 = vset.pattern.permute.xlu0 3
      %1760 = vperm.xlu0 %1759, %v560
      %v1761 = vpop.permute.xlu0 %1760
      %1764 = vset.pattern.permute.xlu0 3
      %1765 = vperm.xlu0 %1764, %v561
      %v1766 = vpop.permute.xlu0 %1765
      %1769 = vset.pattern.permute.xlu0 3
      %1770 = vperm.xlu0 %1769, %v562
      %v1771 = vpop.permute.xlu0 %1770
      %1774 = vset.pattern.permute.xlu0 3
      %1775 = vperm.xlu0 %1774, %v563
      %v1776 = vpop.permute.xlu0 %1775
      %1779 = vset.pattern.permute.xlu0 3
      %1780 = vperm.xlu0 %1779, %v564
      %v1781 = vpop.permute.xlu0 %1780
      %v1783 = vsel %vm1591, %v1626, 0.0
      %v1784 = vsel %vm1592, %v1631, 0.0
      %v1785 = vsel %vm1593, %v1636, 0.0
      %v1786 = vsel %vm1594, %v1641, 0.0
      %v1787 = vsel %vm1595, %v1646, 0.0
      %v1788 = vsel %vm1596, %v1651, 0.0
      %v1789 = vsel %vm1597, %v1656, 0.0
      %v1790 = vsel %vm1598, %v1661, 0.0
      %v1791 = vsel %vm1599, %v1666, 0.0
      %v1792 = vsel %vm1600, %v1671, 0.0
      %v1793 = vsel %vm1601, %v1676, 0.0
      %v1794 = vsel %vm1602, %v1681, 0.0
      %v1795 = vsel %vm1603, %v1686, 0.0
      %v1796 = vsel %vm1604, %v1691, 0.0
      %v1797 = vsel %vm1605, %v1696, 0.0
      %v1798 = vsel %vm1606, %v1701, 0.0
      %v1799 = vsel %vm1607, %v1706, 0.0
      %v1800 = vsel %vm1608, %v1711, 0.0
      %v1801 = vsel %vm1609, %v1716, 0.0
      %v1802 = vsel %vm1610, %v1721, 0.0
      %v1803 = vsel %vm1611, %v1726, 0.0
      %v1804 = vsel %vm1612, %v1731, 0.0
      %v1805 = vsel %vm1613, %v1736, 0.0
      %v1806 = vsel %vm1614, %v1741, 0.0
      %v1807 = vsel %vm1615, %v1746, 0.0
      %v1808 = vsel %vm1616, %v1751, 0.0
      %v1809 = vsel %vm1617, %v1756, 0.0
      %v1810 = vsel %vm1618, %v1761, 0.0
      %v1811 = vsel %vm1619, %v1766, 0.0
      %v1812 = vsel %vm1620, %v1771, 0.0
      %v1813 = vsel %vm1621, %v1776, 0.0
      %v1814 = vsel %vm1622, %v1781, 0.0
      %v1815 = vadd.f32 %v1271, %v1783
      %v1816 = vadd.f32 %v1272, %v1784
      %v1817 = vadd.f32 %v1273, %v1785
      %v1818 = vadd.f32 %v1274, %v1786
      %v1819 = vadd.f32 %v1275, %v1787
      %v1820 = vadd.f32 %v1276, %v1788
      %v1821 = vadd.f32 %v1277, %v1789
      %v1822 = vadd.f32 %v1278, %v1790
      %v1823 = vadd.f32 %v1279, %v1791
      %v1824 = vadd.f32 %v1280, %v1792
      %v1825 = vadd.f32 %v1281, %v1793
      %v1826 = vadd.f32 %v1282, %v1794
      %v1827 = vadd.f32 %v1283, %v1795
      %v1828 = vadd.f32 %v1284, %v1796
      %v1829 = vadd.f32 %v1285, %v1797
      %v1830 = vadd.f32 %v1286, %v1798
      %v1831 = vadd.f32 %v1287, %v1799
      %v1832 = vadd.f32 %v1288, %v1800
      %v1833 = vadd.f32 %v1289, %v1801
      %v1834 = vadd.f32 %v1290, %v1802
      %v1835 = vadd.f32 %v1291, %v1803
      %v1836 = vadd.f32 %v1292, %v1804
      %v1837 = vadd.f32 %v1293, %v1805
      %v1838 = vadd.f32 %v1294, %v1806
      %v1839 = vadd.f32 %v1295, %v1807
      %v1840 = vadd.f32 %v1296, %v1808
      %v1841 = vadd.f32 %v1297, %v1809
      %v1842 = vadd.f32 %v1298, %v1810
      %v1843 = vadd.f32 %v1299, %v1811
      %v1844 = vadd.f32 %v1300, %v1812
      %v1845 = vadd.f32 %v1301, %v1813
      %v1846 = vadd.f32 %v1302, %v1814
      %v1847 = vld [vmem:[%s1] sm:$0xff]
      %v1848 = vld [vmem:[%s1 + $0x8] sm:$0xff]
      %v1849 = vld [vmem:[%s1 + $0x10] sm:$0xff]
      %v1850 = vld [vmem:[%s1 + $0x18] sm:$0xff]
      %v1851 = vld [vmem:[%s1 + $0x20] sm:$0xff]
      %v1852 = vld [vmem:[%s1 + $0x28] sm:$0xff]
      %v1853 = vld [vmem:[%s1 + $0x30] sm:$0xff]
      %v1854 = vld [vmem:[%s1 + $0x38] sm:$0xff]
      %v1855 = vld [vmem:[%s1 + $0x40] sm:$0xff]
      %v1856 = vld [vmem:[%s1 + $0x48] sm:$0xff]
      %v1857 = vld [vmem:[%s1 + $0x50] sm:$0xff]
      %v1858 = vld [vmem:[%s1 + $0x58] sm:$0xff]
      %v1859 = vld [vmem:[%s1 + $0x60] sm:$0xff]
      %v1860 = vld [vmem:[%s1 + $0x68] sm:$0xff]
      %v1861 = vld [vmem:[%s1 + $0x70] sm:$0xff]
      %v1862 = vld [vmem:[%s1 + $0x78] sm:$0xff]
      %v1863 = vmul.f32 %v373, 15.0
      %v1864 = vmul.f32 %v374, 15.0
      %v1865 = vmul.f32 %v375, 15.0
      %v1866 = vmul.f32 %v376, 15.0
      %v1867 = vmul.f32 %v377, 15.0
      %v1868 = vmul.f32 %v378, 15.0
      %v1869 = vmul.f32 %v379, 15.0
      %v1870 = vmul.f32 %v380, 15.0
      %v1871 = vmul.f32 %v381, 15.0
      %v1872 = vmul.f32 %v382, 15.0
      %v1873 = vmul.f32 %v383, 15.0
      %v1874 = vmul.f32 %v384, 15.0
      %v1875 = vmul.f32 %v385, 15.0
      %v1876 = vmul.f32 %v386, 15.0
      %v1877 = vmul.f32 %v387, 15.0
      %v1878 = vmul.f32 %v388, 15.0
      %v1879 = vmul.f32 %v389, 15.0
      %v1880 = vmul.f32 %v390, 15.0
      %v1881 = vmul.f32 %v391, 15.0
      %v1882 = vmul.f32 %v392, 15.0
      %v1883 = vmul.f32 %v393, 15.0
      %v1884 = vmul.f32 %v394, 15.0
      %v1885 = vmul.f32 %v395, 15.0
      %v1886 = vmul.f32 %v396, 15.0
      %v1887 = vmul.f32 %v397, 15.0
      %v1888 = vmul.f32 %v398, 15.0
      %v1889 = vmul.f32 %v399, 15.0
      %v1890 = vmul.f32 %v400, 15.0
      %v1891 = vmul.f32 %v401, 15.0
      %v1892 = vmul.f32 %v402, 15.0
      %v1893 = vmul.f32 %v403, 15.0
      %v1894 = vmul.f32 %v404, 15.0
      %v1895 = vmax.f32 %v1863, 0.0
      %v1896 = vmax.f32 %v1864, 0.0
      %v1897 = vmax.f32 %v1865, 0.0
      %v1898 = vmax.f32 %v1866, 0.0
      %v1899 = vmax.f32 %v1867, 0.0
      %v1900 = vmax.f32 %v1868, 0.0
      %v1901 = vmax.f32 %v1869, 0.0
      %v1902 = vmax.f32 %v1870, 0.0
      %v1903 = vmax.f32 %v1871, 0.0
      %v1904 = vmax.f32 %v1872, 0.0
      %v1905 = vmax.f32 %v1873, 0.0
      %v1906 = vmax.f32 %v1874, 0.0
      %v1907 = vmax.f32 %v1875, 0.0
      %v1908 = vmax.f32 %v1876, 0.0
      %v1909 = vmax.f32 %v1877, 0.0
      %v1910 = vmax.f32 %v1878, 0.0
      %v1911 = vmax.f32 %v1879, 0.0
      %v1912 = vmax.f32 %v1880, 0.0
      %v1913 = vmax.f32 %v1881, 0.0
      %v1914 = vmax.f32 %v1882, 0.0
      %v1915 = vmax.f32 %v1883, 0.0
      %v1916 = vmax.f32 %v1884, 0.0
      %v1917 = vmax.f32 %v1885, 0.0
      %v1918 = vmax.f32 %v1886, 0.0
      %v1919 = vmax.f32 %v1887, 0.0
      %v1920 = vmax.f32 %v1888, 0.0
      %v1921 = vmax.f32 %v1889, 0.0
      %v1922 = vmax.f32 %v1890, 0.0
      %v1923 = vmax.f32 %v1891, 0.0
      %v1924 = vmax.f32 %v1892, 0.0
      %v1925 = vmax.f32 %v1893, 0.0
      %v1926 = vmax.f32 %v1894, 0.0
      %v1927 = vmin.f32 %v1895, 15.0
      %v1928 = vmin.f32 %v1896, 15.0
      %v1929 = vmin.f32 %v1897, 15.0
      %v1930 = vmin.f32 %v1898, 15.0
      %v1931 = vmin.f32 %v1899, 15.0
      %v1932 = vmin.f32 %v1900, 15.0
      %v1933 = vmin.f32 %v1901, 15.0
      %v1934 = vmin.f32 %v1902, 15.0
      %v1935 = vmin.f32 %v1903, 15.0
      %v1936 = vmin.f32 %v1904, 15.0
      %v1937 = vmin.f32 %v1905, 15.0
      %v1938 = vmin.f32 %v1906, 15.0
      %v1939 = vmin.f32 %v1907, 15.0
      %v1940 = vmin.f32 %v1908, 15.0
      %v1941 = vmin.f32 %v1909, 15.0
      %v1942 = vmin.f32 %v1910, 15.0
      %v1943 = vmin.f32 %v1911, 15.0
      %v1944 = vmin.f32 %v1912, 15.0
      %v1945 = vmin.f32 %v1913, 15.0
      %v1946 = vmin.f32 %v1914, 15.0
      %v1947 = vmin.f32 %v1915, 15.0
      %v1948 = vmin.f32 %v1916, 15.0
      %v1949 = vmin.f32 %v1917, 15.0
      %v1950 = vmin.f32 %v1918, 15.0
      %v1951 = vmin.f32 %v1919, 15.0
      %v1952 = vmin.f32 %v1920, 15.0
      %v1953 = vmin.f32 %v1921, 15.0
      %v1954 = vmin.f32 %v1922, 15.0
      %v1955 = vmin.f32 %v1923, 15.0
      %v1956 = vmin.f32 %v1924, 15.0
      %v1957 = vmin.f32 %v1925, 15.0
      %v1958 = vmin.f32 %v1926, 15.0
      %v1959 = vfloor.f32 %v1927
      %v1960 = vfloor.f32 %v1928
      %v1961 = vfloor.f32 %v1929
      %v1962 = vfloor.f32 %v1930
      %v1963 = vfloor.f32 %v1931
      %v1964 = vfloor.f32 %v1932
      %v1965 = vfloor.f32 %v1933
      %v1966 = vfloor.f32 %v1934
      %v1967 = vfloor.f32 %v1935
      %v1968 = vfloor.f32 %v1936
      %v1969 = vfloor.f32 %v1937
      %v1970 = vfloor.f32 %v1938
      %v1971 = vfloor.f32 %v1939
      %v1972 = vfloor.f32 %v1940
      %v1973 = vfloor.f32 %v1941
      %v1974 = vfloor.f32 %v1942
      %v1975 = vfloor.f32 %v1943
      %v1976 = vfloor.f32 %v1944
      %v1977 = vfloor.f32 %v1945
      %v1978 = vfloor.f32 %v1946
      %v1979 = vfloor.f32 %v1947
      %v1980 = vfloor.f32 %v1948
      %v1981 = vfloor.f32 %v1949
      %v1982 = vfloor.f32 %v1950
      %v1983 = vfloor.f32 %v1951
      %v1984 = vfloor.f32 %v1952
      %v1985 = vfloor.f32 %v1953
      %v1986 = vfloor.f32 %v1954
      %v1987 = vfloor.f32 %v1955
      %v1988 = vfloor.f32 %v1956
      %v1989 = vfloor.f32 %v1957
      %v1990 = vfloor.f32 %v1958
      %v1991 = vsub.f32 %v1927, %v1959
      %v1992 = vsub.f32 %v1928, %v1960
      %v1993 = vsub.f32 %v1929, %v1961
      %v1994 = vsub.f32 %v1930, %v1962
      %v1995 = vsub.f32 %v1931, %v1963
      %v1996 = vsub.f32 %v1932, %v1964
      %v1997 = vsub.f32 %v1933, %v1965
      %v1998 = vsub.f32 %v1934, %v1966
      %v1999 = vsub.f32 %v1935, %v1967
      %v2000 = vsub.f32 %v1936, %v1968
      %v2001 = vsub.f32 %v1937, %v1969
      %v2002 = vsub.f32 %v1938, %v1970
      %v2003 = vsub.f32 %v1939, %v1971
      %v2004 = vsub.f32 %v1940, %v1972
      %v2005 = vsub.f32 %v1941, %v1973
      %v2006 = vsub.f32 %v1942, %v1974
      %v2007 = vsub.f32 %v1943, %v1975
      %v2008 = vsub.f32 %v1944, %v1976
      %v2009 = vsub.f32 %v1945, %v1977
      %v2010 = vsub.f32 %v1946, %v1978
      %v2011 = vsub.f32 %v1947, %v1979
      %v2012 = vsub.f32 %v1948, %v1980
      %v2013 = vsub.f32 %v1949, %v1981
      %v2014 = vsub.f32 %v1950, %v1982
      %v2015 = vsub.f32 %v1951, %v1983
      %v2016 = vsub.f32 %v1952, %v1984
      %v2017 = vsub.f32 %v1953, %v1985
      %v2018 = vsub.f32 %v1954, %v1986
      %v2019 = vsub.f32 %v1955, %v1987
      %v2020 = vsub.f32 %v1956, %v1988
      %v2021 = vsub.f32 %v1957, %v1989
      %v2022 = vsub.f32 %v1958, %v1990
      %v2023 = vcvt.f32.s32.to.zero.pseudo %v1959
      %v2024 = vcvt.f32.s32.to.zero.pseudo %v1960
      %v2025 = vcvt.f32.s32.to.zero.pseudo %v1961
      %v2026 = vcvt.f32.s32.to.zero.pseudo %v1962
      %v2027 = vcvt.f32.s32.to.zero.pseudo %v1963
      %v2028 = vcvt.f32.s32.to.zero.pseudo %v1964
      %v2029 = vcvt.f32.s32.to.zero.pseudo %v1965
      %v2030 = vcvt.f32.s32.to.zero.pseudo %v1966
      %v2031 = vcvt.f32.s32.to.zero.pseudo %v1967
      %v2032 = vcvt.f32.s32.to.zero.pseudo %v1968
      %v2033 = vcvt.f32.s32.to.zero.pseudo %v1969
      %v2034 = vcvt.f32.s32.to.zero.pseudo %v1970
      %v2035 = vcvt.f32.s32.to.zero.pseudo %v1971
      %v2036 = vcvt.f32.s32.to.zero.pseudo %v1972
      %v2037 = vcvt.f32.s32.to.zero.pseudo %v1973
      %v2038 = vcvt.f32.s32.to.zero.pseudo %v1974
      %v2039 = vcvt.f32.s32.to.zero.pseudo %v1975
      %v2040 = vcvt.f32.s32.to.zero.pseudo %v1976
      %v2041 = vcvt.f32.s32.to.zero.pseudo %v1977
      %v2042 = vcvt.f32.s32.to.zero.pseudo %v1978
      %v2043 = vcvt.f32.s32.to.zero.pseudo %v1979
      %v2044 = vcvt.f32.s32.to.zero.pseudo %v1980
      %v2045 = vcvt.f32.s32.to.zero.pseudo %v1981
      %v2046 = vcvt.f32.s32.to.zero.pseudo %v1982
      %v2047 = vcvt.f32.s32.to.zero.pseudo %v1983
      %v2048 = vcvt.f32.s32.to.zero.pseudo %v1984
      %v2049 = vcvt.f32.s32.to.zero.pseudo %v1985
      %v2050 = vcvt.f32.s32.to.zero.pseudo %v1986
      %v2051 = vcvt.f32.s32.to.zero.pseudo %v1987
      %v2052 = vcvt.f32.s32.to.zero.pseudo %v1988
      %v2053 = vcvt.f32.s32.to.zero.pseudo %v1989
      %v2054 = vcvt.f32.s32.to.zero.pseudo %v1990
      %v2055 = vadd.s32 %v2023, 1
      %v2056 = vadd.s32 %v2024, 1
      %v2057 = vadd.s32 %v2025, 1
      %v2058 = vadd.s32 %v2026, 1
      %v2059 = vadd.s32 %v2027, 1
      %v2060 = vadd.s32 %v2028, 1
      %v2061 = vadd.s32 %v2029, 1
      %v2062 = vadd.s32 %v2030, 1
      %v2063 = vadd.s32 %v2031, 1
      %v2064 = vadd.s32 %v2032, 1
      %v2065 = vadd.s32 %v2033, 1
      %v2066 = vadd.s32 %v2034, 1
      %v2067 = vadd.s32 %v2035, 1
      %v2068 = vadd.s32 %v2036, 1
      %v2069 = vadd.s32 %v2037, 1
      %v2070 = vadd.s32 %v2038, 1
      %v2071 = vadd.s32 %v2039, 1
      %v2072 = vadd.s32 %v2040, 1
      %v2073 = vadd.s32 %v2041, 1
      %v2074 = vadd.s32 %v2042, 1
      %v2075 = vadd.s32 %v2043, 1
      %v2076 = vadd.s32 %v2044, 1
      %v2077 = vadd.s32 %v2045, 1
      %v2078 = vadd.s32 %v2046, 1
      %v2079 = vadd.s32 %v2047, 1
      %v2080 = vadd.s32 %v2048, 1
      %v2081 = vadd.s32 %v2049, 1
      %v2082 = vadd.s32 %v2050, 1
      %v2083 = vadd.s32 %v2051, 1
      %v2084 = vadd.s32 %v2052, 1
      %v2085 = vadd.s32 %v2053, 1
      %v2086 = vadd.s32 %v2054, 1
      %vm2087 = vcmp.lt.s32.totalorder %v2055, 15
      %v2088 = vsel %vm2087, %v2055, 15
      %vm2089 = vcmp.lt.s32.totalorder %v2056, 15
      %v2090 = vsel %vm2089, %v2056, 15
      %vm2091 = vcmp.lt.s32.totalorder %v2057, 15
      %v2092 = vsel %vm2091, %v2057, 15
      %vm2093 = vcmp.lt.s32.totalorder %v2058, 15
      %v2094 = vsel %vm2093, %v2058, 15
      %vm2095 = vcmp.lt.s32.totalorder %v2059, 15
      %v2096 = vsel %vm2095, %v2059, 15
      %vm2097 = vcmp.lt.s32.totalorder %v2060, 15
      %v2098 = vsel %vm2097, %v2060, 15
      %vm2099 = vcmp.lt.s32.totalorder %v2061, 15
      %v2100 = vsel %vm2099, %v2061, 15
      %vm2101 = vcmp.lt.s32.totalorder %v2062, 15
      %v2102 = vsel %vm2101, %v2062, 15
      %vm2103 = vcmp.lt.s32.totalorder %v2063, 15
      %v2104 = vsel %vm2103, %v2063, 15
      %vm2105 = vcmp.lt.s32.totalorder %v2064, 15
      %v2106 = vsel %vm2105, %v2064, 15
      %vm2107 = vcmp.lt.s32.totalorder %v2065, 15
      %v2108 = vsel %vm2107, %v2065, 15
      %vm2109 = vcmp.lt.s32.totalorder %v2066, 15
      %v2110 = vsel %vm2109, %v2066, 15
      %vm2111 = vcmp.lt.s32.totalorder %v2067, 15
      %v2112 = vsel %vm2111, %v2067, 15
      %vm2113 = vcmp.lt.s32.totalorder %v2068, 15
      %v2114 = vsel %vm2113, %v2068, 15
      %vm2115 = vcmp.lt.s32.totalorder %v2069, 15
      %v2116 = vsel %vm2115, %v2069, 15
      %vm2117 = vcmp.lt.s32.totalorder %v2070, 15
      %v2118 = vsel %vm2117, %v2070, 15
      %vm2119 = vcmp.lt.s32.totalorder %v2071, 15
      %v2120 = vsel %vm2119, %v2071, 15
      %vm2121 = vcmp.lt.s32.totalorder %v2072, 15
      %v2122 = vsel %vm2121, %v2072, 15
      %vm2123 = vcmp.lt.s32.totalorder %v2073, 15
      %v2124 = vsel %vm2123, %v2073, 15
      %vm2125 = vcmp.lt.s32.totalorder %v2074, 15
      %v2126 = vsel %vm2125, %v2074, 15
      %vm2127 = vcmp.lt.s32.totalorder %v2075, 15
      %v2128 = vsel %vm2127, %v2075, 15
      %vm2129 = vcmp.lt.s32.totalorder %v2076, 15
      %v2130 = vsel %vm2129, %v2076, 15
      %vm2131 = vcmp.lt.s32.totalorder %v2077, 15
      %v2132 = vsel %vm2131, %v2077, 15
      %vm2133 = vcmp.lt.s32.totalorder %v2078, 15
      %v2134 = vsel %vm2133, %v2078, 15
      %vm2135 = vcmp.lt.s32.totalorder %v2079, 15
      %v2136 = vsel %vm2135, %v2079, 15
      %vm2137 = vcmp.lt.s32.totalorder %v2080, 15
      %v2138 = vsel %vm2137, %v2080, 15
      %vm2139 = vcmp.lt.s32.totalorder %v2081, 15
      %v2140 = vsel %vm2139, %v2081, 15
      %vm2141 = vcmp.lt.s32.totalorder %v2082, 15
      %v2142 = vsel %vm2141, %v2082, 15
      %vm2143 = vcmp.lt.s32.totalorder %v2083, 15
      %v2144 = vsel %vm2143, %v2083, 15
      %vm2145 = vcmp.lt.s32.totalorder %v2084, 15
      %v2146 = vsel %vm2145, %v2084, 15
      %vm2147 = vcmp.lt.s32.totalorder %v2085, 15
      %v2148 = vsel %vm2147, %v2085, 15
      %vm2149 = vcmp.lt.s32.totalorder %v2086, 15
      %v2150 = vsel %vm2149, %v2086, 15
      %2151 = vset.pattern.permute.xlu0 0
      %2152 = vperm.xlu0 %2151, %v2023
      %v2153 = vpop.permute.xlu0 %2152
      %2154 = vset.pattern.permute.xlu0 0
      %2155 = vperm.xlu0 %2154, %v2024
      %v2156 = vpop.permute.xlu0 %2155
      %2157 = vset.pattern.permute.xlu0 0
      %2158 = vperm.xlu0 %2157, %v2025
      %v2159 = vpop.permute.xlu0 %2158
      %2160 = vset.pattern.permute.xlu0 0
      %2161 = vperm.xlu0 %2160, %v2026
      %v2162 = vpop.permute.xlu0 %2161
      %2163 = vset.pattern.permute.xlu0 0
      %2164 = vperm.xlu0 %2163, %v2027
      %v2165 = vpop.permute.xlu0 %2164
      %2166 = vset.pattern.permute.xlu0 0
      %2167 = vperm.xlu0 %2166, %v2028
      %v2168 = vpop.permute.xlu0 %2167
      %2169 = vset.pattern.permute.xlu0 0
      %2170 = vperm.xlu0 %2169, %v2029
      %v2171 = vpop.permute.xlu0 %2170
      %2172 = vset.pattern.permute.xlu0 0
      %2173 = vperm.xlu0 %2172, %v2030
      %v2174 = vpop.permute.xlu0 %2173
      %2175 = vset.pattern.permute.xlu0 0
      %2176 = vperm.xlu0 %2175, %v2031
      %v2177 = vpop.permute.xlu0 %2176
      %2178 = vset.pattern.permute.xlu0 0
      %2179 = vperm.xlu0 %2178, %v2032
      %v2180 = vpop.permute.xlu0 %2179
      %2181 = vset.pattern.permute.xlu0 0
      %2182 = vperm.xlu0 %2181, %v2033
      %v2183 = vpop.permute.xlu0 %2182
      %2184 = vset.pattern.permute.xlu0 0
      %2185 = vperm.xlu0 %2184, %v2034
      %v2186 = vpop.permute.xlu0 %2185
      %2187 = vset.pattern.permute.xlu0 0
      %2188 = vperm.xlu0 %2187, %v2035
      %v2189 = vpop.permute.xlu0 %2188
      %2190 = vset.pattern.permute.xlu0 0
      %2191 = vperm.xlu0 %2190, %v2036
      %v2192 = vpop.permute.xlu0 %2191
      %2193 = vset.pattern.permute.xlu0 0
      %2194 = vperm.xlu0 %2193, %v2037
      %v2195 = vpop.permute.xlu0 %2194
      %2196 = vset.pattern.permute.xlu0 0
      %2197 = vperm.xlu0 %2196, %v2038
      %v2198 = vpop.permute.xlu0 %2197
      %2199 = vset.pattern.permute.xlu0 0
      %2200 = vperm.xlu0 %2199, %v2039
      %v2201 = vpop.permute.xlu0 %2200
      %2202 = vset.pattern.permute.xlu0 0
      %2203 = vperm.xlu0 %2202, %v2040
      %v2204 = vpop.permute.xlu0 %2203
      %2205 = vset.pattern.permute.xlu0 0
      %2206 = vperm.xlu0 %2205, %v2041
      %v2207 = vpop.permute.xlu0 %2206
      %2208 = vset.pattern.permute.xlu0 0
      %2209 = vperm.xlu0 %2208, %v2042
      %v2210 = vpop.permute.xlu0 %2209
      %2211 = vset.pattern.permute.xlu0 0
      %2212 = vperm.xlu0 %2211, %v2043
      %v2213 = vpop.permute.xlu0 %2212
      %2214 = vset.pattern.permute.xlu0 0
      %2215 = vperm.xlu0 %2214, %v2044
      %v2216 = vpop.permute.xlu0 %2215
      %2217 = vset.pattern.permute.xlu0 0
      %2218 = vperm.xlu0 %2217, %v2045
      %v2219 = vpop.permute.xlu0 %2218
      %2220 = vset.pattern.permute.xlu0 0
      %2221 = vperm.xlu0 %2220, %v2046
      %v2222 = vpop.permute.xlu0 %2221
      %2223 = vset.pattern.permute.xlu0 0
      %2224 = vperm.xlu0 %2223, %v2047
      %v2225 = vpop.permute.xlu0 %2224
      %2226 = vset.pattern.permute.xlu0 0
      %2227 = vperm.xlu0 %2226, %v2048
      %v2228 = vpop.permute.xlu0 %2227
      %2229 = vset.pattern.permute.xlu0 0
      %2230 = vperm.xlu0 %2229, %v2049
      %v2231 = vpop.permute.xlu0 %2230
      %2232 = vset.pattern.permute.xlu0 0
      %2233 = vperm.xlu0 %2232, %v2050
      %v2234 = vpop.permute.xlu0 %2233
      %2235 = vset.pattern.permute.xlu0 0
      %2236 = vperm.xlu0 %2235, %v2051
      %v2237 = vpop.permute.xlu0 %2236
      %2238 = vset.pattern.permute.xlu0 0
      %2239 = vperm.xlu0 %2238, %v2052
      %v2240 = vpop.permute.xlu0 %2239
      %2241 = vset.pattern.permute.xlu0 0
      %2242 = vperm.xlu0 %2241, %v2053
      %v2243 = vpop.permute.xlu0 %2242
      %2244 = vset.pattern.permute.xlu0 0
      %2245 = vperm.xlu0 %2244, %v2054
      %v2246 = vpop.permute.xlu0 %2245
      %vm2247 = vcmp.eq.s32.totalorder %v694, %v2153
      %vm2248 = vcmp.eq.s32.totalorder %v694, %v2156
      %vm2249 = vcmp.eq.s32.totalorder %v694, %v2159
      %vm2250 = vcmp.eq.s32.totalorder %v694, %v2162
      %vm2251 = vcmp.eq.s32.totalorder %v694, %v2165
      %vm2252 = vcmp.eq.s32.totalorder %v694, %v2168
      %vm2253 = vcmp.eq.s32.totalorder %v694, %v2171
      %vm2254 = vcmp.eq.s32.totalorder %v694, %v2174
      %vm2255 = vcmp.eq.s32.totalorder %v694, %v2177
      %vm2256 = vcmp.eq.s32.totalorder %v694, %v2180
      %vm2257 = vcmp.eq.s32.totalorder %v694, %v2183
      %vm2258 = vcmp.eq.s32.totalorder %v694, %v2186
      %vm2259 = vcmp.eq.s32.totalorder %v694, %v2189
      %vm2260 = vcmp.eq.s32.totalorder %v694, %v2192
      %vm2261 = vcmp.eq.s32.totalorder %v694, %v2195
      %vm2262 = vcmp.eq.s32.totalorder %v694, %v2198
      %vm2263 = vcmp.eq.s32.totalorder %v694, %v2201
      %vm2264 = vcmp.eq.s32.totalorder %v694, %v2204
      %vm2265 = vcmp.eq.s32.totalorder %v694, %v2207
      %vm2266 = vcmp.eq.s32.totalorder %v694, %v2210
      %vm2267 = vcmp.eq.s32.totalorder %v694, %v2213
      %vm2268 = vcmp.eq.s32.totalorder %v694, %v2216
      %vm2269 = vcmp.eq.s32.totalorder %v694, %v2219
      %vm2270 = vcmp.eq.s32.totalorder %v694, %v2222
      %vm2271 = vcmp.eq.s32.totalorder %v694, %v2225
      %vm2272 = vcmp.eq.s32.totalorder %v694, %v2228
      %vm2273 = vcmp.eq.s32.totalorder %v694, %v2231
      %vm2274 = vcmp.eq.s32.totalorder %v694, %v2234
      %vm2275 = vcmp.eq.s32.totalorder %v694, %v2237
      %vm2276 = vcmp.eq.s32.totalorder %v694, %v2240
      %vm2277 = vcmp.eq.s32.totalorder %v694, %v2243
      %vm2278 = vcmp.eq.s32.totalorder %v694, %v2246
      %v2279 = vsub.f32 1.0, %v1991
      %v2280 = vsub.f32 1.0, %v1992
      %v2281 = vsub.f32 1.0, %v1993
      %v2282 = vsub.f32 1.0, %v1994
      %v2283 = vsub.f32 1.0, %v1995
      %v2284 = vsub.f32 1.0, %v1996
      %v2285 = vsub.f32 1.0, %v1997
      %v2286 = vsub.f32 1.0, %v1998
      %v2287 = vsub.f32 1.0, %v1999
      %v2288 = vsub.f32 1.0, %v2000
      %v2289 = vsub.f32 1.0, %v2001
      %v2290 = vsub.f32 1.0, %v2002
      %v2291 = vsub.f32 1.0, %v2003
      %v2292 = vsub.f32 1.0, %v2004
      %v2293 = vsub.f32 1.0, %v2005
      %v2294 = vsub.f32 1.0, %v2006
      %v2295 = vsub.f32 1.0, %v2007
      %v2296 = vsub.f32 1.0, %v2008
      %v2297 = vsub.f32 1.0, %v2009
      %v2298 = vsub.f32 1.0, %v2010
      %v2299 = vsub.f32 1.0, %v2011
      %v2300 = vsub.f32 1.0, %v2012
      %v2301 = vsub.f32 1.0, %v2013
      %v2302 = vsub.f32 1.0, %v2014
      %v2303 = vsub.f32 1.0, %v2015
      %v2304 = vsub.f32 1.0, %v2016
      %v2305 = vsub.f32 1.0, %v2017
      %v2306 = vsub.f32 1.0, %v2018
      %v2307 = vsub.f32 1.0, %v2019
      %v2308 = vsub.f32 1.0, %v2020
      %v2309 = vsub.f32 1.0, %v2021
      %v2310 = vsub.f32 1.0, %v2022
      %2312 = vset.pattern.permute.xlu0 0
      %2313 = vperm.xlu0 %2312, %v2279
      %v2314 = vpop.permute.xlu0 %2313
      %2317 = vset.pattern.permute.xlu0 0
      %2318 = vperm.xlu0 %2317, %v2280
      %v2319 = vpop.permute.xlu0 %2318
      %2322 = vset.pattern.permute.xlu0 0
      %2323 = vperm.xlu0 %2322, %v2281
      %v2324 = vpop.permute.xlu0 %2323
      %2327 = vset.pattern.permute.xlu0 0
      %2328 = vperm.xlu0 %2327, %v2282
      %v2329 = vpop.permute.xlu0 %2328
      %2332 = vset.pattern.permute.xlu0 0
      %2333 = vperm.xlu0 %2332, %v2283
      %v2334 = vpop.permute.xlu0 %2333
      %2337 = vset.pattern.permute.xlu0 0
      %2338 = vperm.xlu0 %2337, %v2284
      %v2339 = vpop.permute.xlu0 %2338
      %2342 = vset.pattern.permute.xlu0 0
      %2343 = vperm.xlu0 %2342, %v2285
      %v2344 = vpop.permute.xlu0 %2343
      %2347 = vset.pattern.permute.xlu0 0
      %2348 = vperm.xlu0 %2347, %v2286
      %v2349 = vpop.permute.xlu0 %2348
      %2352 = vset.pattern.permute.xlu0 0
      %2353 = vperm.xlu0 %2352, %v2287
      %v2354 = vpop.permute.xlu0 %2353
      %2357 = vset.pattern.permute.xlu0 0
      %2358 = vperm.xlu0 %2357, %v2288
      %v2359 = vpop.permute.xlu0 %2358
      %2362 = vset.pattern.permute.xlu0 0
      %2363 = vperm.xlu0 %2362, %v2289
      %v2364 = vpop.permute.xlu0 %2363
      %2367 = vset.pattern.permute.xlu0 0
      %2368 = vperm.xlu0 %2367, %v2290
      %v2369 = vpop.permute.xlu0 %2368
      %2372 = vset.pattern.permute.xlu0 0
      %2373 = vperm.xlu0 %2372, %v2291
      %v2374 = vpop.permute.xlu0 %2373
      %2377 = vset.pattern.permute.xlu0 0
      %2378 = vperm.xlu0 %2377, %v2292
      %v2379 = vpop.permute.xlu0 %2378
      %2382 = vset.pattern.permute.xlu0 0
      %2383 = vperm.xlu0 %2382, %v2293
      %v2384 = vpop.permute.xlu0 %2383
      %2387 = vset.pattern.permute.xlu0 0
      %2388 = vperm.xlu0 %2387, %v2294
      %v2389 = vpop.permute.xlu0 %2388
      %2392 = vset.pattern.permute.xlu0 0
      %2393 = vperm.xlu0 %2392, %v2295
      %v2394 = vpop.permute.xlu0 %2393
      %2397 = vset.pattern.permute.xlu0 0
      %2398 = vperm.xlu0 %2397, %v2296
      %v2399 = vpop.permute.xlu0 %2398
      %2402 = vset.pattern.permute.xlu0 0
      %2403 = vperm.xlu0 %2402, %v2297
      %v2404 = vpop.permute.xlu0 %2403
      %2407 = vset.pattern.permute.xlu0 0
      %2408 = vperm.xlu0 %2407, %v2298
      %v2409 = vpop.permute.xlu0 %2408
      %2412 = vset.pattern.permute.xlu0 0
      %2413 = vperm.xlu0 %2412, %v2299
      %v2414 = vpop.permute.xlu0 %2413
      %2417 = vset.pattern.permute.xlu0 0
      %2418 = vperm.xlu0 %2417, %v2300
      %v2419 = vpop.permute.xlu0 %2418
      %2422 = vset.pattern.permute.xlu0 0
      %2423 = vperm.xlu0 %2422, %v2301
      %v2424 = vpop.permute.xlu0 %2423
      %2427 = vset.pattern.permute.xlu0 0
      %2428 = vperm.xlu0 %2427, %v2302
      %v2429 = vpop.permute.xlu0 %2428
      %2432 = vset.pattern.permute.xlu0 0
      %2433 = vperm.xlu0 %2432, %v2303
      %v2434 = vpop.permute.xlu0 %2433
      %2437 = vset.pattern.permute.xlu0 0
      %2438 = vperm.xlu0 %2437, %v2304
      %v2439 = vpop.permute.xlu0 %2438
      %2442 = vset.pattern.permute.xlu0 0
      %2443 = vperm.xlu0 %2442, %v2305
      %v2444 = vpop.permute.xlu0 %2443
      %2447 = vset.pattern.permute.xlu0 0
      %2448 = vperm.xlu0 %2447, %v2306
      %v2449 = vpop.permute.xlu0 %2448
      %2452 = vset.pattern.permute.xlu0 0
      %2453 = vperm.xlu0 %2452, %v2307
      %v2454 = vpop.permute.xlu0 %2453
      %2457 = vset.pattern.permute.xlu0 0
      %2458 = vperm.xlu0 %2457, %v2308
      %v2459 = vpop.permute.xlu0 %2458
      %2462 = vset.pattern.permute.xlu0 0
      %2463 = vperm.xlu0 %2462, %v2309
      %v2464 = vpop.permute.xlu0 %2463
      %2467 = vset.pattern.permute.xlu0 0
      %2468 = vperm.xlu0 %2467, %v2310
      %v2469 = vpop.permute.xlu0 %2468
      %v2471 = vsel %vm2247, %v2314, 0.0
      %v2472 = vsel %vm2248, %v2319, 0.0
      %v2473 = vsel %vm2249, %v2324, 0.0
      %v2474 = vsel %vm2250, %v2329, 0.0
      %v2475 = vsel %vm2251, %v2334, 0.0
      %v2476 = vsel %vm2252, %v2339, 0.0
      %v2477 = vsel %vm2253, %v2344, 0.0
      %v2478 = vsel %vm2254, %v2349, 0.0
      %v2479 = vsel %vm2255, %v2354, 0.0
      %v2480 = vsel %vm2256, %v2359, 0.0
      %v2481 = vsel %vm2257, %v2364, 0.0
      %v2482 = vsel %vm2258, %v2369, 0.0
      %v2483 = vsel %vm2259, %v2374, 0.0
      %v2484 = vsel %vm2260, %v2379, 0.0
      %v2485 = vsel %vm2261, %v2384, 0.0
      %v2486 = vsel %vm2262, %v2389, 0.0
      %v2487 = vsel %vm2263, %v2394, 0.0
      %v2488 = vsel %vm2264, %v2399, 0.0
      %v2489 = vsel %vm2265, %v2404, 0.0
      %v2490 = vsel %vm2266, %v2409, 0.0
      %v2491 = vsel %vm2267, %v2414, 0.0
      %v2492 = vsel %vm2268, %v2419, 0.0
      %v2493 = vsel %vm2269, %v2424, 0.0
      %v2494 = vsel %vm2270, %v2429, 0.0
      %v2495 = vsel %vm2271, %v2434, 0.0
      %v2496 = vsel %vm2272, %v2439, 0.0
      %v2497 = vsel %vm2273, %v2444, 0.0
      %v2498 = vsel %vm2274, %v2449, 0.0
      %v2499 = vsel %vm2275, %v2454, 0.0
      %v2500 = vsel %vm2276, %v2459, 0.0
      %v2501 = vsel %vm2277, %v2464, 0.0
      %v2502 = vsel %vm2278, %v2469, 0.0
      %2503 = vset.pattern.permute.xlu0 0
      %2504 = vperm.xlu0 %2503, %v2088
      %v2505 = vpop.permute.xlu0 %2504
      %2506 = vset.pattern.permute.xlu0 0
      %2507 = vperm.xlu0 %2506, %v2090
      %v2508 = vpop.permute.xlu0 %2507
      %2509 = vset.pattern.permute.xlu0 0
      %2510 = vperm.xlu0 %2509, %v2092
      %v2511 = vpop.permute.xlu0 %2510
      %2512 = vset.pattern.permute.xlu0 0
      %2513 = vperm.xlu0 %2512, %v2094
      %v2514 = vpop.permute.xlu0 %2513
      %2515 = vset.pattern.permute.xlu0 0
      %2516 = vperm.xlu0 %2515, %v2096
      %v2517 = vpop.permute.xlu0 %2516
      %2518 = vset.pattern.permute.xlu0 0
      %2519 = vperm.xlu0 %2518, %v2098
      %v2520 = vpop.permute.xlu0 %2519
      %2521 = vset.pattern.permute.xlu0 0
      %2522 = vperm.xlu0 %2521, %v2100
      %v2523 = vpop.permute.xlu0 %2522
      %2524 = vset.pattern.permute.xlu0 0
      %2525 = vperm.xlu0 %2524, %v2102
      %v2526 = vpop.permute.xlu0 %2525
      %2527 = vset.pattern.permute.xlu0 0
      %2528 = vperm.xlu0 %2527, %v2104
      %v2529 = vpop.permute.xlu0 %2528
      %2530 = vset.pattern.permute.xlu0 0
      %2531 = vperm.xlu0 %2530, %v2106
      %v2532 = vpop.permute.xlu0 %2531
      %2533 = vset.pattern.permute.xlu0 0
      %2534 = vperm.xlu0 %2533, %v2108
      %v2535 = vpop.permute.xlu0 %2534
      %2536 = vset.pattern.permute.xlu0 0
      %2537 = vperm.xlu0 %2536, %v2110
      %v2538 = vpop.permute.xlu0 %2537
      %2539 = vset.pattern.permute.xlu0 0
      %2540 = vperm.xlu0 %2539, %v2112
      %v2541 = vpop.permute.xlu0 %2540
      %2542 = vset.pattern.permute.xlu0 0
      %2543 = vperm.xlu0 %2542, %v2114
      %v2544 = vpop.permute.xlu0 %2543
      %2545 = vset.pattern.permute.xlu0 0
      %2546 = vperm.xlu0 %2545, %v2116
      %v2547 = vpop.permute.xlu0 %2546
      %2548 = vset.pattern.permute.xlu0 0
      %2549 = vperm.xlu0 %2548, %v2118
      %v2550 = vpop.permute.xlu0 %2549
      %2551 = vset.pattern.permute.xlu0 0
      %2552 = vperm.xlu0 %2551, %v2120
      %v2553 = vpop.permute.xlu0 %2552
      %2554 = vset.pattern.permute.xlu0 0
      %2555 = vperm.xlu0 %2554, %v2122
      %v2556 = vpop.permute.xlu0 %2555
      %2557 = vset.pattern.permute.xlu0 0
      %2558 = vperm.xlu0 %2557, %v2124
      %v2559 = vpop.permute.xlu0 %2558
      %2560 = vset.pattern.permute.xlu0 0
      %2561 = vperm.xlu0 %2560, %v2126
      %v2562 = vpop.permute.xlu0 %2561
      %2563 = vset.pattern.permute.xlu0 0
      %2564 = vperm.xlu0 %2563, %v2128
      %v2565 = vpop.permute.xlu0 %2564
      %2566 = vset.pattern.permute.xlu0 0
      %2567 = vperm.xlu0 %2566, %v2130
      %v2568 = vpop.permute.xlu0 %2567
      %2569 = vset.pattern.permute.xlu0 0
      %2570 = vperm.xlu0 %2569, %v2132
      %v2571 = vpop.permute.xlu0 %2570
      %2572 = vset.pattern.permute.xlu0 0
      %2573 = vperm.xlu0 %2572, %v2134
      %v2574 = vpop.permute.xlu0 %2573
      %2575 = vset.pattern.permute.xlu0 0
      %2576 = vperm.xlu0 %2575, %v2136
      %v2577 = vpop.permute.xlu0 %2576
      %2578 = vset.pattern.permute.xlu0 0
      %2579 = vperm.xlu0 %2578, %v2138
      %v2580 = vpop.permute.xlu0 %2579
      %2581 = vset.pattern.permute.xlu0 0
      %2582 = vperm.xlu0 %2581, %v2140
      %v2583 = vpop.permute.xlu0 %2582
      %2584 = vset.pattern.permute.xlu0 0
      %2585 = vperm.xlu0 %2584, %v2142
      %v2586 = vpop.permute.xlu0 %2585
      %2587 = vset.pattern.permute.xlu0 0
      %2588 = vperm.xlu0 %2587, %v2144
      %v2589 = vpop.permute.xlu0 %2588
      %2590 = vset.pattern.permute.xlu0 0
      %2591 = vperm.xlu0 %2590, %v2146
      %v2592 = vpop.permute.xlu0 %2591
      %2593 = vset.pattern.permute.xlu0 0
      %2594 = vperm.xlu0 %2593, %v2148
      %v2595 = vpop.permute.xlu0 %2594
      %2596 = vset.pattern.permute.xlu0 0
      %2597 = vperm.xlu0 %2596, %v2150
      %v2598 = vpop.permute.xlu0 %2597
      %vm2599 = vcmp.eq.s32.totalorder %v694, %v2505
      %vm2600 = vcmp.eq.s32.totalorder %v694, %v2508
      %vm2601 = vcmp.eq.s32.totalorder %v694, %v2511
      %vm2602 = vcmp.eq.s32.totalorder %v694, %v2514
      %vm2603 = vcmp.eq.s32.totalorder %v694, %v2517
      %vm2604 = vcmp.eq.s32.totalorder %v694, %v2520
      %vm2605 = vcmp.eq.s32.totalorder %v694, %v2523
      %vm2606 = vcmp.eq.s32.totalorder %v694, %v2526
      %vm2607 = vcmp.eq.s32.totalorder %v694, %v2529
      %vm2608 = vcmp.eq.s32.totalorder %v694, %v2532
      %vm2609 = vcmp.eq.s32.totalorder %v694, %v2535
      %vm2610 = vcmp.eq.s32.totalorder %v694, %v2538
      %vm2611 = vcmp.eq.s32.totalorder %v694, %v2541
      %vm2612 = vcmp.eq.s32.totalorder %v694, %v2544
      %vm2613 = vcmp.eq.s32.totalorder %v694, %v2547
      %vm2614 = vcmp.eq.s32.totalorder %v694, %v2550
      %vm2615 = vcmp.eq.s32.totalorder %v694, %v2553
      %vm2616 = vcmp.eq.s32.totalorder %v694, %v2556
      %vm2617 = vcmp.eq.s32.totalorder %v694, %v2559
      %vm2618 = vcmp.eq.s32.totalorder %v694, %v2562
      %vm2619 = vcmp.eq.s32.totalorder %v694, %v2565
      %vm2620 = vcmp.eq.s32.totalorder %v694, %v2568
      %vm2621 = vcmp.eq.s32.totalorder %v694, %v2571
      %vm2622 = vcmp.eq.s32.totalorder %v694, %v2574
      %vm2623 = vcmp.eq.s32.totalorder %v694, %v2577
      %vm2624 = vcmp.eq.s32.totalorder %v694, %v2580
      %vm2625 = vcmp.eq.s32.totalorder %v694, %v2583
      %vm2626 = vcmp.eq.s32.totalorder %v694, %v2586
      %vm2627 = vcmp.eq.s32.totalorder %v694, %v2589
      %vm2628 = vcmp.eq.s32.totalorder %v694, %v2592
      %vm2629 = vcmp.eq.s32.totalorder %v694, %v2595
      %vm2630 = vcmp.eq.s32.totalorder %v694, %v2598
      %2632 = vset.pattern.permute.xlu0 0
      %2633 = vperm.xlu0 %2632, %v1991
      %v2634 = vpop.permute.xlu0 %2633
      %2637 = vset.pattern.permute.xlu0 0
      %2638 = vperm.xlu0 %2637, %v1992
      %v2639 = vpop.permute.xlu0 %2638
      %2642 = vset.pattern.permute.xlu0 0
      %2643 = vperm.xlu0 %2642, %v1993
      %v2644 = vpop.permute.xlu0 %2643
      %2647 = vset.pattern.permute.xlu0 0
      %2648 = vperm.xlu0 %2647, %v1994
      %v2649 = vpop.permute.xlu0 %2648
      %2652 = vset.pattern.permute.xlu0 0
      %2653 = vperm.xlu0 %2652, %v1995
      %v2654 = vpop.permute.xlu0 %2653
      %2657 = vset.pattern.permute.xlu0 0
      %2658 = vperm.xlu0 %2657, %v1996
      %v2659 = vpop.permute.xlu0 %2658
      %2662 = vset.pattern.permute.xlu0 0
      %2663 = vperm.xlu0 %2662, %v1997
      %v2664 = vpop.permute.xlu0 %2663
      %2667 = vset.pattern.permute.xlu0 0
      %2668 = vperm.xlu0 %2667, %v1998
      %v2669 = vpop.permute.xlu0 %2668
      %2672 = vset.pattern.permute.xlu0 0
      %2673 = vperm.xlu0 %2672, %v1999
      %v2674 = vpop.permute.xlu0 %2673
      %2677 = vset.pattern.permute.xlu0 0
      %2678 = vperm.xlu0 %2677, %v2000
      %v2679 = vpop.permute.xlu0 %2678
      %2682 = vset.pattern.permute.xlu0 0
      %2683 = vperm.xlu0 %2682, %v2001
      %v2684 = vpop.permute.xlu0 %2683
      %2687 = vset.pattern.permute.xlu0 0
      %2688 = vperm.xlu0 %2687, %v2002
      %v2689 = vpop.permute.xlu0 %2688
      %2692 = vset.pattern.permute.xlu0 0
      %2693 = vperm.xlu0 %2692, %v2003
      %v2694 = vpop.permute.xlu0 %2693
      %2697 = vset.pattern.permute.xlu0 0
      %2698 = vperm.xlu0 %2697, %v2004
      %v2699 = vpop.permute.xlu0 %2698
      %2702 = vset.pattern.permute.xlu0 0
      %2703 = vperm.xlu0 %2702, %v2005
      %v2704 = vpop.permute.xlu0 %2703
      %2707 = vset.pattern.permute.xlu0 0
      %2708 = vperm.xlu0 %2707, %v2006
      %v2709 = vpop.permute.xlu0 %2708
      %2712 = vset.pattern.permute.xlu0 0
      %2713 = vperm.xlu0 %2712, %v2007
      %v2714 = vpop.permute.xlu0 %2713
      %2717 = vset.pattern.permute.xlu0 0
      %2718 = vperm.xlu0 %2717, %v2008
      %v2719 = vpop.permute.xlu0 %2718
      %2722 = vset.pattern.permute.xlu0 0
      %2723 = vperm.xlu0 %2722, %v2009
      %v2724 = vpop.permute.xlu0 %2723
      %2727 = vset.pattern.permute.xlu0 0
      %2728 = vperm.xlu0 %2727, %v2010
      %v2729 = vpop.permute.xlu0 %2728
      %2732 = vset.pattern.permute.xlu0 0
      %2733 = vperm.xlu0 %2732, %v2011
      %v2734 = vpop.permute.xlu0 %2733
      %2737 = vset.pattern.permute.xlu0 0
      %2738 = vperm.xlu0 %2737, %v2012
      %v2739 = vpop.permute.xlu0 %2738
      %2742 = vset.pattern.permute.xlu0 0
      %2743 = vperm.xlu0 %2742, %v2013
      %v2744 = vpop.permute.xlu0 %2743
      %2747 = vset.pattern.permute.xlu0 0
      %2748 = vperm.xlu0 %2747, %v2014
      %v2749 = vpop.permute.xlu0 %2748
      %2752 = vset.pattern.permute.xlu0 0
      %2753 = vperm.xlu0 %2752, %v2015
      %v2754 = vpop.permute.xlu0 %2753
      %2757 = vset.pattern.permute.xlu0 0
      %2758 = vperm.xlu0 %2757, %v2016
      %v2759 = vpop.permute.xlu0 %2758
      %2762 = vset.pattern.permute.xlu0 0
      %2763 = vperm.xlu0 %2762, %v2017
      %v2764 = vpop.permute.xlu0 %2763
      %2767 = vset.pattern.permute.xlu0 0
      %2768 = vperm.xlu0 %2767, %v2018
      %v2769 = vpop.permute.xlu0 %2768
      %2772 = vset.pattern.permute.xlu0 0
      %2773 = vperm.xlu0 %2772, %v2019
      %v2774 = vpop.permute.xlu0 %2773
      %2777 = vset.pattern.permute.xlu0 0
      %2778 = vperm.xlu0 %2777, %v2020
      %v2779 = vpop.permute.xlu0 %2778
      %2782 = vset.pattern.permute.xlu0 0
      %2783 = vperm.xlu0 %2782, %v2021
      %v2784 = vpop.permute.xlu0 %2783
      %2787 = vset.pattern.permute.xlu0 0
      %2788 = vperm.xlu0 %2787, %v2022
      %v2789 = vpop.permute.xlu0 %2788
      %v2791 = vsel %vm2599, %v2634, 0.0
      %v2792 = vsel %vm2600, %v2639, 0.0
      %v2793 = vsel %vm2601, %v2644, 0.0
      %v2794 = vsel %vm2602, %v2649, 0.0
      %v2795 = vsel %vm2603, %v2654, 0.0
      %v2796 = vsel %vm2604, %v2659, 0.0
      %v2797 = vsel %vm2605, %v2664, 0.0
      %v2798 = vsel %vm2606, %v2669, 0.0
      %v2799 = vsel %vm2607, %v2674, 0.0
      %v2800 = vsel %vm2608, %v2679, 0.0
      %v2801 = vsel %vm2609, %v2684, 0.0
      %v2802 = vsel %vm2610, %v2689, 0.0
      %v2803 = vsel %vm2611, %v2694, 0.0
      %v2804 = vsel %vm2612, %v2699, 0.0
      %v2805 = vsel %vm2613, %v2704, 0.0
      %v2806 = vsel %vm2614, %v2709, 0.0
      %v2807 = vsel %vm2615, %v2714, 0.0
      %v2808 = vsel %vm2616, %v2719, 0.0
      %v2809 = vsel %vm2617, %v2724, 0.0
      %v2810 = vsel %vm2618, %v2729, 0.0
      %v2811 = vsel %vm2619, %v2734, 0.0
      %v2812 = vsel %vm2620, %v2739, 0.0
      %v2813 = vsel %vm2621, %v2744, 0.0
      %v2814 = vsel %vm2622, %v2749, 0.0
      %v2815 = vsel %vm2623, %v2754, 0.0
      %v2816 = vsel %vm2624, %v2759, 0.0
      %v2817 = vsel %vm2625, %v2764, 0.0
      %v2818 = vsel %vm2626, %v2769, 0.0
      %v2819 = vsel %vm2627, %v2774, 0.0
      %v2820 = vsel %vm2628, %v2779, 0.0
      %v2821 = vsel %vm2629, %v2784, 0.0
      %v2822 = vsel %vm2630, %v2789, 0.0
      %v2823 = vadd.f32 %v2471, %v2791
      %v2824 = vadd.f32 %v2472, %v2792
      %v2825 = vadd.f32 %v2473, %v2793
      %v2826 = vadd.f32 %v2474, %v2794
      %v2827 = vadd.f32 %v2475, %v2795
      %v2828 = vadd.f32 %v2476, %v2796
      %v2829 = vadd.f32 %v2477, %v2797
      %v2830 = vadd.f32 %v2478, %v2798
      %v2831 = vadd.f32 %v2479, %v2799
      %v2832 = vadd.f32 %v2480, %v2800
      %v2833 = vadd.f32 %v2481, %v2801
      %v2834 = vadd.f32 %v2482, %v2802
      %v2835 = vadd.f32 %v2483, %v2803
      %v2836 = vadd.f32 %v2484, %v2804
      %v2837 = vadd.f32 %v2485, %v2805
      %v2838 = vadd.f32 %v2486, %v2806
      %v2839 = vadd.f32 %v2487, %v2807
      %v2840 = vadd.f32 %v2488, %v2808
      %v2841 = vadd.f32 %v2489, %v2809
      %v2842 = vadd.f32 %v2490, %v2810
      %v2843 = vadd.f32 %v2491, %v2811
      %v2844 = vadd.f32 %v2492, %v2812
      %v2845 = vadd.f32 %v2493, %v2813
      %v2846 = vadd.f32 %v2494, %v2814
      %v2847 = vadd.f32 %v2495, %v2815
      %v2848 = vadd.f32 %v2496, %v2816
      %v2849 = vadd.f32 %v2497, %v2817
      %v2850 = vadd.f32 %v2498, %v2818
      %v2851 = vadd.f32 %v2499, %v2819
      %v2852 = vadd.f32 %v2500, %v2820
      %v2853 = vadd.f32 %v2501, %v2821
      %v2854 = vadd.f32 %v2502, %v2822
      %v2855 = vld [vmem:[%s2] sm:$0xff]
      %v2856 = vld [vmem:[%s2 + $0x8] sm:$0xff]
      %v2857 = vld [vmem:[%s2 + $0x10] sm:$0xff]
      %v2858 = vld [vmem:[%s2 + $0x18] sm:$0xff]
      %v2859 = vld [vmem:[%s2 + $0x20] sm:$0xff]
      %v2860 = vld [vmem:[%s2 + $0x28] sm:$0xff]
      %v2861 = vld [vmem:[%s2 + $0x30] sm:$0xff]
      %v2862 = vld [vmem:[%s2 + $0x38] sm:$0xff]
      %v2863 = vld [vmem:[%s2 + $0x40] sm:$0xff]
      %v2864 = vld [vmem:[%s2 + $0x48] sm:$0xff]
      %v2865 = vld [vmem:[%s2 + $0x50] sm:$0xff]
      %v2866 = vld [vmem:[%s2 + $0x58] sm:$0xff]
      %v2867 = vld [vmem:[%s2 + $0x60] sm:$0xff]
      %v2868 = vld [vmem:[%s2 + $0x68] sm:$0xff]
      %v2869 = vld [vmem:[%s2 + $0x70] sm:$0xff]
      %v2870 = vld [vmem:[%s2 + $0x78] sm:$0xff]
      %2871 = vmatpush.msra.mxu0 %v2870
      %2872 = vmatpush.msra.mxu0 %v2869
      %2873 = vmatpush.msra.mxu0 %v2868
      %2874 = vmatpush.msra.mxu0 %v2867
      %2875 = vmatpush.msra.mxu0 %v2866
      %2876 = vmatpush.msra.mxu0 %v2865
      %2877 = vmatpush.msra.mxu0 %v2864
      %2878 = vmatpush.msra.mxu0 %v2863
      %2879 = vmatpush.msra.mxu0 %v2862
      %2880 = vmatpush.msra.mxu0 %v2861
      %2881 = vmatpush.msra.mxu0 %v2860
      %2882 = vmatpush.msra.mxu0 %v2859
      %2883 = vmatpush.msra.mxu0 %v2858
      %2884 = vmatpush.msra.mxu0 %v2857
      %2885 = vmatpush.msra.mxu0 %v2856
      %2886 = vmatpush.msra.mxu0 %v2855
      %2887 = vmatmul.f32.gmra.mxu0 %v2823
      %v2888 = vpop.f32.mrf.mxu0
      %v2889 = vadd.f32 0.0, %v2888
      %2890 = vmatmul.f32.gmra.mxu0 %v2824
      %v2891 = vpop.f32.mrf.mxu0
      %v2892 = vadd.f32 0.0, %v2891
      %2893 = vmatmul.f32.gmra.mxu0 %v2825
      %v2894 = vpop.f32.mrf.mxu0
      %v2895 = vadd.f32 0.0, %v2894
      %2896 = vmatmul.f32.gmra.mxu0 %v2826
      %v2897 = vpop.f32.mrf.mxu0
      %v2898 = vadd.f32 0.0, %v2897
      %2899 = vmatmul.f32.gmra.mxu0 %v2827
      %v2900 = vpop.f32.mrf.mxu0
      %v2901 = vadd.f32 0.0, %v2900
      %2902 = vmatmul.f32.gmra.mxu0 %v2828
      %v2903 = vpop.f32.mrf.mxu0
      %v2904 = vadd.f32 0.0, %v2903
      %2905 = vmatmul.f32.gmra.mxu0 %v2829
      %v2906 = vpop.f32.mrf.mxu0
      %v2907 = vadd.f32 0.0, %v2906
      %2908 = vmatmul.f32.gmra.mxu0 %v2830
      %v2909 = vpop.f32.mrf.mxu0
      %v2910 = vadd.f32 0.0, %v2909
      %2911 = vmatmul.f32.gmra.mxu0 %v2831
      %v2912 = vpop.f32.mrf.mxu0
      %v2913 = vadd.f32 0.0, %v2912
      %2914 = vmatmul.f32.gmra.mxu0 %v2832
      %v2915 = vpop.f32.mrf.mxu0
      %v2916 = vadd.f32 0.0, %v2915
      %2917 = vmatmul.f32.gmra.mxu0 %v2833
      %v2918 = vpop.f32.mrf.mxu0
      %v2919 = vadd.f32 0.0, %v2918
      %2920 = vmatmul.f32.gmra.mxu0 %v2834
      %v2921 = vpop.f32.mrf.mxu0
      %v2922 = vadd.f32 0.0, %v2921
      %2923 = vmatmul.f32.gmra.mxu0 %v2835
      %v2924 = vpop.f32.mrf.mxu0
      %v2925 = vadd.f32 0.0, %v2924
      %2926 = vmatmul.f32.gmra.mxu0 %v2836
      %v2927 = vpop.f32.mrf.mxu0
      %v2928 = vadd.f32 0.0, %v2927
      %2929 = vmatmul.f32.gmra.mxu0 %v2837
      %v2930 = vpop.f32.mrf.mxu0
      %v2931 = vadd.f32 0.0, %v2930
      %2932 = vmatmul.f32.gmra.mxu0 %v2838
      %v2933 = vpop.f32.mrf.mxu0
      %v2934 = vadd.f32 0.0, %v2933
      %2935 = vmatmul.f32.gmra.mxu0 %v2839
      %v2936 = vpop.f32.mrf.mxu0
      %v2937 = vadd.f32 0.0, %v2936
      %2938 = vmatmul.f32.gmra.mxu0 %v2840
      %v2939 = vpop.f32.mrf.mxu0
      %v2940 = vadd.f32 0.0, %v2939
      %2941 = vmatmul.f32.gmra.mxu0 %v2841
      %v2942 = vpop.f32.mrf.mxu0
      %v2943 = vadd.f32 0.0, %v2942
      %2944 = vmatmul.f32.gmra.mxu0 %v2842
      %v2945 = vpop.f32.mrf.mxu0
      %v2946 = vadd.f32 0.0, %v2945
      %2947 = vmatmul.f32.gmra.mxu0 %v2843
      %v2948 = vpop.f32.mrf.mxu0
      %v2949 = vadd.f32 0.0, %v2948
      %2950 = vmatmul.f32.gmra.mxu0 %v2844
      %v2951 = vpop.f32.mrf.mxu0
      %v2952 = vadd.f32 0.0, %v2951
      %2953 = vmatmul.f32.gmra.mxu0 %v2845
      %v2954 = vpop.f32.mrf.mxu0
      %v2955 = vadd.f32 0.0, %v2954
      %2956 = vmatmul.f32.gmra.mxu0 %v2846
      %v2957 = vpop.f32.mrf.mxu0
      %v2958 = vadd.f32 0.0, %v2957
      %2959 = vmatmul.f32.gmra.mxu0 %v2847
      %v2960 = vpop.f32.mrf.mxu0
      %v2961 = vadd.f32 0.0, %v2960
      %2962 = vmatmul.f32.gmra.mxu0 %v2848
      %v2963 = vpop.f32.mrf.mxu0
      %v2964 = vadd.f32 0.0, %v2963
      %2965 = vmatmul.f32.gmra.mxu0 %v2849
      %v2966 = vpop.f32.mrf.mxu0
      %v2967 = vadd.f32 0.0, %v2966
      %2968 = vmatmul.f32.gmra.mxu0 %v2850
      %v2969 = vpop.f32.mrf.mxu0
      %v2970 = vadd.f32 0.0, %v2969
      %2971 = vmatmul.f32.gmra.mxu0 %v2851
      %v2972 = vpop.f32.mrf.mxu0
      %v2973 = vadd.f32 0.0, %v2972
      %2974 = vmatmul.f32.gmra.mxu0 %v2852
      %v2975 = vpop.f32.mrf.mxu0
      %v2976 = vadd.f32 0.0, %v2975
      %2977 = vmatmul.f32.gmra.mxu0 %v2853
      %v2978 = vpop.f32.mrf.mxu0
      %v2979 = vadd.f32 0.0, %v2978
      %2980 = vmatmul.f32.gmra.mxu0 %v2854
      %v2981 = vpop.f32.mrf.mxu0
      %v2982 = vadd.f32 0.0, %v2981
      %2983 = vdwg.mxu0
      %v2984 = vmul.f32 %v2889, %v1815
      %v2985 = vmul.f32 %v2892, %v1816
      %v2986 = vmul.f32 %v2895, %v1817
      %v2987 = vmul.f32 %v2898, %v1818
      %v2988 = vmul.f32 %v2901, %v1819
      %v2989 = vmul.f32 %v2904, %v1820
      %v2990 = vmul.f32 %v2907, %v1821
      %v2991 = vmul.f32 %v2910, %v1822
      %v2992 = vmul.f32 %v2913, %v1823
      %v2993 = vmul.f32 %v2916, %v1824
      %v2994 = vmul.f32 %v2919, %v1825
      %v2995 = vmul.f32 %v2922, %v1826
      %v2996 = vmul.f32 %v2925, %v1827
      %v2997 = vmul.f32 %v2928, %v1828
      %v2998 = vmul.f32 %v2931, %v1829
      %v2999 = vmul.f32 %v2934, %v1830
      %v3000 = vmul.f32 %v2937, %v1831
      %v3001 = vmul.f32 %v2940, %v1832
      %v3002 = vmul.f32 %v2943, %v1833
      %v3003 = vmul.f32 %v2946, %v1834
      %v3004 = vmul.f32 %v2949, %v1835
      %v3005 = vmul.f32 %v2952, %v1836
      %v3006 = vmul.f32 %v2955, %v1837
      %v3007 = vmul.f32 %v2958, %v1838
      %v3008 = vmul.f32 %v2961, %v1839
      %v3009 = vmul.f32 %v2964, %v1840
      %v3010 = vmul.f32 %v2967, %v1841
      %v3011 = vmul.f32 %v2970, %v1842
      %v3012 = vmul.f32 %v2973, %v1843
      %v3013 = vmul.f32 %v2976, %v1844
      %v3014 = vmul.f32 %v2979, %v1845
      %v3015 = vmul.f32 %v2982, %v1846
      %3016 = vmatpush.msra.mxu0 %v1862
      %3017 = vmatpush.msra.mxu0 %v1861
      %3018 = vmatpush.msra.mxu0 %v1860
      %3019 = vmatpush.msra.mxu0 %v1859
      %3020 = vmatpush.msra.mxu0 %v1858
      %3021 = vmatpush.msra.mxu0 %v1857
      %3022 = vmatpush.msra.mxu0 %v1856
      %3023 = vmatpush.msra.mxu0 %v1855
      %3024 = vmatpush.msra.mxu0 %v1854
      %3025 = vmatpush.msra.mxu0 %v1853
      %3026 = vmatpush.msra.mxu0 %v1852
      %3027 = vmatpush.msra.mxu0 %v1851
      %3028 = vmatpush.msra.mxu0 %v1850
      %3029 = vmatpush.msra.mxu0 %v1849
      %3030 = vmatpush.msra.mxu0 %v1848
      %3031 = vmatpush.msra.mxu0 %v1847
      %3032 = vmatmul.f32.gmra.mxu0 %v2984
      %v3033 = vpop.f32.mrf.mxu0
      %v3034 = vadd.f32 0.0, %v3033
      %3035 = vmatmul.f32.gmra.mxu0 %v2985
      %v3036 = vpop.f32.mrf.mxu0
      %v3037 = vadd.f32 0.0, %v3036
      %3038 = vmatmul.f32.gmra.mxu0 %v2986
      %v3039 = vpop.f32.mrf.mxu0
      %v3040 = vadd.f32 0.0, %v3039
      %3041 = vmatmul.f32.gmra.mxu0 %v2987
      %v3042 = vpop.f32.mrf.mxu0
      %v3043 = vadd.f32 0.0, %v3042
      %3044 = vmatmul.f32.gmra.mxu0 %v2988
      %v3045 = vpop.f32.mrf.mxu0
      %v3046 = vadd.f32 0.0, %v3045
      %3047 = vmatmul.f32.gmra.mxu0 %v2989
      %v3048 = vpop.f32.mrf.mxu0
      %v3049 = vadd.f32 0.0, %v3048
      %3050 = vmatmul.f32.gmra.mxu0 %v2990
      %v3051 = vpop.f32.mrf.mxu0
      %v3052 = vadd.f32 0.0, %v3051
      %3053 = vmatmul.f32.gmra.mxu0 %v2991
      %v3054 = vpop.f32.mrf.mxu0
      %v3055 = vadd.f32 0.0, %v3054
      %3056 = vmatmul.f32.gmra.mxu0 %v2992
      %v3057 = vpop.f32.mrf.mxu0
      %v3058 = vadd.f32 0.0, %v3057
      %3059 = vmatmul.f32.gmra.mxu0 %v2993
      %v3060 = vpop.f32.mrf.mxu0
      %v3061 = vadd.f32 0.0, %v3060
      %3062 = vmatmul.f32.gmra.mxu0 %v2994
      %v3063 = vpop.f32.mrf.mxu0
      %v3064 = vadd.f32 0.0, %v3063
      %3065 = vmatmul.f32.gmra.mxu0 %v2995
      %v3066 = vpop.f32.mrf.mxu0
      %v3067 = vadd.f32 0.0, %v3066
      %3068 = vmatmul.f32.gmra.mxu0 %v2996
      %v3069 = vpop.f32.mrf.mxu0
      %v3070 = vadd.f32 0.0, %v3069
      %3071 = vmatmul.f32.gmra.mxu0 %v2997
      %v3072 = vpop.f32.mrf.mxu0
      %v3073 = vadd.f32 0.0, %v3072
      %3074 = vmatmul.f32.gmra.mxu0 %v2998
      %v3075 = vpop.f32.mrf.mxu0
      %v3076 = vadd.f32 0.0, %v3075
      %3077 = vmatmul.f32.gmra.mxu0 %v2999
      %v3078 = vpop.f32.mrf.mxu0
      %v3079 = vadd.f32 0.0, %v3078
      %3080 = vmatmul.f32.gmra.mxu0 %v3000
      %v3081 = vpop.f32.mrf.mxu0
      %v3082 = vadd.f32 0.0, %v3081
      %3083 = vmatmul.f32.gmra.mxu0 %v3001
      %v3084 = vpop.f32.mrf.mxu0
      %v3085 = vadd.f32 0.0, %v3084
      %3086 = vmatmul.f32.gmra.mxu0 %v3002
      %v3087 = vpop.f32.mrf.mxu0
      %v3088 = vadd.f32 0.0, %v3087
      %3089 = vmatmul.f32.gmra.mxu0 %v3003
      %v3090 = vpop.f32.mrf.mxu0
      %v3091 = vadd.f32 0.0, %v3090
      %3092 = vmatmul.f32.gmra.mxu0 %v3004
      %v3093 = vpop.f32.mrf.mxu0
      %v3094 = vadd.f32 0.0, %v3093
      %3095 = vmatmul.f32.gmra.mxu0 %v3005
      %v3096 = vpop.f32.mrf.mxu0
      %v3097 = vadd.f32 0.0, %v3096
      %3098 = vmatmul.f32.gmra.mxu0 %v3006
      %v3099 = vpop.f32.mrf.mxu0
      %v3100 = vadd.f32 0.0, %v3099
      %3101 = vmatmul.f32.gmra.mxu0 %v3007
      %v3102 = vpop.f32.mrf.mxu0
      %v3103 = vadd.f32 0.0, %v3102
      %3104 = vmatmul.f32.gmra.mxu0 %v3008
      %v3105 = vpop.f32.mrf.mxu0
      %v3106 = vadd.f32 0.0, %v3105
      %3107 = vmatmul.f32.gmra.mxu0 %v3009
      %v3108 = vpop.f32.mrf.mxu0
      %v3109 = vadd.f32 0.0, %v3108
      %3110 = vmatmul.f32.gmra.mxu0 %v3010
      %v3111 = vpop.f32.mrf.mxu0
      %v3112 = vadd.f32 0.0, %v3111
      %3113 = vmatmul.f32.gmra.mxu0 %v3011
      %v3114 = vpop.f32.mrf.mxu0
      %v3115 = vadd.f32 0.0, %v3114
      %3116 = vmatmul.f32.gmra.mxu0 %v3012
      %v3117 = vpop.f32.mrf.mxu0
      %v3118 = vadd.f32 0.0, %v3117
      %3119 = vmatmul.f32.gmra.mxu0 %v3013
      %v3120 = vpop.f32.mrf.mxu0
      %v3121 = vadd.f32 0.0, %v3120
      %3122 = vmatmul.f32.gmra.mxu0 %v3014
      %v3123 = vpop.f32.mrf.mxu0
      %v3124 = vadd.f32 0.0, %v3123
      %3125 = vmatmul.f32.gmra.mxu0 %v3015
      %v3126 = vpop.f32.mrf.mxu0
      %v3127 = vadd.f32 0.0, %v3126
      %3128 = vdwg.mxu0
      %3129 = vset.pattern.permute.xlu0 1
      %3130 = vperm.xlu0 %3129, %v2023
      %v3131 = vpop.permute.xlu0 %3130
      %3132 = vset.pattern.permute.xlu0 1
      %3133 = vperm.xlu0 %3132, %v2024
      %v3134 = vpop.permute.xlu0 %3133
      %3135 = vset.pattern.permute.xlu0 1
      %3136 = vperm.xlu0 %3135, %v2025
      %v3137 = vpop.permute.xlu0 %3136
      %3138 = vset.pattern.permute.xlu0 1
      %3139 = vperm.xlu0 %3138, %v2026
      %v3140 = vpop.permute.xlu0 %3139
      %3141 = vset.pattern.permute.xlu0 1
      %3142 = vperm.xlu0 %3141, %v2027
      %v3143 = vpop.permute.xlu0 %3142
      %3144 = vset.pattern.permute.xlu0 1
      %3145 = vperm.xlu0 %3144, %v2028
      %v3146 = vpop.permute.xlu0 %3145
      %3147 = vset.pattern.permute.xlu0 1
      %3148 = vperm.xlu0 %3147, %v2029
      %v3149 = vpop.permute.xlu0 %3148
      %3150 = vset.pattern.permute.xlu0 1
      %3151 = vperm.xlu0 %3150, %v2030
      %v3152 = vpop.permute.xlu0 %3151
      %3153 = vset.pattern.permute.xlu0 1
      %3154 = vperm.xlu0 %3153, %v2031
      %v3155 = vpop.permute.xlu0 %3154
      %3156 = vset.pattern.permute.xlu0 1
      %3157 = vperm.xlu0 %3156, %v2032
      %v3158 = vpop.permute.xlu0 %3157
      %3159 = vset.pattern.permute.xlu0 1
      %3160 = vperm.xlu0 %3159, %v2033
      %v3161 = vpop.permute.xlu0 %3160
      %3162 = vset.pattern.permute.xlu0 1
      %3163 = vperm.xlu0 %3162, %v2034
      %v3164 = vpop.permute.xlu0 %3163
      %3165 = vset.pattern.permute.xlu0 1
      %3166 = vperm.xlu0 %3165, %v2035
      %v3167 = vpop.permute.xlu0 %3166
      %3168 = vset.pattern.permute.xlu0 1
      %3169 = vperm.xlu0 %3168, %v2036
      %v3170 = vpop.permute.xlu0 %3169
      %3171 = vset.pattern.permute.xlu0 1
      %3172 = vperm.xlu0 %3171, %v2037
      %v3173 = vpop.permute.xlu0 %3172
      %3174 = vset.pattern.permute.xlu0 1
      %3175 = vperm.xlu0 %3174, %v2038
      %v3176 = vpop.permute.xlu0 %3175
      %3177 = vset.pattern.permute.xlu0 1
      %3178 = vperm.xlu0 %3177, %v2039
      %v3179 = vpop.permute.xlu0 %3178
      %3180 = vset.pattern.permute.xlu0 1
      %3181 = vperm.xlu0 %3180, %v2040
      %v3182 = vpop.permute.xlu0 %3181
      %3183 = vset.pattern.permute.xlu0 1
      %3184 = vperm.xlu0 %3183, %v2041
      %v3185 = vpop.permute.xlu0 %3184
      %3186 = vset.pattern.permute.xlu0 1
      %3187 = vperm.xlu0 %3186, %v2042
      %v3188 = vpop.permute.xlu0 %3187
      %3189 = vset.pattern.permute.xlu0 1
      %3190 = vperm.xlu0 %3189, %v2043
      %v3191 = vpop.permute.xlu0 %3190
      %3192 = vset.pattern.permute.xlu0 1
      %3193 = vperm.xlu0 %3192, %v2044
      %v3194 = vpop.permute.xlu0 %3193
      %3195 = vset.pattern.permute.xlu0 1
      %3196 = vperm.xlu0 %3195, %v2045
      %v3197 = vpop.permute.xlu0 %3196
      %3198 = vset.pattern.permute.xlu0 1
      %3199 = vperm.xlu0 %3198, %v2046
      %v3200 = vpop.permute.xlu0 %3199
      %3201 = vset.pattern.permute.xlu0 1
      %3202 = vperm.xlu0 %3201, %v2047
      %v3203 = vpop.permute.xlu0 %3202
      %3204 = vset.pattern.permute.xlu0 1
      %3205 = vperm.xlu0 %3204, %v2048
      %v3206 = vpop.permute.xlu0 %3205
      %3207 = vset.pattern.permute.xlu0 1
      %3208 = vperm.xlu0 %3207, %v2049
      %v3209 = vpop.permute.xlu0 %3208
      %3210 = vset.pattern.permute.xlu0 1
      %3211 = vperm.xlu0 %3210, %v2050
      %v3212 = vpop.permute.xlu0 %3211
      %3213 = vset.pattern.permute.xlu0 1
      %3214 = vperm.xlu0 %3213, %v2051
      %v3215 = vpop.permute.xlu0 %3214
      %3216 = vset.pattern.permute.xlu0 1
      %3217 = vperm.xlu0 %3216, %v2052
      %v3218 = vpop.permute.xlu0 %3217
      %3219 = vset.pattern.permute.xlu0 1
      %3220 = vperm.xlu0 %3219, %v2053
      %v3221 = vpop.permute.xlu0 %3220
      %3222 = vset.pattern.permute.xlu0 1
      %3223 = vperm.xlu0 %3222, %v2054
      %v3224 = vpop.permute.xlu0 %3223
      %vm3225 = vcmp.eq.s32.totalorder %v694, %v3131
      %vm3226 = vcmp.eq.s32.totalorder %v694, %v3134
      %vm3227 = vcmp.eq.s32.totalorder %v694, %v3137
      %vm3228 = vcmp.eq.s32.totalorder %v694, %v3140
      %vm3229 = vcmp.eq.s32.totalorder %v694, %v3143
      %vm3230 = vcmp.eq.s32.totalorder %v694, %v3146
      %vm3231 = vcmp.eq.s32.totalorder %v694, %v3149
      %vm3232 = vcmp.eq.s32.totalorder %v694, %v3152
      %vm3233 = vcmp.eq.s32.totalorder %v694, %v3155
      %vm3234 = vcmp.eq.s32.totalorder %v694, %v3158
      %vm3235 = vcmp.eq.s32.totalorder %v694, %v3161
      %vm3236 = vcmp.eq.s32.totalorder %v694, %v3164
      %vm3237 = vcmp.eq.s32.totalorder %v694, %v3167
      %vm3238 = vcmp.eq.s32.totalorder %v694, %v3170
      %vm3239 = vcmp.eq.s32.totalorder %v694, %v3173
      %vm3240 = vcmp.eq.s32.totalorder %v694, %v3176
      %vm3241 = vcmp.eq.s32.totalorder %v694, %v3179
      %vm3242 = vcmp.eq.s32.totalorder %v694, %v3182
      %vm3243 = vcmp.eq.s32.totalorder %v694, %v3185
      %vm3244 = vcmp.eq.s32.totalorder %v694, %v3188
      %vm3245 = vcmp.eq.s32.totalorder %v694, %v3191
      %vm3246 = vcmp.eq.s32.totalorder %v694, %v3194
      %vm3247 = vcmp.eq.s32.totalorder %v694, %v3197
      %vm3248 = vcmp.eq.s32.totalorder %v694, %v3200
      %vm3249 = vcmp.eq.s32.totalorder %v694, %v3203
      %vm3250 = vcmp.eq.s32.totalorder %v694, %v3206
      %vm3251 = vcmp.eq.s32.totalorder %v694, %v3209
      %vm3252 = vcmp.eq.s32.totalorder %v694, %v3212
      %vm3253 = vcmp.eq.s32.totalorder %v694, %v3215
      %vm3254 = vcmp.eq.s32.totalorder %v694, %v3218
      %vm3255 = vcmp.eq.s32.totalorder %v694, %v3221
      %vm3256 = vcmp.eq.s32.totalorder %v694, %v3224
      %3257 = vset.pattern.permute.xlu0 1
      %3258 = vperm.xlu0 %3257, %v2279
      %v3259 = vpop.permute.xlu0 %3258
      %3261 = vset.pattern.permute.xlu0 1
      %3262 = vperm.xlu0 %3261, %v2280
      %v3263 = vpop.permute.xlu0 %3262
      %3265 = vset.pattern.permute.xlu0 1
      %3266 = vperm.xlu0 %3265, %v2281
      %v3267 = vpop.permute.xlu0 %3266
      %3269 = vset.pattern.permute.xlu0 1
      %3270 = vperm.xlu0 %3269, %v2282
      %v3271 = vpop.permute.xlu0 %3270
      %3273 = vset.pattern.permute.xlu0 1
      %3274 = vperm.xlu0 %3273, %v2283
      %v3275 = vpop.permute.xlu0 %3274
      %3277 = vset.pattern.permute.xlu0 1
      %3278 = vperm.xlu0 %3277, %v2284
      %v3279 = vpop.permute.xlu0 %3278
      %3281 = vset.pattern.permute.xlu0 1
      %3282 = vperm.xlu0 %3281, %v2285
      %v3283 = vpop.permute.xlu0 %3282
      %3285 = vset.pattern.permute.xlu0 1
      %3286 = vperm.xlu0 %3285, %v2286
      %v3287 = vpop.permute.xlu0 %3286
      %3289 = vset.pattern.permute.xlu0 1
      %3290 = vperm.xlu0 %3289, %v2287
      %v3291 = vpop.permute.xlu0 %3290
      %3293 = vset.pattern.permute.xlu0 1
      %3294 = vperm.xlu0 %3293, %v2288
      %v3295 = vpop.permute.xlu0 %3294
      %3297 = vset.pattern.permute.xlu0 1
      %3298 = vperm.xlu0 %3297, %v2289
      %v3299 = vpop.permute.xlu0 %3298
      %3301 = vset.pattern.permute.xlu0 1
      %3302 = vperm.xlu0 %3301, %v2290
      %v3303 = vpop.permute.xlu0 %3302
      %3305 = vset.pattern.permute.xlu0 1
      %3306 = vperm.xlu0 %3305, %v2291
      %v3307 = vpop.permute.xlu0 %3306
      %3309 = vset.pattern.permute.xlu0 1
      %3310 = vperm.xlu0 %3309, %v2292
      %v3311 = vpop.permute.xlu0 %3310
      %3313 = vset.pattern.permute.xlu0 1
      %3314 = vperm.xlu0 %3313, %v2293
      %v3315 = vpop.permute.xlu0 %3314
      %3317 = vset.pattern.permute.xlu0 1
      %3318 = vperm.xlu0 %3317, %v2294
      %v3319 = vpop.permute.xlu0 %3318
      %3321 = vset.pattern.permute.xlu0 1
      %3322 = vperm.xlu0 %3321, %v2295
      %v3323 = vpop.permute.xlu0 %3322
      %3325 = vset.pattern.permute.xlu0 1
      %3326 = vperm.xlu0 %3325, %v2296
      %v3327 = vpop.permute.xlu0 %3326
      %3329 = vset.pattern.permute.xlu0 1
      %3330 = vperm.xlu0 %3329, %v2297
      %v3331 = vpop.permute.xlu0 %3330
      %3333 = vset.pattern.permute.xlu0 1
      %3334 = vperm.xlu0 %3333, %v2298
      %v3335 = vpop.permute.xlu0 %3334
      %3337 = vset.pattern.permute.xlu0 1
      %3338 = vperm.xlu0 %3337, %v2299
      %v3339 = vpop.permute.xlu0 %3338
      %3341 = vset.pattern.permute.xlu0 1
      %3342 = vperm.xlu0 %3341, %v2300
      %v3343 = vpop.permute.xlu0 %3342
      %3345 = vset.pattern.permute.xlu0 1
      %3346 = vperm.xlu0 %3345, %v2301
      %v3347 = vpop.permute.xlu0 %3346
      %3349 = vset.pattern.permute.xlu0 1
      %3350 = vperm.xlu0 %3349, %v2302
      %v3351 = vpop.permute.xlu0 %3350
      %3353 = vset.pattern.permute.xlu0 1
      %3354 = vperm.xlu0 %3353, %v2303
      %v3355 = vpop.permute.xlu0 %3354
      %3357 = vset.pattern.permute.xlu0 1
      %3358 = vperm.xlu0 %3357, %v2304
      %v3359 = vpop.permute.xlu0 %3358
      %3361 = vset.pattern.permute.xlu0 1
      %3362 = vperm.xlu0 %3361, %v2305
      %v3363 = vpop.permute.xlu0 %3362
      %3365 = vset.pattern.permute.xlu0 1
      %3366 = vperm.xlu0 %3365, %v2306
      %v3367 = vpop.permute.xlu0 %3366
      %3369 = vset.pattern.permute.xlu0 1
      %3370 = vperm.xlu0 %3369, %v2307
      %v3371 = vpop.permute.xlu0 %3370
      %3373 = vset.pattern.permute.xlu0 1
      %3374 = vperm.xlu0 %3373, %v2308
      %v3375 = vpop.permute.xlu0 %3374
      %3377 = vset.pattern.permute.xlu0 1
      %3378 = vperm.xlu0 %3377, %v2309
      %v3379 = vpop.permute.xlu0 %3378
      %3381 = vset.pattern.permute.xlu0 1
      %3382 = vperm.xlu0 %3381, %v2310
      %v3383 = vpop.permute.xlu0 %3382
      %v3385 = vsel %vm3225, %v3259, 0.0
      %v3386 = vsel %vm3226, %v3263, 0.0
      %v3387 = vsel %vm3227, %v3267, 0.0
      %v3388 = vsel %vm3228, %v3271, 0.0
      %v3389 = vsel %vm3229, %v3275, 0.0
      %v3390 = vsel %vm3230, %v3279, 0.0
      %v3391 = vsel %vm3231, %v3283, 0.0
      %v3392 = vsel %vm3232, %v3287, 0.0
      %v3393 = vsel %vm3233, %v3291, 0.0
      %v3394 = vsel %vm3234, %v3295, 0.0
      %v3395 = vsel %vm3235, %v3299, 0.0
      %v3396 = vsel %vm3236, %v3303, 0.0
      %v3397 = vsel %vm3237, %v3307, 0.0
      %v3398 = vsel %vm3238, %v3311, 0.0
      %v3399 = vsel %vm3239, %v3315, 0.0
      %v3400 = vsel %vm3240, %v3319, 0.0
      %v3401 = vsel %vm3241, %v3323, 0.0
      %v3402 = vsel %vm3242, %v3327, 0.0
      %v3403 = vsel %vm3243, %v3331, 0.0
      %v3404 = vsel %vm3244, %v3335, 0.0
      %v3405 = vsel %vm3245, %v3339, 0.0
      %v3406 = vsel %vm3246, %v3343, 0.0
      %v3407 = vsel %vm3247, %v3347, 0.0
      %v3408 = vsel %vm3248, %v3351, 0.0
      %v3409 = vsel %vm3249, %v3355, 0.0
      %v3410 = vsel %vm3250, %v3359, 0.0
      %v3411 = vsel %vm3251, %v3363, 0.0
      %v3412 = vsel %vm3252, %v3367, 0.0
      %v3413 = vsel %vm3253, %v3371, 0.0
      %v3414 = vsel %vm3254, %v3375, 0.0
      %v3415 = vsel %vm3255, %v3379, 0.0
      %v3416 = vsel %vm3256, %v3383, 0.0
      %3417 = vset.pattern.permute.xlu0 1
      %3418 = vperm.xlu0 %3417, %v2088
      %v3419 = vpop.permute.xlu0 %3418
      %3420 = vset.pattern.permute.xlu0 1
      %3421 = vperm.xlu0 %3420, %v2090
      %v3422 = vpop.permute.xlu0 %3421
      %3423 = vset.pattern.permute.xlu0 1
      %3424 = vperm.xlu0 %3423, %v2092
      %v3425 = vpop.permute.xlu0 %3424
      %3426 = vset.pattern.permute.xlu0 1
      %3427 = vperm.xlu0 %3426, %v2094
      %v3428 = vpop.permute.xlu0 %3427
      %3429 = vset.pattern.permute.xlu0 1
      %3430 = vperm.xlu0 %3429, %v2096
      %v3431 = vpop.permute.xlu0 %3430
      %3432 = vset.pattern.permute.xlu0 1
      %3433 = vperm.xlu0 %3432, %v2098
      %v3434 = vpop.permute.xlu0 %3433
      %3435 = vset.pattern.permute.xlu0 1
      %3436 = vperm.xlu0 %3435, %v2100
      %v3437 = vpop.permute.xlu0 %3436
      %3438 = vset.pattern.permute.xlu0 1
      %3439 = vperm.xlu0 %3438, %v2102
      %v3440 = vpop.permute.xlu0 %3439
      %3441 = vset.pattern.permute.xlu0 1
      %3442 = vperm.xlu0 %3441, %v2104
      %v3443 = vpop.permute.xlu0 %3442
      %3444 = vset.pattern.permute.xlu0 1
      %3445 = vperm.xlu0 %3444, %v2106
      %v3446 = vpop.permute.xlu0 %3445
      %3447 = vset.pattern.permute.xlu0 1
      %3448 = vperm.xlu0 %3447, %v2108
      %v3449 = vpop.permute.xlu0 %3448
      %3450 = vset.pattern.permute.xlu0 1
      %3451 = vperm.xlu0 %3450, %v2110
      %v3452 = vpop.permute.xlu0 %3451
      %3453 = vset.pattern.permute.xlu0 1
      %3454 = vperm.xlu0 %3453, %v2112
      %v3455 = vpop.permute.xlu0 %3454
      %3456 = vset.pattern.permute.xlu0 1
      %3457 = vperm.xlu0 %3456, %v2114
      %v3458 = vpop.permute.xlu0 %3457
      %3459 = vset.pattern.permute.xlu0 1
      %3460 = vperm.xlu0 %3459, %v2116
      %v3461 = vpop.permute.xlu0 %3460
      %3462 = vset.pattern.permute.xlu0 1
      %3463 = vperm.xlu0 %3462, %v2118
      %v3464 = vpop.permute.xlu0 %3463
      %3465 = vset.pattern.permute.xlu0 1
      %3466 = vperm.xlu0 %3465, %v2120
      %v3467 = vpop.permute.xlu0 %3466
      %3468 = vset.pattern.permute.xlu0 1
      %3469 = vperm.xlu0 %3468, %v2122
      %v3470 = vpop.permute.xlu0 %3469
      %3471 = vset.pattern.permute.xlu0 1
      %3472 = vperm.xlu0 %3471, %v2124
      %v3473 = vpop.permute.xlu0 %3472
      %3474 = vset.pattern.permute.xlu0 1
      %3475 = vperm.xlu0 %3474, %v2126
      %v3476 = vpop.permute.xlu0 %3475
      %3477 = vset.pattern.permute.xlu0 1
      %3478 = vperm.xlu0 %3477, %v2128
      %v3479 = vpop.permute.xlu0 %3478
      %3480 = vset.pattern.permute.xlu0 1
      %3481 = vperm.xlu0 %3480, %v2130
      %v3482 = vpop.permute.xlu0 %3481
      %3483 = vset.pattern.permute.xlu0 1
      %3484 = vperm.xlu0 %3483, %v2132
      %v3485 = vpop.permute.xlu0 %3484
      %3486 = vset.pattern.permute.xlu0 1
      %3487 = vperm.xlu0 %3486, %v2134
      %v3488 = vpop.permute.xlu0 %3487
      %3489 = vset.pattern.permute.xlu0 1
      %3490 = vperm.xlu0 %3489, %v2136
      %v3491 = vpop.permute.xlu0 %3490
      %3492 = vset.pattern.permute.xlu0 1
      %3493 = vperm.xlu0 %3492, %v2138
      %v3494 = vpop.permute.xlu0 %3493
      %3495 = vset.pattern.permute.xlu0 1
      %3496 = vperm.xlu0 %3495, %v2140
      %v3497 = vpop.permute.xlu0 %3496
      %3498 = vset.pattern.permute.xlu0 1
      %3499 = vperm.xlu0 %3498, %v2142
      %v3500 = vpop.permute.xlu0 %3499
      %3501 = vset.pattern.permute.xlu0 1
      %3502 = vperm.xlu0 %3501, %v2144
      %v3503 = vpop.permute.xlu0 %3502
      %3504 = vset.pattern.permute.xlu0 1
      %3505 = vperm.xlu0 %3504, %v2146
      %v3506 = vpop.permute.xlu0 %3505
      %3507 = vset.pattern.permute.xlu0 1
      %3508 = vperm.xlu0 %3507, %v2148
      %v3509 = vpop.permute.xlu0 %3508
      %3510 = vset.pattern.permute.xlu0 1
      %3511 = vperm.xlu0 %3510, %v2150
      %v3512 = vpop.permute.xlu0 %3511
      %vm3513 = vcmp.eq.s32.totalorder %v694, %v3419
      %vm3514 = vcmp.eq.s32.totalorder %v694, %v3422
      %vm3515 = vcmp.eq.s32.totalorder %v694, %v3425
      %vm3516 = vcmp.eq.s32.totalorder %v694, %v3428
      %vm3517 = vcmp.eq.s32.totalorder %v694, %v3431
      %vm3518 = vcmp.eq.s32.totalorder %v694, %v3434
      %vm3519 = vcmp.eq.s32.totalorder %v694, %v3437
      %vm3520 = vcmp.eq.s32.totalorder %v694, %v3440
      %vm3521 = vcmp.eq.s32.totalorder %v694, %v3443
      %vm3522 = vcmp.eq.s32.totalorder %v694, %v3446
      %vm3523 = vcmp.eq.s32.totalorder %v694, %v3449
      %vm3524 = vcmp.eq.s32.totalorder %v694, %v3452
      %vm3525 = vcmp.eq.s32.totalorder %v694, %v3455
      %vm3526 = vcmp.eq.s32.totalorder %v694, %v3458
      %vm3527 = vcmp.eq.s32.totalorder %v694, %v3461
      %vm3528 = vcmp.eq.s32.totalorder %v694, %v3464
      %vm3529 = vcmp.eq.s32.totalorder %v694, %v3467
      %vm3530 = vcmp.eq.s32.totalorder %v694, %v3470
      %vm3531 = vcmp.eq.s32.totalorder %v694, %v3473
      %vm3532 = vcmp.eq.s32.totalorder %v694, %v3476
      %vm3533 = vcmp.eq.s32.totalorder %v694, %v3479
      %vm3534 = vcmp.eq.s32.totalorder %v694, %v3482
      %vm3535 = vcmp.eq.s32.totalorder %v694, %v3485
      %vm3536 = vcmp.eq.s32.totalorder %v694, %v3488
      %vm3537 = vcmp.eq.s32.totalorder %v694, %v3491
      %vm3538 = vcmp.eq.s32.totalorder %v694, %v3494
      %vm3539 = vcmp.eq.s32.totalorder %v694, %v3497
      %vm3540 = vcmp.eq.s32.totalorder %v694, %v3500
      %vm3541 = vcmp.eq.s32.totalorder %v694, %v3503
      %vm3542 = vcmp.eq.s32.totalorder %v694, %v3506
      %vm3543 = vcmp.eq.s32.totalorder %v694, %v3509
      %vm3544 = vcmp.eq.s32.totalorder %v694, %v3512
      %3545 = vset.pattern.permute.xlu0 1
      %3546 = vperm.xlu0 %3545, %v1991
      %v3547 = vpop.permute.xlu0 %3546
      %3549 = vset.pattern.permute.xlu0 1
      %3550 = vperm.xlu0 %3549, %v1992
      %v3551 = vpop.permute.xlu0 %3550
      %3553 = vset.pattern.permute.xlu0 1
      %3554 = vperm.xlu0 %3553, %v1993
      %v3555 = vpop.permute.xlu0 %3554
      %3557 = vset.pattern.permute.xlu0 1
      %3558 = vperm.xlu0 %3557, %v1994
      %v3559 = vpop.permute.xlu0 %3558
      %3561 = vset.pattern.permute.xlu0 1
      %3562 = vperm.xlu0 %3561, %v1995
      %v3563 = vpop.permute.xlu0 %3562
      %3565 = vset.pattern.permute.xlu0 1
      %3566 = vperm.xlu0 %3565, %v1996
      %v3567 = vpop.permute.xlu0 %3566
      %3569 = vset.pattern.permute.xlu0 1
      %3570 = vperm.xlu0 %3569, %v1997
      %v3571 = vpop.permute.xlu0 %3570
      %3573 = vset.pattern.permute.xlu0 1
      %3574 = vperm.xlu0 %3573, %v1998
      %v3575 = vpop.permute.xlu0 %3574
      %3577 = vset.pattern.permute.xlu0 1
      %3578 = vperm.xlu0 %3577, %v1999
      %v3579 = vpop.permute.xlu0 %3578
      %3581 = vset.pattern.permute.xlu0 1
      %3582 = vperm.xlu0 %3581, %v2000
      %v3583 = vpop.permute.xlu0 %3582
      %3585 = vset.pattern.permute.xlu0 1
      %3586 = vperm.xlu0 %3585, %v2001
      %v3587 = vpop.permute.xlu0 %3586
      %3589 = vset.pattern.permute.xlu0 1
      %3590 = vperm.xlu0 %3589, %v2002
      %v3591 = vpop.permute.xlu0 %3590
      %3593 = vset.pattern.permute.xlu0 1
      %3594 = vperm.xlu0 %3593, %v2003
      %v3595 = vpop.permute.xlu0 %3594
      %3597 = vset.pattern.permute.xlu0 1
      %3598 = vperm.xlu0 %3597, %v2004
      %v3599 = vpop.permute.xlu0 %3598
      %3601 = vset.pattern.permute.xlu0 1
      %3602 = vperm.xlu0 %3601, %v2005
      %v3603 = vpop.permute.xlu0 %3602
      %3605 = vset.pattern.permute.xlu0 1
      %3606 = vperm.xlu0 %3605, %v2006
      %v3607 = vpop.permute.xlu0 %3606
      %3609 = vset.pattern.permute.xlu0 1
      %3610 = vperm.xlu0 %3609, %v2007
      %v3611 = vpop.permute.xlu0 %3610
      %3613 = vset.pattern.permute.xlu0 1
      %3614 = vperm.xlu0 %3613, %v2008
      %v3615 = vpop.permute.xlu0 %3614
      %3617 = vset.pattern.permute.xlu0 1
      %3618 = vperm.xlu0 %3617, %v2009
      %v3619 = vpop.permute.xlu0 %3618
      %3621 = vset.pattern.permute.xlu0 1
      %3622 = vperm.xlu0 %3621, %v2010
      %v3623 = vpop.permute.xlu0 %3622
      %3625 = vset.pattern.permute.xlu0 1
      %3626 = vperm.xlu0 %3625, %v2011
      %v3627 = vpop.permute.xlu0 %3626
      %3629 = vset.pattern.permute.xlu0 1
      %3630 = vperm.xlu0 %3629, %v2012
      %v3631 = vpop.permute.xlu0 %3630
      %3633 = vset.pattern.permute.xlu0 1
      %3634 = vperm.xlu0 %3633, %v2013
      %v3635 = vpop.permute.xlu0 %3634
      %3637 = vset.pattern.permute.xlu0 1
      %3638 = vperm.xlu0 %3637, %v2014
      %v3639 = vpop.permute.xlu0 %3638
      %3641 = vset.pattern.permute.xlu0 1
      %3642 = vperm.xlu0 %3641, %v2015
      %v3643 = vpop.permute.xlu0 %3642
      %3645 = vset.pattern.permute.xlu0 1
      %3646 = vperm.xlu0 %3645, %v2016
      %v3647 = vpop.permute.xlu0 %3646
      %3649 = vset.pattern.permute.xlu0 1
      %3650 = vperm.xlu0 %3649, %v2017
      %v3651 = vpop.permute.xlu0 %3650
      %3653 = vset.pattern.permute.xlu0 1
      %3654 = vperm.xlu0 %3653, %v2018
      %v3655 = vpop.permute.xlu0 %3654
      %3657 = vset.pattern.permute.xlu0 1
      %3658 = vperm.xlu0 %3657, %v2019
      %v3659 = vpop.permute.xlu0 %3658
      %3661 = vset.pattern.permute.xlu0 1
      %3662 = vperm.xlu0 %3661, %v2020
      %v3663 = vpop.permute.xlu0 %3662
      %3665 = vset.pattern.permute.xlu0 1
      %3666 = vperm.xlu0 %3665, %v2021
      %v3667 = vpop.permute.xlu0 %3666
      %3669 = vset.pattern.permute.xlu0 1
      %3670 = vperm.xlu0 %3669, %v2022
      %v3671 = vpop.permute.xlu0 %3670
      %v3673 = vsel %vm3513, %v3547, 0.0
      %v3674 = vsel %vm3514, %v3551, 0.0
      %v3675 = vsel %vm3515, %v3555, 0.0
      %v3676 = vsel %vm3516, %v3559, 0.0
      %v3677 = vsel %vm3517, %v3563, 0.0
      %v3678 = vsel %vm3518, %v3567, 0.0
      %v3679 = vsel %vm3519, %v3571, 0.0
      %v3680 = vsel %vm3520, %v3575, 0.0
      %v3681 = vsel %vm3521, %v3579, 0.0
      %v3682 = vsel %vm3522, %v3583, 0.0
      %v3683 = vsel %vm3523, %v3587, 0.0
      %v3684 = vsel %vm3524, %v3591, 0.0
      %v3685 = vsel %vm3525, %v3595, 0.0
      %v3686 = vsel %vm3526, %v3599, 0.0
      %v3687 = vsel %vm3527, %v3603, 0.0
      %v3688 = vsel %vm3528, %v3607, 0.0
      %v3689 = vsel %vm3529, %v3611, 0.0
      %v3690 = vsel %vm3530, %v3615, 0.0
      %v3691 = vsel %vm3531, %v3619, 0.0
      %v3692 = vsel %vm3532, %v3623, 0.0
      %v3693 = vsel %vm3533, %v3627, 0.0
      %v3694 = vsel %vm3534, %v3631, 0.0
      %v3695 = vsel %vm3535, %v3635, 0.0
      %v3696 = vsel %vm3536, %v3639, 0.0
      %v3697 = vsel %vm3537, %v3643, 0.0
      %v3698 = vsel %vm3538, %v3647, 0.0
      %v3699 = vsel %vm3539, %v3651, 0.0
      %v3700 = vsel %vm3540, %v3655, 0.0
      %v3701 = vsel %vm3541, %v3659, 0.0
      %v3702 = vsel %vm3542, %v3663, 0.0
      %v3703 = vsel %vm3543, %v3667, 0.0
      %v3704 = vsel %vm3544, %v3671, 0.0
      %v3705 = vadd.f32 %v3385, %v3673
      %v3706 = vadd.f32 %v3386, %v3674
      %v3707 = vadd.f32 %v3387, %v3675
      %v3708 = vadd.f32 %v3388, %v3676
      %v3709 = vadd.f32 %v3389, %v3677
      %v3710 = vadd.f32 %v3390, %v3678
      %v3711 = vadd.f32 %v3391, %v3679
      %v3712 = vadd.f32 %v3392, %v3680
      %v3713 = vadd.f32 %v3393, %v3681
      %v3714 = vadd.f32 %v3394, %v3682
      %v3715 = vadd.f32 %v3395, %v3683
      %v3716 = vadd.f32 %v3396, %v3684
      %v3717 = vadd.f32 %v3397, %v3685
      %v3718 = vadd.f32 %v3398, %v3686
      %v3719 = vadd.f32 %v3399, %v3687
      %v3720 = vadd.f32 %v3400, %v3688
      %v3721 = vadd.f32 %v3401, %v3689
      %v3722 = vadd.f32 %v3402, %v3690
      %v3723 = vadd.f32 %v3403, %v3691
      %v3724 = vadd.f32 %v3404, %v3692
      %v3725 = vadd.f32 %v3405, %v3693
      %v3726 = vadd.f32 %v3406, %v3694
      %v3727 = vadd.f32 %v3407, %v3695
      %v3728 = vadd.f32 %v3408, %v3696
      %v3729 = vadd.f32 %v3409, %v3697
      %v3730 = vadd.f32 %v3410, %v3698
      %v3731 = vadd.f32 %v3411, %v3699
      %v3732 = vadd.f32 %v3412, %v3700
      %v3733 = vadd.f32 %v3413, %v3701
      %v3734 = vadd.f32 %v3414, %v3702
      %v3735 = vadd.f32 %v3415, %v3703
      %v3736 = vadd.f32 %v3416, %v3704
      %v3737 = vld [vmem:[%s3] sm:$0xff]
      %v3738 = vld [vmem:[%s3 + $0x8] sm:$0xff]
      %v3739 = vld [vmem:[%s3 + $0x10] sm:$0xff]
      %v3740 = vld [vmem:[%s3 + $0x18] sm:$0xff]
      %v3741 = vld [vmem:[%s3 + $0x20] sm:$0xff]
      %v3742 = vld [vmem:[%s3 + $0x28] sm:$0xff]
      %v3743 = vld [vmem:[%s3 + $0x30] sm:$0xff]
      %v3744 = vld [vmem:[%s3 + $0x38] sm:$0xff]
      %v3745 = vld [vmem:[%s3 + $0x40] sm:$0xff]
      %v3746 = vld [vmem:[%s3 + $0x48] sm:$0xff]
      %v3747 = vld [vmem:[%s3 + $0x50] sm:$0xff]
      %v3748 = vld [vmem:[%s3 + $0x58] sm:$0xff]
      %v3749 = vld [vmem:[%s3 + $0x60] sm:$0xff]
      %v3750 = vld [vmem:[%s3 + $0x68] sm:$0xff]
      %v3751 = vld [vmem:[%s3 + $0x70] sm:$0xff]
      %v3752 = vld [vmem:[%s3 + $0x78] sm:$0xff]
      %3753 = vmatpush.msra.mxu0 %v3752
      %3754 = vmatpush.msra.mxu0 %v3751
      %3755 = vmatpush.msra.mxu0 %v3750
      %3756 = vmatpush.msra.mxu0 %v3749
      %3757 = vmatpush.msra.mxu0 %v3748
      %3758 = vmatpush.msra.mxu0 %v3747
      %3759 = vmatpush.msra.mxu0 %v3746
      %3760 = vmatpush.msra.mxu0 %v3745
      %3761 = vmatpush.msra.mxu0 %v3744
      %3762 = vmatpush.msra.mxu0 %v3743
      %3763 = vmatpush.msra.mxu0 %v3742
      %3764 = vmatpush.msra.mxu0 %v3741
      %3765 = vmatpush.msra.mxu0 %v3740
      %3766 = vmatpush.msra.mxu0 %v3739
      %3767 = vmatpush.msra.mxu0 %v3738
      %3768 = vmatpush.msra.mxu0 %v3737
      %3769 = vmatmul.f32.gmra.mxu0 %v3705
      %v3770 = vpop.f32.mrf.mxu0
      %v3771 = vadd.f32 0.0, %v3770
      %3772 = vmatmul.f32.gmra.mxu0 %v3706
      %v3773 = vpop.f32.mrf.mxu0
      %v3774 = vadd.f32 0.0, %v3773
      %3775 = vmatmul.f32.gmra.mxu0 %v3707
      %v3776 = vpop.f32.mrf.mxu0
      %v3777 = vadd.f32 0.0, %v3776
      %3778 = vmatmul.f32.gmra.mxu0 %v3708
      %v3779 = vpop.f32.mrf.mxu0
      %v3780 = vadd.f32 0.0, %v3779
      %3781 = vmatmul.f32.gmra.mxu0 %v3709
      %v3782 = vpop.f32.mrf.mxu0
      %v3783 = vadd.f32 0.0, %v3782
      %3784 = vmatmul.f32.gmra.mxu0 %v3710
      %v3785 = vpop.f32.mrf.mxu0
      %v3786 = vadd.f32 0.0, %v3785
      %3787 = vmatmul.f32.gmra.mxu0 %v3711
      %v3788 = vpop.f32.mrf.mxu0
      %v3789 = vadd.f32 0.0, %v3788
      %3790 = vmatmul.f32.gmra.mxu0 %v3712
      %v3791 = vpop.f32.mrf.mxu0
      %v3792 = vadd.f32 0.0, %v3791
      %3793 = vmatmul.f32.gmra.mxu0 %v3713
      %v3794 = vpop.f32.mrf.mxu0
      %v3795 = vadd.f32 0.0, %v3794
      %3796 = vmatmul.f32.gmra.mxu0 %v3714
      %v3797 = vpop.f32.mrf.mxu0
      %v3798 = vadd.f32 0.0, %v3797
      %3799 = vmatmul.f32.gmra.mxu0 %v3715
      %v3800 = vpop.f32.mrf.mxu0
      %v3801 = vadd.f32 0.0, %v3800
      %3802 = vmatmul.f32.gmra.mxu0 %v3716
      %v3803 = vpop.f32.mrf.mxu0
      %v3804 = vadd.f32 0.0, %v3803
      %3805 = vmatmul.f32.gmra.mxu0 %v3717
      %v3806 = vpop.f32.mrf.mxu0
      %v3807 = vadd.f32 0.0, %v3806
      %3808 = vmatmul.f32.gmra.mxu0 %v3718
      %v3809 = vpop.f32.mrf.mxu0
      %v3810 = vadd.f32 0.0, %v3809
      %3811 = vmatmul.f32.gmra.mxu0 %v3719
      %v3812 = vpop.f32.mrf.mxu0
      %v3813 = vadd.f32 0.0, %v3812
      %3814 = vmatmul.f32.gmra.mxu0 %v3720
      %v3815 = vpop.f32.mrf.mxu0
      %v3816 = vadd.f32 0.0, %v3815
      %3817 = vmatmul.f32.gmra.mxu0 %v3721
      %v3818 = vpop.f32.mrf.mxu0
      %v3819 = vadd.f32 0.0, %v3818
      %3820 = vmatmul.f32.gmra.mxu0 %v3722
      %v3821 = vpop.f32.mrf.mxu0
      %v3822 = vadd.f32 0.0, %v3821
      %3823 = vmatmul.f32.gmra.mxu0 %v3723
      %v3824 = vpop.f32.mrf.mxu0
      %v3825 = vadd.f32 0.0, %v3824
      %3826 = vmatmul.f32.gmra.mxu0 %v3724
      %v3827 = vpop.f32.mrf.mxu0
      %v3828 = vadd.f32 0.0, %v3827
      %3829 = vmatmul.f32.gmra.mxu0 %v3725
      %v3830 = vpop.f32.mrf.mxu0
      %v3831 = vadd.f32 0.0, %v3830
      %3832 = vmatmul.f32.gmra.mxu0 %v3726
      %v3833 = vpop.f32.mrf.mxu0
      %v3834 = vadd.f32 0.0, %v3833
      %3835 = vmatmul.f32.gmra.mxu0 %v3727
      %v3836 = vpop.f32.mrf.mxu0
      %v3837 = vadd.f32 0.0, %v3836
      %3838 = vmatmul.f32.gmra.mxu0 %v3728
      %v3839 = vpop.f32.mrf.mxu0
      %v3840 = vadd.f32 0.0, %v3839
      %3841 = vmatmul.f32.gmra.mxu0 %v3729
      %v3842 = vpop.f32.mrf.mxu0
      %v3843 = vadd.f32 0.0, %v3842
      %3844 = vmatmul.f32.gmra.mxu0 %v3730
      %v3845 = vpop.f32.mrf.mxu0
      %v3846 = vadd.f32 0.0, %v3845
      %3847 = vmatmul.f32.gmra.mxu0 %v3731
      %v3848 = vpop.f32.mrf.mxu0
      %v3849 = vadd.f32 0.0, %v3848
      %3850 = vmatmul.f32.gmra.mxu0 %v3732
      %v3851 = vpop.f32.mrf.mxu0
      %v3852 = vadd.f32 0.0, %v3851
      %3853 = vmatmul.f32.gmra.mxu0 %v3733
      %v3854 = vpop.f32.mrf.mxu0
      %v3855 = vadd.f32 0.0, %v3854
      %3856 = vmatmul.f32.gmra.mxu0 %v3734
      %v3857 = vpop.f32.mrf.mxu0
      %v3858 = vadd.f32 0.0, %v3857
      %3859 = vmatmul.f32.gmra.mxu0 %v3735
      %v3860 = vpop.f32.mrf.mxu0
      %v3861 = vadd.f32 0.0, %v3860
      %3862 = vmatmul.f32.gmra.mxu0 %v3736
      %v3863 = vpop.f32.mrf.mxu0
      %v3864 = vadd.f32 0.0, %v3863
      %3865 = vdwg.mxu0
      %v3866 = vmul.f32 %v3771, %v1815
      %v3867 = vmul.f32 %v3774, %v1816
      %v3868 = vmul.f32 %v3777, %v1817
      %v3869 = vmul.f32 %v3780, %v1818
      %v3870 = vmul.f32 %v3783, %v1819
      %v3871 = vmul.f32 %v3786, %v1820
      %v3872 = vmul.f32 %v3789, %v1821
      %v3873 = vmul.f32 %v3792, %v1822
      %v3874 = vmul.f32 %v3795, %v1823
      %v3875 = vmul.f32 %v3798, %v1824
      %v3876 = vmul.f32 %v3801, %v1825
      %v3877 = vmul.f32 %v3804, %v1826
      %v3878 = vmul.f32 %v3807, %v1827
      %v3879 = vmul.f32 %v3810, %v1828
      %v3880 = vmul.f32 %v3813, %v1829
      %v3881 = vmul.f32 %v3816, %v1830
      %v3882 = vmul.f32 %v3819, %v1831
      %v3883 = vmul.f32 %v3822, %v1832
      %v3884 = vmul.f32 %v3825, %v1833
      %v3885 = vmul.f32 %v3828, %v1834
      %v3886 = vmul.f32 %v3831, %v1835
      %v3887 = vmul.f32 %v3834, %v1836
      %v3888 = vmul.f32 %v3837, %v1837
      %v3889 = vmul.f32 %v3840, %v1838
      %v3890 = vmul.f32 %v3843, %v1839
      %v3891 = vmul.f32 %v3846, %v1840
      %v3892 = vmul.f32 %v3849, %v1841
      %v3893 = vmul.f32 %v3852, %v1842
      %v3894 = vmul.f32 %v3855, %v1843
      %v3895 = vmul.f32 %v3858, %v1844
      %v3896 = vmul.f32 %v3861, %v1845
      %v3897 = vmul.f32 %v3864, %v1846
      %3898 = vmatpush.msra.mxu0 %v1862
      %3899 = vmatpush.msra.mxu0 %v1861
      %3900 = vmatpush.msra.mxu0 %v1860
      %3901 = vmatpush.msra.mxu0 %v1859
      %3902 = vmatpush.msra.mxu0 %v1858
      %3903 = vmatpush.msra.mxu0 %v1857
      %3904 = vmatpush.msra.mxu0 %v1856
      %3905 = vmatpush.msra.mxu0 %v1855
      %3906 = vmatpush.msra.mxu0 %v1854
      %3907 = vmatpush.msra.mxu0 %v1853
      %3908 = vmatpush.msra.mxu0 %v1852
      %3909 = vmatpush.msra.mxu0 %v1851
      %3910 = vmatpush.msra.mxu0 %v1850
      %3911 = vmatpush.msra.mxu0 %v1849
      %3912 = vmatpush.msra.mxu0 %v1848
      %3913 = vmatpush.msra.mxu0 %v1847
      %3914 = vmatmul.f32.gmra.mxu0 %v3866
      %v3915 = vpop.f32.mrf.mxu0
      %v3916 = vadd.f32 0.0, %v3915
      %3917 = vmatmul.f32.gmra.mxu0 %v3867
      %v3918 = vpop.f32.mrf.mxu0
      %v3919 = vadd.f32 0.0, %v3918
      %3920 = vmatmul.f32.gmra.mxu0 %v3868
      %v3921 = vpop.f32.mrf.mxu0
      %v3922 = vadd.f32 0.0, %v3921
      %3923 = vmatmul.f32.gmra.mxu0 %v3869
      %v3924 = vpop.f32.mrf.mxu0
      %v3925 = vadd.f32 0.0, %v3924
      %3926 = vmatmul.f32.gmra.mxu0 %v3870
      %v3927 = vpop.f32.mrf.mxu0
      %v3928 = vadd.f32 0.0, %v3927
      %3929 = vmatmul.f32.gmra.mxu0 %v3871
      %v3930 = vpop.f32.mrf.mxu0
      %v3931 = vadd.f32 0.0, %v3930
      %3932 = vmatmul.f32.gmra.mxu0 %v3872
      %v3933 = vpop.f32.mrf.mxu0
      %v3934 = vadd.f32 0.0, %v3933
      %3935 = vmatmul.f32.gmra.mxu0 %v3873
      %v3936 = vpop.f32.mrf.mxu0
      %v3937 = vadd.f32 0.0, %v3936
      %3938 = vmatmul.f32.gmra.mxu0 %v3874
      %v3939 = vpop.f32.mrf.mxu0
      %v3940 = vadd.f32 0.0, %v3939
      %3941 = vmatmul.f32.gmra.mxu0 %v3875
      %v3942 = vpop.f32.mrf.mxu0
      %v3943 = vadd.f32 0.0, %v3942
      %3944 = vmatmul.f32.gmra.mxu0 %v3876
      %v3945 = vpop.f32.mrf.mxu0
      %v3946 = vadd.f32 0.0, %v3945
      %3947 = vmatmul.f32.gmra.mxu0 %v3877
      %v3948 = vpop.f32.mrf.mxu0
      %v3949 = vadd.f32 0.0, %v3948
      %3950 = vmatmul.f32.gmra.mxu0 %v3878
      %v3951 = vpop.f32.mrf.mxu0
      %v3952 = vadd.f32 0.0, %v3951
      %3953 = vmatmul.f32.gmra.mxu0 %v3879
      %v3954 = vpop.f32.mrf.mxu0
      %v3955 = vadd.f32 0.0, %v3954
      %3956 = vmatmul.f32.gmra.mxu0 %v3880
      %v3957 = vpop.f32.mrf.mxu0
      %v3958 = vadd.f32 0.0, %v3957
      %3959 = vmatmul.f32.gmra.mxu0 %v3881
      %v3960 = vpop.f32.mrf.mxu0
      %v3961 = vadd.f32 0.0, %v3960
      %3962 = vmatmul.f32.gmra.mxu0 %v3882
      %v3963 = vpop.f32.mrf.mxu0
      %v3964 = vadd.f32 0.0, %v3963
      %3965 = vmatmul.f32.gmra.mxu0 %v3883
      %v3966 = vpop.f32.mrf.mxu0
      %v3967 = vadd.f32 0.0, %v3966
      %3968 = vmatmul.f32.gmra.mxu0 %v3884
      %v3969 = vpop.f32.mrf.mxu0
      %v3970 = vadd.f32 0.0, %v3969
      %3971 = vmatmul.f32.gmra.mxu0 %v3885
      %v3972 = vpop.f32.mrf.mxu0
      %v3973 = vadd.f32 0.0, %v3972
      %3974 = vmatmul.f32.gmra.mxu0 %v3886
      %v3975 = vpop.f32.mrf.mxu0
      %v3976 = vadd.f32 0.0, %v3975
      %3977 = vmatmul.f32.gmra.mxu0 %v3887
      %v3978 = vpop.f32.mrf.mxu0
      %v3979 = vadd.f32 0.0, %v3978
      %3980 = vmatmul.f32.gmra.mxu0 %v3888
      %v3981 = vpop.f32.mrf.mxu0
      %v3982 = vadd.f32 0.0, %v3981
      %3983 = vmatmul.f32.gmra.mxu0 %v3889
      %v3984 = vpop.f32.mrf.mxu0
      %v3985 = vadd.f32 0.0, %v3984
      %3986 = vmatmul.f32.gmra.mxu0 %v3890
      %v3987 = vpop.f32.mrf.mxu0
      %v3988 = vadd.f32 0.0, %v3987
      %3989 = vmatmul.f32.gmra.mxu0 %v3891
      %v3990 = vpop.f32.mrf.mxu0
      %v3991 = vadd.f32 0.0, %v3990
      %3992 = vmatmul.f32.gmra.mxu0 %v3892
      %v3993 = vpop.f32.mrf.mxu0
      %v3994 = vadd.f32 0.0, %v3993
      %3995 = vmatmul.f32.gmra.mxu0 %v3893
      %v3996 = vpop.f32.mrf.mxu0
      %v3997 = vadd.f32 0.0, %v3996
      %3998 = vmatmul.f32.gmra.mxu0 %v3894
      %v3999 = vpop.f32.mrf.mxu0
      %v4000 = vadd.f32 0.0, %v3999
      %4001 = vmatmul.f32.gmra.mxu0 %v3895
      %v4002 = vpop.f32.mrf.mxu0
      %v4003 = vadd.f32 0.0, %v4002
      %4004 = vmatmul.f32.gmra.mxu0 %v3896
      %v4005 = vpop.f32.mrf.mxu0
      %v4006 = vadd.f32 0.0, %v4005
      %4007 = vmatmul.f32.gmra.mxu0 %v3897
      %v4008 = vpop.f32.mrf.mxu0
      %v4009 = vadd.f32 0.0, %v4008
      %4010 = vdwg.mxu0
      %v4011 = vmul.f32 %v3034, %v3916
      %v4012 = vmul.f32 %v3037, %v3919
      %v4013 = vmul.f32 %v3040, %v3922
      %v4014 = vmul.f32 %v3043, %v3925
      %v4015 = vmul.f32 %v3046, %v3928
      %v4016 = vmul.f32 %v3049, %v3931
      %v4017 = vmul.f32 %v3052, %v3934
      %v4018 = vmul.f32 %v3055, %v3937
      %v4019 = vmul.f32 %v3058, %v3940
      %v4020 = vmul.f32 %v3061, %v3943
      %v4021 = vmul.f32 %v3064, %v3946
      %v4022 = vmul.f32 %v3067, %v3949
      %v4023 = vmul.f32 %v3070, %v3952
      %v4024 = vmul.f32 %v3073, %v3955
      %v4025 = vmul.f32 %v3076, %v3958
      %v4026 = vmul.f32 %v3079, %v3961
      %v4027 = vmul.f32 %v3082, %v3964
      %v4028 = vmul.f32 %v3085, %v3967
      %v4029 = vmul.f32 %v3088, %v3970
      %v4030 = vmul.f32 %v3091, %v3973
      %v4031 = vmul.f32 %v3094, %v3976
      %v4032 = vmul.f32 %v3097, %v3979
      %v4033 = vmul.f32 %v3100, %v3982
      %v4034 = vmul.f32 %v3103, %v3985
      %v4035 = vmul.f32 %v3106, %v3988
      %v4036 = vmul.f32 %v3109, %v3991
      %v4037 = vmul.f32 %v3112, %v3994
      %v4038 = vmul.f32 %v3115, %v3997
      %v4039 = vmul.f32 %v3118, %v4000
      %v4040 = vmul.f32 %v3121, %v4003
      %v4041 = vmul.f32 %v3124, %v4006
      %v4042 = vmul.f32 %v3127, %v4009
      %4043 = vset.pattern.permute.xlu0 2
      %4044 = vperm.xlu0 %4043, %v2023
      %v4045 = vpop.permute.xlu0 %4044
      %4046 = vset.pattern.permute.xlu0 2
      %4047 = vperm.xlu0 %4046, %v2024
      %v4048 = vpop.permute.xlu0 %4047
      %4049 = vset.pattern.permute.xlu0 2
      %4050 = vperm.xlu0 %4049, %v2025
      %v4051 = vpop.permute.xlu0 %4050
      %4052 = vset.pattern.permute.xlu0 2
      %4053 = vperm.xlu0 %4052, %v2026
      %v4054 = vpop.permute.xlu0 %4053
      %4055 = vset.pattern.permute.xlu0 2
      %4056 = vperm.xlu0 %4055, %v2027
      %v4057 = vpop.permute.xlu0 %4056
      %4058 = vset.pattern.permute.xlu0 2
      %4059 = vperm.xlu0 %4058, %v2028
      %v4060 = vpop.permute.xlu0 %4059
      %4061 = vset.pattern.permute.xlu0 2
      %4062 = vperm.xlu0 %4061, %v2029
      %v4063 = vpop.permute.xlu0 %4062
      %4064 = vset.pattern.permute.xlu0 2
      %4065 = vperm.xlu0 %4064, %v2030
      %v4066 = vpop.permute.xlu0 %4065
      %4067 = vset.pattern.permute.xlu0 2
      %4068 = vperm.xlu0 %4067, %v2031
      %v4069 = vpop.permute.xlu0 %4068
      %4070 = vset.pattern.permute.xlu0 2
      %4071 = vperm.xlu0 %4070, %v2032
      %v4072 = vpop.permute.xlu0 %4071
      %4073 = vset.pattern.permute.xlu0 2
      %4074 = vperm.xlu0 %4073, %v2033
      %v4075 = vpop.permute.xlu0 %4074
      %4076 = vset.pattern.permute.xlu0 2
      %4077 = vperm.xlu0 %4076, %v2034
      %v4078 = vpop.permute.xlu0 %4077
      %4079 = vset.pattern.permute.xlu0 2
      %4080 = vperm.xlu0 %4079, %v2035
      %v4081 = vpop.permute.xlu0 %4080
      %4082 = vset.pattern.permute.xlu0 2
      %4083 = vperm.xlu0 %4082, %v2036
      %v4084 = vpop.permute.xlu0 %4083
      %4085 = vset.pattern.permute.xlu0 2
      %4086 = vperm.xlu0 %4085, %v2037
      %v4087 = vpop.permute.xlu0 %4086
      %4088 = vset.pattern.permute.xlu0 2
      %4089 = vperm.xlu0 %4088, %v2038
      %v4090 = vpop.permute.xlu0 %4089
      %4091 = vset.pattern.permute.xlu0 2
      %4092 = vperm.xlu0 %4091, %v2039
      %v4093 = vpop.permute.xlu0 %4092
      %4094 = vset.pattern.permute.xlu0 2
      %4095 = vperm.xlu0 %4094, %v2040
      %v4096 = vpop.permute.xlu0 %4095
      %4097 = vset.pattern.permute.xlu0 2
      %4098 = vperm.xlu0 %4097, %v2041
      %v4099 = vpop.permute.xlu0 %4098
      %4100 = vset.pattern.permute.xlu0 2
      %4101 = vperm.xlu0 %4100, %v2042
      %v4102 = vpop.permute.xlu0 %4101
      %4103 = vset.pattern.permute.xlu0 2
      %4104 = vperm.xlu0 %4103, %v2043
      %v4105 = vpop.permute.xlu0 %4104
      %4106 = vset.pattern.permute.xlu0 2
      %4107 = vperm.xlu0 %4106, %v2044
      %v4108 = vpop.permute.xlu0 %4107
      %4109 = vset.pattern.permute.xlu0 2
      %4110 = vperm.xlu0 %4109, %v2045
      %v4111 = vpop.permute.xlu0 %4110
      %4112 = vset.pattern.permute.xlu0 2
      %4113 = vperm.xlu0 %4112, %v2046
      %v4114 = vpop.permute.xlu0 %4113
      %4115 = vset.pattern.permute.xlu0 2
      %4116 = vperm.xlu0 %4115, %v2047
      %v4117 = vpop.permute.xlu0 %4116
      %4118 = vset.pattern.permute.xlu0 2
      %4119 = vperm.xlu0 %4118, %v2048
      %v4120 = vpop.permute.xlu0 %4119
      %4121 = vset.pattern.permute.xlu0 2
      %4122 = vperm.xlu0 %4121, %v2049
      %v4123 = vpop.permute.xlu0 %4122
      %4124 = vset.pattern.permute.xlu0 2
      %4125 = vperm.xlu0 %4124, %v2050
      %v4126 = vpop.permute.xlu0 %4125
      %4127 = vset.pattern.permute.xlu0 2
      %4128 = vperm.xlu0 %4127, %v2051
      %v4129 = vpop.permute.xlu0 %4128
      %4130 = vset.pattern.permute.xlu0 2
      %4131 = vperm.xlu0 %4130, %v2052
      %v4132 = vpop.permute.xlu0 %4131
      %4133 = vset.pattern.permute.xlu0 2
      %4134 = vperm.xlu0 %4133, %v2053
      %v4135 = vpop.permute.xlu0 %4134
      %4136 = vset.pattern.permute.xlu0 2
      %4137 = vperm.xlu0 %4136, %v2054
      %v4138 = vpop.permute.xlu0 %4137
      %vm4139 = vcmp.eq.s32.totalorder %v694, %v4045
      %vm4140 = vcmp.eq.s32.totalorder %v694, %v4048
      %vm4141 = vcmp.eq.s32.totalorder %v694, %v4051
      %vm4142 = vcmp.eq.s32.totalorder %v694, %v4054
      %vm4143 = vcmp.eq.s32.totalorder %v694, %v4057
      %vm4144 = vcmp.eq.s32.totalorder %v694, %v4060
      %vm4145 = vcmp.eq.s32.totalorder %v694, %v4063
      %vm4146 = vcmp.eq.s32.totalorder %v694, %v4066
      %vm4147 = vcmp.eq.s32.totalorder %v694, %v4069
      %vm4148 = vcmp.eq.s32.totalorder %v694, %v4072
      %vm4149 = vcmp.eq.s32.totalorder %v694, %v4075
      %vm4150 = vcmp.eq.s32.totalorder %v694, %v4078
      %vm4151 = vcmp.eq.s32.totalorder %v694, %v4081
      %vm4152 = vcmp.eq.s32.totalorder %v694, %v4084
      %vm4153 = vcmp.eq.s32.totalorder %v694, %v4087
      %vm4154 = vcmp.eq.s32.totalorder %v694, %v4090
      %vm4155 = vcmp.eq.s32.totalorder %v694, %v4093
      %vm4156 = vcmp.eq.s32.totalorder %v694, %v4096
      %vm4157 = vcmp.eq.s32.totalorder %v694, %v4099
      %vm4158 = vcmp.eq.s32.totalorder %v694, %v4102
      %vm4159 = vcmp.eq.s32.totalorder %v694, %v4105
      %vm4160 = vcmp.eq.s32.totalorder %v694, %v4108
      %vm4161 = vcmp.eq.s32.totalorder %v694, %v4111
      %vm4162 = vcmp.eq.s32.totalorder %v694, %v4114
      %vm4163 = vcmp.eq.s32.totalorder %v694, %v4117
      %vm4164 = vcmp.eq.s32.totalorder %v694, %v4120
      %vm4165 = vcmp.eq.s32.totalorder %v694, %v4123
      %vm4166 = vcmp.eq.s32.totalorder %v694, %v4126
      %vm4167 = vcmp.eq.s32.totalorder %v694, %v4129
      %vm4168 = vcmp.eq.s32.totalorder %v694, %v4132
      %vm4169 = vcmp.eq.s32.totalorder %v694, %v4135
      %vm4170 = vcmp.eq.s32.totalorder %v694, %v4138
      %4171 = vset.pattern.permute.xlu0 2
      %4172 = vperm.xlu0 %4171, %v2279
      %v4173 = vpop.permute.xlu0 %4172
      %4175 = vset.pattern.permute.xlu0 2
      %4176 = vperm.xlu0 %4175, %v2280
      %v4177 = vpop.permute.xlu0 %4176
      %4179 = vset.pattern.permute.xlu0 2
      %4180 = vperm.xlu0 %4179, %v2281
      %v4181 = vpop.permute.xlu0 %4180
      %4183 = vset.pattern.permute.xlu0 2
      %4184 = vperm.xlu0 %4183, %v2282
      %v4185 = vpop.permute.xlu0 %4184
      %4187 = vset.pattern.permute.xlu0 2
      %4188 = vperm.xlu0 %4187, %v2283
      %v4189 = vpop.permute.xlu0 %4188
      %4191 = vset.pattern.permute.xlu0 2
      %4192 = vperm.xlu0 %4191, %v2284
      %v4193 = vpop.permute.xlu0 %4192
      %4195 = vset.pattern.permute.xlu0 2
      %4196 = vperm.xlu0 %4195, %v2285
      %v4197 = vpop.permute.xlu0 %4196
      %4199 = vset.pattern.permute.xlu0 2
      %4200 = vperm.xlu0 %4199, %v2286
      %v4201 = vpop.permute.xlu0 %4200
      %4203 = vset.pattern.permute.xlu0 2
      %4204 = vperm.xlu0 %4203, %v2287
      %v4205 = vpop.permute.xlu0 %4204
      %4207 = vset.pattern.permute.xlu0 2
      %4208 = vperm.xlu0 %4207, %v2288
      %v4209 = vpop.permute.xlu0 %4208
      %4211 = vset.pattern.permute.xlu0 2
      %4212 = vperm.xlu0 %4211, %v2289
      %v4213 = vpop.permute.xlu0 %4212
      %4215 = vset.pattern.permute.xlu0 2
      %4216 = vperm.xlu0 %4215, %v2290
      %v4217 = vpop.permute.xlu0 %4216
      %4219 = vset.pattern.permute.xlu0 2
      %4220 = vperm.xlu0 %4219, %v2291
      %v4221 = vpop.permute.xlu0 %4220
      %4223 = vset.pattern.permute.xlu0 2
      %4224 = vperm.xlu0 %4223, %v2292
      %v4225 = vpop.permute.xlu0 %4224
      %4227 = vset.pattern.permute.xlu0 2
      %4228 = vperm.xlu0 %4227, %v2293
      %v4229 = vpop.permute.xlu0 %4228
      %4231 = vset.pattern.permute.xlu0 2
      %4232 = vperm.xlu0 %4231, %v2294
      %v4233 = vpop.permute.xlu0 %4232
      %4235 = vset.pattern.permute.xlu0 2
      %4236 = vperm.xlu0 %4235, %v2295
      %v4237 = vpop.permute.xlu0 %4236
      %4239 = vset.pattern.permute.xlu0 2
      %4240 = vperm.xlu0 %4239, %v2296
      %v4241 = vpop.permute.xlu0 %4240
      %4243 = vset.pattern.permute.xlu0 2
      %4244 = vperm.xlu0 %4243, %v2297
      %v4245 = vpop.permute.xlu0 %4244
      %4247 = vset.pattern.permute.xlu0 2
      %4248 = vperm.xlu0 %4247, %v2298
      %v4249 = vpop.permute.xlu0 %4248
      %4251 = vset.pattern.permute.xlu0 2
      %4252 = vperm.xlu0 %4251, %v2299
      %v4253 = vpop.permute.xlu0 %4252
      %4255 = vset.pattern.permute.xlu0 2
      %4256 = vperm.xlu0 %4255, %v2300
      %v4257 = vpop.permute.xlu0 %4256
      %4259 = vset.pattern.permute.xlu0 2
      %4260 = vperm.xlu0 %4259, %v2301
      %v4261 = vpop.permute.xlu0 %4260
      %4263 = vset.pattern.permute.xlu0 2
      %4264 = vperm.xlu0 %4263, %v2302
      %v4265 = vpop.permute.xlu0 %4264
      %4267 = vset.pattern.permute.xlu0 2
      %4268 = vperm.xlu0 %4267, %v2303
      %v4269 = vpop.permute.xlu0 %4268
      %4271 = vset.pattern.permute.xlu0 2
      %4272 = vperm.xlu0 %4271, %v2304
      %v4273 = vpop.permute.xlu0 %4272
      %4275 = vset.pattern.permute.xlu0 2
      %4276 = vperm.xlu0 %4275, %v2305
      %v4277 = vpop.permute.xlu0 %4276
      %4279 = vset.pattern.permute.xlu0 2
      %4280 = vperm.xlu0 %4279, %v2306
      %v4281 = vpop.permute.xlu0 %4280
      %4283 = vset.pattern.permute.xlu0 2
      %4284 = vperm.xlu0 %4283, %v2307
      %v4285 = vpop.permute.xlu0 %4284
      %4287 = vset.pattern.permute.xlu0 2
      %4288 = vperm.xlu0 %4287, %v2308
      %v4289 = vpop.permute.xlu0 %4288
      %4291 = vset.pattern.permute.xlu0 2
      %4292 = vperm.xlu0 %4291, %v2309
      %v4293 = vpop.permute.xlu0 %4292
      %4295 = vset.pattern.permute.xlu0 2
      %4296 = vperm.xlu0 %4295, %v2310
      %v4297 = vpop.permute.xlu0 %4296
      %v4299 = vsel %vm4139, %v4173, 0.0
      %v4300 = vsel %vm4140, %v4177, 0.0
      %v4301 = vsel %vm4141, %v4181, 0.0
      %v4302 = vsel %vm4142, %v4185, 0.0
      %v4303 = vsel %vm4143, %v4189, 0.0
      %v4304 = vsel %vm4144, %v4193, 0.0
      %v4305 = vsel %vm4145, %v4197, 0.0
      %v4306 = vsel %vm4146, %v4201, 0.0
      %v4307 = vsel %vm4147, %v4205, 0.0
      %v4308 = vsel %vm4148, %v4209, 0.0
      %v4309 = vsel %vm4149, %v4213, 0.0
      %v4310 = vsel %vm4150, %v4217, 0.0
      %v4311 = vsel %vm4151, %v4221, 0.0
      %v4312 = vsel %vm4152, %v4225, 0.0
      %v4313 = vsel %vm4153, %v4229, 0.0
      %v4314 = vsel %vm4154, %v4233, 0.0
      %v4315 = vsel %vm4155, %v4237, 0.0
      %v4316 = vsel %vm4156, %v4241, 0.0
      %v4317 = vsel %vm4157, %v4245, 0.0
      %v4318 = vsel %vm4158, %v4249, 0.0
      %v4319 = vsel %vm4159, %v4253, 0.0
      %v4320 = vsel %vm4160, %v4257, 0.0
      %v4321 = vsel %vm4161, %v4261, 0.0
      %v4322 = vsel %vm4162, %v4265, 0.0
      %v4323 = vsel %vm4163, %v4269, 0.0
      %v4324 = vsel %vm4164, %v4273, 0.0
      %v4325 = vsel %vm4165, %v4277, 0.0
      %v4326 = vsel %vm4166, %v4281, 0.0
      %v4327 = vsel %vm4167, %v4285, 0.0
      %v4328 = vsel %vm4168, %v4289, 0.0
      %v4329 = vsel %vm4169, %v4293, 0.0
      %v4330 = vsel %vm4170, %v4297, 0.0
      %4331 = vset.pattern.permute.xlu0 2
      %4332 = vperm.xlu0 %4331, %v2088
      %v4333 = vpop.permute.xlu0 %4332
      %4334 = vset.pattern.permute.xlu0 2
      %4335 = vperm.xlu0 %4334, %v2090
      %v4336 = vpop.permute.xlu0 %4335
      %4337 = vset.pattern.permute.xlu0 2
      %4338 = vperm.xlu0 %4337, %v2092
      %v4339 = vpop.permute.xlu0 %4338
      %4340 = vset.pattern.permute.xlu0 2
      %4341 = vperm.xlu0 %4340, %v2094
      %v4342 = vpop.permute.xlu0 %4341
      %4343 = vset.pattern.permute.xlu0 2
      %4344 = vperm.xlu0 %4343, %v2096
      %v4345 = vpop.permute.xlu0 %4344
      %4346 = vset.pattern.permute.xlu0 2
      %4347 = vperm.xlu0 %4346, %v2098
      %v4348 = vpop.permute.xlu0 %4347
      %4349 = vset.pattern.permute.xlu0 2
      %4350 = vperm.xlu0 %4349, %v2100
      %v4351 = vpop.permute.xlu0 %4350
      %4352 = vset.pattern.permute.xlu0 2
      %4353 = vperm.xlu0 %4352, %v2102
      %v4354 = vpop.permute.xlu0 %4353
      %4355 = vset.pattern.permute.xlu0 2
      %4356 = vperm.xlu0 %4355, %v2104
      %v4357 = vpop.permute.xlu0 %4356
      %4358 = vset.pattern.permute.xlu0 2
      %4359 = vperm.xlu0 %4358, %v2106
      %v4360 = vpop.permute.xlu0 %4359
      %4361 = vset.pattern.permute.xlu0 2
      %4362 = vperm.xlu0 %4361, %v2108
      %v4363 = vpop.permute.xlu0 %4362
      %4364 = vset.pattern.permute.xlu0 2
      %4365 = vperm.xlu0 %4364, %v2110
      %v4366 = vpop.permute.xlu0 %4365
      %4367 = vset.pattern.permute.xlu0 2
      %4368 = vperm.xlu0 %4367, %v2112
      %v4369 = vpop.permute.xlu0 %4368
      %4370 = vset.pattern.permute.xlu0 2
      %4371 = vperm.xlu0 %4370, %v2114
      %v4372 = vpop.permute.xlu0 %4371
      %4373 = vset.pattern.permute.xlu0 2
      %4374 = vperm.xlu0 %4373, %v2116
      %v4375 = vpop.permute.xlu0 %4374
      %4376 = vset.pattern.permute.xlu0 2
      %4377 = vperm.xlu0 %4376, %v2118
      %v4378 = vpop.permute.xlu0 %4377
      %4379 = vset.pattern.permute.xlu0 2
      %4380 = vperm.xlu0 %4379, %v2120
      %v4381 = vpop.permute.xlu0 %4380
      %4382 = vset.pattern.permute.xlu0 2
      %4383 = vperm.xlu0 %4382, %v2122
      %v4384 = vpop.permute.xlu0 %4383
      %4385 = vset.pattern.permute.xlu0 2
      %4386 = vperm.xlu0 %4385, %v2124
      %v4387 = vpop.permute.xlu0 %4386
      %4388 = vset.pattern.permute.xlu0 2
      %4389 = vperm.xlu0 %4388, %v2126
      %v4390 = vpop.permute.xlu0 %4389
      %4391 = vset.pattern.permute.xlu0 2
      %4392 = vperm.xlu0 %4391, %v2128
      %v4393 = vpop.permute.xlu0 %4392
      %4394 = vset.pattern.permute.xlu0 2
      %4395 = vperm.xlu0 %4394, %v2130
      %v4396 = vpop.permute.xlu0 %4395
      %4397 = vset.pattern.permute.xlu0 2
      %4398 = vperm.xlu0 %4397, %v2132
      %v4399 = vpop.permute.xlu0 %4398
      %4400 = vset.pattern.permute.xlu0 2
      %4401 = vperm.xlu0 %4400, %v2134
      %v4402 = vpop.permute.xlu0 %4401
      %4403 = vset.pattern.permute.xlu0 2
      %4404 = vperm.xlu0 %4403, %v2136
      %v4405 = vpop.permute.xlu0 %4404
      %4406 = vset.pattern.permute.xlu0 2
      %4407 = vperm.xlu0 %4406, %v2138
      %v4408 = vpop.permute.xlu0 %4407
      %4409 = vset.pattern.permute.xlu0 2
      %4410 = vperm.xlu0 %4409, %v2140
      %v4411 = vpop.permute.xlu0 %4410
      %4412 = vset.pattern.permute.xlu0 2
      %4413 = vperm.xlu0 %4412, %v2142
      %v4414 = vpop.permute.xlu0 %4413
      %4415 = vset.pattern.permute.xlu0 2
      %4416 = vperm.xlu0 %4415, %v2144
      %v4417 = vpop.permute.xlu0 %4416
      %4418 = vset.pattern.permute.xlu0 2
      %4419 = vperm.xlu0 %4418, %v2146
      %v4420 = vpop.permute.xlu0 %4419
      %4421 = vset.pattern.permute.xlu0 2
      %4422 = vperm.xlu0 %4421, %v2148
      %v4423 = vpop.permute.xlu0 %4422
      %4424 = vset.pattern.permute.xlu0 2
      %4425 = vperm.xlu0 %4424, %v2150
      %v4426 = vpop.permute.xlu0 %4425
      %vm4427 = vcmp.eq.s32.totalorder %v694, %v4333
      %vm4428 = vcmp.eq.s32.totalorder %v694, %v4336
      %vm4429 = vcmp.eq.s32.totalorder %v694, %v4339
      %vm4430 = vcmp.eq.s32.totalorder %v694, %v4342
      %vm4431 = vcmp.eq.s32.totalorder %v694, %v4345
      %vm4432 = vcmp.eq.s32.totalorder %v694, %v4348
      %vm4433 = vcmp.eq.s32.totalorder %v694, %v4351
      %vm4434 = vcmp.eq.s32.totalorder %v694, %v4354
      %vm4435 = vcmp.eq.s32.totalorder %v694, %v4357
      %vm4436 = vcmp.eq.s32.totalorder %v694, %v4360
      %vm4437 = vcmp.eq.s32.totalorder %v694, %v4363
      %vm4438 = vcmp.eq.s32.totalorder %v694, %v4366
      %vm4439 = vcmp.eq.s32.totalorder %v694, %v4369
      %vm4440 = vcmp.eq.s32.totalorder %v694, %v4372
      %vm4441 = vcmp.eq.s32.totalorder %v694, %v4375
      %vm4442 = vcmp.eq.s32.totalorder %v694, %v4378
      %vm4443 = vcmp.eq.s32.totalorder %v694, %v4381
      %vm4444 = vcmp.eq.s32.totalorder %v694, %v4384
      %vm4445 = vcmp.eq.s32.totalorder %v694, %v4387
      %vm4446 = vcmp.eq.s32.totalorder %v694, %v4390
      %vm4447 = vcmp.eq.s32.totalorder %v694, %v4393
      %vm4448 = vcmp.eq.s32.totalorder %v694, %v4396
      %vm4449 = vcmp.eq.s32.totalorder %v694, %v4399
      %vm4450 = vcmp.eq.s32.totalorder %v694, %v4402
      %vm4451 = vcmp.eq.s32.totalorder %v694, %v4405
      %vm4452 = vcmp.eq.s32.totalorder %v694, %v4408
      %vm4453 = vcmp.eq.s32.totalorder %v694, %v4411
      %vm4454 = vcmp.eq.s32.totalorder %v694, %v4414
      %vm4455 = vcmp.eq.s32.totalorder %v694, %v4417
      %vm4456 = vcmp.eq.s32.totalorder %v694, %v4420
      %vm4457 = vcmp.eq.s32.totalorder %v694, %v4423
      %vm4458 = vcmp.eq.s32.totalorder %v694, %v4426
      %4459 = vset.pattern.permute.xlu0 2
      %4460 = vperm.xlu0 %4459, %v1991
      %v4461 = vpop.permute.xlu0 %4460
      %4463 = vset.pattern.permute.xlu0 2
      %4464 = vperm.xlu0 %4463, %v1992
      %v4465 = vpop.permute.xlu0 %4464
      %4467 = vset.pattern.permute.xlu0 2
      %4468 = vperm.xlu0 %4467, %v1993
      %v4469 = vpop.permute.xlu0 %4468
      %4471 = vset.pattern.permute.xlu0 2
      %4472 = vperm.xlu0 %4471, %v1994
      %v4473 = vpop.permute.xlu0 %4472
      %4475 = vset.pattern.permute.xlu0 2
      %4476 = vperm.xlu0 %4475, %v1995
      %v4477 = vpop.permute.xlu0 %4476
      %4479 = vset.pattern.permute.xlu0 2
      %4480 = vperm.xlu0 %4479, %v1996
      %v4481 = vpop.permute.xlu0 %4480
      %4483 = vset.pattern.permute.xlu0 2
      %4484 = vperm.xlu0 %4483, %v1997
      %v4485 = vpop.permute.xlu0 %4484
      %4487 = vset.pattern.permute.xlu0 2
      %4488 = vperm.xlu0 %4487, %v1998
      %v4489 = vpop.permute.xlu0 %4488
      %4491 = vset.pattern.permute.xlu0 2
      %4492 = vperm.xlu0 %4491, %v1999
      %v4493 = vpop.permute.xlu0 %4492
      %4495 = vset.pattern.permute.xlu0 2
      %4496 = vperm.xlu0 %4495, %v2000
      %v4497 = vpop.permute.xlu0 %4496
      %4499 = vset.pattern.permute.xlu0 2
      %4500 = vperm.xlu0 %4499, %v2001
      %v4501 = vpop.permute.xlu0 %4500
      %4503 = vset.pattern.permute.xlu0 2
      %4504 = vperm.xlu0 %4503, %v2002
      %v4505 = vpop.permute.xlu0 %4504
      %4507 = vset.pattern.permute.xlu0 2
      %4508 = vperm.xlu0 %4507, %v2003
      %v4509 = vpop.permute.xlu0 %4508
      %4511 = vset.pattern.permute.xlu0 2
      %4512 = vperm.xlu0 %4511, %v2004
      %v4513 = vpop.permute.xlu0 %4512
      %4515 = vset.pattern.permute.xlu0 2
      %4516 = vperm.xlu0 %4515, %v2005
      %v4517 = vpop.permute.xlu0 %4516
      %4519 = vset.pattern.permute.xlu0 2
      %4520 = vperm.xlu0 %4519, %v2006
      %v4521 = vpop.permute.xlu0 %4520
      %4523 = vset.pattern.permute.xlu0 2
      %4524 = vperm.xlu0 %4523, %v2007
      %v4525 = vpop.permute.xlu0 %4524
      %4527 = vset.pattern.permute.xlu0 2
      %4528 = vperm.xlu0 %4527, %v2008
      %v4529 = vpop.permute.xlu0 %4528
      %4531 = vset.pattern.permute.xlu0 2
      %4532 = vperm.xlu0 %4531, %v2009
      %v4533 = vpop.permute.xlu0 %4532
      %4535 = vset.pattern.permute.xlu0 2
      %4536 = vperm.xlu0 %4535, %v2010
      %v4537 = vpop.permute.xlu0 %4536
      %4539 = vset.pattern.permute.xlu0 2
      %4540 = vperm.xlu0 %4539, %v2011
      %v4541 = vpop.permute.xlu0 %4540
      %4543 = vset.pattern.permute.xlu0 2
      %4544 = vperm.xlu0 %4543, %v2012
      %v4545 = vpop.permute.xlu0 %4544
      %4547 = vset.pattern.permute.xlu0 2
      %4548 = vperm.xlu0 %4547, %v2013
      %v4549 = vpop.permute.xlu0 %4548
      %4551 = vset.pattern.permute.xlu0 2
      %4552 = vperm.xlu0 %4551, %v2014
      %v4553 = vpop.permute.xlu0 %4552
      %4555 = vset.pattern.permute.xlu0 2
      %4556 = vperm.xlu0 %4555, %v2015
      %v4557 = vpop.permute.xlu0 %4556
      %4559 = vset.pattern.permute.xlu0 2
      %4560 = vperm.xlu0 %4559, %v2016
      %v4561 = vpop.permute.xlu0 %4560
      %4563 = vset.pattern.permute.xlu0 2
      %4564 = vperm.xlu0 %4563, %v2017
      %v4565 = vpop.permute.xlu0 %4564
      %4567 = vset.pattern.permute.xlu0 2
      %4568 = vperm.xlu0 %4567, %v2018
      %v4569 = vpop.permute.xlu0 %4568
      %4571 = vset.pattern.permute.xlu0 2
      %4572 = vperm.xlu0 %4571, %v2019
      %v4573 = vpop.permute.xlu0 %4572
      %4575 = vset.pattern.permute.xlu0 2
      %4576 = vperm.xlu0 %4575, %v2020
      %v4577 = vpop.permute.xlu0 %4576
      %4579 = vset.pattern.permute.xlu0 2
      %4580 = vperm.xlu0 %4579, %v2021
      %v4581 = vpop.permute.xlu0 %4580
      %4583 = vset.pattern.permute.xlu0 2
      %4584 = vperm.xlu0 %4583, %v2022
      %v4585 = vpop.permute.xlu0 %4584
      %v4587 = vsel %vm4427, %v4461, 0.0
      %v4588 = vsel %vm4428, %v4465, 0.0
      %v4589 = vsel %vm4429, %v4469, 0.0
      %v4590 = vsel %vm4430, %v4473, 0.0
      %v4591 = vsel %vm4431, %v4477, 0.0
      %v4592 = vsel %vm4432, %v4481, 0.0
      %v4593 = vsel %vm4433, %v4485, 0.0
      %v4594 = vsel %vm4434, %v4489, 0.0
      %v4595 = vsel %vm4435, %v4493, 0.0
      %v4596 = vsel %vm4436, %v4497, 0.0
      %v4597 = vsel %vm4437, %v4501, 0.0
      %v4598 = vsel %vm4438, %v4505, 0.0
      %v4599 = vsel %vm4439, %v4509, 0.0
      %v4600 = vsel %vm4440, %v4513, 0.0
      %v4601 = vsel %vm4441, %v4517, 0.0
      %v4602 = vsel %vm4442, %v4521, 0.0
      %v4603 = vsel %vm4443, %v4525, 0.0
      %v4604 = vsel %vm4444, %v4529, 0.0
      %v4605 = vsel %vm4445, %v4533, 0.0
      %v4606 = vsel %vm4446, %v4537, 0.0
      %v4607 = vsel %vm4447, %v4541, 0.0
      %v4608 = vsel %vm4448, %v4545, 0.0
      %v4609 = vsel %vm4449, %v4549, 0.0
      %v4610 = vsel %vm4450, %v4553, 0.0
      %v4611 = vsel %vm4451, %v4557, 0.0
      %v4612 = vsel %vm4452, %v4561, 0.0
      %v4613 = vsel %vm4453, %v4565, 0.0
      %v4614 = vsel %vm4454, %v4569, 0.0
      %v4615 = vsel %vm4455, %v4573, 0.0
      %v4616 = vsel %vm4456, %v4577, 0.0
      %v4617 = vsel %vm4457, %v4581, 0.0
      %v4618 = vsel %vm4458, %v4585, 0.0
      %v4619 = vadd.f32 %v4299, %v4587
      %v4620 = vadd.f32 %v4300, %v4588
      %v4621 = vadd.f32 %v4301, %v4589
      %v4622 = vadd.f32 %v4302, %v4590
      %v4623 = vadd.f32 %v4303, %v4591
      %v4624 = vadd.f32 %v4304, %v4592
      %v4625 = vadd.f32 %v4305, %v4593
      %v4626 = vadd.f32 %v4306, %v4594
      %v4627 = vadd.f32 %v4307, %v4595
      %v4628 = vadd.f32 %v4308, %v4596
      %v4629 = vadd.f32 %v4309, %v4597
      %v4630 = vadd.f32 %v4310, %v4598
      %v4631 = vadd.f32 %v4311, %v4599
      %v4632 = vadd.f32 %v4312, %v4600
      %v4633 = vadd.f32 %v4313, %v4601
      %v4634 = vadd.f32 %v4314, %v4602
      %v4635 = vadd.f32 %v4315, %v4603
      %v4636 = vadd.f32 %v4316, %v4604
      %v4637 = vadd.f32 %v4317, %v4605
      %v4638 = vadd.f32 %v4318, %v4606
      %v4639 = vadd.f32 %v4319, %v4607
      %v4640 = vadd.f32 %v4320, %v4608
      %v4641 = vadd.f32 %v4321, %v4609
      %v4642 = vadd.f32 %v4322, %v4610
      %v4643 = vadd.f32 %v4323, %v4611
      %v4644 = vadd.f32 %v4324, %v4612
      %v4645 = vadd.f32 %v4325, %v4613
      %v4646 = vadd.f32 %v4326, %v4614
      %v4647 = vadd.f32 %v4327, %v4615
      %v4648 = vadd.f32 %v4328, %v4616
      %v4649 = vadd.f32 %v4329, %v4617
      %v4650 = vadd.f32 %v4330, %v4618
      %v4651 = vld [vmem:[%s4] sm:$0xff]
      %v4652 = vld [vmem:[%s4 + $0x8] sm:$0xff]
      %v4653 = vld [vmem:[%s4 + $0x10] sm:$0xff]
      %v4654 = vld [vmem:[%s4 + $0x18] sm:$0xff]
      %v4655 = vld [vmem:[%s4 + $0x20] sm:$0xff]
      %v4656 = vld [vmem:[%s4 + $0x28] sm:$0xff]
      %v4657 = vld [vmem:[%s4 + $0x30] sm:$0xff]
      %v4658 = vld [vmem:[%s4 + $0x38] sm:$0xff]
      %v4659 = vld [vmem:[%s4 + $0x40] sm:$0xff]
      %v4660 = vld [vmem:[%s4 + $0x48] sm:$0xff]
      %v4661 = vld [vmem:[%s4 + $0x50] sm:$0xff]
      %v4662 = vld [vmem:[%s4 + $0x58] sm:$0xff]
      %v4663 = vld [vmem:[%s4 + $0x60] sm:$0xff]
      %v4664 = vld [vmem:[%s4 + $0x68] sm:$0xff]
      %v4665 = vld [vmem:[%s4 + $0x70] sm:$0xff]
      %v4666 = vld [vmem:[%s4 + $0x78] sm:$0xff]
      %4667 = vmatpush.msra.mxu0 %v4666
      %4668 = vmatpush.msra.mxu0 %v4665
      %4669 = vmatpush.msra.mxu0 %v4664
      %4670 = vmatpush.msra.mxu0 %v4663
      %4671 = vmatpush.msra.mxu0 %v4662
      %4672 = vmatpush.msra.mxu0 %v4661
      %4673 = vmatpush.msra.mxu0 %v4660
      %4674 = vmatpush.msra.mxu0 %v4659
      %4675 = vmatpush.msra.mxu0 %v4658
      %4676 = vmatpush.msra.mxu0 %v4657
      %4677 = vmatpush.msra.mxu0 %v4656
      %4678 = vmatpush.msra.mxu0 %v4655
      %4679 = vmatpush.msra.mxu0 %v4654
      %4680 = vmatpush.msra.mxu0 %v4653
      %4681 = vmatpush.msra.mxu0 %v4652
      %4682 = vmatpush.msra.mxu0 %v4651
      %4683 = vmatmul.f32.gmra.mxu0 %v4619
      %v4684 = vpop.f32.mrf.mxu0
      %v4685 = vadd.f32 0.0, %v4684
      %4686 = vmatmul.f32.gmra.mxu0 %v4620
      %v4687 = vpop.f32.mrf.mxu0
      %v4688 = vadd.f32 0.0, %v4687
      %4689 = vmatmul.f32.gmra.mxu0 %v4621
      %v4690 = vpop.f32.mrf.mxu0
      %v4691 = vadd.f32 0.0, %v4690
      %4692 = vmatmul.f32.gmra.mxu0 %v4622
      %v4693 = vpop.f32.mrf.mxu0
      %v4694 = vadd.f32 0.0, %v4693
      %4695 = vmatmul.f32.gmra.mxu0 %v4623
      %v4696 = vpop.f32.mrf.mxu0
      %v4697 = vadd.f32 0.0, %v4696
      %4698 = vmatmul.f32.gmra.mxu0 %v4624
      %v4699 = vpop.f32.mrf.mxu0
      %v4700 = vadd.f32 0.0, %v4699
      %4701 = vmatmul.f32.gmra.mxu0 %v4625
      %v4702 = vpop.f32.mrf.mxu0
      %v4703 = vadd.f32 0.0, %v4702
      %4704 = vmatmul.f32.gmra.mxu0 %v4626
      %v4705 = vpop.f32.mrf.mxu0
      %v4706 = vadd.f32 0.0, %v4705
      %4707 = vmatmul.f32.gmra.mxu0 %v4627
      %v4708 = vpop.f32.mrf.mxu0
      %v4709 = vadd.f32 0.0, %v4708
      %4710 = vmatmul.f32.gmra.mxu0 %v4628
      %v4711 = vpop.f32.mrf.mxu0
      %v4712 = vadd.f32 0.0, %v4711
      %4713 = vmatmul.f32.gmra.mxu0 %v4629
      %v4714 = vpop.f32.mrf.mxu0
      %v4715 = vadd.f32 0.0, %v4714
      %4716 = vmatmul.f32.gmra.mxu0 %v4630
      %v4717 = vpop.f32.mrf.mxu0
      %v4718 = vadd.f32 0.0, %v4717
      %4719 = vmatmul.f32.gmra.mxu0 %v4631
      %v4720 = vpop.f32.mrf.mxu0
      %v4721 = vadd.f32 0.0, %v4720
      %4722 = vmatmul.f32.gmra.mxu0 %v4632
      %v4723 = vpop.f32.mrf.mxu0
      %v4724 = vadd.f32 0.0, %v4723
      %4725 = vmatmul.f32.gmra.mxu0 %v4633
      %v4726 = vpop.f32.mrf.mxu0
      %v4727 = vadd.f32 0.0, %v4726
      %4728 = vmatmul.f32.gmra.mxu0 %v4634
      %v4729 = vpop.f32.mrf.mxu0
      %v4730 = vadd.f32 0.0, %v4729
      %4731 = vmatmul.f32.gmra.mxu0 %v4635
      %v4732 = vpop.f32.mrf.mxu0
      %v4733 = vadd.f32 0.0, %v4732
      %4734 = vmatmul.f32.gmra.mxu0 %v4636
      %v4735 = vpop.f32.mrf.mxu0
      %v4736 = vadd.f32 0.0, %v4735
      %4737 = vmatmul.f32.gmra.mxu0 %v4637
      %v4738 = vpop.f32.mrf.mxu0
      %v4739 = vadd.f32 0.0, %v4738
      %4740 = vmatmul.f32.gmra.mxu0 %v4638
      %v4741 = vpop.f32.mrf.mxu0
      %v4742 = vadd.f32 0.0, %v4741
      %4743 = vmatmul.f32.gmra.mxu0 %v4639
      %v4744 = vpop.f32.mrf.mxu0
      %v4745 = vadd.f32 0.0, %v4744
      %4746 = vmatmul.f32.gmra.mxu0 %v4640
      %v4747 = vpop.f32.mrf.mxu0
      %v4748 = vadd.f32 0.0, %v4747
      %4749 = vmatmul.f32.gmra.mxu0 %v4641
      %v4750 = vpop.f32.mrf.mxu0
      %v4751 = vadd.f32 0.0, %v4750
      %4752 = vmatmul.f32.gmra.mxu0 %v4642
      %v4753 = vpop.f32.mrf.mxu0
      %v4754 = vadd.f32 0.0, %v4753
      %4755 = vmatmul.f32.gmra.mxu0 %v4643
      %v4756 = vpop.f32.mrf.mxu0
      %v4757 = vadd.f32 0.0, %v4756
      %4758 = vmatmul.f32.gmra.mxu0 %v4644
      %v4759 = vpop.f32.mrf.mxu0
      %v4760 = vadd.f32 0.0, %v4759
      %4761 = vmatmul.f32.gmra.mxu0 %v4645
      %v4762 = vpop.f32.mrf.mxu0
      %v4763 = vadd.f32 0.0, %v4762
      %4764 = vmatmul.f32.gmra.mxu0 %v4646
      %v4765 = vpop.f32.mrf.mxu0
      %v4766 = vadd.f32 0.0, %v4765
      %4767 = vmatmul.f32.gmra.mxu0 %v4647
      %v4768 = vpop.f32.mrf.mxu0
      %v4769 = vadd.f32 0.0, %v4768
      %4770 = vmatmul.f32.gmra.mxu0 %v4648
      %v4771 = vpop.f32.mrf.mxu0
      %v4772 = vadd.f32 0.0, %v4771
      %4773 = vmatmul.f32.gmra.mxu0 %v4649
      %v4774 = vpop.f32.mrf.mxu0
      %v4775 = vadd.f32 0.0, %v4774
      %4776 = vmatmul.f32.gmra.mxu0 %v4650
      %v4777 = vpop.f32.mrf.mxu0
      %v4778 = vadd.f32 0.0, %v4777
      %4779 = vdwg.mxu0
      %v4780 = vmul.f32 %v4685, %v1815
      %v4781 = vmul.f32 %v4688, %v1816
      %v4782 = vmul.f32 %v4691, %v1817
      %v4783 = vmul.f32 %v4694, %v1818
      %v4784 = vmul.f32 %v4697, %v1819
      %v4785 = vmul.f32 %v4700, %v1820
      %v4786 = vmul.f32 %v4703, %v1821
      %v4787 = vmul.f32 %v4706, %v1822
      %v4788 = vmul.f32 %v4709, %v1823
      %v4789 = vmul.f32 %v4712, %v1824
      %v4790 = vmul.f32 %v4715, %v1825
      %v4791 = vmul.f32 %v4718, %v1826
      %v4792 = vmul.f32 %v4721, %v1827
      %v4793 = vmul.f32 %v4724, %v1828
      %v4794 = vmul.f32 %v4727, %v1829
      %v4795 = vmul.f32 %v4730, %v1830
      %v4796 = vmul.f32 %v4733, %v1831
      %v4797 = vmul.f32 %v4736, %v1832
      %v4798 = vmul.f32 %v4739, %v1833
      %v4799 = vmul.f32 %v4742, %v1834
      %v4800 = vmul.f32 %v4745, %v1835
      %v4801 = vmul.f32 %v4748, %v1836
      %v4802 = vmul.f32 %v4751, %v1837
      %v4803 = vmul.f32 %v4754, %v1838
      %v4804 = vmul.f32 %v4757, %v1839
      %v4805 = vmul.f32 %v4760, %v1840
      %v4806 = vmul.f32 %v4763, %v1841
      %v4807 = vmul.f32 %v4766, %v1842
      %v4808 = vmul.f32 %v4769, %v1843
      %v4809 = vmul.f32 %v4772, %v1844
      %v4810 = vmul.f32 %v4775, %v1845
      %v4811 = vmul.f32 %v4778, %v1846
      %4812 = vmatpush.msra.mxu0 %v1862
      %4813 = vmatpush.msra.mxu0 %v1861
      %4814 = vmatpush.msra.mxu0 %v1860
      %4815 = vmatpush.msra.mxu0 %v1859
      %4816 = vmatpush.msra.mxu0 %v1858
      %4817 = vmatpush.msra.mxu0 %v1857
      %4818 = vmatpush.msra.mxu0 %v1856
      %4819 = vmatpush.msra.mxu0 %v1855
      %4820 = vmatpush.msra.mxu0 %v1854
      %4821 = vmatpush.msra.mxu0 %v1853
      %4822 = vmatpush.msra.mxu0 %v1852
      %4823 = vmatpush.msra.mxu0 %v1851
      %4824 = vmatpush.msra.mxu0 %v1850
      %4825 = vmatpush.msra.mxu0 %v1849
      %4826 = vmatpush.msra.mxu0 %v1848
      %4827 = vmatpush.msra.mxu0 %v1847
      %4828 = vmatmul.f32.gmra.mxu0 %v4780
      %v4829 = vpop.f32.mrf.mxu0
      %v4830 = vadd.f32 0.0, %v4829
      %4831 = vmatmul.f32.gmra.mxu0 %v4781
      %v4832 = vpop.f32.mrf.mxu0
      %v4833 = vadd.f32 0.0, %v4832
      %4834 = vmatmul.f32.gmra.mxu0 %v4782
      %v4835 = vpop.f32.mrf.mxu0
      %v4836 = vadd.f32 0.0, %v4835
      %4837 = vmatmul.f32.gmra.mxu0 %v4783
      %v4838 = vpop.f32.mrf.mxu0
      %v4839 = vadd.f32 0.0, %v4838
      %4840 = vmatmul.f32.gmra.mxu0 %v4784
      %v4841 = vpop.f32.mrf.mxu0
      %v4842 = vadd.f32 0.0, %v4841
      %4843 = vmatmul.f32.gmra.mxu0 %v4785
      %v4844 = vpop.f32.mrf.mxu0
      %v4845 = vadd.f32 0.0, %v4844
      %4846 = vmatmul.f32.gmra.mxu0 %v4786
      %v4847 = vpop.f32.mrf.mxu0
      %v4848 = vadd.f32 0.0, %v4847
      %4849 = vmatmul.f32.gmra.mxu0 %v4787
      %v4850 = vpop.f32.mrf.mxu0
      %v4851 = vadd.f32 0.0, %v4850
      %4852 = vmatmul.f32.gmra.mxu0 %v4788
      %v4853 = vpop.f32.mrf.mxu0
      %v4854 = vadd.f32 0.0, %v4853
      %4855 = vmatmul.f32.gmra.mxu0 %v4789
      %v4856 = vpop.f32.mrf.mxu0
      %v4857 = vadd.f32 0.0, %v4856
      %4858 = vmatmul.f32.gmra.mxu0 %v4790
      %v4859 = vpop.f32.mrf.mxu0
      %v4860 = vadd.f32 0.0, %v4859
      %4861 = vmatmul.f32.gmra.mxu0 %v4791
      %v4862 = vpop.f32.mrf.mxu0
      %v4863 = vadd.f32 0.0, %v4862
      %4864 = vmatmul.f32.gmra.mxu0 %v4792
      %v4865 = vpop.f32.mrf.mxu0
      %v4866 = vadd.f32 0.0, %v4865
      %4867 = vmatmul.f32.gmra.mxu0 %v4793
      %v4868 = vpop.f32.mrf.mxu0
      %v4869 = vadd.f32 0.0, %v4868
      %4870 = vmatmul.f32.gmra.mxu0 %v4794
      %v4871 = vpop.f32.mrf.mxu0
      %v4872 = vadd.f32 0.0, %v4871
      %4873 = vmatmul.f32.gmra.mxu0 %v4795
      %v4874 = vpop.f32.mrf.mxu0
      %v4875 = vadd.f32 0.0, %v4874
      %4876 = vmatmul.f32.gmra.mxu0 %v4796
      %v4877 = vpop.f32.mrf.mxu0
      %v4878 = vadd.f32 0.0, %v4877
      %4879 = vmatmul.f32.gmra.mxu0 %v4797
      %v4880 = vpop.f32.mrf.mxu0
      %v4881 = vadd.f32 0.0, %v4880
      %4882 = vmatmul.f32.gmra.mxu0 %v4798
      %v4883 = vpop.f32.mrf.mxu0
      %v4884 = vadd.f32 0.0, %v4883
      %4885 = vmatmul.f32.gmra.mxu0 %v4799
      %v4886 = vpop.f32.mrf.mxu0
      %v4887 = vadd.f32 0.0, %v4886
      %4888 = vmatmul.f32.gmra.mxu0 %v4800
      %v4889 = vpop.f32.mrf.mxu0
      %v4890 = vadd.f32 0.0, %v4889
      %4891 = vmatmul.f32.gmra.mxu0 %v4801
      %v4892 = vpop.f32.mrf.mxu0
      %v4893 = vadd.f32 0.0, %v4892
      %4894 = vmatmul.f32.gmra.mxu0 %v4802
      %v4895 = vpop.f32.mrf.mxu0
      %v4896 = vadd.f32 0.0, %v4895
      %4897 = vmatmul.f32.gmra.mxu0 %v4803
      %v4898 = vpop.f32.mrf.mxu0
      %v4899 = vadd.f32 0.0, %v4898
      %4900 = vmatmul.f32.gmra.mxu0 %v4804
      %v4901 = vpop.f32.mrf.mxu0
      %v4902 = vadd.f32 0.0, %v4901
      %4903 = vmatmul.f32.gmra.mxu0 %v4805
      %v4904 = vpop.f32.mrf.mxu0
      %v4905 = vadd.f32 0.0, %v4904
      %4906 = vmatmul.f32.gmra.mxu0 %v4806
      %v4907 = vpop.f32.mrf.mxu0
      %v4908 = vadd.f32 0.0, %v4907
      %4909 = vmatmul.f32.gmra.mxu0 %v4807
      %v4910 = vpop.f32.mrf.mxu0
      %v4911 = vadd.f32 0.0, %v4910
      %4912 = vmatmul.f32.gmra.mxu0 %v4808
      %v4913 = vpop.f32.mrf.mxu0
      %v4914 = vadd.f32 0.0, %v4913
      %4915 = vmatmul.f32.gmra.mxu0 %v4809
      %v4916 = vpop.f32.mrf.mxu0
      %v4917 = vadd.f32 0.0, %v4916
      %4918 = vmatmul.f32.gmra.mxu0 %v4810
      %v4919 = vpop.f32.mrf.mxu0
      %v4920 = vadd.f32 0.0, %v4919
      %4921 = vmatmul.f32.gmra.mxu0 %v4811
      %v4922 = vpop.f32.mrf.mxu0
      %v4923 = vadd.f32 0.0, %v4922
      %4924 = vdwg.mxu0
      %v4925 = vmul.f32 %v4011, %v4830
      %v4926 = vmul.f32 %v4012, %v4833
      %v4927 = vmul.f32 %v4013, %v4836
      %v4928 = vmul.f32 %v4014, %v4839
      %v4929 = vmul.f32 %v4015, %v4842
      %v4930 = vmul.f32 %v4016, %v4845
      %v4931 = vmul.f32 %v4017, %v4848
      %v4932 = vmul.f32 %v4018, %v4851
      %v4933 = vmul.f32 %v4019, %v4854
      %v4934 = vmul.f32 %v4020, %v4857
      %v4935 = vmul.f32 %v4021, %v4860
      %v4936 = vmul.f32 %v4022, %v4863
      %v4937 = vmul.f32 %v4023, %v4866
      %v4938 = vmul.f32 %v4024, %v4869
      %v4939 = vmul.f32 %v4025, %v4872
      %v4940 = vmul.f32 %v4026, %v4875
      %v4941 = vmul.f32 %v4027, %v4878
      %v4942 = vmul.f32 %v4028, %v4881
      %v4943 = vmul.f32 %v4029, %v4884
      %v4944 = vmul.f32 %v4030, %v4887
      %v4945 = vmul.f32 %v4031, %v4890
      %v4946 = vmul.f32 %v4032, %v4893
      %v4947 = vmul.f32 %v4033, %v4896
      %v4948 = vmul.f32 %v4034, %v4899
      %v4949 = vmul.f32 %v4035, %v4902
      %v4950 = vmul.f32 %v4036, %v4905
      %v4951 = vmul.f32 %v4037, %v4908
      %v4952 = vmul.f32 %v4038, %v4911
      %v4953 = vmul.f32 %v4039, %v4914
      %v4954 = vmul.f32 %v4040, %v4917
      %v4955 = vmul.f32 %v4041, %v4920
      %v4956 = vmul.f32 %v4042, %v4923
      %vm4957 = vcmask 130048
      %4958 = vst.msk [vmem:[%s307] sm:$0xff] %vm4957, %v4925
      %4959 = vst.msk [vmem:[%s307 + $0x8] sm:$0xff] %vm4957, %v4926
      %4960 = vst.msk [vmem:[%s307 + $0x10] sm:$0xff] %vm4957, %v4927
      %4961 = vst.msk [vmem:[%s307 + $0x18] sm:$0xff] %vm4957, %v4928
      %4962 = vst.msk [vmem:[%s307 + $0x20] sm:$0xff] %vm4957, %v4929
      %4963 = vst.msk [vmem:[%s307 + $0x28] sm:$0xff] %vm4957, %v4930
      %4964 = vst.msk [vmem:[%s307 + $0x30] sm:$0xff] %vm4957, %v4931
      %4965 = vst.msk [vmem:[%s307 + $0x38] sm:$0xff] %vm4957, %v4932
      %4966 = vst.msk [vmem:[%s307 + $0x40] sm:$0xff] %vm4957, %v4933
      %4967 = vst.msk [vmem:[%s307 + $0x48] sm:$0xff] %vm4957, %v4934
      %4968 = vst.msk [vmem:[%s307 + $0x50] sm:$0xff] %vm4957, %v4935
      %4969 = vst.msk [vmem:[%s307 + $0x58] sm:$0xff] %vm4957, %v4936
      %4970 = vst.msk [vmem:[%s307 + $0x60] sm:$0xff] %vm4957, %v4937
      %4971 = vst.msk [vmem:[%s307 + $0x68] sm:$0xff] %vm4957, %v4938
      %4972 = vst.msk [vmem:[%s307 + $0x70] sm:$0xff] %vm4957, %v4939
      %4973 = vst.msk [vmem:[%s307 + $0x78] sm:$0xff] %vm4957, %v4940
      %4974 = vst.msk [vmem:[%s307 + $0x80] sm:$0xff] %vm4957, %v4941
      %4975 = vst.msk [vmem:[%s307 + $0x88] sm:$0xff] %vm4957, %v4942
      %4976 = vst.msk [vmem:[%s307 + $0x90] sm:$0xff] %vm4957, %v4943
      %4977 = vst.msk [vmem:[%s307 + $0x98] sm:$0xff] %vm4957, %v4944
      %4978 = vst.msk [vmem:[%s307 + $0xa0] sm:$0xff] %vm4957, %v4945
      %4979 = vst.msk [vmem:[%s307 + $0xa8] sm:$0xff] %vm4957, %v4946
      %4980 = vst.msk [vmem:[%s307 + $0xb0] sm:$0xff] %vm4957, %v4947
      %4981 = vst.msk [vmem:[%s307 + $0xb8] sm:$0xff] %vm4957, %v4948
      %4982 = vst.msk [vmem:[%s307 + $0xc0] sm:$0xff] %vm4957, %v4949
      %4983 = vst.msk [vmem:[%s307 + $0xc8] sm:$0xff] %vm4957, %v4950
      %4984 = vst.msk [vmem:[%s307 + $0xd0] sm:$0xff] %vm4957, %v4951
      %4985 = vst.msk [vmem:[%s307 + $0xd8] sm:$0xff] %vm4957, %v4952
      %4986 = vst.msk [vmem:[%s307 + $0xe0] sm:$0xff] %vm4957, %v4953
      %4987 = vst.msk [vmem:[%s307 + $0xe8] sm:$0xff] %vm4957, %v4954
      %4988 = vst.msk [vmem:[%s307 + $0xf0] sm:$0xff] %vm4957, %v4955
      %4989 = vst.msk [vmem:[%s307 + $0xf8] sm:$0xff] %vm4957, %v4956
      %v4990 = vmul.f32 %v373, 31.0
      %v4991 = vmul.f32 %v374, 31.0
      %v4992 = vmul.f32 %v375, 31.0
      %v4993 = vmul.f32 %v376, 31.0
      %v4994 = vmul.f32 %v377, 31.0
      %v4995 = vmul.f32 %v378, 31.0
      %v4996 = vmul.f32 %v379, 31.0
      %v4997 = vmul.f32 %v380, 31.0
      %v4998 = vmul.f32 %v381, 31.0
      %v4999 = vmul.f32 %v382, 31.0
      %v5000 = vmul.f32 %v383, 31.0
      %v5001 = vmul.f32 %v384, 31.0
      %v5002 = vmul.f32 %v385, 31.0
      %v5003 = vmul.f32 %v386, 31.0
      %v5004 = vmul.f32 %v387, 31.0
      %v5005 = vmul.f32 %v388, 31.0
      %v5006 = vmul.f32 %v389, 31.0
      %v5007 = vmul.f32 %v390, 31.0
      %v5008 = vmul.f32 %v391, 31.0
      %v5009 = vmul.f32 %v392, 31.0
      %v5010 = vmul.f32 %v393, 31.0
      %v5011 = vmul.f32 %v394, 31.0
      %v5012 = vmul.f32 %v395, 31.0
      %v5013 = vmul.f32 %v396, 31.0
      %v5014 = vmul.f32 %v397, 31.0
      %v5015 = vmul.f32 %v398, 31.0
      %v5016 = vmul.f32 %v399, 31.0
      %v5017 = vmul.f32 %v400, 31.0
      %v5018 = vmul.f32 %v401, 31.0
      %v5019 = vmul.f32 %v402, 31.0
      %v5020 = vmul.f32 %v403, 31.0
      %v5021 = vmul.f32 %v404, 31.0
      %v5022 = vmax.f32 %v4990, 0.0
      %v5023 = vmax.f32 %v4991, 0.0
      %v5024 = vmax.f32 %v4992, 0.0
      %v5025 = vmax.f32 %v4993, 0.0
      %v5026 = vmax.f32 %v4994, 0.0
      %v5027 = vmax.f32 %v4995, 0.0
      %v5028 = vmax.f32 %v4996, 0.0
      %v5029 = vmax.f32 %v4997, 0.0
      %v5030 = vmax.f32 %v4998, 0.0
      %v5031 = vmax.f32 %v4999, 0.0
      %v5032 = vmax.f32 %v5000, 0.0
      %v5033 = vmax.f32 %v5001, 0.0
      %v5034 = vmax.f32 %v5002, 0.0
      %v5035 = vmax.f32 %v5003, 0.0
      %v5036 = vmax.f32 %v5004, 0.0
      %v5037 = vmax.f32 %v5005, 0.0
      %v5038 = vmax.f32 %v5006, 0.0
      %v5039 = vmax.f32 %v5007, 0.0
      %v5040 = vmax.f32 %v5008, 0.0
      %v5041 = vmax.f32 %v5009, 0.0
      %v5042 = vmax.f32 %v5010, 0.0
      %v5043 = vmax.f32 %v5011, 0.0
      %v5044 = vmax.f32 %v5012, 0.0
      %v5045 = vmax.f32 %v5013, 0.0
      %v5046 = vmax.f32 %v5014, 0.0
      %v5047 = vmax.f32 %v5015, 0.0
      %v5048 = vmax.f32 %v5016, 0.0
      %v5049 = vmax.f32 %v5017, 0.0
      %v5050 = vmax.f32 %v5018, 0.0
      %v5051 = vmax.f32 %v5019, 0.0
      %v5052 = vmax.f32 %v5020, 0.0
      %v5053 = vmax.f32 %v5021, 0.0
      %v5054 = vmin.f32 %v5022, 31.0
      %v5055 = vmin.f32 %v5023, 31.0
      %v5056 = vmin.f32 %v5024, 31.0
      %v5057 = vmin.f32 %v5025, 31.0
      %v5058 = vmin.f32 %v5026, 31.0
      %v5059 = vmin.f32 %v5027, 31.0
      %v5060 = vmin.f32 %v5028, 31.0
      %v5061 = vmin.f32 %v5029, 31.0
      %v5062 = vmin.f32 %v5030, 31.0
      %v5063 = vmin.f32 %v5031, 31.0
      %v5064 = vmin.f32 %v5032, 31.0
      %v5065 = vmin.f32 %v5033, 31.0
      %v5066 = vmin.f32 %v5034, 31.0
      %v5067 = vmin.f32 %v5035, 31.0
      %v5068 = vmin.f32 %v5036, 31.0
      %v5069 = vmin.f32 %v5037, 31.0
      %v5070 = vmin.f32 %v5038, 31.0
      %v5071 = vmin.f32 %v5039, 31.0
      %v5072 = vmin.f32 %v5040, 31.0
      %v5073 = vmin.f32 %v5041, 31.0
      %v5074 = vmin.f32 %v5042, 31.0
      %v5075 = vmin.f32 %v5043, 31.0
      %v5076 = vmin.f32 %v5044, 31.0
      %v5077 = vmin.f32 %v5045, 31.0
      %v5078 = vmin.f32 %v5046, 31.0
      %v5079 = vmin.f32 %v5047, 31.0
      %v5080 = vmin.f32 %v5048, 31.0
      %v5081 = vmin.f32 %v5049, 31.0
      %v5082 = vmin.f32 %v5050, 31.0
      %v5083 = vmin.f32 %v5051, 31.0
      %v5084 = vmin.f32 %v5052, 31.0
      %v5085 = vmin.f32 %v5053, 31.0
      %v5086 = vfloor.f32 %v5054
      %v5087 = vfloor.f32 %v5055
      %v5088 = vfloor.f32 %v5056
      %v5089 = vfloor.f32 %v5057
      %v5090 = vfloor.f32 %v5058
      %v5091 = vfloor.f32 %v5059
      %v5092 = vfloor.f32 %v5060
      %v5093 = vfloor.f32 %v5061
      %v5094 = vfloor.f32 %v5062
      %v5095 = vfloor.f32 %v5063
      %v5096 = vfloor.f32 %v5064
      %v5097 = vfloor.f32 %v5065
      %v5098 = vfloor.f32 %v5066
      %v5099 = vfloor.f32 %v5067
      %v5100 = vfloor.f32 %v5068
      %v5101 = vfloor.f32 %v5069
      %v5102 = vfloor.f32 %v5070
      %v5103 = vfloor.f32 %v5071
      %v5104 = vfloor.f32 %v5072
      %v5105 = vfloor.f32 %v5073
      %v5106 = vfloor.f32 %v5074
      %v5107 = vfloor.f32 %v5075
      %v5108 = vfloor.f32 %v5076
      %v5109 = vfloor.f32 %v5077
      %v5110 = vfloor.f32 %v5078
      %v5111 = vfloor.f32 %v5079
      %v5112 = vfloor.f32 %v5080
      %v5113 = vfloor.f32 %v5081
      %v5114 = vfloor.f32 %v5082
      %v5115 = vfloor.f32 %v5083
      %v5116 = vfloor.f32 %v5084
      %v5117 = vfloor.f32 %v5085
      %v5118 = vsub.f32 %v5054, %v5086
      %v5119 = vsub.f32 %v5055, %v5087
      %v5120 = vsub.f32 %v5056, %v5088
      %v5121 = vsub.f32 %v5057, %v5089
      %v5122 = vsub.f32 %v5058, %v5090
      %v5123 = vsub.f32 %v5059, %v5091
      %v5124 = vsub.f32 %v5060, %v5092
      %v5125 = vsub.f32 %v5061, %v5093
      %v5126 = vsub.f32 %v5062, %v5094
      %v5127 = vsub.f32 %v5063, %v5095
      %v5128 = vsub.f32 %v5064, %v5096
      %v5129 = vsub.f32 %v5065, %v5097
      %v5130 = vsub.f32 %v5066, %v5098
      %v5131 = vsub.f32 %v5067, %v5099
      %v5132 = vsub.f32 %v5068, %v5100
      %v5133 = vsub.f32 %v5069, %v5101
      %v5134 = vsub.f32 %v5070, %v5102
      %v5135 = vsub.f32 %v5071, %v5103
      %v5136 = vsub.f32 %v5072, %v5104
      %v5137 = vsub.f32 %v5073, %v5105
      %v5138 = vsub.f32 %v5074, %v5106
      %v5139 = vsub.f32 %v5075, %v5107
      %v5140 = vsub.f32 %v5076, %v5108
      %v5141 = vsub.f32 %v5077, %v5109
      %v5142 = vsub.f32 %v5078, %v5110
      %v5143 = vsub.f32 %v5079, %v5111
      %v5144 = vsub.f32 %v5080, %v5112
      %v5145 = vsub.f32 %v5081, %v5113
      %v5146 = vsub.f32 %v5082, %v5114
      %v5147 = vsub.f32 %v5083, %v5115
      %v5148 = vsub.f32 %v5084, %v5116
      %v5149 = vsub.f32 %v5085, %v5117
      %v5150 = vcvt.f32.s32.to.zero.pseudo %v5086
      %v5151 = vcvt.f32.s32.to.zero.pseudo %v5087
      %v5152 = vcvt.f32.s32.to.zero.pseudo %v5088
      %v5153 = vcvt.f32.s32.to.zero.pseudo %v5089
      %v5154 = vcvt.f32.s32.to.zero.pseudo %v5090
      %v5155 = vcvt.f32.s32.to.zero.pseudo %v5091
      %v5156 = vcvt.f32.s32.to.zero.pseudo %v5092
      %v5157 = vcvt.f32.s32.to.zero.pseudo %v5093
      %v5158 = vcvt.f32.s32.to.zero.pseudo %v5094
      %v5159 = vcvt.f32.s32.to.zero.pseudo %v5095
      %v5160 = vcvt.f32.s32.to.zero.pseudo %v5096
      %v5161 = vcvt.f32.s32.to.zero.pseudo %v5097
      %v5162 = vcvt.f32.s32.to.zero.pseudo %v5098
      %v5163 = vcvt.f32.s32.to.zero.pseudo %v5099
      %v5164 = vcvt.f32.s32.to.zero.pseudo %v5100
      %v5165 = vcvt.f32.s32.to.zero.pseudo %v5101
      %v5166 = vcvt.f32.s32.to.zero.pseudo %v5102
      %v5167 = vcvt.f32.s32.to.zero.pseudo %v5103
      %v5168 = vcvt.f32.s32.to.zero.pseudo %v5104
      %v5169 = vcvt.f32.s32.to.zero.pseudo %v5105
      %v5170 = vcvt.f32.s32.to.zero.pseudo %v5106
      %v5171 = vcvt.f32.s32.to.zero.pseudo %v5107
      %v5172 = vcvt.f32.s32.to.zero.pseudo %v5108
      %v5173 = vcvt.f32.s32.to.zero.pseudo %v5109
      %v5174 = vcvt.f32.s32.to.zero.pseudo %v5110
      %v5175 = vcvt.f32.s32.to.zero.pseudo %v5111
      %v5176 = vcvt.f32.s32.to.zero.pseudo %v5112
      %v5177 = vcvt.f32.s32.to.zero.pseudo %v5113
      %v5178 = vcvt.f32.s32.to.zero.pseudo %v5114
      %v5179 = vcvt.f32.s32.to.zero.pseudo %v5115
      %v5180 = vcvt.f32.s32.to.zero.pseudo %v5116
      %v5181 = vcvt.f32.s32.to.zero.pseudo %v5117
      %v5182 = vadd.s32 %v5150, 1
      %v5183 = vadd.s32 %v5151, 1
      %v5184 = vadd.s32 %v5152, 1
      %v5185 = vadd.s32 %v5153, 1
      %v5186 = vadd.s32 %v5154, 1
      %v5187 = vadd.s32 %v5155, 1
      %v5188 = vadd.s32 %v5156, 1
      %v5189 = vadd.s32 %v5157, 1
      %v5190 = vadd.s32 %v5158, 1
      %v5191 = vadd.s32 %v5159, 1
      %v5192 = vadd.s32 %v5160, 1
      %v5193 = vadd.s32 %v5161, 1
      %v5194 = vadd.s32 %v5162, 1
      %v5195 = vadd.s32 %v5163, 1
      %v5196 = vadd.s32 %v5164, 1
      %v5197 = vadd.s32 %v5165, 1
      %v5198 = vadd.s32 %v5166, 1
      %v5199 = vadd.s32 %v5167, 1
      %v5200 = vadd.s32 %v5168, 1
      %v5201 = vadd.s32 %v5169, 1
      %v5202 = vadd.s32 %v5170, 1
      %v5203 = vadd.s32 %v5171, 1
      %v5204 = vadd.s32 %v5172, 1
      %v5205 = vadd.s32 %v5173, 1
      %v5206 = vadd.s32 %v5174, 1
      %v5207 = vadd.s32 %v5175, 1
      %v5208 = vadd.s32 %v5176, 1
      %v5209 = vadd.s32 %v5177, 1
      %v5210 = vadd.s32 %v5178, 1
      %v5211 = vadd.s32 %v5179, 1
      %v5212 = vadd.s32 %v5180, 1
      %v5213 = vadd.s32 %v5181, 1
      %vm5214 = vcmp.lt.s32.totalorder %v5182, 31
      %v5215 = vsel %vm5214, %v5182, 31
      %vm5216 = vcmp.lt.s32.totalorder %v5183, 31
      %v5217 = vsel %vm5216, %v5183, 31
      %vm5218 = vcmp.lt.s32.totalorder %v5184, 31
      %v5219 = vsel %vm5218, %v5184, 31
      %vm5220 = vcmp.lt.s32.totalorder %v5185, 31
      %v5221 = vsel %vm5220, %v5185, 31
      %vm5222 = vcmp.lt.s32.totalorder %v5186, 31
      %v5223 = vsel %vm5222, %v5186, 31
      %vm5224 = vcmp.lt.s32.totalorder %v5187, 31
      %v5225 = vsel %vm5224, %v5187, 31
      %vm5226 = vcmp.lt.s32.totalorder %v5188, 31
      %v5227 = vsel %vm5226, %v5188, 31
      %vm5228 = vcmp.lt.s32.totalorder %v5189, 31
      %v5229 = vsel %vm5228, %v5189, 31
      %vm5230 = vcmp.lt.s32.totalorder %v5190, 31
      %v5231 = vsel %vm5230, %v5190, 31
      %vm5232 = vcmp.lt.s32.totalorder %v5191, 31
      %v5233 = vsel %vm5232, %v5191, 31
      %vm5234 = vcmp.lt.s32.totalorder %v5192, 31
      %v5235 = vsel %vm5234, %v5192, 31
      %vm5236 = vcmp.lt.s32.totalorder %v5193, 31
      %v5237 = vsel %vm5236, %v5193, 31
      %vm5238 = vcmp.lt.s32.totalorder %v5194, 31
      %v5239 = vsel %vm5238, %v5194, 31
      %vm5240 = vcmp.lt.s32.totalorder %v5195, 31
      %v5241 = vsel %vm5240, %v5195, 31
      %vm5242 = vcmp.lt.s32.totalorder %v5196, 31
      %v5243 = vsel %vm5242, %v5196, 31
      %vm5244 = vcmp.lt.s32.totalorder %v5197, 31
      %v5245 = vsel %vm5244, %v5197, 31
      %vm5246 = vcmp.lt.s32.totalorder %v5198, 31
      %v5247 = vsel %vm5246, %v5198, 31
      %vm5248 = vcmp.lt.s32.totalorder %v5199, 31
      %v5249 = vsel %vm5248, %v5199, 31
      %vm5250 = vcmp.lt.s32.totalorder %v5200, 31
      %v5251 = vsel %vm5250, %v5200, 31
      %vm5252 = vcmp.lt.s32.totalorder %v5201, 31
      %v5253 = vsel %vm5252, %v5201, 31
      %vm5254 = vcmp.lt.s32.totalorder %v5202, 31
      %v5255 = vsel %vm5254, %v5202, 31
      %vm5256 = vcmp.lt.s32.totalorder %v5203, 31
      %v5257 = vsel %vm5256, %v5203, 31
      %vm5258 = vcmp.lt.s32.totalorder %v5204, 31
      %v5259 = vsel %vm5258, %v5204, 31
      %vm5260 = vcmp.lt.s32.totalorder %v5205, 31
      %v5261 = vsel %vm5260, %v5205, 31
      %vm5262 = vcmp.lt.s32.totalorder %v5206, 31
      %v5263 = vsel %vm5262, %v5206, 31
      %vm5264 = vcmp.lt.s32.totalorder %v5207, 31
      %v5265 = vsel %vm5264, %v5207, 31
      %vm5266 = vcmp.lt.s32.totalorder %v5208, 31
      %v5267 = vsel %vm5266, %v5208, 31
      %vm5268 = vcmp.lt.s32.totalorder %v5209, 31
      %v5269 = vsel %vm5268, %v5209, 31
      %vm5270 = vcmp.lt.s32.totalorder %v5210, 31
      %v5271 = vsel %vm5270, %v5210, 31
      %vm5272 = vcmp.lt.s32.totalorder %v5211, 31
      %v5273 = vsel %vm5272, %v5211, 31
      %vm5274 = vcmp.lt.s32.totalorder %v5212, 31
      %v5275 = vsel %vm5274, %v5212, 31
      %vm5276 = vcmp.lt.s32.totalorder %v5213, 31
      %v5277 = vsel %vm5276, %v5213, 31
      %5278 = vset.pattern.permute.xlu0 0
      %5279 = vperm.xlu0 %5278, %v5150
      %v5280 = vpop.permute.xlu0 %5279
      %5281 = vset.pattern.permute.xlu0 0
      %5282 = vperm.xlu0 %5281, %v5151
      %v5283 = vpop.permute.xlu0 %5282
      %5284 = vset.pattern.permute.xlu0 0
      %5285 = vperm.xlu0 %5284, %v5152
      %v5286 = vpop.permute.xlu0 %5285
      %5287 = vset.pattern.permute.xlu0 0
      %5288 = vperm.xlu0 %5287, %v5153
      %v5289 = vpop.permute.xlu0 %5288
      %5290 = vset.pattern.permute.xlu0 0
      %5291 = vperm.xlu0 %5290, %v5154
      %v5292 = vpop.permute.xlu0 %5291
      %5293 = vset.pattern.permute.xlu0 0
      %5294 = vperm.xlu0 %5293, %v5155
      %v5295 = vpop.permute.xlu0 %5294
      %5296 = vset.pattern.permute.xlu0 0
      %5297 = vperm.xlu0 %5296, %v5156
      %v5298 = vpop.permute.xlu0 %5297
      %5299 = vset.pattern.permute.xlu0 0
      %5300 = vperm.xlu0 %5299, %v5157
      %v5301 = vpop.permute.xlu0 %5300
      %5302 = vset.pattern.permute.xlu0 0
      %5303 = vperm.xlu0 %5302, %v5158
      %v5304 = vpop.permute.xlu0 %5303
      %5305 = vset.pattern.permute.xlu0 0
      %5306 = vperm.xlu0 %5305, %v5159
      %v5307 = vpop.permute.xlu0 %5306
      %5308 = vset.pattern.permute.xlu0 0
      %5309 = vperm.xlu0 %5308, %v5160
      %v5310 = vpop.permute.xlu0 %5309
      %5311 = vset.pattern.permute.xlu0 0
      %5312 = vperm.xlu0 %5311, %v5161
      %v5313 = vpop.permute.xlu0 %5312
      %5314 = vset.pattern.permute.xlu0 0
      %5315 = vperm.xlu0 %5314, %v5162
      %v5316 = vpop.permute.xlu0 %5315
      %5317 = vset.pattern.permute.xlu0 0
      %5318 = vperm.xlu0 %5317, %v5163
      %v5319 = vpop.permute.xlu0 %5318
      %5320 = vset.pattern.permute.xlu0 0
      %5321 = vperm.xlu0 %5320, %v5164
      %v5322 = vpop.permute.xlu0 %5321
      %5323 = vset.pattern.permute.xlu0 0
      %5324 = vperm.xlu0 %5323, %v5165
      %v5325 = vpop.permute.xlu0 %5324
      %5326 = vset.pattern.permute.xlu0 0
      %5327 = vperm.xlu0 %5326, %v5166
      %v5328 = vpop.permute.xlu0 %5327
      %5329 = vset.pattern.permute.xlu0 0
      %5330 = vperm.xlu0 %5329, %v5167
      %v5331 = vpop.permute.xlu0 %5330
      %5332 = vset.pattern.permute.xlu0 0
      %5333 = vperm.xlu0 %5332, %v5168
      %v5334 = vpop.permute.xlu0 %5333
      %5335 = vset.pattern.permute.xlu0 0
      %5336 = vperm.xlu0 %5335, %v5169
      %v5337 = vpop.permute.xlu0 %5336
      %5338 = vset.pattern.permute.xlu0 0
      %5339 = vperm.xlu0 %5338, %v5170
      %v5340 = vpop.permute.xlu0 %5339
      %5341 = vset.pattern.permute.xlu0 0
      %5342 = vperm.xlu0 %5341, %v5171
      %v5343 = vpop.permute.xlu0 %5342
      %5344 = vset.pattern.permute.xlu0 0
      %5345 = vperm.xlu0 %5344, %v5172
      %v5346 = vpop.permute.xlu0 %5345
      %5347 = vset.pattern.permute.xlu0 0
      %5348 = vperm.xlu0 %5347, %v5173
      %v5349 = vpop.permute.xlu0 %5348
      %5350 = vset.pattern.permute.xlu0 0
      %5351 = vperm.xlu0 %5350, %v5174
      %v5352 = vpop.permute.xlu0 %5351
      %5353 = vset.pattern.permute.xlu0 0
      %5354 = vperm.xlu0 %5353, %v5175
      %v5355 = vpop.permute.xlu0 %5354
      %5356 = vset.pattern.permute.xlu0 0
      %5357 = vperm.xlu0 %5356, %v5176
      %v5358 = vpop.permute.xlu0 %5357
      %5359 = vset.pattern.permute.xlu0 0
      %5360 = vperm.xlu0 %5359, %v5177
      %v5361 = vpop.permute.xlu0 %5360
      %5362 = vset.pattern.permute.xlu0 0
      %5363 = vperm.xlu0 %5362, %v5178
      %v5364 = vpop.permute.xlu0 %5363
      %5365 = vset.pattern.permute.xlu0 0
      %5366 = vperm.xlu0 %5365, %v5179
      %v5367 = vpop.permute.xlu0 %5366
      %5368 = vset.pattern.permute.xlu0 0
      %5369 = vperm.xlu0 %5368, %v5180
      %v5370 = vpop.permute.xlu0 %5369
      %5371 = vset.pattern.permute.xlu0 0
      %5372 = vperm.xlu0 %5371, %v5181
      %v5373 = vpop.permute.xlu0 %5372
      %vm5374 = vcmp.eq.s32.totalorder %v694, %v5280
      %vm5375 = vcmp.eq.s32.totalorder %v694, %v5283
      %vm5376 = vcmp.eq.s32.totalorder %v694, %v5286
      %vm5377 = vcmp.eq.s32.totalorder %v694, %v5289
      %vm5378 = vcmp.eq.s32.totalorder %v694, %v5292
      %vm5379 = vcmp.eq.s32.totalorder %v694, %v5295
      %vm5380 = vcmp.eq.s32.totalorder %v694, %v5298
      %vm5381 = vcmp.eq.s32.totalorder %v694, %v5301
      %vm5382 = vcmp.eq.s32.totalorder %v694, %v5304
      %vm5383 = vcmp.eq.s32.totalorder %v694, %v5307
      %vm5384 = vcmp.eq.s32.totalorder %v694, %v5310
      %vm5385 = vcmp.eq.s32.totalorder %v694, %v5313
      %vm5386 = vcmp.eq.s32.totalorder %v694, %v5316
      %vm5387 = vcmp.eq.s32.totalorder %v694, %v5319
      %vm5388 = vcmp.eq.s32.totalorder %v694, %v5322
      %vm5389 = vcmp.eq.s32.totalorder %v694, %v5325
      %vm5390 = vcmp.eq.s32.totalorder %v694, %v5328
      %vm5391 = vcmp.eq.s32.totalorder %v694, %v5331
      %vm5392 = vcmp.eq.s32.totalorder %v694, %v5334
      %vm5393 = vcmp.eq.s32.totalorder %v694, %v5337
      %vm5394 = vcmp.eq.s32.totalorder %v694, %v5340
      %vm5395 = vcmp.eq.s32.totalorder %v694, %v5343
      %vm5396 = vcmp.eq.s32.totalorder %v694, %v5346
      %vm5397 = vcmp.eq.s32.totalorder %v694, %v5349
      %vm5398 = vcmp.eq.s32.totalorder %v694, %v5352
      %vm5399 = vcmp.eq.s32.totalorder %v694, %v5355
      %vm5400 = vcmp.eq.s32.totalorder %v694, %v5358
      %vm5401 = vcmp.eq.s32.totalorder %v694, %v5361
      %vm5402 = vcmp.eq.s32.totalorder %v694, %v5364
      %vm5403 = vcmp.eq.s32.totalorder %v694, %v5367
      %vm5404 = vcmp.eq.s32.totalorder %v694, %v5370
      %vm5405 = vcmp.eq.s32.totalorder %v694, %v5373
      %v5406 = vsub.f32 1.0, %v5118
      %v5407 = vsub.f32 1.0, %v5119
      %v5408 = vsub.f32 1.0, %v5120
      %v5409 = vsub.f32 1.0, %v5121
      %v5410 = vsub.f32 1.0, %v5122
      %v5411 = vsub.f32 1.0, %v5123
      %v5412 = vsub.f32 1.0, %v5124
      %v5413 = vsub.f32 1.0, %v5125
      %v5414 = vsub.f32 1.0, %v5126
      %v5415 = vsub.f32 1.0, %v5127
      %v5416 = vsub.f32 1.0, %v5128
      %v5417 = vsub.f32 1.0, %v5129
      %v5418 = vsub.f32 1.0, %v5130
      %v5419 = vsub.f32 1.0, %v5131
      %v5420 = vsub.f32 1.0, %v5132
      %v5421 = vsub.f32 1.0, %v5133
      %v5422 = vsub.f32 1.0, %v5134
      %v5423 = vsub.f32 1.0, %v5135
      %v5424 = vsub.f32 1.0, %v5136
      %v5425 = vsub.f32 1.0, %v5137
      %v5426 = vsub.f32 1.0, %v5138
      %v5427 = vsub.f32 1.0, %v5139
      %v5428 = vsub.f32 1.0, %v5140
      %v5429 = vsub.f32 1.0, %v5141
      %v5430 = vsub.f32 1.0, %v5142
      %v5431 = vsub.f32 1.0, %v5143
      %v5432 = vsub.f32 1.0, %v5144
      %v5433 = vsub.f32 1.0, %v5145
      %v5434 = vsub.f32 1.0, %v5146
      %v5435 = vsub.f32 1.0, %v5147
      %v5436 = vsub.f32 1.0, %v5148
      %v5437 = vsub.f32 1.0, %v5149
      %5439 = vset.pattern.permute.xlu0 0
      %5440 = vperm.xlu0 %5439, %v5406
      %v5441 = vpop.permute.xlu0 %5440
      %5444 = vset.pattern.permute.xlu0 0
      %5445 = vperm.xlu0 %5444, %v5407
      %v5446 = vpop.permute.xlu0 %5445
      %5449 = vset.pattern.permute.xlu0 0
      %5450 = vperm.xlu0 %5449, %v5408
      %v5451 = vpop.permute.xlu0 %5450
      %5454 = vset.pattern.permute.xlu0 0
      %5455 = vperm.xlu0 %5454, %v5409
      %v5456 = vpop.permute.xlu0 %5455
      %5459 = vset.pattern.permute.xlu0 0
      %5460 = vperm.xlu0 %5459, %v5410
      %v5461 = vpop.permute.xlu0 %5460
      %5464 = vset.pattern.permute.xlu0 0
      %5465 = vperm.xlu0 %5464, %v5411
      %v5466 = vpop.permute.xlu0 %5465
      %5469 = vset.pattern.permute.xlu0 0
      %5470 = vperm.xlu0 %5469, %v5412
      %v5471 = vpop.permute.xlu0 %5470
      %5474 = vset.pattern.permute.xlu0 0
      %5475 = vperm.xlu0 %5474, %v5413
      %v5476 = vpop.permute.xlu0 %5475
      %5479 = vset.pattern.permute.xlu0 0
      %5480 = vperm.xlu0 %5479, %v5414
      %v5481 = vpop.permute.xlu0 %5480
      %5484 = vset.pattern.permute.xlu0 0
      %5485 = vperm.xlu0 %5484, %v5415
      %v5486 = vpop.permute.xlu0 %5485
      %5489 = vset.pattern.permute.xlu0 0
      %5490 = vperm.xlu0 %5489, %v5416
      %v5491 = vpop.permute.xlu0 %5490
      %5494 = vset.pattern.permute.xlu0 0
      %5495 = vperm.xlu0 %5494, %v5417
      %v5496 = vpop.permute.xlu0 %5495
      %5499 = vset.pattern.permute.xlu0 0
      %5500 = vperm.xlu0 %5499, %v5418
      %v5501 = vpop.permute.xlu0 %5500
      %5504 = vset.pattern.permute.xlu0 0
      %5505 = vperm.xlu0 %5504, %v5419
      %v5506 = vpop.permute.xlu0 %5505
      %5509 = vset.pattern.permute.xlu0 0
      %5510 = vperm.xlu0 %5509, %v5420
      %v5511 = vpop.permute.xlu0 %5510
      %5514 = vset.pattern.permute.xlu0 0
      %5515 = vperm.xlu0 %5514, %v5421
      %v5516 = vpop.permute.xlu0 %5515
      %5519 = vset.pattern.permute.xlu0 0
      %5520 = vperm.xlu0 %5519, %v5422
      %v5521 = vpop.permute.xlu0 %5520
      %5524 = vset.pattern.permute.xlu0 0
      %5525 = vperm.xlu0 %5524, %v5423
      %v5526 = vpop.permute.xlu0 %5525
      %5529 = vset.pattern.permute.xlu0 0
      %5530 = vperm.xlu0 %5529, %v5424
      %v5531 = vpop.permute.xlu0 %5530
      %5534 = vset.pattern.permute.xlu0 0
      %5535 = vperm.xlu0 %5534, %v5425
      %v5536 = vpop.permute.xlu0 %5535
      %5539 = vset.pattern.permute.xlu0 0
      %5540 = vperm.xlu0 %5539, %v5426
      %v5541 = vpop.permute.xlu0 %5540
      %5544 = vset.pattern.permute.xlu0 0
      %5545 = vperm.xlu0 %5544, %v5427
      %v5546 = vpop.permute.xlu0 %5545
      %5549 = vset.pattern.permute.xlu0 0
      %5550 = vperm.xlu0 %5549, %v5428
      %v5551 = vpop.permute.xlu0 %5550
      %5554 = vset.pattern.permute.xlu0 0
      %5555 = vperm.xlu0 %5554, %v5429
      %v5556 = vpop.permute.xlu0 %5555
      %5559 = vset.pattern.permute.xlu0 0
      %5560 = vperm.xlu0 %5559, %v5430
      %v5561 = vpop.permute.xlu0 %5560
      %5564 = vset.pattern.permute.xlu0 0
      %5565 = vperm.xlu0 %5564, %v5431
      %v5566 = vpop.permute.xlu0 %5565
      %5569 = vset.pattern.permute.xlu0 0
      %5570 = vperm.xlu0 %5569, %v5432
      %v5571 = vpop.permute.xlu0 %5570
      %5574 = vset.pattern.permute.xlu0 0
      %5575 = vperm.xlu0 %5574, %v5433
      %v5576 = vpop.permute.xlu0 %5575
      %5579 = vset.pattern.permute.xlu0 0
      %5580 = vperm.xlu0 %5579, %v5434
      %v5581 = vpop.permute.xlu0 %5580
      %5584 = vset.pattern.permute.xlu0 0
      %5585 = vperm.xlu0 %5584, %v5435
      %v5586 = vpop.permute.xlu0 %5585
      %5589 = vset.pattern.permute.xlu0 0
      %5590 = vperm.xlu0 %5589, %v5436
      %v5591 = vpop.permute.xlu0 %5590
      %5594 = vset.pattern.permute.xlu0 0
      %5595 = vperm.xlu0 %5594, %v5437
      %v5596 = vpop.permute.xlu0 %5595
      %v5598 = vsel %vm5374, %v5441, 0.0
      %v5599 = vsel %vm5375, %v5446, 0.0
      %v5600 = vsel %vm5376, %v5451, 0.0
      %v5601 = vsel %vm5377, %v5456, 0.0
      %v5602 = vsel %vm5378, %v5461, 0.0
      %v5603 = vsel %vm5379, %v5466, 0.0
      %v5604 = vsel %vm5380, %v5471, 0.0
      %v5605 = vsel %vm5381, %v5476, 0.0
      %v5606 = vsel %vm5382, %v5481, 0.0
      %v5607 = vsel %vm5383, %v5486, 0.0
      %v5608 = vsel %vm5384, %v5491, 0.0
      %v5609 = vsel %vm5385, %v5496, 0.0
      %v5610 = vsel %vm5386, %v5501, 0.0
      %v5611 = vsel %vm5387, %v5506, 0.0
      %v5612 = vsel %vm5388, %v5511, 0.0
      %v5613 = vsel %vm5389, %v5516, 0.0
      %v5614 = vsel %vm5390, %v5521, 0.0
      %v5615 = vsel %vm5391, %v5526, 0.0
      %v5616 = vsel %vm5392, %v5531, 0.0
      %v5617 = vsel %vm5393, %v5536, 0.0
      %v5618 = vsel %vm5394, %v5541, 0.0
      %v5619 = vsel %vm5395, %v5546, 0.0
      %v5620 = vsel %vm5396, %v5551, 0.0
      %v5621 = vsel %vm5397, %v5556, 0.0
      %v5622 = vsel %vm5398, %v5561, 0.0
      %v5623 = vsel %vm5399, %v5566, 0.0
      %v5624 = vsel %vm5400, %v5571, 0.0
      %v5625 = vsel %vm5401, %v5576, 0.0
      %v5626 = vsel %vm5402, %v5581, 0.0
      %v5627 = vsel %vm5403, %v5586, 0.0
      %v5628 = vsel %vm5404, %v5591, 0.0
      %v5629 = vsel %vm5405, %v5596, 0.0
      %5630 = vset.pattern.permute.xlu0 0
      %5631 = vperm.xlu0 %5630, %v5215
      %v5632 = vpop.permute.xlu0 %5631
      %5633 = vset.pattern.permute.xlu0 0
      %5634 = vperm.xlu0 %5633, %v5217
      %v5635 = vpop.permute.xlu0 %5634
      %5636 = vset.pattern.permute.xlu0 0
      %5637 = vperm.xlu0 %5636, %v5219
      %v5638 = vpop.permute.xlu0 %5637
      %5639 = vset.pattern.permute.xlu0 0
      %5640 = vperm.xlu0 %5639, %v5221
      %v5641 = vpop.permute.xlu0 %5640
      %5642 = vset.pattern.permute.xlu0 0
      %5643 = vperm.xlu0 %5642, %v5223
      %v5644 = vpop.permute.xlu0 %5643
      %5645 = vset.pattern.permute.xlu0 0
      %5646 = vperm.xlu0 %5645, %v5225
      %v5647 = vpop.permute.xlu0 %5646
      %5648 = vset.pattern.permute.xlu0 0
      %5649 = vperm.xlu0 %5648, %v5227
      %v5650 = vpop.permute.xlu0 %5649
      %5651 = vset.pattern.permute.xlu0 0
      %5652 = vperm.xlu0 %5651, %v5229
      %v5653 = vpop.permute.xlu0 %5652
      %5654 = vset.pattern.permute.xlu0 0
      %5655 = vperm.xlu0 %5654, %v5231
      %v5656 = vpop.permute.xlu0 %5655
      %5657 = vset.pattern.permute.xlu0 0
      %5658 = vperm.xlu0 %5657, %v5233
      %v5659 = vpop.permute.xlu0 %5658
      %5660 = vset.pattern.permute.xlu0 0
      %5661 = vperm.xlu0 %5660, %v5235
      %v5662 = vpop.permute.xlu0 %5661
      %5663 = vset.pattern.permute.xlu0 0
      %5664 = vperm.xlu0 %5663, %v5237
      %v5665 = vpop.permute.xlu0 %5664
      %5666 = vset.pattern.permute.xlu0 0
      %5667 = vperm.xlu0 %5666, %v5239
      %v5668 = vpop.permute.xlu0 %5667
      %5669 = vset.pattern.permute.xlu0 0
      %5670 = vperm.xlu0 %5669, %v5241
      %v5671 = vpop.permute.xlu0 %5670
      %5672 = vset.pattern.permute.xlu0 0
      %5673 = vperm.xlu0 %5672, %v5243
      %v5674 = vpop.permute.xlu0 %5673
      %5675 = vset.pattern.permute.xlu0 0
      %5676 = vperm.xlu0 %5675, %v5245
      %v5677 = vpop.permute.xlu0 %5676
      %5678 = vset.pattern.permute.xlu0 0
      %5679 = vperm.xlu0 %5678, %v5247
      %v5680 = vpop.permute.xlu0 %5679
      %5681 = vset.pattern.permute.xlu0 0
      %5682 = vperm.xlu0 %5681, %v5249
      %v5683 = vpop.permute.xlu0 %5682
      %5684 = vset.pattern.permute.xlu0 0
      %5685 = vperm.xlu0 %5684, %v5251
      %v5686 = vpop.permute.xlu0 %5685
      %5687 = vset.pattern.permute.xlu0 0
      %5688 = vperm.xlu0 %5687, %v5253
      %v5689 = vpop.permute.xlu0 %5688
      %5690 = vset.pattern.permute.xlu0 0
      %5691 = vperm.xlu0 %5690, %v5255
      %v5692 = vpop.permute.xlu0 %5691
      %5693 = vset.pattern.permute.xlu0 0
      %5694 = vperm.xlu0 %5693, %v5257
      %v5695 = vpop.permute.xlu0 %5694
      %5696 = vset.pattern.permute.xlu0 0
      %5697 = vperm.xlu0 %5696, %v5259
      %v5698 = vpop.permute.xlu0 %5697
      %5699 = vset.pattern.permute.xlu0 0
      %5700 = vperm.xlu0 %5699, %v5261
      %v5701 = vpop.permute.xlu0 %5700
      %5702 = vset.pattern.permute.xlu0 0
      %5703 = vperm.xlu0 %5702, %v5263
      %v5704 = vpop.permute.xlu0 %5703
      %5705 = vset.pattern.permute.xlu0 0
      %5706 = vperm.xlu0 %5705, %v5265
      %v5707 = vpop.permute.xlu0 %5706
      %5708 = vset.pattern.permute.xlu0 0
      %5709 = vperm.xlu0 %5708, %v5267
      %v5710 = vpop.permute.xlu0 %5709
      %5711 = vset.pattern.permute.xlu0 0
      %5712 = vperm.xlu0 %5711, %v5269
      %v5713 = vpop.permute.xlu0 %5712
      %5714 = vset.pattern.permute.xlu0 0
      %5715 = vperm.xlu0 %5714, %v5271
      %v5716 = vpop.permute.xlu0 %5715
      %5717 = vset.pattern.permute.xlu0 0
      %5718 = vperm.xlu0 %5717, %v5273
      %v5719 = vpop.permute.xlu0 %5718
      %5720 = vset.pattern.permute.xlu0 0
      %5721 = vperm.xlu0 %5720, %v5275
      %v5722 = vpop.permute.xlu0 %5721
      %5723 = vset.pattern.permute.xlu0 0
      %5724 = vperm.xlu0 %5723, %v5277
      %v5725 = vpop.permute.xlu0 %5724
      %vm5726 = vcmp.eq.s32.totalorder %v694, %v5632
      %vm5727 = vcmp.eq.s32.totalorder %v694, %v5635
      %vm5728 = vcmp.eq.s32.totalorder %v694, %v5638
      %vm5729 = vcmp.eq.s32.totalorder %v694, %v5641
      %vm5730 = vcmp.eq.s32.totalorder %v694, %v5644
      %vm5731 = vcmp.eq.s32.totalorder %v694, %v5647
      %vm5732 = vcmp.eq.s32.totalorder %v694, %v5650
      %vm5733 = vcmp.eq.s32.totalorder %v694, %v5653
      %vm5734 = vcmp.eq.s32.totalorder %v694, %v5656
      %vm5735 = vcmp.eq.s32.totalorder %v694, %v5659
      %vm5736 = vcmp.eq.s32.totalorder %v694, %v5662
      %vm5737 = vcmp.eq.s32.totalorder %v694, %v5665
      %vm5738 = vcmp.eq.s32.totalorder %v694, %v5668
      %vm5739 = vcmp.eq.s32.totalorder %v694, %v5671
      %vm5740 = vcmp.eq.s32.totalorder %v694, %v5674
      %vm5741 = vcmp.eq.s32.totalorder %v694, %v5677
      %vm5742 = vcmp.eq.s32.totalorder %v694, %v5680
      %vm5743 = vcmp.eq.s32.totalorder %v694, %v5683
      %vm5744 = vcmp.eq.s32.totalorder %v694, %v5686
      %vm5745 = vcmp.eq.s32.totalorder %v694, %v5689
      %vm5746 = vcmp.eq.s32.totalorder %v694, %v5692
      %vm5747 = vcmp.eq.s32.totalorder %v694, %v5695
      %vm5748 = vcmp.eq.s32.totalorder %v694, %v5698
      %vm5749 = vcmp.eq.s32.totalorder %v694, %v5701
      %vm5750 = vcmp.eq.s32.totalorder %v694, %v5704
      %vm5751 = vcmp.eq.s32.totalorder %v694, %v5707
      %vm5752 = vcmp.eq.s32.totalorder %v694, %v5710
      %vm5753 = vcmp.eq.s32.totalorder %v694, %v5713
      %vm5754 = vcmp.eq.s32.totalorder %v694, %v5716
      %vm5755 = vcmp.eq.s32.totalorder %v694, %v5719
      %vm5756 = vcmp.eq.s32.totalorder %v694, %v5722
      %vm5757 = vcmp.eq.s32.totalorder %v694, %v5725
      %5759 = vset.pattern.permute.xlu0 0
      %5760 = vperm.xlu0 %5759, %v5118
      %v5761 = vpop.permute.xlu0 %5760
      %5764 = vset.pattern.permute.xlu0 0
      %5765 = vperm.xlu0 %5764, %v5119
      %v5766 = vpop.permute.xlu0 %5765
      %5769 = vset.pattern.permute.xlu0 0
      %5770 = vperm.xlu0 %5769, %v5120
      %v5771 = vpop.permute.xlu0 %5770
      %5774 = vset.pattern.permute.xlu0 0
      %5775 = vperm.xlu0 %5774, %v5121
      %v5776 = vpop.permute.xlu0 %5775
      %5779 = vset.pattern.permute.xlu0 0
      %5780 = vperm.xlu0 %5779, %v5122
      %v5781 = vpop.permute.xlu0 %5780
      %5784 = vset.pattern.permute.xlu0 0
      %5785 = vperm.xlu0 %5784, %v5123
      %v5786 = vpop.permute.xlu0 %5785
      %5789 = vset.pattern.permute.xlu0 0
      %5790 = vperm.xlu0 %5789, %v5124
      %v5791 = vpop.permute.xlu0 %5790
      %5794 = vset.pattern.permute.xlu0 0
      %5795 = vperm.xlu0 %5794, %v5125
      %v5796 = vpop.permute.xlu0 %5795
      %5799 = vset.pattern.permute.xlu0 0
      %5800 = vperm.xlu0 %5799, %v5126
      %v5801 = vpop.permute.xlu0 %5800
      %5804 = vset.pattern.permute.xlu0 0
      %5805 = vperm.xlu0 %5804, %v5127
      %v5806 = vpop.permute.xlu0 %5805
      %5809 = vset.pattern.permute.xlu0 0
      %5810 = vperm.xlu0 %5809, %v5128
      %v5811 = vpop.permute.xlu0 %5810
      %5814 = vset.pattern.permute.xlu0 0
      %5815 = vperm.xlu0 %5814, %v5129
      %v5816 = vpop.permute.xlu0 %5815
      %5819 = vset.pattern.permute.xlu0 0
      %5820 = vperm.xlu0 %5819, %v5130
      %v5821 = vpop.permute.xlu0 %5820
      %5824 = vset.pattern.permute.xlu0 0
      %5825 = vperm.xlu0 %5824, %v5131
      %v5826 = vpop.permute.xlu0 %5825
      %5829 = vset.pattern.permute.xlu0 0
      %5830 = vperm.xlu0 %5829, %v5132
      %v5831 = vpop.permute.xlu0 %5830
      %5834 = vset.pattern.permute.xlu0 0
      %5835 = vperm.xlu0 %5834, %v5133
      %v5836 = vpop.permute.xlu0 %5835
      %5839 = vset.pattern.permute.xlu0 0
      %5840 = vperm.xlu0 %5839, %v5134
      %v5841 = vpop.permute.xlu0 %5840
      %5844 = vset.pattern.permute.xlu0 0
      %5845 = vperm.xlu0 %5844, %v5135
      %v5846 = vpop.permute.xlu0 %5845
      %5849 = vset.pattern.permute.xlu0 0
      %5850 = vperm.xlu0 %5849, %v5136
      %v5851 = vpop.permute.xlu0 %5850
      %5854 = vset.pattern.permute.xlu0 0
      %5855 = vperm.xlu0 %5854, %v5137
      %v5856 = vpop.permute.xlu0 %5855
      %5859 = vset.pattern.permute.xlu0 0
      %5860 = vperm.xlu0 %5859, %v5138
      %v5861 = vpop.permute.xlu0 %5860
      %5864 = vset.pattern.permute.xlu0 0
      %5865 = vperm.xlu0 %5864, %v5139
      %v5866 = vpop.permute.xlu0 %5865
      %5869 = vset.pattern.permute.xlu0 0
      %5870 = vperm.xlu0 %5869, %v5140
      %v5871 = vpop.permute.xlu0 %5870
      %5874 = vset.pattern.permute.xlu0 0
      %5875 = vperm.xlu0 %5874, %v5141
      %v5876 = vpop.permute.xlu0 %5875
      %5879 = vset.pattern.permute.xlu0 0
      %5880 = vperm.xlu0 %5879, %v5142
      %v5881 = vpop.permute.xlu0 %5880
      %5884 = vset.pattern.permute.xlu0 0
      %5885 = vperm.xlu0 %5884, %v5143
      %v5886 = vpop.permute.xlu0 %5885
      %5889 = vset.pattern.permute.xlu0 0
      %5890 = vperm.xlu0 %5889, %v5144
      %v5891 = vpop.permute.xlu0 %5890
      %5894 = vset.pattern.permute.xlu0 0
      %5895 = vperm.xlu0 %5894, %v5145
      %v5896 = vpop.permute.xlu0 %5895
      %5899 = vset.pattern.permute.xlu0 0
      %5900 = vperm.xlu0 %5899, %v5146
      %v5901 = vpop.permute.xlu0 %5900
      %5904 = vset.pattern.permute.xlu0 0
      %5905 = vperm.xlu0 %5904, %v5147
      %v5906 = vpop.permute.xlu0 %5905
      %5909 = vset.pattern.permute.xlu0 0
      %5910 = vperm.xlu0 %5909, %v5148
      %v5911 = vpop.permute.xlu0 %5910
      %5914 = vset.pattern.permute.xlu0 0
      %5915 = vperm.xlu0 %5914, %v5149
      %v5916 = vpop.permute.xlu0 %5915
      %v5918 = vsel %vm5726, %v5761, 0.0
      %v5919 = vsel %vm5727, %v5766, 0.0
      %v5920 = vsel %vm5728, %v5771, 0.0
      %v5921 = vsel %vm5729, %v5776, 0.0
      %v5922 = vsel %vm5730, %v5781, 0.0
      %v5923 = vsel %vm5731, %v5786, 0.0
      %v5924 = vsel %vm5732, %v5791, 0.0
      %v5925 = vsel %vm5733, %v5796, 0.0
      %v5926 = vsel %vm5734, %v5801, 0.0
      %v5927 = vsel %vm5735, %v5806, 0.0
      %v5928 = vsel %vm5736, %v5811, 0.0
      %v5929 = vsel %vm5737, %v5816, 0.0
      %v5930 = vsel %vm5738, %v5821, 0.0
      %v5931 = vsel %vm5739, %v5826, 0.0
      %v5932 = vsel %vm5740, %v5831, 0.0
      %v5933 = vsel %vm5741, %v5836, 0.0
      %v5934 = vsel %vm5742, %v5841, 0.0
      %v5935 = vsel %vm5743, %v5846, 0.0
      %v5936 = vsel %vm5744, %v5851, 0.0
      %v5937 = vsel %vm5745, %v5856, 0.0
      %v5938 = vsel %vm5746, %v5861, 0.0
      %v5939 = vsel %vm5747, %v5866, 0.0
      %v5940 = vsel %vm5748, %v5871, 0.0
      %v5941 = vsel %vm5749, %v5876, 0.0
      %v5942 = vsel %vm5750, %v5881, 0.0
      %v5943 = vsel %vm5751, %v5886, 0.0
      %v5944 = vsel %vm5752, %v5891, 0.0
      %v5945 = vsel %vm5753, %v5896, 0.0
      %v5946 = vsel %vm5754, %v5901, 0.0
      %v5947 = vsel %vm5755, %v5906, 0.0
      %v5948 = vsel %vm5756, %v5911, 0.0
      %v5949 = vsel %vm5757, %v5916, 0.0
      %v5950 = vadd.f32 %v5598, %v5918
      %v5951 = vadd.f32 %v5599, %v5919
      %v5952 = vadd.f32 %v5600, %v5920
      %v5953 = vadd.f32 %v5601, %v5921
      %v5954 = vadd.f32 %v5602, %v5922
      %v5955 = vadd.f32 %v5603, %v5923
      %v5956 = vadd.f32 %v5604, %v5924
      %v5957 = vadd.f32 %v5605, %v5925
      %v5958 = vadd.f32 %v5606, %v5926
      %v5959 = vadd.f32 %v5607, %v5927
      %v5960 = vadd.f32 %v5608, %v5928
      %v5961 = vadd.f32 %v5609, %v5929
      %v5962 = vadd.f32 %v5610, %v5930
      %v5963 = vadd.f32 %v5611, %v5931
      %v5964 = vadd.f32 %v5612, %v5932
      %v5965 = vadd.f32 %v5613, %v5933
      %v5966 = vadd.f32 %v5614, %v5934
      %v5967 = vadd.f32 %v5615, %v5935
      %v5968 = vadd.f32 %v5616, %v5936
      %v5969 = vadd.f32 %v5617, %v5937
      %v5970 = vadd.f32 %v5618, %v5938
      %v5971 = vadd.f32 %v5619, %v5939
      %v5972 = vadd.f32 %v5620, %v5940
      %v5973 = vadd.f32 %v5621, %v5941
      %v5974 = vadd.f32 %v5622, %v5942
      %v5975 = vadd.f32 %v5623, %v5943
      %v5976 = vadd.f32 %v5624, %v5944
      %v5977 = vadd.f32 %v5625, %v5945
      %v5978 = vadd.f32 %v5626, %v5946
      %v5979 = vadd.f32 %v5627, %v5947
      %v5980 = vadd.f32 %v5628, %v5948
      %v5981 = vadd.f32 %v5629, %v5949
      %v5982 = vld [vmem:[%s5] sm:$0xff]
      %v5983 = vld [vmem:[%s5 + $0x8] sm:$0xff]
      %v5984 = vld [vmem:[%s5 + $0x10] sm:$0xff]
      %v5985 = vld [vmem:[%s5 + $0x18] sm:$0xff]
      %v5986 = vld [vmem:[%s5 + $0x20] sm:$0xff]
      %v5987 = vld [vmem:[%s5 + $0x28] sm:$0xff]
      %v5988 = vld [vmem:[%s5 + $0x30] sm:$0xff]
      %v5989 = vld [vmem:[%s5 + $0x38] sm:$0xff]
      %v5990 = vld [vmem:[%s5 + $0x40] sm:$0xff]
      %v5991 = vld [vmem:[%s5 + $0x48] sm:$0xff]
      %v5992 = vld [vmem:[%s5 + $0x50] sm:$0xff]
      %v5993 = vld [vmem:[%s5 + $0x58] sm:$0xff]
      %v5994 = vld [vmem:[%s5 + $0x60] sm:$0xff]
      %v5995 = vld [vmem:[%s5 + $0x68] sm:$0xff]
      %v5996 = vld [vmem:[%s5 + $0x70] sm:$0xff]
      %v5997 = vld [vmem:[%s5 + $0x78] sm:$0xff]
      %5998 = vmatpush.msra.mxu0 %v5997
      %5999 = vmatpush.msra.mxu0 %v5996
      %6000 = vmatpush.msra.mxu0 %v5995
      %6001 = vmatpush.msra.mxu0 %v5994
      %6002 = vmatpush.msra.mxu0 %v5993
      %6003 = vmatpush.msra.mxu0 %v5992
      %6004 = vmatpush.msra.mxu0 %v5991
      %6005 = vmatpush.msra.mxu0 %v5990
      %6006 = vmatpush.msra.mxu0 %v5989
      %6007 = vmatpush.msra.mxu0 %v5988
      %6008 = vmatpush.msra.mxu0 %v5987
      %6009 = vmatpush.msra.mxu0 %v5986
      %6010 = vmatpush.msra.mxu0 %v5985
      %6011 = vmatpush.msra.mxu0 %v5984
      %6012 = vmatpush.msra.mxu0 %v5983
      %6013 = vmatpush.msra.mxu0 %v5982
      %6014 = vmatmul.f32.gmra.mxu0 %v5950
      %v6015 = vpop.f32.mrf.mxu0
      %v6016 = vadd.f32 0.0, %v6015
      %6017 = vmatmul.f32.gmra.mxu0 %v5951
      %v6018 = vpop.f32.mrf.mxu0
      %v6019 = vadd.f32 0.0, %v6018
      %6020 = vmatmul.f32.gmra.mxu0 %v5952
      %v6021 = vpop.f32.mrf.mxu0
      %v6022 = vadd.f32 0.0, %v6021
      %6023 = vmatmul.f32.gmra.mxu0 %v5953
      %v6024 = vpop.f32.mrf.mxu0
      %v6025 = vadd.f32 0.0, %v6024
      %6026 = vmatmul.f32.gmra.mxu0 %v5954
      %v6027 = vpop.f32.mrf.mxu0
      %v6028 = vadd.f32 0.0, %v6027
      %6029 = vmatmul.f32.gmra.mxu0 %v5955
      %v6030 = vpop.f32.mrf.mxu0
      %v6031 = vadd.f32 0.0, %v6030
      %6032 = vmatmul.f32.gmra.mxu0 %v5956
      %v6033 = vpop.f32.mrf.mxu0
      %v6034 = vadd.f32 0.0, %v6033
      %6035 = vmatmul.f32.gmra.mxu0 %v5957
      %v6036 = vpop.f32.mrf.mxu0
      %v6037 = vadd.f32 0.0, %v6036
      %6038 = vmatmul.f32.gmra.mxu0 %v5958
      %v6039 = vpop.f32.mrf.mxu0
      %v6040 = vadd.f32 0.0, %v6039
      %6041 = vmatmul.f32.gmra.mxu0 %v5959
      %v6042 = vpop.f32.mrf.mxu0
      %v6043 = vadd.f32 0.0, %v6042
      %6044 = vmatmul.f32.gmra.mxu0 %v5960
      %v6045 = vpop.f32.mrf.mxu0
      %v6046 = vadd.f32 0.0, %v6045
      %6047 = vmatmul.f32.gmra.mxu0 %v5961
      %v6048 = vpop.f32.mrf.mxu0
      %v6049 = vadd.f32 0.0, %v6048
      %6050 = vmatmul.f32.gmra.mxu0 %v5962
      %v6051 = vpop.f32.mrf.mxu0
      %v6052 = vadd.f32 0.0, %v6051
      %6053 = vmatmul.f32.gmra.mxu0 %v5963
      %v6054 = vpop.f32.mrf.mxu0
      %v6055 = vadd.f32 0.0, %v6054
      %6056 = vmatmul.f32.gmra.mxu0 %v5964
      %v6057 = vpop.f32.mrf.mxu0
      %v6058 = vadd.f32 0.0, %v6057
      %6059 = vmatmul.f32.gmra.mxu0 %v5965
      %v6060 = vpop.f32.mrf.mxu0
      %v6061 = vadd.f32 0.0, %v6060
      %6062 = vmatmul.f32.gmra.mxu0 %v5966
      %v6063 = vpop.f32.mrf.mxu0
      %v6064 = vadd.f32 0.0, %v6063
      %6065 = vmatmul.f32.gmra.mxu0 %v5967
      %v6066 = vpop.f32.mrf.mxu0
      %v6067 = vadd.f32 0.0, %v6066
      %6068 = vmatmul.f32.gmra.mxu0 %v5968
      %v6069 = vpop.f32.mrf.mxu0
      %v6070 = vadd.f32 0.0, %v6069
      %6071 = vmatmul.f32.gmra.mxu0 %v5969
      %v6072 = vpop.f32.mrf.mxu0
      %v6073 = vadd.f32 0.0, %v6072
      %6074 = vmatmul.f32.gmra.mxu0 %v5970
      %v6075 = vpop.f32.mrf.mxu0
      %v6076 = vadd.f32 0.0, %v6075
      %6077 = vmatmul.f32.gmra.mxu0 %v5971
      %v6078 = vpop.f32.mrf.mxu0
      %v6079 = vadd.f32 0.0, %v6078
      %6080 = vmatmul.f32.gmra.mxu0 %v5972
      %v6081 = vpop.f32.mrf.mxu0
      %v6082 = vadd.f32 0.0, %v6081
      %6083 = vmatmul.f32.gmra.mxu0 %v5973
      %v6084 = vpop.f32.mrf.mxu0
      %v6085 = vadd.f32 0.0, %v6084
      %6086 = vmatmul.f32.gmra.mxu0 %v5974
      %v6087 = vpop.f32.mrf.mxu0
      %v6088 = vadd.f32 0.0, %v6087
      %6089 = vmatmul.f32.gmra.mxu0 %v5975
      %v6090 = vpop.f32.mrf.mxu0
      %v6091 = vadd.f32 0.0, %v6090
      %6092 = vmatmul.f32.gmra.mxu0 %v5976
      %v6093 = vpop.f32.mrf.mxu0
      %v6094 = vadd.f32 0.0, %v6093
      %6095 = vmatmul.f32.gmra.mxu0 %v5977
      %v6096 = vpop.f32.mrf.mxu0
      %v6097 = vadd.f32 0.0, %v6096
      %6098 = vmatmul.f32.gmra.mxu0 %v5978
      %v6099 = vpop.f32.mrf.mxu0
      %v6100 = vadd.f32 0.0, %v6099
      %6101 = vmatmul.f32.gmra.mxu0 %v5979
      %v6102 = vpop.f32.mrf.mxu0
      %v6103 = vadd.f32 0.0, %v6102
      %6104 = vmatmul.f32.gmra.mxu0 %v5980
      %v6105 = vpop.f32.mrf.mxu0
      %v6106 = vadd.f32 0.0, %v6105
      %6107 = vmatmul.f32.gmra.mxu0 %v5981
      %v6108 = vpop.f32.mrf.mxu0
      %v6109 = vadd.f32 0.0, %v6108
      %6110 = vdwg.mxu0
      %v6111 = vmul.f32 %v6016, %v1815
      %v6112 = vmul.f32 %v6019, %v1816
      %v6113 = vmul.f32 %v6022, %v1817
      %v6114 = vmul.f32 %v6025, %v1818
      %v6115 = vmul.f32 %v6028, %v1819
      %v6116 = vmul.f32 %v6031, %v1820
      %v6117 = vmul.f32 %v6034, %v1821
      %v6118 = vmul.f32 %v6037, %v1822
      %v6119 = vmul.f32 %v6040, %v1823
      %v6120 = vmul.f32 %v6043, %v1824
      %v6121 = vmul.f32 %v6046, %v1825
      %v6122 = vmul.f32 %v6049, %v1826
      %v6123 = vmul.f32 %v6052, %v1827
      %v6124 = vmul.f32 %v6055, %v1828
      %v6125 = vmul.f32 %v6058, %v1829
      %v6126 = vmul.f32 %v6061, %v1830
      %v6127 = vmul.f32 %v6064, %v1831
      %v6128 = vmul.f32 %v6067, %v1832
      %v6129 = vmul.f32 %v6070, %v1833
      %v6130 = vmul.f32 %v6073, %v1834
      %v6131 = vmul.f32 %v6076, %v1835
      %v6132 = vmul.f32 %v6079, %v1836
      %v6133 = vmul.f32 %v6082, %v1837
      %v6134 = vmul.f32 %v6085, %v1838
      %v6135 = vmul.f32 %v6088, %v1839
      %v6136 = vmul.f32 %v6091, %v1840
      %v6137 = vmul.f32 %v6094, %v1841
      %v6138 = vmul.f32 %v6097, %v1842
      %v6139 = vmul.f32 %v6100, %v1843
      %v6140 = vmul.f32 %v6103, %v1844
      %v6141 = vmul.f32 %v6106, %v1845
      %v6142 = vmul.f32 %v6109, %v1846
      %6143 = vmatpush.msra.mxu0 %v1862
      %6144 = vmatpush.msra.mxu0 %v1861
      %6145 = vmatpush.msra.mxu0 %v1860
      %6146 = vmatpush.msra.mxu0 %v1859
      %6147 = vmatpush.msra.mxu0 %v1858
      %6148 = vmatpush.msra.mxu0 %v1857
      %6149 = vmatpush.msra.mxu0 %v1856
      %6150 = vmatpush.msra.mxu0 %v1855
      %6151 = vmatpush.msra.mxu0 %v1854
      %6152 = vmatpush.msra.mxu0 %v1853
      %6153 = vmatpush.msra.mxu0 %v1852
      %6154 = vmatpush.msra.mxu0 %v1851
      %6155 = vmatpush.msra.mxu0 %v1850
      %6156 = vmatpush.msra.mxu0 %v1849
      %6157 = vmatpush.msra.mxu0 %v1848
      %6158 = vmatpush.msra.mxu0 %v1847
      %6159 = vmatmul.f32.gmra.mxu0 %v6111
      %v6160 = vpop.f32.mrf.mxu0
      %v6161 = vadd.f32 0.0, %v6160
      %6162 = vmatmul.f32.gmra.mxu0 %v6112
      %v6163 = vpop.f32.mrf.mxu0
      %v6164 = vadd.f32 0.0, %v6163
      %6165 = vmatmul.f32.gmra.mxu0 %v6113
      %v6166 = vpop.f32.mrf.mxu0
      %v6167 = vadd.f32 0.0, %v6166
      %6168 = vmatmul.f32.gmra.mxu0 %v6114
      %v6169 = vpop.f32.mrf.mxu0
      %v6170 = vadd.f32 0.0, %v6169
      %6171 = vmatmul.f32.gmra.mxu0 %v6115
      %v6172 = vpop.f32.mrf.mxu0
      %v6173 = vadd.f32 0.0, %v6172
      %6174 = vmatmul.f32.gmra.mxu0 %v6116
      %v6175 = vpop.f32.mrf.mxu0
      %v6176 = vadd.f32 0.0, %v6175
      %6177 = vmatmul.f32.gmra.mxu0 %v6117
      %v6178 = vpop.f32.mrf.mxu0
      %v6179 = vadd.f32 0.0, %v6178
      %6180 = vmatmul.f32.gmra.mxu0 %v6118
      %v6181 = vpop.f32.mrf.mxu0
      %v6182 = vadd.f32 0.0, %v6181
      %6183 = vmatmul.f32.gmra.mxu0 %v6119
      %v6184 = vpop.f32.mrf.mxu0
      %v6185 = vadd.f32 0.0, %v6184
      %6186 = vmatmul.f32.gmra.mxu0 %v6120
      %v6187 = vpop.f32.mrf.mxu0
      %v6188 = vadd.f32 0.0, %v6187
      %6189 = vmatmul.f32.gmra.mxu0 %v6121
      %v6190 = vpop.f32.mrf.mxu0
      %v6191 = vadd.f32 0.0, %v6190
      %6192 = vmatmul.f32.gmra.mxu0 %v6122
      %v6193 = vpop.f32.mrf.mxu0
      %v6194 = vadd.f32 0.0, %v6193
      %6195 = vmatmul.f32.gmra.mxu0 %v6123
      %v6196 = vpop.f32.mrf.mxu0
      %v6197 = vadd.f32 0.0, %v6196
      %6198 = vmatmul.f32.gmra.mxu0 %v6124
      %v6199 = vpop.f32.mrf.mxu0
      %v6200 = vadd.f32 0.0, %v6199
      %6201 = vmatmul.f32.gmra.mxu0 %v6125
      %v6202 = vpop.f32.mrf.mxu0
      %v6203 = vadd.f32 0.0, %v6202
      %6204 = vmatmul.f32.gmra.mxu0 %v6126
      %v6205 = vpop.f32.mrf.mxu0
      %v6206 = vadd.f32 0.0, %v6205
      %6207 = vmatmul.f32.gmra.mxu0 %v6127
      %v6208 = vpop.f32.mrf.mxu0
      %v6209 = vadd.f32 0.0, %v6208
      %6210 = vmatmul.f32.gmra.mxu0 %v6128
      %v6211 = vpop.f32.mrf.mxu0
      %v6212 = vadd.f32 0.0, %v6211
      %6213 = vmatmul.f32.gmra.mxu0 %v6129
      %v6214 = vpop.f32.mrf.mxu0
      %v6215 = vadd.f32 0.0, %v6214
      %6216 = vmatmul.f32.gmra.mxu0 %v6130
      %v6217 = vpop.f32.mrf.mxu0
      %v6218 = vadd.f32 0.0, %v6217
      %6219 = vmatmul.f32.gmra.mxu0 %v6131
      %v6220 = vpop.f32.mrf.mxu0
      %v6221 = vadd.f32 0.0, %v6220
      %6222 = vmatmul.f32.gmra.mxu0 %v6132
      %v6223 = vpop.f32.mrf.mxu0
      %v6224 = vadd.f32 0.0, %v6223
      %6225 = vmatmul.f32.gmra.mxu0 %v6133
      %v6226 = vpop.f32.mrf.mxu0
      %v6227 = vadd.f32 0.0, %v6226
      %6228 = vmatmul.f32.gmra.mxu0 %v6134
      %v6229 = vpop.f32.mrf.mxu0
      %v6230 = vadd.f32 0.0, %v6229
      %6231 = vmatmul.f32.gmra.mxu0 %v6135
      %v6232 = vpop.f32.mrf.mxu0
      %v6233 = vadd.f32 0.0, %v6232
      %6234 = vmatmul.f32.gmra.mxu0 %v6136
      %v6235 = vpop.f32.mrf.mxu0
      %v6236 = vadd.f32 0.0, %v6235
      %6237 = vmatmul.f32.gmra.mxu0 %v6137
      %v6238 = vpop.f32.mrf.mxu0
      %v6239 = vadd.f32 0.0, %v6238
      %6240 = vmatmul.f32.gmra.mxu0 %v6138
      %v6241 = vpop.f32.mrf.mxu0
      %v6242 = vadd.f32 0.0, %v6241
      %6243 = vmatmul.f32.gmra.mxu0 %v6139
      %v6244 = vpop.f32.mrf.mxu0
      %v6245 = vadd.f32 0.0, %v6244
      %6246 = vmatmul.f32.gmra.mxu0 %v6140
      %v6247 = vpop.f32.mrf.mxu0
      %v6248 = vadd.f32 0.0, %v6247
      %6249 = vmatmul.f32.gmra.mxu0 %v6141
      %v6250 = vpop.f32.mrf.mxu0
      %v6251 = vadd.f32 0.0, %v6250
      %6252 = vmatmul.f32.gmra.mxu0 %v6142
      %v6253 = vpop.f32.mrf.mxu0
      %v6254 = vadd.f32 0.0, %v6253
      %6255 = vdwg.mxu0
      %6256 = vset.pattern.permute.xlu0 1
      %6257 = vperm.xlu0 %6256, %v5150
      %v6258 = vpop.permute.xlu0 %6257
      %6259 = vset.pattern.permute.xlu0 1
      %6260 = vperm.xlu0 %6259, %v5151
      %v6261 = vpop.permute.xlu0 %6260
      %6262 = vset.pattern.permute.xlu0 1
      %6263 = vperm.xlu0 %6262, %v5152
      %v6264 = vpop.permute.xlu0 %6263
      %6265 = vset.pattern.permute.xlu0 1
      %6266 = vperm.xlu0 %6265, %v5153
      %v6267 = vpop.permute.xlu0 %6266
      %6268 = vset.pattern.permute.xlu0 1
      %6269 = vperm.xlu0 %6268, %v5154
      %v6270 = vpop.permute.xlu0 %6269
      %6271 = vset.pattern.permute.xlu0 1
      %6272 = vperm.xlu0 %6271, %v5155
      %v6273 = vpop.permute.xlu0 %6272
      %6274 = vset.pattern.permute.xlu0 1
      %6275 = vperm.xlu0 %6274, %v5156
      %v6276 = vpop.permute.xlu0 %6275
      %6277 = vset.pattern.permute.xlu0 1
      %6278 = vperm.xlu0 %6277, %v5157
      %v6279 = vpop.permute.xlu0 %6278
      %6280 = vset.pattern.permute.xlu0 1
      %6281 = vperm.xlu0 %6280, %v5158
      %v6282 = vpop.permute.xlu0 %6281
      %6283 = vset.pattern.permute.xlu0 1
      %6284 = vperm.xlu0 %6283, %v5159
      %v6285 = vpop.permute.xlu0 %6284
      %6286 = vset.pattern.permute.xlu0 1
      %6287 = vperm.xlu0 %6286, %v5160
      %v6288 = vpop.permute.xlu0 %6287
      %6289 = vset.pattern.permute.xlu0 1
      %6290 = vperm.xlu0 %6289, %v5161
      %v6291 = vpop.permute.xlu0 %6290
      %6292 = vset.pattern.permute.xlu0 1
      %6293 = vperm.xlu0 %6292, %v5162
      %v6294 = vpop.permute.xlu0 %6293
      %6295 = vset.pattern.permute.xlu0 1
      %6296 = vperm.xlu0 %6295, %v5163
      %v6297 = vpop.permute.xlu0 %6296
      %6298 = vset.pattern.permute.xlu0 1
      %6299 = vperm.xlu0 %6298, %v5164
      %v6300 = vpop.permute.xlu0 %6299
      %6301 = vset.pattern.permute.xlu0 1
      %6302 = vperm.xlu0 %6301, %v5165
      %v6303 = vpop.permute.xlu0 %6302
      %6304 = vset.pattern.permute.xlu0 1
      %6305 = vperm.xlu0 %6304, %v5166
      %v6306 = vpop.permute.xlu0 %6305
      %6307 = vset.pattern.permute.xlu0 1
      %6308 = vperm.xlu0 %6307, %v5167
      %v6309 = vpop.permute.xlu0 %6308
      %6310 = vset.pattern.permute.xlu0 1
      %6311 = vperm.xlu0 %6310, %v5168
      %v6312 = vpop.permute.xlu0 %6311
      %6313 = vset.pattern.permute.xlu0 1
      %6314 = vperm.xlu0 %6313, %v5169
      %v6315 = vpop.permute.xlu0 %6314
      %6316 = vset.pattern.permute.xlu0 1
      %6317 = vperm.xlu0 %6316, %v5170
      %v6318 = vpop.permute.xlu0 %6317
      %6319 = vset.pattern.permute.xlu0 1
      %6320 = vperm.xlu0 %6319, %v5171
      %v6321 = vpop.permute.xlu0 %6320
      %6322 = vset.pattern.permute.xlu0 1
      %6323 = vperm.xlu0 %6322, %v5172
      %v6324 = vpop.permute.xlu0 %6323
      %6325 = vset.pattern.permute.xlu0 1
      %6326 = vperm.xlu0 %6325, %v5173
      %v6327 = vpop.permute.xlu0 %6326
      %6328 = vset.pattern.permute.xlu0 1
      %6329 = vperm.xlu0 %6328, %v5174
      %v6330 = vpop.permute.xlu0 %6329
      %6331 = vset.pattern.permute.xlu0 1
      %6332 = vperm.xlu0 %6331, %v5175
      %v6333 = vpop.permute.xlu0 %6332
      %6334 = vset.pattern.permute.xlu0 1
      %6335 = vperm.xlu0 %6334, %v5176
      %v6336 = vpop.permute.xlu0 %6335
      %6337 = vset.pattern.permute.xlu0 1
      %6338 = vperm.xlu0 %6337, %v5177
      %v6339 = vpop.permute.xlu0 %6338
      %6340 = vset.pattern.permute.xlu0 1
      %6341 = vperm.xlu0 %6340, %v5178
      %v6342 = vpop.permute.xlu0 %6341
      %6343 = vset.pattern.permute.xlu0 1
      %6344 = vperm.xlu0 %6343, %v5179
      %v6345 = vpop.permute.xlu0 %6344
      %6346 = vset.pattern.permute.xlu0 1
      %6347 = vperm.xlu0 %6346, %v5180
      %v6348 = vpop.permute.xlu0 %6347
      %6349 = vset.pattern.permute.xlu0 1
      %6350 = vperm.xlu0 %6349, %v5181
      %v6351 = vpop.permute.xlu0 %6350
      %vm6352 = vcmp.eq.s32.totalorder %v694, %v6258
      %vm6353 = vcmp.eq.s32.totalorder %v694, %v6261
      %vm6354 = vcmp.eq.s32.totalorder %v694, %v6264
      %vm6355 = vcmp.eq.s32.totalorder %v694, %v6267
      %vm6356 = vcmp.eq.s32.totalorder %v694, %v6270
      %vm6357 = vcmp.eq.s32.totalorder %v694, %v6273
      %vm6358 = vcmp.eq.s32.totalorder %v694, %v6276
      %vm6359 = vcmp.eq.s32.totalorder %v694, %v6279
      %vm6360 = vcmp.eq.s32.totalorder %v694, %v6282
      %vm6361 = vcmp.eq.s32.totalorder %v694, %v6285
      %vm6362 = vcmp.eq.s32.totalorder %v694, %v6288
      %vm6363 = vcmp.eq.s32.totalorder %v694, %v6291
      %vm6364 = vcmp.eq.s32.totalorder %v694, %v6294
      %vm6365 = vcmp.eq.s32.totalorder %v694, %v6297
      %vm6366 = vcmp.eq.s32.totalorder %v694, %v6300
      %vm6367 = vcmp.eq.s32.totalorder %v694, %v6303
      %vm6368 = vcmp.eq.s32.totalorder %v694, %v6306
      %vm6369 = vcmp.eq.s32.totalorder %v694, %v6309
      %vm6370 = vcmp.eq.s32.totalorder %v694, %v6312
      %vm6371 = vcmp.eq.s32.totalorder %v694, %v6315
      %vm6372 = vcmp.eq.s32.totalorder %v694, %v6318
      %vm6373 = vcmp.eq.s32.totalorder %v694, %v6321
      %vm6374 = vcmp.eq.s32.totalorder %v694, %v6324
      %vm6375 = vcmp.eq.s32.totalorder %v694, %v6327
      %vm6376 = vcmp.eq.s32.totalorder %v694, %v6330
      %vm6377 = vcmp.eq.s32.totalorder %v694, %v6333
      %vm6378 = vcmp.eq.s32.totalorder %v694, %v6336
      %vm6379 = vcmp.eq.s32.totalorder %v694, %v6339
      %vm6380 = vcmp.eq.s32.totalorder %v694, %v6342
      %vm6381 = vcmp.eq.s32.totalorder %v694, %v6345
      %vm6382 = vcmp.eq.s32.totalorder %v694, %v6348
      %vm6383 = vcmp.eq.s32.totalorder %v694, %v6351
      %6384 = vset.pattern.permute.xlu0 1
      %6385 = vperm.xlu0 %6384, %v5406
      %v6386 = vpop.permute.xlu0 %6385
      %6388 = vset.pattern.permute.xlu0 1
      %6389 = vperm.xlu0 %6388, %v5407
      %v6390 = vpop.permute.xlu0 %6389
      %6392 = vset.pattern.permute.xlu0 1
      %6393 = vperm.xlu0 %6392, %v5408
      %v6394 = vpop.permute.xlu0 %6393
      %6396 = vset.pattern.permute.xlu0 1
      %6397 = vperm.xlu0 %6396, %v5409
      %v6398 = vpop.permute.xlu0 %6397
      %6400 = vset.pattern.permute.xlu0 1
      %6401 = vperm.xlu0 %6400, %v5410
      %v6402 = vpop.permute.xlu0 %6401
      %6404 = vset.pattern.permute.xlu0 1
      %6405 = vperm.xlu0 %6404, %v5411
      %v6406 = vpop.permute.xlu0 %6405
      %6408 = vset.pattern.permute.xlu0 1
      %6409 = vperm.xlu0 %6408, %v5412
      %v6410 = vpop.permute.xlu0 %6409
      %6412 = vset.pattern.permute.xlu0 1
      %6413 = vperm.xlu0 %6412, %v5413
      %v6414 = vpop.permute.xlu0 %6413
      %6416 = vset.pattern.permute.xlu0 1
      %6417 = vperm.xlu0 %6416, %v5414
      %v6418 = vpop.permute.xlu0 %6417
      %6420 = vset.pattern.permute.xlu0 1
      %6421 = vperm.xlu0 %6420, %v5415
      %v6422 = vpop.permute.xlu0 %6421
      %6424 = vset.pattern.permute.xlu0 1
      %6425 = vperm.xlu0 %6424, %v5416
      %v6426 = vpop.permute.xlu0 %6425
      %6428 = vset.pattern.permute.xlu0 1
      %6429 = vperm.xlu0 %6428, %v5417
      %v6430 = vpop.permute.xlu0 %6429
      %6432 = vset.pattern.permute.xlu0 1
      %6433 = vperm.xlu0 %6432, %v5418
      %v6434 = vpop.permute.xlu0 %6433
      %6436 = vset.pattern.permute.xlu0 1
      %6437 = vperm.xlu0 %6436, %v5419
      %v6438 = vpop.permute.xlu0 %6437
      %6440 = vset.pattern.permute.xlu0 1
      %6441 = vperm.xlu0 %6440, %v5420
      %v6442 = vpop.permute.xlu0 %6441
      %6444 = vset.pattern.permute.xlu0 1
      %6445 = vperm.xlu0 %6444, %v5421
      %v6446 = vpop.permute.xlu0 %6445
      %6448 = vset.pattern.permute.xlu0 1
      %6449 = vperm.xlu0 %6448, %v5422
      %v6450 = vpop.permute.xlu0 %6449
      %6452 = vset.pattern.permute.xlu0 1
      %6453 = vperm.xlu0 %6452, %v5423
      %v6454 = vpop.permute.xlu0 %6453
      %6456 = vset.pattern.permute.xlu0 1
      %6457 = vperm.xlu0 %6456, %v5424
      %v6458 = vpop.permute.xlu0 %6457
      %6460 = vset.pattern.permute.xlu0 1
      %6461 = vperm.xlu0 %6460, %v5425
      %v6462 = vpop.permute.xlu0 %6461
      %6464 = vset.pattern.permute.xlu0 1
      %6465 = vperm.xlu0 %6464, %v5426
      %v6466 = vpop.permute.xlu0 %6465
      %6468 = vset.pattern.permute.xlu0 1
      %6469 = vperm.xlu0 %6468, %v5427
      %v6470 = vpop.permute.xlu0 %6469
      %6472 = vset.pattern.permute.xlu0 1
      %6473 = vperm.xlu0 %6472, %v5428
      %v6474 = vpop.permute.xlu0 %6473
      %6476 = vset.pattern.permute.xlu0 1
      %6477 = vperm.xlu0 %6476, %v5429
      %v6478 = vpop.permute.xlu0 %6477
      %6480 = vset.pattern.permute.xlu0 1
      %6481 = vperm.xlu0 %6480, %v5430
      %v6482 = vpop.permute.xlu0 %6481
      %6484 = vset.pattern.permute.xlu0 1
      %6485 = vperm.xlu0 %6484, %v5431
      %v6486 = vpop.permute.xlu0 %6485
      %6488 = vset.pattern.permute.xlu0 1
      %6489 = vperm.xlu0 %6488, %v5432
      %v6490 = vpop.permute.xlu0 %6489
      %6492 = vset.pattern.permute.xlu0 1
      %6493 = vperm.xlu0 %6492, %v5433
      %v6494 = vpop.permute.xlu0 %6493
      %6496 = vset.pattern.permute.xlu0 1
      %6497 = vperm.xlu0 %6496, %v5434
      %v6498 = vpop.permute.xlu0 %6497
      %6500 = vset.pattern.permute.xlu0 1
      %6501 = vperm.xlu0 %6500, %v5435
      %v6502 = vpop.permute.xlu0 %6501
      %6504 = vset.pattern.permute.xlu0 1
      %6505 = vperm.xlu0 %6504, %v5436
      %v6506 = vpop.permute.xlu0 %6505
      %6508 = vset.pattern.permute.xlu0 1
      %6509 = vperm.xlu0 %6508, %v5437
      %v6510 = vpop.permute.xlu0 %6509
      %v6512 = vsel %vm6352, %v6386, 0.0
      %v6513 = vsel %vm6353, %v6390, 0.0
      %v6514 = vsel %vm6354, %v6394, 0.0
      %v6515 = vsel %vm6355, %v6398, 0.0
      %v6516 = vsel %vm6356, %v6402, 0.0
      %v6517 = vsel %vm6357, %v6406, 0.0
      %v6518 = vsel %vm6358, %v6410, 0.0
      %v6519 = vsel %vm6359, %v6414, 0.0
      %v6520 = vsel %vm6360, %v6418, 0.0
      %v6521 = vsel %vm6361, %v6422, 0.0
      %v6522 = vsel %vm6362, %v6426, 0.0
      %v6523 = vsel %vm6363, %v6430, 0.0
      %v6524 = vsel %vm6364, %v6434, 0.0
      %v6525 = vsel %vm6365, %v6438, 0.0
      %v6526 = vsel %vm6366, %v6442, 0.0
      %v6527 = vsel %vm6367, %v6446, 0.0
      %v6528 = vsel %vm6368, %v6450, 0.0
      %v6529 = vsel %vm6369, %v6454, 0.0
      %v6530 = vsel %vm6370, %v6458, 0.0
      %v6531 = vsel %vm6371, %v6462, 0.0
      %v6532 = vsel %vm6372, %v6466, 0.0
      %v6533 = vsel %vm6373, %v6470, 0.0
      %v6534 = vsel %vm6374, %v6474, 0.0
      %v6535 = vsel %vm6375, %v6478, 0.0
      %v6536 = vsel %vm6376, %v6482, 0.0
      %v6537 = vsel %vm6377, %v6486, 0.0
      %v6538 = vsel %vm6378, %v6490, 0.0
      %v6539 = vsel %vm6379, %v6494, 0.0
      %v6540 = vsel %vm6380, %v6498, 0.0
      %v6541 = vsel %vm6381, %v6502, 0.0
      %v6542 = vsel %vm6382, %v6506, 0.0
      %v6543 = vsel %vm6383, %v6510, 0.0
      %6544 = vset.pattern.permute.xlu0 1
      %6545 = vperm.xlu0 %6544, %v5215
      %v6546 = vpop.permute.xlu0 %6545
      %6547 = vset.pattern.permute.xlu0 1
      %6548 = vperm.xlu0 %6547, %v5217
      %v6549 = vpop.permute.xlu0 %6548
      %6550 = vset.pattern.permute.xlu0 1
      %6551 = vperm.xlu0 %6550, %v5219
      %v6552 = vpop.permute.xlu0 %6551
      %6553 = vset.pattern.permute.xlu0 1
      %6554 = vperm.xlu0 %6553, %v5221
      %v6555 = vpop.permute.xlu0 %6554
      %6556 = vset.pattern.permute.xlu0 1
      %6557 = vperm.xlu0 %6556, %v5223
      %v6558 = vpop.permute.xlu0 %6557
      %6559 = vset.pattern.permute.xlu0 1
      %6560 = vperm.xlu0 %6559, %v5225
      %v6561 = vpop.permute.xlu0 %6560
      %6562 = vset.pattern.permute.xlu0 1
      %6563 = vperm.xlu0 %6562, %v5227
      %v6564 = vpop.permute.xlu0 %6563
      %6565 = vset.pattern.permute.xlu0 1
      %6566 = vperm.xlu0 %6565, %v5229
      %v6567 = vpop.permute.xlu0 %6566
      %6568 = vset.pattern.permute.xlu0 1
      %6569 = vperm.xlu0 %6568, %v5231
      %v6570 = vpop.permute.xlu0 %6569
      %6571 = vset.pattern.permute.xlu0 1
      %6572 = vperm.xlu0 %6571, %v5233
      %v6573 = vpop.permute.xlu0 %6572
      %6574 = vset.pattern.permute.xlu0 1
      %6575 = vperm.xlu0 %6574, %v5235
      %v6576 = vpop.permute.xlu0 %6575
      %6577 = vset.pattern.permute.xlu0 1
      %6578 = vperm.xlu0 %6577, %v5237
      %v6579 = vpop.permute.xlu0 %6578
      %6580 = vset.pattern.permute.xlu0 1
      %6581 = vperm.xlu0 %6580, %v5239
      %v6582 = vpop.permute.xlu0 %6581
      %6583 = vset.pattern.permute.xlu0 1
      %6584 = vperm.xlu0 %6583, %v5241
      %v6585 = vpop.permute.xlu0 %6584
      %6586 = vset.pattern.permute.xlu0 1
      %6587 = vperm.xlu0 %6586, %v5243
      %v6588 = vpop.permute.xlu0 %6587
      %6589 = vset.pattern.permute.xlu0 1
      %6590 = vperm.xlu0 %6589, %v5245
      %v6591 = vpop.permute.xlu0 %6590
      %6592 = vset.pattern.permute.xlu0 1
      %6593 = vperm.xlu0 %6592, %v5247
      %v6594 = vpop.permute.xlu0 %6593
      %6595 = vset.pattern.permute.xlu0 1
      %6596 = vperm.xlu0 %6595, %v5249
      %v6597 = vpop.permute.xlu0 %6596
      %6598 = vset.pattern.permute.xlu0 1
      %6599 = vperm.xlu0 %6598, %v5251
      %v6600 = vpop.permute.xlu0 %6599
      %6601 = vset.pattern.permute.xlu0 1
      %6602 = vperm.xlu0 %6601, %v5253
      %v6603 = vpop.permute.xlu0 %6602
      %6604 = vset.pattern.permute.xlu0 1
      %6605 = vperm.xlu0 %6604, %v5255
      %v6606 = vpop.permute.xlu0 %6605
      %6607 = vset.pattern.permute.xlu0 1
      %6608 = vperm.xlu0 %6607, %v5257
      %v6609 = vpop.permute.xlu0 %6608
      %6610 = vset.pattern.permute.xlu0 1
      %6611 = vperm.xlu0 %6610, %v5259
      %v6612 = vpop.permute.xlu0 %6611
      %6613 = vset.pattern.permute.xlu0 1
      %6614 = vperm.xlu0 %6613, %v5261
      %v6615 = vpop.permute.xlu0 %6614
      %6616 = vset.pattern.permute.xlu0 1
      %6617 = vperm.xlu0 %6616, %v5263
      %v6618 = vpop.permute.xlu0 %6617
      %6619 = vset.pattern.permute.xlu0 1
      %6620 = vperm.xlu0 %6619, %v5265
      %v6621 = vpop.permute.xlu0 %6620
      %6622 = vset.pattern.permute.xlu0 1
      %6623 = vperm.xlu0 %6622, %v5267
      %v6624 = vpop.permute.xlu0 %6623
      %6625 = vset.pattern.permute.xlu0 1
      %6626 = vperm.xlu0 %6625, %v5269
      %v6627 = vpop.permute.xlu0 %6626
      %6628 = vset.pattern.permute.xlu0 1
      %6629 = vperm.xlu0 %6628, %v5271
      %v6630 = vpop.permute.xlu0 %6629
      %6631 = vset.pattern.permute.xlu0 1
      %6632 = vperm.xlu0 %6631, %v5273
      %v6633 = vpop.permute.xlu0 %6632
      %6634 = vset.pattern.permute.xlu0 1
      %6635 = vperm.xlu0 %6634, %v5275
      %v6636 = vpop.permute.xlu0 %6635
      %6637 = vset.pattern.permute.xlu0 1
      %6638 = vperm.xlu0 %6637, %v5277
      %v6639 = vpop.permute.xlu0 %6638
      %vm6640 = vcmp.eq.s32.totalorder %v694, %v6546
      %vm6641 = vcmp.eq.s32.totalorder %v694, %v6549
      %vm6642 = vcmp.eq.s32.totalorder %v694, %v6552
      %vm6643 = vcmp.eq.s32.totalorder %v694, %v6555
      %vm6644 = vcmp.eq.s32.totalorder %v694, %v6558
      %vm6645 = vcmp.eq.s32.totalorder %v694, %v6561
      %vm6646 = vcmp.eq.s32.totalorder %v694, %v6564
      %vm6647 = vcmp.eq.s32.totalorder %v694, %v6567
      %vm6648 = vcmp.eq.s32.totalorder %v694, %v6570
      %vm6649 = vcmp.eq.s32.totalorder %v694, %v6573
      %vm6650 = vcmp.eq.s32.totalorder %v694, %v6576
      %vm6651 = vcmp.eq.s32.totalorder %v694, %v6579
      %vm6652 = vcmp.eq.s32.totalorder %v694, %v6582
      %vm6653 = vcmp.eq.s32.totalorder %v694, %v6585
      %vm6654 = vcmp.eq.s32.totalorder %v694, %v6588
      %vm6655 = vcmp.eq.s32.totalorder %v694, %v6591
      %vm6656 = vcmp.eq.s32.totalorder %v694, %v6594
      %vm6657 = vcmp.eq.s32.totalorder %v694, %v6597
      %vm6658 = vcmp.eq.s32.totalorder %v694, %v6600
      %vm6659 = vcmp.eq.s32.totalorder %v694, %v6603
      %vm6660 = vcmp.eq.s32.totalorder %v694, %v6606
      %vm6661 = vcmp.eq.s32.totalorder %v694, %v6609
      %vm6662 = vcmp.eq.s32.totalorder %v694, %v6612
      %vm6663 = vcmp.eq.s32.totalorder %v694, %v6615
      %vm6664 = vcmp.eq.s32.totalorder %v694, %v6618
      %vm6665 = vcmp.eq.s32.totalorder %v694, %v6621
      %vm6666 = vcmp.eq.s32.totalorder %v694, %v6624
      %vm6667 = vcmp.eq.s32.totalorder %v694, %v6627
      %vm6668 = vcmp.eq.s32.totalorder %v694, %v6630
      %vm6669 = vcmp.eq.s32.totalorder %v694, %v6633
      %vm6670 = vcmp.eq.s32.totalorder %v694, %v6636
      %vm6671 = vcmp.eq.s32.totalorder %v694, %v6639
      %6672 = vset.pattern.permute.xlu0 1
      %6673 = vperm.xlu0 %6672, %v5118
      %v6674 = vpop.permute.xlu0 %6673
      %6676 = vset.pattern.permute.xlu0 1
      %6677 = vperm.xlu0 %6676, %v5119
      %v6678 = vpop.permute.xlu0 %6677
      %6680 = vset.pattern.permute.xlu0 1
      %6681 = vperm.xlu0 %6680, %v5120
      %v6682 = vpop.permute.xlu0 %6681
      %6684 = vset.pattern.permute.xlu0 1
      %6685 = vperm.xlu0 %6684, %v5121
      %v6686 = vpop.permute.xlu0 %6685
      %6688 = vset.pattern.permute.xlu0 1
      %6689 = vperm.xlu0 %6688, %v5122
      %v6690 = vpop.permute.xlu0 %6689
      %6692 = vset.pattern.permute.xlu0 1
      %6693 = vperm.xlu0 %6692, %v5123
      %v6694 = vpop.permute.xlu0 %6693
      %6696 = vset.pattern.permute.xlu0 1
      %6697 = vperm.xlu0 %6696, %v5124
      %v6698 = vpop.permute.xlu0 %6697
      %6700 = vset.pattern.permute.xlu0 1
      %6701 = vperm.xlu0 %6700, %v5125
      %v6702 = vpop.permute.xlu0 %6701
      %6704 = vset.pattern.permute.xlu0 1
      %6705 = vperm.xlu0 %6704, %v5126
      %v6706 = vpop.permute.xlu0 %6705
      %6708 = vset.pattern.permute.xlu0 1
      %6709 = vperm.xlu0 %6708, %v5127
      %v6710 = vpop.permute.xlu0 %6709
      %6712 = vset.pattern.permute.xlu0 1
      %6713 = vperm.xlu0 %6712, %v5128
      %v6714 = vpop.permute.xlu0 %6713
      %6716 = vset.pattern.permute.xlu0 1
      %6717 = vperm.xlu0 %6716, %v5129
      %v6718 = vpop.permute.xlu0 %6717
      %6720 = vset.pattern.permute.xlu0 1
      %6721 = vperm.xlu0 %6720, %v5130
      %v6722 = vpop.permute.xlu0 %6721
      %6724 = vset.pattern.permute.xlu0 1
      %6725 = vperm.xlu0 %6724, %v5131
      %v6726 = vpop.permute.xlu0 %6725
      %6728 = vset.pattern.permute.xlu0 1
      %6729 = vperm.xlu0 %6728, %v5132
      %v6730 = vpop.permute.xlu0 %6729
      %6732 = vset.pattern.permute.xlu0 1
      %6733 = vperm.xlu0 %6732, %v5133
      %v6734 = vpop.permute.xlu0 %6733
      %6736 = vset.pattern.permute.xlu0 1
      %6737 = vperm.xlu0 %6736, %v5134
      %v6738 = vpop.permute.xlu0 %6737
      %6740 = vset.pattern.permute.xlu0 1
      %6741 = vperm.xlu0 %6740, %v5135
      %v6742 = vpop.permute.xlu0 %6741
      %6744 = vset.pattern.permute.xlu0 1
      %6745 = vperm.xlu0 %6744, %v5136
      %v6746 = vpop.permute.xlu0 %6745
      %6748 = vset.pattern.permute.xlu0 1
      %6749 = vperm.xlu0 %6748, %v5137
      %v6750 = vpop.permute.xlu0 %6749
      %6752 = vset.pattern.permute.xlu0 1
      %6753 = vperm.xlu0 %6752, %v5138
      %v6754 = vpop.permute.xlu0 %6753
      %6756 = vset.pattern.permute.xlu0 1
      %6757 = vperm.xlu0 %6756, %v5139
      %v6758 = vpop.permute.xlu0 %6757
      %6760 = vset.pattern.permute.xlu0 1
      %6761 = vperm.xlu0 %6760, %v5140
      %v6762 = vpop.permute.xlu0 %6761
      %6764 = vset.pattern.permute.xlu0 1
      %6765 = vperm.xlu0 %6764, %v5141
      %v6766 = vpop.permute.xlu0 %6765
      %6768 = vset.pattern.permute.xlu0 1
      %6769 = vperm.xlu0 %6768, %v5142
      %v6770 = vpop.permute.xlu0 %6769
      %6772 = vset.pattern.permute.xlu0 1
      %6773 = vperm.xlu0 %6772, %v5143
      %v6774 = vpop.permute.xlu0 %6773
      %6776 = vset.pattern.permute.xlu0 1
      %6777 = vperm.xlu0 %6776, %v5144
      %v6778 = vpop.permute.xlu0 %6777
      %6780 = vset.pattern.permute.xlu0 1
      %6781 = vperm.xlu0 %6780, %v5145
      %v6782 = vpop.permute.xlu0 %6781
      %6784 = vset.pattern.permute.xlu0 1
      %6785 = vperm.xlu0 %6784, %v5146
      %v6786 = vpop.permute.xlu0 %6785
      %6788 = vset.pattern.permute.xlu0 1
      %6789 = vperm.xlu0 %6788, %v5147
      %v6790 = vpop.permute.xlu0 %6789
      %6792 = vset.pattern.permute.xlu0 1
      %6793 = vperm.xlu0 %6792, %v5148
      %v6794 = vpop.permute.xlu0 %6793
      %6796 = vset.pattern.permute.xlu0 1
      %6797 = vperm.xlu0 %6796, %v5149
      %v6798 = vpop.permute.xlu0 %6797
      %v6800 = vsel %vm6640, %v6674, 0.0
      %v6801 = vsel %vm6641, %v6678, 0.0
      %v6802 = vsel %vm6642, %v6682, 0.0
      %v6803 = vsel %vm6643, %v6686, 0.0
      %v6804 = vsel %vm6644, %v6690, 0.0
      %v6805 = vsel %vm6645, %v6694, 0.0
      %v6806 = vsel %vm6646, %v6698, 0.0
      %v6807 = vsel %vm6647, %v6702, 0.0
      %v6808 = vsel %vm6648, %v6706, 0.0
      %v6809 = vsel %vm6649, %v6710, 0.0
      %v6810 = vsel %vm6650, %v6714, 0.0
      %v6811 = vsel %vm6651, %v6718, 0.0
      %v6812 = vsel %vm6652, %v6722, 0.0
      %v6813 = vsel %vm6653, %v6726, 0.0
      %v6814 = vsel %vm6654, %v6730, 0.0
      %v6815 = vsel %vm6655, %v6734, 0.0
      %v6816 = vsel %vm6656, %v6738, 0.0
      %v6817 = vsel %vm6657, %v6742, 0.0
      %v6818 = vsel %vm6658, %v6746, 0.0
      %v6819 = vsel %vm6659, %v6750, 0.0
      %v6820 = vsel %vm6660, %v6754, 0.0
      %v6821 = vsel %vm6661, %v6758, 0.0
      %v6822 = vsel %vm6662, %v6762, 0.0
      %v6823 = vsel %vm6663, %v6766, 0.0
      %v6824 = vsel %vm6664, %v6770, 0.0
      %v6825 = vsel %vm6665, %v6774, 0.0
      %v6826 = vsel %vm6666, %v6778, 0.0
      %v6827 = vsel %vm6667, %v6782, 0.0
      %v6828 = vsel %vm6668, %v6786, 0.0
      %v6829 = vsel %vm6669, %v6790, 0.0
      %v6830 = vsel %vm6670, %v6794, 0.0
      %v6831 = vsel %vm6671, %v6798, 0.0
      %v6832 = vadd.f32 %v6512, %v6800
      %v6833 = vadd.f32 %v6513, %v6801
      %v6834 = vadd.f32 %v6514, %v6802
      %v6835 = vadd.f32 %v6515, %v6803
      %v6836 = vadd.f32 %v6516, %v6804
      %v6837 = vadd.f32 %v6517, %v6805
      %v6838 = vadd.f32 %v6518, %v6806
      %v6839 = vadd.f32 %v6519, %v6807
      %v6840 = vadd.f32 %v6520, %v6808
      %v6841 = vadd.f32 %v6521, %v6809
      %v6842 = vadd.f32 %v6522, %v6810
      %v6843 = vadd.f32 %v6523, %v6811
      %v6844 = vadd.f32 %v6524, %v6812
      %v6845 = vadd.f32 %v6525, %v6813
      %v6846 = vadd.f32 %v6526, %v6814
      %v6847 = vadd.f32 %v6527, %v6815
      %v6848 = vadd.f32 %v6528, %v6816
      %v6849 = vadd.f32 %v6529, %v6817
      %v6850 = vadd.f32 %v6530, %v6818
      %v6851 = vadd.f32 %v6531, %v6819
      %v6852 = vadd.f32 %v6532, %v6820
      %v6853 = vadd.f32 %v6533, %v6821
      %v6854 = vadd.f32 %v6534, %v6822
      %v6855 = vadd.f32 %v6535, %v6823
      %v6856 = vadd.f32 %v6536, %v6824
      %v6857 = vadd.f32 %v6537, %v6825
      %v6858 = vadd.f32 %v6538, %v6826
      %v6859 = vadd.f32 %v6539, %v6827
      %v6860 = vadd.f32 %v6540, %v6828
      %v6861 = vadd.f32 %v6541, %v6829
      %v6862 = vadd.f32 %v6542, %v6830
      %v6863 = vadd.f32 %v6543, %v6831
      %v6864 = vld [vmem:[%s6] sm:$0xff]
      %v6865 = vld [vmem:[%s6 + $0x8] sm:$0xff]
      %v6866 = vld [vmem:[%s6 + $0x10] sm:$0xff]
      %v6867 = vld [vmem:[%s6 + $0x18] sm:$0xff]
      %v6868 = vld [vmem:[%s6 + $0x20] sm:$0xff]
      %v6869 = vld [vmem:[%s6 + $0x28] sm:$0xff]
      %v6870 = vld [vmem:[%s6 + $0x30] sm:$0xff]
      %v6871 = vld [vmem:[%s6 + $0x38] sm:$0xff]
      %v6872 = vld [vmem:[%s6 + $0x40] sm:$0xff]
      %v6873 = vld [vmem:[%s6 + $0x48] sm:$0xff]
      %v6874 = vld [vmem:[%s6 + $0x50] sm:$0xff]
      %v6875 = vld [vmem:[%s6 + $0x58] sm:$0xff]
      %v6876 = vld [vmem:[%s6 + $0x60] sm:$0xff]
      %v6877 = vld [vmem:[%s6 + $0x68] sm:$0xff]
      %v6878 = vld [vmem:[%s6 + $0x70] sm:$0xff]
      %v6879 = vld [vmem:[%s6 + $0x78] sm:$0xff]
      %6880 = vmatpush.msra.mxu0 %v6879
      %6881 = vmatpush.msra.mxu0 %v6878
      %6882 = vmatpush.msra.mxu0 %v6877
      %6883 = vmatpush.msra.mxu0 %v6876
      %6884 = vmatpush.msra.mxu0 %v6875
      %6885 = vmatpush.msra.mxu0 %v6874
      %6886 = vmatpush.msra.mxu0 %v6873
      %6887 = vmatpush.msra.mxu0 %v6872
      %6888 = vmatpush.msra.mxu0 %v6871
      %6889 = vmatpush.msra.mxu0 %v6870
      %6890 = vmatpush.msra.mxu0 %v6869
      %6891 = vmatpush.msra.mxu0 %v6868
      %6892 = vmatpush.msra.mxu0 %v6867
      %6893 = vmatpush.msra.mxu0 %v6866
      %6894 = vmatpush.msra.mxu0 %v6865
      %6895 = vmatpush.msra.mxu0 %v6864
      %6896 = vmatmul.f32.gmra.mxu0 %v6832
      %v6897 = vpop.f32.mrf.mxu0
      %v6898 = vadd.f32 0.0, %v6897
      %6899 = vmatmul.f32.gmra.mxu0 %v6833
      %v6900 = vpop.f32.mrf.mxu0
      %v6901 = vadd.f32 0.0, %v6900
      %6902 = vmatmul.f32.gmra.mxu0 %v6834
      %v6903 = vpop.f32.mrf.mxu0
      %v6904 = vadd.f32 0.0, %v6903
      %6905 = vmatmul.f32.gmra.mxu0 %v6835
      %v6906 = vpop.f32.mrf.mxu0
      %v6907 = vadd.f32 0.0, %v6906
      %6908 = vmatmul.f32.gmra.mxu0 %v6836
      %v6909 = vpop.f32.mrf.mxu0
      %v6910 = vadd.f32 0.0, %v6909
      %6911 = vmatmul.f32.gmra.mxu0 %v6837
      %v6912 = vpop.f32.mrf.mxu0
      %v6913 = vadd.f32 0.0, %v6912
      %6914 = vmatmul.f32.gmra.mxu0 %v6838
      %v6915 = vpop.f32.mrf.mxu0
      %v6916 = vadd.f32 0.0, %v6915
      %6917 = vmatmul.f32.gmra.mxu0 %v6839
      %v6918 = vpop.f32.mrf.mxu0
      %v6919 = vadd.f32 0.0, %v6918
      %6920 = vmatmul.f32.gmra.mxu0 %v6840
      %v6921 = vpop.f32.mrf.mxu0
      %v6922 = vadd.f32 0.0, %v6921
      %6923 = vmatmul.f32.gmra.mxu0 %v6841
      %v6924 = vpop.f32.mrf.mxu0
      %v6925 = vadd.f32 0.0, %v6924
      %6926 = vmatmul.f32.gmra.mxu0 %v6842
      %v6927 = vpop.f32.mrf.mxu0
      %v6928 = vadd.f32 0.0, %v6927
      %6929 = vmatmul.f32.gmra.mxu0 %v6843
      %v6930 = vpop.f32.mrf.mxu0
      %v6931 = vadd.f32 0.0, %v6930
      %6932 = vmatmul.f32.gmra.mxu0 %v6844
      %v6933 = vpop.f32.mrf.mxu0
      %v6934 = vadd.f32 0.0, %v6933
      %6935 = vmatmul.f32.gmra.mxu0 %v6845
      %v6936 = vpop.f32.mrf.mxu0
      %v6937 = vadd.f32 0.0, %v6936
      %6938 = vmatmul.f32.gmra.mxu0 %v6846
      %v6939 = vpop.f32.mrf.mxu0
      %v6940 = vadd.f32 0.0, %v6939
      %6941 = vmatmul.f32.gmra.mxu0 %v6847
      %v6942 = vpop.f32.mrf.mxu0
      %v6943 = vadd.f32 0.0, %v6942
      %6944 = vmatmul.f32.gmra.mxu0 %v6848
      %v6945 = vpop.f32.mrf.mxu0
      %v6946 = vadd.f32 0.0, %v6945
      %6947 = vmatmul.f32.gmra.mxu0 %v6849
      %v6948 = vpop.f32.mrf.mxu0
      %v6949 = vadd.f32 0.0, %v6948
      %6950 = vmatmul.f32.gmra.mxu0 %v6850
      %v6951 = vpop.f32.mrf.mxu0
      %v6952 = vadd.f32 0.0, %v6951
      %6953 = vmatmul.f32.gmra.mxu0 %v6851
      %v6954 = vpop.f32.mrf.mxu0
      %v6955 = vadd.f32 0.0, %v6954
      %6956 = vmatmul.f32.gmra.mxu0 %v6852
      %v6957 = vpop.f32.mrf.mxu0
      %v6958 = vadd.f32 0.0, %v6957
      %6959 = vmatmul.f32.gmra.mxu0 %v6853
      %v6960 = vpop.f32.mrf.mxu0
      %v6961 = vadd.f32 0.0, %v6960
      %6962 = vmatmul.f32.gmra.mxu0 %v6854
      %v6963 = vpop.f32.mrf.mxu0
      %v6964 = vadd.f32 0.0, %v6963
      %6965 = vmatmul.f32.gmra.mxu0 %v6855
      %v6966 = vpop.f32.mrf.mxu0
      %v6967 = vadd.f32 0.0, %v6966
      %6968 = vmatmul.f32.gmra.mxu0 %v6856
      %v6969 = vpop.f32.mrf.mxu0
      %v6970 = vadd.f32 0.0, %v6969
      %6971 = vmatmul.f32.gmra.mxu0 %v6857
      %v6972 = vpop.f32.mrf.mxu0
      %v6973 = vadd.f32 0.0, %v6972
      %6974 = vmatmul.f32.gmra.mxu0 %v6858
      %v6975 = vpop.f32.mrf.mxu0
      %v6976 = vadd.f32 0.0, %v6975
      %6977 = vmatmul.f32.gmra.mxu0 %v6859
      %v6978 = vpop.f32.mrf.mxu0
      %v6979 = vadd.f32 0.0, %v6978
      %6980 = vmatmul.f32.gmra.mxu0 %v6860
      %v6981 = vpop.f32.mrf.mxu0
      %v6982 = vadd.f32 0.0, %v6981
      %6983 = vmatmul.f32.gmra.mxu0 %v6861
      %v6984 = vpop.f32.mrf.mxu0
      %v6985 = vadd.f32 0.0, %v6984
      %6986 = vmatmul.f32.gmra.mxu0 %v6862
      %v6987 = vpop.f32.mrf.mxu0
      %v6988 = vadd.f32 0.0, %v6987
      %6989 = vmatmul.f32.gmra.mxu0 %v6863
      %v6990 = vpop.f32.mrf.mxu0
      %v6991 = vadd.f32 0.0, %v6990
      %6992 = vdwg.mxu0
      %v6993 = vmul.f32 %v6898, %v1815
      %v6994 = vmul.f32 %v6901, %v1816
      %v6995 = vmul.f32 %v6904, %v1817
      %v6996 = vmul.f32 %v6907, %v1818
      %v6997 = vmul.f32 %v6910, %v1819
      %v6998 = vmul.f32 %v6913, %v1820
      %v6999 = vmul.f32 %v6916, %v1821
      %v7000 = vmul.f32 %v6919, %v1822
      %v7001 = vmul.f32 %v6922, %v1823
      %v7002 = vmul.f32 %v6925, %v1824
      %v7003 = vmul.f32 %v6928, %v1825
      %v7004 = vmul.f32 %v6931, %v1826
      %v7005 = vmul.f32 %v6934, %v1827
      %v7006 = vmul.f32 %v6937, %v1828
      %v7007 = vmul.f32 %v6940, %v1829
      %v7008 = vmul.f32 %v6943, %v1830
      %v7009 = vmul.f32 %v6946, %v1831
      %v7010 = vmul.f32 %v6949, %v1832
      %v7011 = vmul.f32 %v6952, %v1833
      %v7012 = vmul.f32 %v6955, %v1834
      %v7013 = vmul.f32 %v6958, %v1835
      %v7014 = vmul.f32 %v6961, %v1836
      %v7015 = vmul.f32 %v6964, %v1837
      %v7016 = vmul.f32 %v6967, %v1838
      %v7017 = vmul.f32 %v6970, %v1839
      %v7018 = vmul.f32 %v6973, %v1840
      %v7019 = vmul.f32 %v6976, %v1841
      %v7020 = vmul.f32 %v6979, %v1842
      %v7021 = vmul.f32 %v6982, %v1843
      %v7022 = vmul.f32 %v6985, %v1844
      %v7023 = vmul.f32 %v6988, %v1845
      %v7024 = vmul.f32 %v6991, %v1846
      %7025 = vmatpush.msra.mxu0 %v1862
      %7026 = vmatpush.msra.mxu0 %v1861
      %7027 = vmatpush.msra.mxu0 %v1860
      %7028 = vmatpush.msra.mxu0 %v1859
      %7029 = vmatpush.msra.mxu0 %v1858
      %7030 = vmatpush.msra.mxu0 %v1857
      %7031 = vmatpush.msra.mxu0 %v1856
      %7032 = vmatpush.msra.mxu0 %v1855
      %7033 = vmatpush.msra.mxu0 %v1854
      %7034 = vmatpush.msra.mxu0 %v1853
      %7035 = vmatpush.msra.mxu0 %v1852
      %7036 = vmatpush.msra.mxu0 %v1851
      %7037 = vmatpush.msra.mxu0 %v1850
      %7038 = vmatpush.msra.mxu0 %v1849
      %7039 = vmatpush.msra.mxu0 %v1848
      %7040 = vmatpush.msra.mxu0 %v1847
      %7041 = vmatmul.f32.gmra.mxu0 %v6993
      %v7042 = vpop.f32.mrf.mxu0
      %v7043 = vadd.f32 0.0, %v7042
      %7044 = vmatmul.f32.gmra.mxu0 %v6994
      %v7045 = vpop.f32.mrf.mxu0
      %v7046 = vadd.f32 0.0, %v7045
      %7047 = vmatmul.f32.gmra.mxu0 %v6995
      %v7048 = vpop.f32.mrf.mxu0
      %v7049 = vadd.f32 0.0, %v7048
      %7050 = vmatmul.f32.gmra.mxu0 %v6996
      %v7051 = vpop.f32.mrf.mxu0
      %v7052 = vadd.f32 0.0, %v7051
      %7053 = vmatmul.f32.gmra.mxu0 %v6997
      %v7054 = vpop.f32.mrf.mxu0
      %v7055 = vadd.f32 0.0, %v7054
      %7056 = vmatmul.f32.gmra.mxu0 %v6998
      %v7057 = vpop.f32.mrf.mxu0
      %v7058 = vadd.f32 0.0, %v7057
      %7059 = vmatmul.f32.gmra.mxu0 %v6999
      %v7060 = vpop.f32.mrf.mxu0
      %v7061 = vadd.f32 0.0, %v7060
      %7062 = vmatmul.f32.gmra.mxu0 %v7000
      %v7063 = vpop.f32.mrf.mxu0
      %v7064 = vadd.f32 0.0, %v7063
      %7065 = vmatmul.f32.gmra.mxu0 %v7001
      %v7066 = vpop.f32.mrf.mxu0
      %v7067 = vadd.f32 0.0, %v7066
      %7068 = vmatmul.f32.gmra.mxu0 %v7002
      %v7069 = vpop.f32.mrf.mxu0
      %v7070 = vadd.f32 0.0, %v7069
      %7071 = vmatmul.f32.gmra.mxu0 %v7003
      %v7072 = vpop.f32.mrf.mxu0
      %v7073 = vadd.f32 0.0, %v7072
      %7074 = vmatmul.f32.gmra.mxu0 %v7004
      %v7075 = vpop.f32.mrf.mxu0
      %v7076 = vadd.f32 0.0, %v7075
      %7077 = vmatmul.f32.gmra.mxu0 %v7005
      %v7078 = vpop.f32.mrf.mxu0
      %v7079 = vadd.f32 0.0, %v7078
      %7080 = vmatmul.f32.gmra.mxu0 %v7006
      %v7081 = vpop.f32.mrf.mxu0
      %v7082 = vadd.f32 0.0, %v7081
      %7083 = vmatmul.f32.gmra.mxu0 %v7007
      %v7084 = vpop.f32.mrf.mxu0
      %v7085 = vadd.f32 0.0, %v7084
      %7086 = vmatmul.f32.gmra.mxu0 %v7008
      %v7087 = vpop.f32.mrf.mxu0
      %v7088 = vadd.f32 0.0, %v7087
      %7089 = vmatmul.f32.gmra.mxu0 %v7009
      %v7090 = vpop.f32.mrf.mxu0
      %v7091 = vadd.f32 0.0, %v7090
      %7092 = vmatmul.f32.gmra.mxu0 %v7010
      %v7093 = vpop.f32.mrf.mxu0
      %v7094 = vadd.f32 0.0, %v7093
      %7095 = vmatmul.f32.gmra.mxu0 %v7011
      %v7096 = vpop.f32.mrf.mxu0
      %v7097 = vadd.f32 0.0, %v7096
      %7098 = vmatmul.f32.gmra.mxu0 %v7012
      %v7099 = vpop.f32.mrf.mxu0
      %v7100 = vadd.f32 0.0, %v7099
      %7101 = vmatmul.f32.gmra.mxu0 %v7013
      %v7102 = vpop.f32.mrf.mxu0
      %v7103 = vadd.f32 0.0, %v7102
      %7104 = vmatmul.f32.gmra.mxu0 %v7014
      %v7105 = vpop.f32.mrf.mxu0
      %v7106 = vadd.f32 0.0, %v7105
      %7107 = vmatmul.f32.gmra.mxu0 %v7015
      %v7108 = vpop.f32.mrf.mxu0
      %v7109 = vadd.f32 0.0, %v7108
      %7110 = vmatmul.f32.gmra.mxu0 %v7016
      %v7111 = vpop.f32.mrf.mxu0
      %v7112 = vadd.f32 0.0, %v7111
      %7113 = vmatmul.f32.gmra.mxu0 %v7017
      %v7114 = vpop.f32.mrf.mxu0
      %v7115 = vadd.f32 0.0, %v7114
      %7116 = vmatmul.f32.gmra.mxu0 %v7018
      %v7117 = vpop.f32.mrf.mxu0
      %v7118 = vadd.f32 0.0, %v7117
      %7119 = vmatmul.f32.gmra.mxu0 %v7019
      %v7120 = vpop.f32.mrf.mxu0
      %v7121 = vadd.f32 0.0, %v7120
      %7122 = vmatmul.f32.gmra.mxu0 %v7020
      %v7123 = vpop.f32.mrf.mxu0
      %v7124 = vadd.f32 0.0, %v7123
      %7125 = vmatmul.f32.gmra.mxu0 %v7021
      %v7126 = vpop.f32.mrf.mxu0
      %v7127 = vadd.f32 0.0, %v7126
      %7128 = vmatmul.f32.gmra.mxu0 %v7022
      %v7129 = vpop.f32.mrf.mxu0
      %v7130 = vadd.f32 0.0, %v7129
      %7131 = vmatmul.f32.gmra.mxu0 %v7023
      %v7132 = vpop.f32.mrf.mxu0
      %v7133 = vadd.f32 0.0, %v7132
      %7134 = vmatmul.f32.gmra.mxu0 %v7024
      %v7135 = vpop.f32.mrf.mxu0
      %v7136 = vadd.f32 0.0, %v7135
      %7137 = vdwg.mxu0
      %v7138 = vmul.f32 %v6161, %v7043
      %v7139 = vmul.f32 %v6164, %v7046
      %v7140 = vmul.f32 %v6167, %v7049
      %v7141 = vmul.f32 %v6170, %v7052
      %v7142 = vmul.f32 %v6173, %v7055
      %v7143 = vmul.f32 %v6176, %v7058
      %v7144 = vmul.f32 %v6179, %v7061
      %v7145 = vmul.f32 %v6182, %v7064
      %v7146 = vmul.f32 %v6185, %v7067
      %v7147 = vmul.f32 %v6188, %v7070
      %v7148 = vmul.f32 %v6191, %v7073
      %v7149 = vmul.f32 %v6194, %v7076
      %v7150 = vmul.f32 %v6197, %v7079
      %v7151 = vmul.f32 %v6200, %v7082
      %v7152 = vmul.f32 %v6203, %v7085
      %v7153 = vmul.f32 %v6206, %v7088
      %v7154 = vmul.f32 %v6209, %v7091
      %v7155 = vmul.f32 %v6212, %v7094
      %v7156 = vmul.f32 %v6215, %v7097
      %v7157 = vmul.f32 %v6218, %v7100
      %v7158 = vmul.f32 %v6221, %v7103
      %v7159 = vmul.f32 %v6224, %v7106
      %v7160 = vmul.f32 %v6227, %v7109
      %v7161 = vmul.f32 %v6230, %v7112
      %v7162 = vmul.f32 %v6233, %v7115
      %v7163 = vmul.f32 %v6236, %v7118
      %v7164 = vmul.f32 %v6239, %v7121
      %v7165 = vmul.f32 %v6242, %v7124
      %v7166 = vmul.f32 %v6245, %v7127
      %v7167 = vmul.f32 %v6248, %v7130
      %v7168 = vmul.f32 %v6251, %v7133
      %v7169 = vmul.f32 %v6254, %v7136
      %7170 = vset.pattern.permute.xlu0 2
      %7171 = vperm.xlu0 %7170, %v5150
      %v7172 = vpop.permute.xlu0 %7171
      %7173 = vset.pattern.permute.xlu0 2
      %7174 = vperm.xlu0 %7173, %v5151
      %v7175 = vpop.permute.xlu0 %7174
      %7176 = vset.pattern.permute.xlu0 2
      %7177 = vperm.xlu0 %7176, %v5152
      %v7178 = vpop.permute.xlu0 %7177
      %7179 = vset.pattern.permute.xlu0 2
      %7180 = vperm.xlu0 %7179, %v5153
      %v7181 = vpop.permute.xlu0 %7180
      %7182 = vset.pattern.permute.xlu0 2
      %7183 = vperm.xlu0 %7182, %v5154
      %v7184 = vpop.permute.xlu0 %7183
      %7185 = vset.pattern.permute.xlu0 2
      %7186 = vperm.xlu0 %7185, %v5155
      %v7187 = vpop.permute.xlu0 %7186
      %7188 = vset.pattern.permute.xlu0 2
      %7189 = vperm.xlu0 %7188, %v5156
      %v7190 = vpop.permute.xlu0 %7189
      %7191 = vset.pattern.permute.xlu0 2
      %7192 = vperm.xlu0 %7191, %v5157
      %v7193 = vpop.permute.xlu0 %7192
      %7194 = vset.pattern.permute.xlu0 2
      %7195 = vperm.xlu0 %7194, %v5158
      %v7196 = vpop.permute.xlu0 %7195
      %7197 = vset.pattern.permute.xlu0 2
      %7198 = vperm.xlu0 %7197, %v5159
      %v7199 = vpop.permute.xlu0 %7198
      %7200 = vset.pattern.permute.xlu0 2
      %7201 = vperm.xlu0 %7200, %v5160
      %v7202 = vpop.permute.xlu0 %7201
      %7203 = vset.pattern.permute.xlu0 2
      %7204 = vperm.xlu0 %7203, %v5161
      %v7205 = vpop.permute.xlu0 %7204
      %7206 = vset.pattern.permute.xlu0 2
      %7207 = vperm.xlu0 %7206, %v5162
      %v7208 = vpop.permute.xlu0 %7207
      %7209 = vset.pattern.permute.xlu0 2
      %7210 = vperm.xlu0 %7209, %v5163
      %v7211 = vpop.permute.xlu0 %7210
      %7212 = vset.pattern.permute.xlu0 2
      %7213 = vperm.xlu0 %7212, %v5164
      %v7214 = vpop.permute.xlu0 %7213
      %7215 = vset.pattern.permute.xlu0 2
      %7216 = vperm.xlu0 %7215, %v5165
      %v7217 = vpop.permute.xlu0 %7216
      %7218 = vset.pattern.permute.xlu0 2
      %7219 = vperm.xlu0 %7218, %v5166
      %v7220 = vpop.permute.xlu0 %7219
      %7221 = vset.pattern.permute.xlu0 2
      %7222 = vperm.xlu0 %7221, %v5167
      %v7223 = vpop.permute.xlu0 %7222
      %7224 = vset.pattern.permute.xlu0 2
      %7225 = vperm.xlu0 %7224, %v5168
      %v7226 = vpop.permute.xlu0 %7225
      %7227 = vset.pattern.permute.xlu0 2
      %7228 = vperm.xlu0 %7227, %v5169
      %v7229 = vpop.permute.xlu0 %7228
      %7230 = vset.pattern.permute.xlu0 2
      %7231 = vperm.xlu0 %7230, %v5170
      %v7232 = vpop.permute.xlu0 %7231
      %7233 = vset.pattern.permute.xlu0 2
      %7234 = vperm.xlu0 %7233, %v5171
      %v7235 = vpop.permute.xlu0 %7234
      %7236 = vset.pattern.permute.xlu0 2
      %7237 = vperm.xlu0 %7236, %v5172
      %v7238 = vpop.permute.xlu0 %7237
      %7239 = vset.pattern.permute.xlu0 2
      %7240 = vperm.xlu0 %7239, %v5173
      %v7241 = vpop.permute.xlu0 %7240
      %7242 = vset.pattern.permute.xlu0 2
      %7243 = vperm.xlu0 %7242, %v5174
      %v7244 = vpop.permute.xlu0 %7243
      %7245 = vset.pattern.permute.xlu0 2
      %7246 = vperm.xlu0 %7245, %v5175
      %v7247 = vpop.permute.xlu0 %7246
      %7248 = vset.pattern.permute.xlu0 2
      %7249 = vperm.xlu0 %7248, %v5176
      %v7250 = vpop.permute.xlu0 %7249
      %7251 = vset.pattern.permute.xlu0 2
      %7252 = vperm.xlu0 %7251, %v5177
      %v7253 = vpop.permute.xlu0 %7252
      %7254 = vset.pattern.permute.xlu0 2
      %7255 = vperm.xlu0 %7254, %v5178
      %v7256 = vpop.permute.xlu0 %7255
      %7257 = vset.pattern.permute.xlu0 2
      %7258 = vperm.xlu0 %7257, %v5179
      %v7259 = vpop.permute.xlu0 %7258
      %7260 = vset.pattern.permute.xlu0 2
      %7261 = vperm.xlu0 %7260, %v5180
      %v7262 = vpop.permute.xlu0 %7261
      %7263 = vset.pattern.permute.xlu0 2
      %7264 = vperm.xlu0 %7263, %v5181
      %v7265 = vpop.permute.xlu0 %7264
      %vm7266 = vcmp.eq.s32.totalorder %v694, %v7172
      %vm7267 = vcmp.eq.s32.totalorder %v694, %v7175
      %vm7268 = vcmp.eq.s32.totalorder %v694, %v7178
      %vm7269 = vcmp.eq.s32.totalorder %v694, %v7181
      %vm7270 = vcmp.eq.s32.totalorder %v694, %v7184
      %vm7271 = vcmp.eq.s32.totalorder %v694, %v7187
      %vm7272 = vcmp.eq.s32.totalorder %v694, %v7190
      %vm7273 = vcmp.eq.s32.totalorder %v694, %v7193
      %vm7274 = vcmp.eq.s32.totalorder %v694, %v7196
      %vm7275 = vcmp.eq.s32.totalorder %v694, %v7199
      %vm7276 = vcmp.eq.s32.totalorder %v694, %v7202
      %vm7277 = vcmp.eq.s32.totalorder %v694, %v7205
      %vm7278 = vcmp.eq.s32.totalorder %v694, %v7208
      %vm7279 = vcmp.eq.s32.totalorder %v694, %v7211
      %vm7280 = vcmp.eq.s32.totalorder %v694, %v7214
      %vm7281 = vcmp.eq.s32.totalorder %v694, %v7217
      %vm7282 = vcmp.eq.s32.totalorder %v694, %v7220
      %vm7283 = vcmp.eq.s32.totalorder %v694, %v7223
      %vm7284 = vcmp.eq.s32.totalorder %v694, %v7226
      %vm7285 = vcmp.eq.s32.totalorder %v694, %v7229
      %vm7286 = vcmp.eq.s32.totalorder %v694, %v7232
      %vm7287 = vcmp.eq.s32.totalorder %v694, %v7235
      %vm7288 = vcmp.eq.s32.totalorder %v694, %v7238
      %vm7289 = vcmp.eq.s32.totalorder %v694, %v7241
      %vm7290 = vcmp.eq.s32.totalorder %v694, %v7244
      %vm7291 = vcmp.eq.s32.totalorder %v694, %v7247
      %vm7292 = vcmp.eq.s32.totalorder %v694, %v7250
      %vm7293 = vcmp.eq.s32.totalorder %v694, %v7253
      %vm7294 = vcmp.eq.s32.totalorder %v694, %v7256
      %vm7295 = vcmp.eq.s32.totalorder %v694, %v7259
      %vm7296 = vcmp.eq.s32.totalorder %v694, %v7262
      %vm7297 = vcmp.eq.s32.totalorder %v694, %v7265
      %7298 = vset.pattern.permute.xlu0 2
      %7299 = vperm.xlu0 %7298, %v5406
      %v7300 = vpop.permute.xlu0 %7299
      %7302 = vset.pattern.permute.xlu0 2
      %7303 = vperm.xlu0 %7302, %v5407
      %v7304 = vpop.permute.xlu0 %7303
      %7306 = vset.pattern.permute.xlu0 2
      %7307 = vperm.xlu0 %7306, %v5408
      %v7308 = vpop.permute.xlu0 %7307
      %7310 = vset.pattern.permute.xlu0 2
      %7311 = vperm.xlu0 %7310, %v5409
      %v7312 = vpop.permute.xlu0 %7311
      %7314 = vset.pattern.permute.xlu0 2
      %7315 = vperm.xlu0 %7314, %v5410
      %v7316 = vpop.permute.xlu0 %7315
      %7318 = vset.pattern.permute.xlu0 2
      %7319 = vperm.xlu0 %7318, %v5411
      %v7320 = vpop.permute.xlu0 %7319
      %7322 = vset.pattern.permute.xlu0 2
      %7323 = vperm.xlu0 %7322, %v5412
      %v7324 = vpop.permute.xlu0 %7323
      %7326 = vset.pattern.permute.xlu0 2
      %7327 = vperm.xlu0 %7326, %v5413
      %v7328 = vpop.permute.xlu0 %7327
      %7330 = vset.pattern.permute.xlu0 2
      %7331 = vperm.xlu0 %7330, %v5414
      %v7332 = vpop.permute.xlu0 %7331
      %7334 = vset.pattern.permute.xlu0 2
      %7335 = vperm.xlu0 %7334, %v5415
      %v7336 = vpop.permute.xlu0 %7335
      %7338 = vset.pattern.permute.xlu0 2
      %7339 = vperm.xlu0 %7338, %v5416
      %v7340 = vpop.permute.xlu0 %7339
      %7342 = vset.pattern.permute.xlu0 2
      %7343 = vperm.xlu0 %7342, %v5417
      %v7344 = vpop.permute.xlu0 %7343
      %7346 = vset.pattern.permute.xlu0 2
      %7347 = vperm.xlu0 %7346, %v5418
      %v7348 = vpop.permute.xlu0 %7347
      %7350 = vset.pattern.permute.xlu0 2
      %7351 = vperm.xlu0 %7350, %v5419
      %v7352 = vpop.permute.xlu0 %7351
      %7354 = vset.pattern.permute.xlu0 2
      %7355 = vperm.xlu0 %7354, %v5420
      %v7356 = vpop.permute.xlu0 %7355
      %7358 = vset.pattern.permute.xlu0 2
      %7359 = vperm.xlu0 %7358, %v5421
      %v7360 = vpop.permute.xlu0 %7359
      %7362 = vset.pattern.permute.xlu0 2
      %7363 = vperm.xlu0 %7362, %v5422
      %v7364 = vpop.permute.xlu0 %7363
      %7366 = vset.pattern.permute.xlu0 2
      %7367 = vperm.xlu0 %7366, %v5423
      %v7368 = vpop.permute.xlu0 %7367
      %7370 = vset.pattern.permute.xlu0 2
      %7371 = vperm.xlu0 %7370, %v5424
      %v7372 = vpop.permute.xlu0 %7371
      %7374 = vset.pattern.permute.xlu0 2
      %7375 = vperm.xlu0 %7374, %v5425
      %v7376 = vpop.permute.xlu0 %7375
      %7378 = vset.pattern.permute.xlu0 2
      %7379 = vperm.xlu0 %7378, %v5426
      %v7380 = vpop.permute.xlu0 %7379
      %7382 = vset.pattern.permute.xlu0 2
      %7383 = vperm.xlu0 %7382, %v5427
      %v7384 = vpop.permute.xlu0 %7383
      %7386 = vset.pattern.permute.xlu0 2
      %7387 = vperm.xlu0 %7386, %v5428
      %v7388 = vpop.permute.xlu0 %7387
      %7390 = vset.pattern.permute.xlu0 2
      %7391 = vperm.xlu0 %7390, %v5429
      %v7392 = vpop.permute.xlu0 %7391
      %7394 = vset.pattern.permute.xlu0 2
      %7395 = vperm.xlu0 %7394, %v5430
      %v7396 = vpop.permute.xlu0 %7395
      %7398 = vset.pattern.permute.xlu0 2
      %7399 = vperm.xlu0 %7398, %v5431
      %v7400 = vpop.permute.xlu0 %7399
      %7402 = vset.pattern.permute.xlu0 2
      %7403 = vperm.xlu0 %7402, %v5432
      %v7404 = vpop.permute.xlu0 %7403
      %7406 = vset.pattern.permute.xlu0 2
      %7407 = vperm.xlu0 %7406, %v5433
      %v7408 = vpop.permute.xlu0 %7407
      %7410 = vset.pattern.permute.xlu0 2
      %7411 = vperm.xlu0 %7410, %v5434
      %v7412 = vpop.permute.xlu0 %7411
      %7414 = vset.pattern.permute.xlu0 2
      %7415 = vperm.xlu0 %7414, %v5435
      %v7416 = vpop.permute.xlu0 %7415
      %7418 = vset.pattern.permute.xlu0 2
      %7419 = vperm.xlu0 %7418, %v5436
      %v7420 = vpop.permute.xlu0 %7419
      %7422 = vset.pattern.permute.xlu0 2
      %7423 = vperm.xlu0 %7422, %v5437
      %v7424 = vpop.permute.xlu0 %7423
      %v7426 = vsel %vm7266, %v7300, 0.0
      %v7427 = vsel %vm7267, %v7304, 0.0
      %v7428 = vsel %vm7268, %v7308, 0.0
      %v7429 = vsel %vm7269, %v7312, 0.0
      %v7430 = vsel %vm7270, %v7316, 0.0
      %v7431 = vsel %vm7271, %v7320, 0.0
      %v7432 = vsel %vm7272, %v7324, 0.0
      %v7433 = vsel %vm7273, %v7328, 0.0
      %v7434 = vsel %vm7274, %v7332, 0.0
      %v7435 = vsel %vm7275, %v7336, 0.0
      %v7436 = vsel %vm7276, %v7340, 0.0
      %v7437 = vsel %vm7277, %v7344, 0.0
      %v7438 = vsel %vm7278, %v7348, 0.0
      %v7439 = vsel %vm7279, %v7352, 0.0
      %v7440 = vsel %vm7280, %v7356, 0.0
      %v7441 = vsel %vm7281, %v7360, 0.0
      %v7442 = vsel %vm7282, %v7364, 0.0
      %v7443 = vsel %vm7283, %v7368, 0.0
      %v7444 = vsel %vm7284, %v7372, 0.0
      %v7445 = vsel %vm7285, %v7376, 0.0
      %v7446 = vsel %vm7286, %v7380, 0.0
      %v7447 = vsel %vm7287, %v7384, 0.0
      %v7448 = vsel %vm7288, %v7388, 0.0
      %v7449 = vsel %vm7289, %v7392, 0.0
      %v7450 = vsel %vm7290, %v7396, 0.0
      %v7451 = vsel %vm7291, %v7400, 0.0
      %v7452 = vsel %vm7292, %v7404, 0.0
      %v7453 = vsel %vm7293, %v7408, 0.0
      %v7454 = vsel %vm7294, %v7412, 0.0
      %v7455 = vsel %vm7295, %v7416, 0.0
      %v7456 = vsel %vm7296, %v7420, 0.0
      %v7457 = vsel %vm7297, %v7424, 0.0
      %7458 = vset.pattern.permute.xlu0 2
      %7459 = vperm.xlu0 %7458, %v5215
      %v7460 = vpop.permute.xlu0 %7459
      %7461 = vset.pattern.permute.xlu0 2
      %7462 = vperm.xlu0 %7461, %v5217
      %v7463 = vpop.permute.xlu0 %7462
      %7464 = vset.pattern.permute.xlu0 2
      %7465 = vperm.xlu0 %7464, %v5219
      %v7466 = vpop.permute.xlu0 %7465
      %7467 = vset.pattern.permute.xlu0 2
      %7468 = vperm.xlu0 %7467, %v5221
      %v7469 = vpop.permute.xlu0 %7468
      %7470 = vset.pattern.permute.xlu0 2
      %7471 = vperm.xlu0 %7470, %v5223
      %v7472 = vpop.permute.xlu0 %7471
      %7473 = vset.pattern.permute.xlu0 2
      %7474 = vperm.xlu0 %7473, %v5225
      %v7475 = vpop.permute.xlu0 %7474
      %7476 = vset.pattern.permute.xlu0 2
      %7477 = vperm.xlu0 %7476, %v5227
      %v7478 = vpop.permute.xlu0 %7477
      %7479 = vset.pattern.permute.xlu0 2
      %7480 = vperm.xlu0 %7479, %v5229
      %v7481 = vpop.permute.xlu0 %7480
      %7482 = vset.pattern.permute.xlu0 2
      %7483 = vperm.xlu0 %7482, %v5231
      %v7484 = vpop.permute.xlu0 %7483
      %7485 = vset.pattern.permute.xlu0 2
      %7486 = vperm.xlu0 %7485, %v5233
      %v7487 = vpop.permute.xlu0 %7486
      %7488 = vset.pattern.permute.xlu0 2
      %7489 = vperm.xlu0 %7488, %v5235
      %v7490 = vpop.permute.xlu0 %7489
      %7491 = vset.pattern.permute.xlu0 2
      %7492 = vperm.xlu0 %7491, %v5237
      %v7493 = vpop.permute.xlu0 %7492
      %7494 = vset.pattern.permute.xlu0 2
      %7495 = vperm.xlu0 %7494, %v5239
      %v7496 = vpop.permute.xlu0 %7495
      %7497 = vset.pattern.permute.xlu0 2
      %7498 = vperm.xlu0 %7497, %v5241
      %v7499 = vpop.permute.xlu0 %7498
      %7500 = vset.pattern.permute.xlu0 2
      %7501 = vperm.xlu0 %7500, %v5243
      %v7502 = vpop.permute.xlu0 %7501
      %7503 = vset.pattern.permute.xlu0 2
      %7504 = vperm.xlu0 %7503, %v5245
      %v7505 = vpop.permute.xlu0 %7504
      %7506 = vset.pattern.permute.xlu0 2
      %7507 = vperm.xlu0 %7506, %v5247
      %v7508 = vpop.permute.xlu0 %7507
      %7509 = vset.pattern.permute.xlu0 2
      %7510 = vperm.xlu0 %7509, %v5249
      %v7511 = vpop.permute.xlu0 %7510
      %7512 = vset.pattern.permute.xlu0 2
      %7513 = vperm.xlu0 %7512, %v5251
      %v7514 = vpop.permute.xlu0 %7513
      %7515 = vset.pattern.permute.xlu0 2
      %7516 = vperm.xlu0 %7515, %v5253
      %v7517 = vpop.permute.xlu0 %7516
      %7518 = vset.pattern.permute.xlu0 2
      %7519 = vperm.xlu0 %7518, %v5255
      %v7520 = vpop.permute.xlu0 %7519
      %7521 = vset.pattern.permute.xlu0 2
      %7522 = vperm.xlu0 %7521, %v5257
      %v7523 = vpop.permute.xlu0 %7522
      %7524 = vset.pattern.permute.xlu0 2
      %7525 = vperm.xlu0 %7524, %v5259
      %v7526 = vpop.permute.xlu0 %7525
      %7527 = vset.pattern.permute.xlu0 2
      %7528 = vperm.xlu0 %7527, %v5261
      %v7529 = vpop.permute.xlu0 %7528
      %7530 = vset.pattern.permute.xlu0 2
      %7531 = vperm.xlu0 %7530, %v5263
      %v7532 = vpop.permute.xlu0 %7531
      %7533 = vset.pattern.permute.xlu0 2
      %7534 = vperm.xlu0 %7533, %v5265
      %v7535 = vpop.permute.xlu0 %7534
      %7536 = vset.pattern.permute.xlu0 2
      %7537 = vperm.xlu0 %7536, %v5267
      %v7538 = vpop.permute.xlu0 %7537
      %7539 = vset.pattern.permute.xlu0 2
      %7540 = vperm.xlu0 %7539, %v5269
      %v7541 = vpop.permute.xlu0 %7540
      %7542 = vset.pattern.permute.xlu0 2
      %7543 = vperm.xlu0 %7542, %v5271
      %v7544 = vpop.permute.xlu0 %7543
      %7545 = vset.pattern.permute.xlu0 2
      %7546 = vperm.xlu0 %7545, %v5273
      %v7547 = vpop.permute.xlu0 %7546
      %7548 = vset.pattern.permute.xlu0 2
      %7549 = vperm.xlu0 %7548, %v5275
      %v7550 = vpop.permute.xlu0 %7549
      %7551 = vset.pattern.permute.xlu0 2
      %7552 = vperm.xlu0 %7551, %v5277
      %v7553 = vpop.permute.xlu0 %7552
      %vm7554 = vcmp.eq.s32.totalorder %v694, %v7460
      %vm7555 = vcmp.eq.s32.totalorder %v694, %v7463
      %vm7556 = vcmp.eq.s32.totalorder %v694, %v7466
      %vm7557 = vcmp.eq.s32.totalorder %v694, %v7469
      %vm7558 = vcmp.eq.s32.totalorder %v694, %v7472
      %vm7559 = vcmp.eq.s32.totalorder %v694, %v7475
      %vm7560 = vcmp.eq.s32.totalorder %v694, %v7478
      %vm7561 = vcmp.eq.s32.totalorder %v694, %v7481
      %vm7562 = vcmp.eq.s32.totalorder %v694, %v7484
      %vm7563 = vcmp.eq.s32.totalorder %v694, %v7487
      %vm7564 = vcmp.eq.s32.totalorder %v694, %v7490
      %vm7565 = vcmp.eq.s32.totalorder %v694, %v7493
      %vm7566 = vcmp.eq.s32.totalorder %v694, %v7496
      %vm7567 = vcmp.eq.s32.totalorder %v694, %v7499
      %vm7568 = vcmp.eq.s32.totalorder %v694, %v7502
      %vm7569 = vcmp.eq.s32.totalorder %v694, %v7505
      %vm7570 = vcmp.eq.s32.totalorder %v694, %v7508
      %vm7571 = vcmp.eq.s32.totalorder %v694, %v7511
      %vm7572 = vcmp.eq.s32.totalorder %v694, %v7514
      %vm7573 = vcmp.eq.s32.totalorder %v694, %v7517
      %vm7574 = vcmp.eq.s32.totalorder %v694, %v7520
      %vm7575 = vcmp.eq.s32.totalorder %v694, %v7523
      %vm7576 = vcmp.eq.s32.totalorder %v694, %v7526
      %vm7577 = vcmp.eq.s32.totalorder %v694, %v7529
      %vm7578 = vcmp.eq.s32.totalorder %v694, %v7532
      %vm7579 = vcmp.eq.s32.totalorder %v694, %v7535
      %vm7580 = vcmp.eq.s32.totalorder %v694, %v7538
      %vm7581 = vcmp.eq.s32.totalorder %v694, %v7541
      %vm7582 = vcmp.eq.s32.totalorder %v694, %v7544
      %vm7583 = vcmp.eq.s32.totalorder %v694, %v7547
      %vm7584 = vcmp.eq.s32.totalorder %v694, %v7550
      %vm7585 = vcmp.eq.s32.totalorder %v694, %v7553
      %7586 = vset.pattern.permute.xlu0 2
      %7587 = vperm.xlu0 %7586, %v5118
      %v7588 = vpop.permute.xlu0 %7587
      %7590 = vset.pattern.permute.xlu0 2
      %7591 = vperm.xlu0 %7590, %v5119
      %v7592 = vpop.permute.xlu0 %7591
      %7594 = vset.pattern.permute.xlu0 2
      %7595 = vperm.xlu0 %7594, %v5120
      %v7596 = vpop.permute.xlu0 %7595
      %7598 = vset.pattern.permute.xlu0 2
      %7599 = vperm.xlu0 %7598, %v5121
      %v7600 = vpop.permute.xlu0 %7599
      %7602 = vset.pattern.permute.xlu0 2
      %7603 = vperm.xlu0 %7602, %v5122
      %v7604 = vpop.permute.xlu0 %7603
      %7606 = vset.pattern.permute.xlu0 2
      %7607 = vperm.xlu0 %7606, %v5123
      %v7608 = vpop.permute.xlu0 %7607
      %7610 = vset.pattern.permute.xlu0 2
      %7611 = vperm.xlu0 %7610, %v5124
      %v7612 = vpop.permute.xlu0 %7611
      %7614 = vset.pattern.permute.xlu0 2
      %7615 = vperm.xlu0 %7614, %v5125
      %v7616 = vpop.permute.xlu0 %7615
      %7618 = vset.pattern.permute.xlu0 2
      %7619 = vperm.xlu0 %7618, %v5126
      %v7620 = vpop.permute.xlu0 %7619
      %7622 = vset.pattern.permute.xlu0 2
      %7623 = vperm.xlu0 %7622, %v5127
      %v7624 = vpop.permute.xlu0 %7623
      %7626 = vset.pattern.permute.xlu0 2
      %7627 = vperm.xlu0 %7626, %v5128
      %v7628 = vpop.permute.xlu0 %7627
      %7630 = vset.pattern.permute.xlu0 2
      %7631 = vperm.xlu0 %7630, %v5129
      %v7632 = vpop.permute.xlu0 %7631
      %7634 = vset.pattern.permute.xlu0 2
      %7635 = vperm.xlu0 %7634, %v5130
      %v7636 = vpop.permute.xlu0 %7635
      %7638 = vset.pattern.permute.xlu0 2
      %7639 = vperm.xlu0 %7638, %v5131
      %v7640 = vpop.permute.xlu0 %7639
      %7642 = vset.pattern.permute.xlu0 2
      %7643 = vperm.xlu0 %7642, %v5132
      %v7644 = vpop.permute.xlu0 %7643
      %7646 = vset.pattern.permute.xlu0 2
      %7647 = vperm.xlu0 %7646, %v5133
      %v7648 = vpop.permute.xlu0 %7647
      %7650 = vset.pattern.permute.xlu0 2
      %7651 = vperm.xlu0 %7650, %v5134
      %v7652 = vpop.permute.xlu0 %7651
      %7654 = vset.pattern.permute.xlu0 2
      %7655 = vperm.xlu0 %7654, %v5135
      %v7656 = vpop.permute.xlu0 %7655
      %7658 = vset.pattern.permute.xlu0 2
      %7659 = vperm.xlu0 %7658, %v5136
      %v7660 = vpop.permute.xlu0 %7659
      %7662 = vset.pattern.permute.xlu0 2
      %7663 = vperm.xlu0 %7662, %v5137
      %v7664 = vpop.permute.xlu0 %7663
      %7666 = vset.pattern.permute.xlu0 2
      %7667 = vperm.xlu0 %7666, %v5138
      %v7668 = vpop.permute.xlu0 %7667
      %7670 = vset.pattern.permute.xlu0 2
      %7671 = vperm.xlu0 %7670, %v5139
      %v7672 = vpop.permute.xlu0 %7671
      %7674 = vset.pattern.permute.xlu0 2
      %7675 = vperm.xlu0 %7674, %v5140
      %v7676 = vpop.permute.xlu0 %7675
      %7678 = vset.pattern.permute.xlu0 2
      %7679 = vperm.xlu0 %7678, %v5141
      %v7680 = vpop.permute.xlu0 %7679
      %7682 = vset.pattern.permute.xlu0 2
      %7683 = vperm.xlu0 %7682, %v5142
      %v7684 = vpop.permute.xlu0 %7683
      %7686 = vset.pattern.permute.xlu0 2
      %7687 = vperm.xlu0 %7686, %v5143
      %v7688 = vpop.permute.xlu0 %7687
      %7690 = vset.pattern.permute.xlu0 2
      %7691 = vperm.xlu0 %7690, %v5144
      %v7692 = vpop.permute.xlu0 %7691
      %7694 = vset.pattern.permute.xlu0 2
      %7695 = vperm.xlu0 %7694, %v5145
      %v7696 = vpop.permute.xlu0 %7695
      %7698 = vset.pattern.permute.xlu0 2
      %7699 = vperm.xlu0 %7698, %v5146
      %v7700 = vpop.permute.xlu0 %7699
      %7702 = vset.pattern.permute.xlu0 2
      %7703 = vperm.xlu0 %7702, %v5147
      %v7704 = vpop.permute.xlu0 %7703
      %7706 = vset.pattern.permute.xlu0 2
      %7707 = vperm.xlu0 %7706, %v5148
      %v7708 = vpop.permute.xlu0 %7707
      %7710 = vset.pattern.permute.xlu0 2
      %7711 = vperm.xlu0 %7710, %v5149
      %v7712 = vpop.permute.xlu0 %7711
      %v7714 = vsel %vm7554, %v7588, 0.0
      %v7715 = vsel %vm7555, %v7592, 0.0
      %v7716 = vsel %vm7556, %v7596, 0.0
      %v7717 = vsel %vm7557, %v7600, 0.0
      %v7718 = vsel %vm7558, %v7604, 0.0
      %v7719 = vsel %vm7559, %v7608, 0.0
      %v7720 = vsel %vm7560, %v7612, 0.0
      %v7721 = vsel %vm7561, %v7616, 0.0
      %v7722 = vsel %vm7562, %v7620, 0.0
      %v7723 = vsel %vm7563, %v7624, 0.0
      %v7724 = vsel %vm7564, %v7628, 0.0
      %v7725 = vsel %vm7565, %v7632, 0.0
      %v7726 = vsel %vm7566, %v7636, 0.0
      %v7727 = vsel %vm7567, %v7640, 0.0
      %v7728 = vsel %vm7568, %v7644, 0.0
      %v7729 = vsel %vm7569, %v7648, 0.0
      %v7730 = vsel %vm7570, %v7652, 0.0
      %v7731 = vsel %vm7571, %v7656, 0.0
      %v7732 = vsel %vm7572, %v7660, 0.0
      %v7733 = vsel %vm7573, %v7664, 0.0
      %v7734 = vsel %vm7574, %v7668, 0.0
      %v7735 = vsel %vm7575, %v7672, 0.0
      %v7736 = vsel %vm7576, %v7676, 0.0
      %v7737 = vsel %vm7577, %v7680, 0.0
      %v7738 = vsel %vm7578, %v7684, 0.0
      %v7739 = vsel %vm7579, %v7688, 0.0
      %v7740 = vsel %vm7580, %v7692, 0.0
      %v7741 = vsel %vm7581, %v7696, 0.0
      %v7742 = vsel %vm7582, %v7700, 0.0
      %v7743 = vsel %vm7583, %v7704, 0.0
      %v7744 = vsel %vm7584, %v7708, 0.0
      %v7745 = vsel %vm7585, %v7712, 0.0
      %v7746 = vadd.f32 %v7426, %v7714
      %v7747 = vadd.f32 %v7427, %v7715
      %v7748 = vadd.f32 %v7428, %v7716
      %v7749 = vadd.f32 %v7429, %v7717
      %v7750 = vadd.f32 %v7430, %v7718
      %v7751 = vadd.f32 %v7431, %v7719
      %v7752 = vadd.f32 %v7432, %v7720
      %v7753 = vadd.f32 %v7433, %v7721
      %v7754 = vadd.f32 %v7434, %v7722
      %v7755 = vadd.f32 %v7435, %v7723
      %v7756 = vadd.f32 %v7436, %v7724
      %v7757 = vadd.f32 %v7437, %v7725
      %v7758 = vadd.f32 %v7438, %v7726
      %v7759 = vadd.f32 %v7439, %v7727
      %v7760 = vadd.f32 %v7440, %v7728
      %v7761 = vadd.f32 %v7441, %v7729
      %v7762 = vadd.f32 %v7442, %v7730
      %v7763 = vadd.f32 %v7443, %v7731
      %v7764 = vadd.f32 %v7444, %v7732
      %v7765 = vadd.f32 %v7445, %v7733
      %v7766 = vadd.f32 %v7446, %v7734
      %v7767 = vadd.f32 %v7447, %v7735
      %v7768 = vadd.f32 %v7448, %v7736
      %v7769 = vadd.f32 %v7449, %v7737
      %v7770 = vadd.f32 %v7450, %v7738
      %v7771 = vadd.f32 %v7451, %v7739
      %v7772 = vadd.f32 %v7452, %v7740
      %v7773 = vadd.f32 %v7453, %v7741
      %v7774 = vadd.f32 %v7454, %v7742
      %v7775 = vadd.f32 %v7455, %v7743
      %v7776 = vadd.f32 %v7456, %v7744
      %v7777 = vadd.f32 %v7457, %v7745
      %v7778 = vld [vmem:[%s7] sm:$0xff]
      %v7779 = vld [vmem:[%s7 + $0x8] sm:$0xff]
      %v7780 = vld [vmem:[%s7 + $0x10] sm:$0xff]
      %v7781 = vld [vmem:[%s7 + $0x18] sm:$0xff]
      %v7782 = vld [vmem:[%s7 + $0x20] sm:$0xff]
      %v7783 = vld [vmem:[%s7 + $0x28] sm:$0xff]
      %v7784 = vld [vmem:[%s7 + $0x30] sm:$0xff]
      %v7785 = vld [vmem:[%s7 + $0x38] sm:$0xff]
      %v7786 = vld [vmem:[%s7 + $0x40] sm:$0xff]
      %v7787 = vld [vmem:[%s7 + $0x48] sm:$0xff]
      %v7788 = vld [vmem:[%s7 + $0x50] sm:$0xff]
      %v7789 = vld [vmem:[%s7 + $0x58] sm:$0xff]
      %v7790 = vld [vmem:[%s7 + $0x60] sm:$0xff]
      %v7791 = vld [vmem:[%s7 + $0x68] sm:$0xff]
      %v7792 = vld [vmem:[%s7 + $0x70] sm:$0xff]
      %v7793 = vld [vmem:[%s7 + $0x78] sm:$0xff]
      %7794 = vmatpush.msra.mxu0 %v7793
      %7795 = vmatpush.msra.mxu0 %v7792
      %7796 = vmatpush.msra.mxu0 %v7791
      %7797 = vmatpush.msra.mxu0 %v7790
      %7798 = vmatpush.msra.mxu0 %v7789
      %7799 = vmatpush.msra.mxu0 %v7788
      %7800 = vmatpush.msra.mxu0 %v7787
      %7801 = vmatpush.msra.mxu0 %v7786
      %7802 = vmatpush.msra.mxu0 %v7785
      %7803 = vmatpush.msra.mxu0 %v7784
      %7804 = vmatpush.msra.mxu0 %v7783
      %7805 = vmatpush.msra.mxu0 %v7782
      %7806 = vmatpush.msra.mxu0 %v7781
      %7807 = vmatpush.msra.mxu0 %v7780
      %7808 = vmatpush.msra.mxu0 %v7779
      %7809 = vmatpush.msra.mxu0 %v7778
      %7810 = vmatmul.f32.gmra.mxu0 %v7746
      %v7811 = vpop.f32.mrf.mxu0
      %v7812 = vadd.f32 0.0, %v7811
      %7813 = vmatmul.f32.gmra.mxu0 %v7747
      %v7814 = vpop.f32.mrf.mxu0
      %v7815 = vadd.f32 0.0, %v7814
      %7816 = vmatmul.f32.gmra.mxu0 %v7748
      %v7817 = vpop.f32.mrf.mxu0
      %v7818 = vadd.f32 0.0, %v7817
      %7819 = vmatmul.f32.gmra.mxu0 %v7749
      %v7820 = vpop.f32.mrf.mxu0
      %v7821 = vadd.f32 0.0, %v7820
      %7822 = vmatmul.f32.gmra.mxu0 %v7750
      %v7823 = vpop.f32.mrf.mxu0
      %v7824 = vadd.f32 0.0, %v7823
      %7825 = vmatmul.f32.gmra.mxu0 %v7751
      %v7826 = vpop.f32.mrf.mxu0
      %v7827 = vadd.f32 0.0, %v7826
      %7828 = vmatmul.f32.gmra.mxu0 %v7752
      %v7829 = vpop.f32.mrf.mxu0
      %v7830 = vadd.f32 0.0, %v7829
      %7831 = vmatmul.f32.gmra.mxu0 %v7753
      %v7832 = vpop.f32.mrf.mxu0
      %v7833 = vadd.f32 0.0, %v7832
      %7834 = vmatmul.f32.gmra.mxu0 %v7754
      %v7835 = vpop.f32.mrf.mxu0
      %v7836 = vadd.f32 0.0, %v7835
      %7837 = vmatmul.f32.gmra.mxu0 %v7755
      %v7838 = vpop.f32.mrf.mxu0
      %v7839 = vadd.f32 0.0, %v7838
      %7840 = vmatmul.f32.gmra.mxu0 %v7756
      %v7841 = vpop.f32.mrf.mxu0
      %v7842 = vadd.f32 0.0, %v7841
      %7843 = vmatmul.f32.gmra.mxu0 %v7757
      %v7844 = vpop.f32.mrf.mxu0
      %v7845 = vadd.f32 0.0, %v7844
      %7846 = vmatmul.f32.gmra.mxu0 %v7758
      %v7847 = vpop.f32.mrf.mxu0
      %v7848 = vadd.f32 0.0, %v7847
      %7849 = vmatmul.f32.gmra.mxu0 %v7759
      %v7850 = vpop.f32.mrf.mxu0
      %v7851 = vadd.f32 0.0, %v7850
      %7852 = vmatmul.f32.gmra.mxu0 %v7760
      %v7853 = vpop.f32.mrf.mxu0
      %v7854 = vadd.f32 0.0, %v7853
      %7855 = vmatmul.f32.gmra.mxu0 %v7761
      %v7856 = vpop.f32.mrf.mxu0
      %v7857 = vadd.f32 0.0, %v7856
      %7858 = vmatmul.f32.gmra.mxu0 %v7762
      %v7859 = vpop.f32.mrf.mxu0
      %v7860 = vadd.f32 0.0, %v7859
      %7861 = vmatmul.f32.gmra.mxu0 %v7763
      %v7862 = vpop.f32.mrf.mxu0
      %v7863 = vadd.f32 0.0, %v7862
      %7864 = vmatmul.f32.gmra.mxu0 %v7764
      %v7865 = vpop.f32.mrf.mxu0
      %v7866 = vadd.f32 0.0, %v7865
      %7867 = vmatmul.f32.gmra.mxu0 %v7765
      %v7868 = vpop.f32.mrf.mxu0
      %v7869 = vadd.f32 0.0, %v7868
      %7870 = vmatmul.f32.gmra.mxu0 %v7766
      %v7871 = vpop.f32.mrf.mxu0
      %v7872 = vadd.f32 0.0, %v7871
      %7873 = vmatmul.f32.gmra.mxu0 %v7767
      %v7874 = vpop.f32.mrf.mxu0
      %v7875 = vadd.f32 0.0, %v7874
      %7876 = vmatmul.f32.gmra.mxu0 %v7768
      %v7877 = vpop.f32.mrf.mxu0
      %v7878 = vadd.f32 0.0, %v7877
      %7879 = vmatmul.f32.gmra.mxu0 %v7769
      %v7880 = vpop.f32.mrf.mxu0
      %v7881 = vadd.f32 0.0, %v7880
      %7882 = vmatmul.f32.gmra.mxu0 %v7770
      %v7883 = vpop.f32.mrf.mxu0
      %v7884 = vadd.f32 0.0, %v7883
      %7885 = vmatmul.f32.gmra.mxu0 %v7771
      %v7886 = vpop.f32.mrf.mxu0
      %v7887 = vadd.f32 0.0, %v7886
      %7888 = vmatmul.f32.gmra.mxu0 %v7772
      %v7889 = vpop.f32.mrf.mxu0
      %v7890 = vadd.f32 0.0, %v7889
      %7891 = vmatmul.f32.gmra.mxu0 %v7773
      %v7892 = vpop.f32.mrf.mxu0
      %v7893 = vadd.f32 0.0, %v7892
      %7894 = vmatmul.f32.gmra.mxu0 %v7774
      %v7895 = vpop.f32.mrf.mxu0
      %v7896 = vadd.f32 0.0, %v7895
      %7897 = vmatmul.f32.gmra.mxu0 %v7775
      %v7898 = vpop.f32.mrf.mxu0
      %v7899 = vadd.f32 0.0, %v7898
      %7900 = vmatmul.f32.gmra.mxu0 %v7776
      %v7901 = vpop.f32.mrf.mxu0
      %v7902 = vadd.f32 0.0, %v7901
      %7903 = vmatmul.f32.gmra.mxu0 %v7777
      %v7904 = vpop.f32.mrf.mxu0
      %v7905 = vadd.f32 0.0, %v7904
      %7906 = vdwg.mxu0
      %v7907 = vmul.f32 %v7812, %v1815
      %v7908 = vmul.f32 %v7815, %v1816
      %v7909 = vmul.f32 %v7818, %v1817
      %v7910 = vmul.f32 %v7821, %v1818
      %v7911 = vmul.f32 %v7824, %v1819
      %v7912 = vmul.f32 %v7827, %v1820
      %v7913 = vmul.f32 %v7830, %v1821
      %v7914 = vmul.f32 %v7833, %v1822
      %v7915 = vmul.f32 %v7836, %v1823
      %v7916 = vmul.f32 %v7839, %v1824
      %v7917 = vmul.f32 %v7842, %v1825
      %v7918 = vmul.f32 %v7845, %v1826
      %v7919 = vmul.f32 %v7848, %v1827
      %v7920 = vmul.f32 %v7851, %v1828
      %v7921 = vmul.f32 %v7854, %v1829
      %v7922 = vmul.f32 %v7857, %v1830
      %v7923 = vmul.f32 %v7860, %v1831
      %v7924 = vmul.f32 %v7863, %v1832
      %v7925 = vmul.f32 %v7866, %v1833
      %v7926 = vmul.f32 %v7869, %v1834
      %v7927 = vmul.f32 %v7872, %v1835
      %v7928 = vmul.f32 %v7875, %v1836
      %v7929 = vmul.f32 %v7878, %v1837
      %v7930 = vmul.f32 %v7881, %v1838
      %v7931 = vmul.f32 %v7884, %v1839
      %v7932 = vmul.f32 %v7887, %v1840
      %v7933 = vmul.f32 %v7890, %v1841
      %v7934 = vmul.f32 %v7893, %v1842
      %v7935 = vmul.f32 %v7896, %v1843
      %v7936 = vmul.f32 %v7899, %v1844
      %v7937 = vmul.f32 %v7902, %v1845
      %v7938 = vmul.f32 %v7905, %v1846
      %7939 = vmatpush.msra.mxu0 %v1862
      %7940 = vmatpush.msra.mxu0 %v1861
      %7941 = vmatpush.msra.mxu0 %v1860
      %7942 = vmatpush.msra.mxu0 %v1859
      %7943 = vmatpush.msra.mxu0 %v1858
      %7944 = vmatpush.msra.mxu0 %v1857
      %7945 = vmatpush.msra.mxu0 %v1856
      %7946 = vmatpush.msra.mxu0 %v1855
      %7947 = vmatpush.msra.mxu0 %v1854
      %7948 = vmatpush.msra.mxu0 %v1853
      %7949 = vmatpush.msra.mxu0 %v1852
      %7950 = vmatpush.msra.mxu0 %v1851
      %7951 = vmatpush.msra.mxu0 %v1850
      %7952 = vmatpush.msra.mxu0 %v1849
      %7953 = vmatpush.msra.mxu0 %v1848
      %7954 = vmatpush.msra.mxu0 %v1847
      %7955 = vmatmul.f32.gmra.mxu0 %v7907
      %v7956 = vpop.f32.mrf.mxu0
      %v7957 = vadd.f32 0.0, %v7956
      %7958 = vmatmul.f32.gmra.mxu0 %v7908
      %v7959 = vpop.f32.mrf.mxu0
      %v7960 = vadd.f32 0.0, %v7959
      %7961 = vmatmul.f32.gmra.mxu0 %v7909
      %v7962 = vpop.f32.mrf.mxu0
      %v7963 = vadd.f32 0.0, %v7962
      %7964 = vmatmul.f32.gmra.mxu0 %v7910
      %v7965 = vpop.f32.mrf.mxu0
      %v7966 = vadd.f32 0.0, %v7965
      %7967 = vmatmul.f32.gmra.mxu0 %v7911
      %v7968 = vpop.f32.mrf.mxu0
      %v7969 = vadd.f32 0.0, %v7968
      %7970 = vmatmul.f32.gmra.mxu0 %v7912
      %v7971 = vpop.f32.mrf.mxu0
      %v7972 = vadd.f32 0.0, %v7971
      %7973 = vmatmul.f32.gmra.mxu0 %v7913
      %v7974 = vpop.f32.mrf.mxu0
      %v7975 = vadd.f32 0.0, %v7974
      %7976 = vmatmul.f32.gmra.mxu0 %v7914
      %v7977 = vpop.f32.mrf.mxu0
      %v7978 = vadd.f32 0.0, %v7977
      %7979 = vmatmul.f32.gmra.mxu0 %v7915
      %v7980 = vpop.f32.mrf.mxu0
      %v7981 = vadd.f32 0.0, %v7980
      %7982 = vmatmul.f32.gmra.mxu0 %v7916
      %v7983 = vpop.f32.mrf.mxu0
      %v7984 = vadd.f32 0.0, %v7983
      %7985 = vmatmul.f32.gmra.mxu0 %v7917
      %v7986 = vpop.f32.mrf.mxu0
      %v7987 = vadd.f32 0.0, %v7986
      %7988 = vmatmul.f32.gmra.mxu0 %v7918
      %v7989 = vpop.f32.mrf.mxu0
      %v7990 = vadd.f32 0.0, %v7989
      %7991 = vmatmul.f32.gmra.mxu0 %v7919
      %v7992 = vpop.f32.mrf.mxu0
      %v7993 = vadd.f32 0.0, %v7992
      %7994 = vmatmul.f32.gmra.mxu0 %v7920
      %v7995 = vpop.f32.mrf.mxu0
      %v7996 = vadd.f32 0.0, %v7995
      %7997 = vmatmul.f32.gmra.mxu0 %v7921
      %v7998 = vpop.f32.mrf.mxu0
      %v7999 = vadd.f32 0.0, %v7998
      %8000 = vmatmul.f32.gmra.mxu0 %v7922
      %v8001 = vpop.f32.mrf.mxu0
      %v8002 = vadd.f32 0.0, %v8001
      %8003 = vmatmul.f32.gmra.mxu0 %v7923
      %v8004 = vpop.f32.mrf.mxu0
      %v8005 = vadd.f32 0.0, %v8004
      %8006 = vmatmul.f32.gmra.mxu0 %v7924
      %v8007 = vpop.f32.mrf.mxu0
      %v8008 = vadd.f32 0.0, %v8007
      %8009 = vmatmul.f32.gmra.mxu0 %v7925
      %v8010 = vpop.f32.mrf.mxu0
      %v8011 = vadd.f32 0.0, %v8010
      %8012 = vmatmul.f32.gmra.mxu0 %v7926
      %v8013 = vpop.f32.mrf.mxu0
      %v8014 = vadd.f32 0.0, %v8013
      %8015 = vmatmul.f32.gmra.mxu0 %v7927
      %v8016 = vpop.f32.mrf.mxu0
      %v8017 = vadd.f32 0.0, %v8016
      %8018 = vmatmul.f32.gmra.mxu0 %v7928
      %v8019 = vpop.f32.mrf.mxu0
      %v8020 = vadd.f32 0.0, %v8019
      %8021 = vmatmul.f32.gmra.mxu0 %v7929
      %v8022 = vpop.f32.mrf.mxu0
      %v8023 = vadd.f32 0.0, %v8022
      %8024 = vmatmul.f32.gmra.mxu0 %v7930
      %v8025 = vpop.f32.mrf.mxu0
      %v8026 = vadd.f32 0.0, %v8025
      %8027 = vmatmul.f32.gmra.mxu0 %v7931
      %v8028 = vpop.f32.mrf.mxu0
      %v8029 = vadd.f32 0.0, %v8028
      %8030 = vmatmul.f32.gmra.mxu0 %v7932
      %v8031 = vpop.f32.mrf.mxu0
      %v8032 = vadd.f32 0.0, %v8031
      %8033 = vmatmul.f32.gmra.mxu0 %v7933
      %v8034 = vpop.f32.mrf.mxu0
      %v8035 = vadd.f32 0.0, %v8034
      %8036 = vmatmul.f32.gmra.mxu0 %v7934
      %v8037 = vpop.f32.mrf.mxu0
      %v8038 = vadd.f32 0.0, %v8037
      %8039 = vmatmul.f32.gmra.mxu0 %v7935
      %v8040 = vpop.f32.mrf.mxu0
      %v8041 = vadd.f32 0.0, %v8040
      %8042 = vmatmul.f32.gmra.mxu0 %v7936
      %v8043 = vpop.f32.mrf.mxu0
      %v8044 = vadd.f32 0.0, %v8043
      %8045 = vmatmul.f32.gmra.mxu0 %v7937
      %v8046 = vpop.f32.mrf.mxu0
      %v8047 = vadd.f32 0.0, %v8046
      %8048 = vmatmul.f32.gmra.mxu0 %v7938
      %v8049 = vpop.f32.mrf.mxu0
      %v8050 = vadd.f32 0.0, %v8049
      %8051 = vdwg.mxu0
      %v8052 = vmul.f32 %v7138, %v7957
      %v8053 = vmul.f32 %v7139, %v7960
      %v8054 = vmul.f32 %v7140, %v7963
      %v8055 = vmul.f32 %v7141, %v7966
      %v8056 = vmul.f32 %v7142, %v7969
      %v8057 = vmul.f32 %v7143, %v7972
      %v8058 = vmul.f32 %v7144, %v7975
      %v8059 = vmul.f32 %v7145, %v7978
      %v8060 = vmul.f32 %v7146, %v7981
      %v8061 = vmul.f32 %v7147, %v7984
      %v8062 = vmul.f32 %v7148, %v7987
      %v8063 = vmul.f32 %v7149, %v7990
      %v8064 = vmul.f32 %v7150, %v7993
      %v8065 = vmul.f32 %v7151, %v7996
      %v8066 = vmul.f32 %v7152, %v7999
      %v8067 = vmul.f32 %v7153, %v8002
      %v8068 = vmul.f32 %v7154, %v8005
      %v8069 = vmul.f32 %v7155, %v8008
      %v8070 = vmul.f32 %v7156, %v8011
      %v8071 = vmul.f32 %v7157, %v8014
      %v8072 = vmul.f32 %v7158, %v8017
      %v8073 = vmul.f32 %v7159, %v8020
      %v8074 = vmul.f32 %v7160, %v8023
      %v8075 = vmul.f32 %v7161, %v8026
      %v8076 = vmul.f32 %v7162, %v8029
      %v8077 = vmul.f32 %v7163, %v8032
      %v8078 = vmul.f32 %v7164, %v8035
      %v8079 = vmul.f32 %v7165, %v8038
      %v8080 = vmul.f32 %v7166, %v8041
      %v8081 = vmul.f32 %v7167, %v8044
      %v8082 = vmul.f32 %v7168, %v8047
      %v8083 = vmul.f32 %v7169, %v8050
      %8116 = vrot.lane.b32.xlu0 %v8052, 16
      %v8117 = vpop.permute.xlu0 %8116
      %8118 = vrot.lane.b32.xlu0 %v8053, 16
      %v8119 = vpop.permute.xlu0 %8118
      %8120 = vrot.lane.b32.xlu0 %v8054, 16
      %v8121 = vpop.permute.xlu0 %8120
      %8122 = vrot.lane.b32.xlu0 %v8055, 16
      %v8123 = vpop.permute.xlu0 %8122
      %8124 = vrot.lane.b32.xlu0 %v8056, 16
      %v8125 = vpop.permute.xlu0 %8124
      %8126 = vrot.lane.b32.xlu0 %v8057, 16
      %v8127 = vpop.permute.xlu0 %8126
      %8128 = vrot.lane.b32.xlu0 %v8058, 16
      %v8129 = vpop.permute.xlu0 %8128
      %8130 = vrot.lane.b32.xlu0 %v8059, 16
      %v8131 = vpop.permute.xlu0 %8130
      %8132 = vrot.lane.b32.xlu0 %v8060, 16
      %v8133 = vpop.permute.xlu0 %8132
      %8134 = vrot.lane.b32.xlu0 %v8061, 16
      %v8135 = vpop.permute.xlu0 %8134
      %8136 = vrot.lane.b32.xlu0 %v8062, 16
      %v8137 = vpop.permute.xlu0 %8136
      %8138 = vrot.lane.b32.xlu0 %v8063, 16
      %v8139 = vpop.permute.xlu0 %8138
      %8140 = vrot.lane.b32.xlu0 %v8064, 16
      %v8141 = vpop.permute.xlu0 %8140
      %8142 = vrot.lane.b32.xlu0 %v8065, 16
      %v8143 = vpop.permute.xlu0 %8142
      %8144 = vrot.lane.b32.xlu0 %v8066, 16
      %v8145 = vpop.permute.xlu0 %8144
      %8146 = vrot.lane.b32.xlu0 %v8067, 16
      %v8147 = vpop.permute.xlu0 %8146
      %8148 = vrot.lane.b32.xlu0 %v8068, 16
      %v8149 = vpop.permute.xlu0 %8148
      %8150 = vrot.lane.b32.xlu0 %v8069, 16
      %v8151 = vpop.permute.xlu0 %8150
      %8152 = vrot.lane.b32.xlu0 %v8070, 16
      %v8153 = vpop.permute.xlu0 %8152
      %8154 = vrot.lane.b32.xlu0 %v8071, 16
      %v8155 = vpop.permute.xlu0 %8154
      %8156 = vrot.lane.b32.xlu0 %v8072, 16
      %v8157 = vpop.permute.xlu0 %8156
      %8158 = vrot.lane.b32.xlu0 %v8073, 16
      %v8159 = vpop.permute.xlu0 %8158
      %8160 = vrot.lane.b32.xlu0 %v8074, 16
      %v8161 = vpop.permute.xlu0 %8160
      %8162 = vrot.lane.b32.xlu0 %v8075, 16
      %v8163 = vpop.permute.xlu0 %8162
      %8164 = vrot.lane.b32.xlu0 %v8076, 16
      %v8165 = vpop.permute.xlu0 %8164
      %8166 = vrot.lane.b32.xlu0 %v8077, 16
      %v8167 = vpop.permute.xlu0 %8166
      %8168 = vrot.lane.b32.xlu0 %v8078, 16
      %v8169 = vpop.permute.xlu0 %8168
      %8170 = vrot.lane.b32.xlu0 %v8079, 16
      %v8171 = vpop.permute.xlu0 %8170
      %8172 = vrot.lane.b32.xlu0 %v8080, 16
      %v8173 = vpop.permute.xlu0 %8172
      %8174 = vrot.lane.b32.xlu0 %v8081, 16
      %v8175 = vpop.permute.xlu0 %8174
      %8176 = vrot.lane.b32.xlu0 %v8082, 16
      %v8177 = vpop.permute.xlu0 %8176
      %8178 = vrot.lane.b32.xlu0 %v8083, 16
      %v8179 = vpop.permute.xlu0 %8178
      %vm8212 = vcmask 261248
      %8213 = vst.msk [vmem:[%s307] sm:$0xff] %vm8212, %v8117
      %8214 = vst.msk [vmem:[%s307 + $0x8] sm:$0xff] %vm8212, %v8119
      %8215 = vst.msk [vmem:[%s307 + $0x10] sm:$0xff] %vm8212, %v8121
      %8216 = vst.msk [vmem:[%s307 + $0x18] sm:$0xff] %vm8212, %v8123
      %8217 = vst.msk [vmem:[%s307 + $0x20] sm:$0xff] %vm8212, %v8125
      %8218 = vst.msk [vmem:[%s307 + $0x28] sm:$0xff] %vm8212, %v8127
      %8219 = vst.msk [vmem:[%s307 + $0x30] sm:$0xff] %vm8212, %v8129
      %8220 = vst.msk [vmem:[%s307 + $0x38] sm:$0xff] %vm8212, %v8131
      %8221 = vst.msk [vmem:[%s307 + $0x40] sm:$0xff] %vm8212, %v8133
      %8222 = vst.msk [vmem:[%s307 + $0x48] sm:$0xff] %vm8212, %v8135
      %8223 = vst.msk [vmem:[%s307 + $0x50] sm:$0xff] %vm8212, %v8137
      %8224 = vst.msk [vmem:[%s307 + $0x58] sm:$0xff] %vm8212, %v8139
      %8225 = vst.msk [vmem:[%s307 + $0x60] sm:$0xff] %vm8212, %v8141
      %8226 = vst.msk [vmem:[%s307 + $0x68] sm:$0xff] %vm8212, %v8143
      %8227 = vst.msk [vmem:[%s307 + $0x70] sm:$0xff] %vm8212, %v8145
      %8228 = vst.msk [vmem:[%s307 + $0x78] sm:$0xff] %vm8212, %v8147
      %8229 = vst.msk [vmem:[%s307 + $0x80] sm:$0xff] %vm8212, %v8149
      %8230 = vst.msk [vmem:[%s307 + $0x88] sm:$0xff] %vm8212, %v8151
      %8231 = vst.msk [vmem:[%s307 + $0x90] sm:$0xff] %vm8212, %v8153
      %8232 = vst.msk [vmem:[%s307 + $0x98] sm:$0xff] %vm8212, %v8155
      %8233 = vst.msk [vmem:[%s307 + $0xa0] sm:$0xff] %vm8212, %v8157
      %8234 = vst.msk [vmem:[%s307 + $0xa8] sm:$0xff] %vm8212, %v8159
      %8235 = vst.msk [vmem:[%s307 + $0xb0] sm:$0xff] %vm8212, %v8161
      %8236 = vst.msk [vmem:[%s307 + $0xb8] sm:$0xff] %vm8212, %v8163
      %8237 = vst.msk [vmem:[%s307 + $0xc0] sm:$0xff] %vm8212, %v8165
      %8238 = vst.msk [vmem:[%s307 + $0xc8] sm:$0xff] %vm8212, %v8167
      %8239 = vst.msk [vmem:[%s307 + $0xd0] sm:$0xff] %vm8212, %v8169
      %8240 = vst.msk [vmem:[%s307 + $0xd8] sm:$0xff] %vm8212, %v8171
      %8241 = vst.msk [vmem:[%s307 + $0xe0] sm:$0xff] %vm8212, %v8173
      %8242 = vst.msk [vmem:[%s307 + $0xe8] sm:$0xff] %vm8212, %v8175
      %8243 = vst.msk [vmem:[%s307 + $0xf0] sm:$0xff] %vm8212, %v8177
      %8244 = vst.msk [vmem:[%s307 + $0xf8] sm:$0xff] %vm8212, %v8179
      %s8245 = smul.u32 32, %s19
      %p8246 = scmp.lt.s32.totalorder %s8245, 127
      %s8247 = scalar_select %p8246, %s8245, 127
      %s8248 = smul.addr %s8247, 8
      %s8249 = scalar_lea.vmem %s8, %s8248
      // Predicated region
      $region53: #{tpu_custom_call.1} parent=51 // pred_check
        %p8250 = pneg %p210
      $region54: #{tpu_custom_call.1} parent=51 // pred_check_branch
        %8252 = sbr.rel (%p8250) target = $region56
      $region55: #{tpu_custom_call.1} parent=51 // pred_region
        %s8253 = smul.u32 32, %s19
      $region56: #{tpu_custom_call.1} parent=51 // pred_fallthru
        _
    $region52: #{tpu_custom_call.1} parent=5 // pred_fallthru
      _
    %p8254 = scmp.le.s32.totalorder 2, %s14
    // Predicated region
    $region57: #{tpu_custom_call.1} parent=5 // pred_check
      %p8255 = pneg %p8254
    $region58: #{tpu_custom_call.1} parent=5 // pred_check_branch
      %8257 = sbr.rel (%p8255) target = $region60
    $region59: #{tpu_custom_call.1} parent=5 // pred_region
      %s8258 = ssub.s32 %s14, 2
      // Predicated region
      $region61: #{tpu_custom_call.1} parent=59 // pred_check
        %p8259 = pneg %p216
      $region62: #{tpu_custom_call.1} parent=59 // pred_check_branch
        %8261 = sbr.rel (%p8259) target = $region64
      $region63: #{tpu_custom_call.1} parent=59 // pred_region
        %s8262 = smul.u32 32, %s20
        %p8263 = scmp.lt.s32.totalorder %s8262, 127
        %s8264 = scalar_select %p8263, %s8262, 127
        %s8265 = smul.addr %s8264, 8
        %s8266 = scalar_lea.vmem %s8, %s8265
      $region64: #{tpu_custom_call.1} parent=59 // pred_fallthru
        _
    $region60: #{tpu_custom_call.1} parent=5 // pred_fallthru
      _
  $region6: #{tpu_custom_call.1} parent=0 // loop_footer
    %s18 = sadd.s32 1, %s14
  $region7: #{tpu_custom_call.1} parent=0 // loop_footer_branch
    %13 = sbr.rel target = $region3
  $region8: #{tpu_custom_call.1} parent=0 // loop_exit
    _

</llo_original>
